<compile_context>
chip_gen: v7x
topology: tpu7x:2x2x1
jax: 0.10.0
libtpu: 0.0.40
codegen_flags: <defaults>
</compile_context>

<pallas_src>
import functools
import math

import jax
import jax.numpy as jnp
import numpy as np
from jax.experimental import pallas as pl
from jax.experimental.pallas import tpu as pltpu

EPS = 1e-5
NEG_SLOPE = 0.2
# MXU operand dtype (accumulation always f32).  Set to jnp.float32 for strict
# f32 parity with the PyTorch reference.
MXU_DTYPE = jnp.bfloat16


# ----------------------------------------------------------------------------
# In-kernel helpers.  Activations are (C, H*W): channels on sublanes,
# flattened spatial on lanes (lane-dense).
# ----------------------------------------------------------------------------
def _roll_lanes(x, k, n):
    """out[:, p] = x[:, (p + k) % n] for a static shift k (lane rotation)."""
    k = k % n
    if k == 0:
        return x
    return jnp.concatenate([x[:, k:], x[:, :k]], axis=1)


def _taps3x3(act, m_ref, H, W):
    """Nine 3x3 'same'-conv taps of act (C, H*W) stacked on the sublane axis
    -> (9*C, H*W).  Out-of-image positions are zeroed by per-tap masks
    (m_ref: (9, 1, H*W))."""
    HW = H * W
    cols = []
    for dy in (-1, 0, 1):
        for dx in (-1, 0, 1):
            t = (dy + 1) * 3 + (dx + 1)
            piece = _roll_lanes(act, dy * W + dx, HW)
            if dy != 0 or dx != 0:
                piece = piece * m_ref[t]
            cols.append(piece)
    return jnp.concatenate(cols, axis=0)


def _in_lrelu(acc):
    """InstanceNorm2d (biased var, eps=1e-5, affine=False) + LeakyReLU(0.2)."""
    mean = jnp.mean(acc, axis=1, keepdims=True)
    var = jnp.mean((acc - mean) ** 2, axis=1, keepdims=True)
    y = (acc - mean) * jax.lax.rsqrt(var + EPS)
    return jnp.where(y >= 0, y, NEG_SLOPE * y)


def _conv3x3_in_lrelu(sources, Cout, H, W):
    """3x3 'same' conv (bias=False) + InstanceNorm + LeakyReLU.

    sources: list of (act (Cin_i, H*W) f32, w9_ref (Cout, 9*Cin_i), mask_ref).
    Several sources implement the skip-connection concat as a sum of matmuls
    (no activation concatenation); one K=9*Cin matmul per source."""
    acc = jnp.zeros((Cout, H * W), jnp.float32)
    for act, w_ref, m_ref in sources:
        col = _taps3x3(act, m_ref, H, W).astype(MXU_DTYPE)
        acc = acc + jnp.dot(w_ref[...], col, preferred_element_type=jnp.float32)
    return _in_lrelu(acc)


def _avg_pool2(act, p_ref):
    """2x2 average pool as a matmul with a constant (H*W, H*W/4) matrix."""
    return jnp.dot(act.astype(MXU_DTYPE), p_ref[...],
                   preferred_element_type=jnp.float32)


def _upconv2x2_in_lrelu(act, w_ref, s_ref, Cout, HW_in):
    """ConvTranspose2d(k=2, s=2, bias=False) + InstanceNorm + LeakyReLU.

    act: (Cin, HW_in); w_ref: (4*Cout, Cin) computes the four sub-pixel groups
    in one matmul; s_ref: (4, HW_in, 4*HW_in) constant scatter matrices that
    interleave the groups into the 2x-upsampled flat layout in-kernel."""
    y = jnp.dot(w_ref[...], act.astype(MXU_DTYPE),
                preferred_element_type=jnp.float32)           # (4*Cout, HW_in)
    ys = [y[t * Cout:(t + 1) * Cout, :] for t in range(4)]
    inv_n = 1.0 / (4.0 * HW_in)
    mean = (ys[0] + ys[1] + ys[2] + ys[3]).sum(axis=1, keepdims=True) * inv_n
    var = sum(((yt - mean) ** 2).sum(axis=1, keepdims=True) for yt in ys) * inv_n
    rstd = jax.lax.rsqrt(var + EPS)
    out = jnp.zeros((Cout, 4 * HW_in), jnp.float32)
    for t in range(4):
        z = (ys[t] - mean) * rstd
        z = jnp.where(z >= 0, z, NEG_SLOPE * z)
        out = out + jnp.dot(z.astype(MXU_DTYPE), s_ref[t],
                            preferred_element_type=jnp.float32)
    return out


# ----------------------------------------------------------------------------
# The fused UNet kernel (one grid step == one batch element)
# ----------------------------------------------------------------------------
def _norm_unet_kernel(x_ref, m0, m1, m2, p0, p1, s1, s0,
                      w_e1a, w_e1b, w_e2a, w_e2b, w_bta, w_btb,
                      w_up2, w_d2u, w_d2s, w_d2b,
                      w_up1, w_d1u, w_d1s, w_d1b,
                      w_fin, b_fin,
                      o_ref, *, ch, H0, W0):
    H1, W1 = H0 // 2, W0 // 2
    H2, W2 = H1 // 2, W1 // 2

    x0 = x_ref[0].astype(jnp.float32)                     # (in_ch, H0*W0)

    # encoder level 0
    a = _conv3x3_in_lrelu([(x0, w_e1a, m0)], ch, H0, W0)
    e1 = _conv3x3_in_lrelu([(a, w_e1b, m0)], ch, H0, W0)

    # encoder level 1
    a = _avg_pool2(e1, p0)
    a = _conv3x3_in_lrelu([(a, w_e2a, m1)], 2 * ch, H1, W1)
    e2 = _conv3x3_in_lrelu([(a, w_e2b, m1)], 2 * ch, H1, W1)

    # bottleneck (level 2)
    a = _avg_pool2(e2, p1)
    a = _conv3x3_in_lrelu([(a, w_bta, m2)], 4 * ch, H2, W2)
    bt = _conv3x3_in_lrelu([(a, w_btb, m2)], 4 * ch, H2, W2)

    # decoder level 1 (skip e2 fed as a second matmul source -- no concat)
    u2 = _upconv2x2_in_lrelu(bt, w_up2, s1, 2 * ch, H2 * W2)       # (2ch, H1*W1)
    a = _conv3x3_in_lrelu([(u2, w_d2u, m1), (e2, w_d2s, m1)], 2 * ch, H1, W1)
    d2 = _conv3x3_in_lrelu([(a, w_d2b, m1)], 2 * ch, H1, W1)

    # decoder level 0 (skip e1)
    u1 = _upconv2x2_in_lrelu(d2, w_up1, s0, ch, H1 * W1)           # (ch, H0*W0)
    a = _conv3x3_in_lrelu([(u1, w_d1u, m0), (e1, w_d1s, m0)], ch, H0, W0)
    d1 = _conv3x3_in_lrelu([(a, w_d1b, m0)], ch, H0, W0)

    # final 1x1 conv (+ bias); lane-dense (out_ch, H0*W0) output block
    out = jnp.dot(w_fin[...], d1.astype(MXU_DTYPE),
                  preferred_element_type=jnp.float32) + b_fin[...]
    o_ref[0] = out.astype(o_ref.dtype)


# ----------------------------------------------------------------------------
# Constant matrices (built once, host-side numpy) and weight packing
# ----------------------------------------------------------------------------
def _tap_masks(H, W):
    m = np.zeros((9, 1, H * W), np.float32)
    yy, xx = np.meshgrid(np.arange(H), np.arange(W), indexing="ij")
    for i, dy in enumerate((-1, 0, 1)):
        for j, dx in enumerate((-1, 0, 1)):
            valid = ((yy + dy >= 0) & (yy + dy < H)
                     & (xx + dx >= 0) & (xx + dx < W))
            m[i * 3 + j, 0] = valid.reshape(-1).astype(np.float32)
    return m


def _pool_matrix(H, W):
    Ho, Wo = H // 2, W // 2
    P = np.zeros((H * W, Ho * Wo), np.float32)
    s = np.arange(H * W)
    d = (s // W // 2) * Wo + (s % W) // 2
    P[s, d] = 0.25
    return P


def _upsample_scatter(H, W):
    # (4, H*W, (2H)*(2W)); group t = dy*2+dx places input (y,x) at (2y+dy, 2x+dx)
    S = np.zeros((4, H * W, 4 * H * W), np.float32)
    s = np.arange(H * W)
    y, x = s // W, s % W
    for dy in range(2):
        for dx in range(2):
            d = (2 * y + dy) * (2 * W) + (2 * x + dx)
            S[dy * 2 + dx, s, d] = 1.0
    return S


def _w9(w):   # (3,3,Cin,Cout) -> (Cout, 9*Cin), column = (3*ky+kx)*Cin + cin
    cout = w.shape[-1]
    return jnp.transpose(w, (3, 0, 1, 2)).reshape(cout, -1).astype(MXU_DTYPE)


def _wup(w):  # (2,2,Cin,Cout) -> (4*Cout, Cin), row = (2*dy+dx)*Cout + cout
    cin, cout = w.shape[2], w.shape[3]
    return jnp.transpose(w, (0, 1, 3, 2)).reshape(4 * cout, cin).astype(MXU_DTYPE)


def _unet_fused(xp, params, ch, in_ch, out_ch, H0, W0):
    """xp: (B, in_ch, H0*W0) normalized + 16-multiple padded input (flat)."""
    B = xp.shape[0]
    H1, W1, H2, W2 = H0 // 2, W0 // 2, H0 // 4, W0 // 4

    m0 = jnp.asarray(_tap_masks(H0, W0))
    m1 = jnp.asarray(_tap_masks(H1, W1))
    m2 = jnp.asarray(_tap_masks(H2, W2))
    p0 = jnp.asarray(_pool_matrix(H0, W0), MXU_DTYPE)
    p1 = jnp.asarray(_pool_matrix(H1, W1), MXU_DTYPE)
    s1 = jnp.asarray(_upsample_scatter(H2, W2), MXU_DTYPE)
    s0 = jnp.asarray(_upsample_scatter(H1, W1), MXU_DTYPE)

    w_e1a, w_e1b = _w9(params["enc1"]["w1"]), _w9(params["enc1"]["w2"])
    w_e2a, w_e2b = _w9(params["enc2"]["w1"]), _w9(params["enc2"]["w2"])
    w_bta, w_btb = _w9(params["bottleneck"]["w1"]), _w9(params["bottleneck"]["w2"])
    w_up2 = _wup(params["up2"])
    w_d2u = _w9(params["dec2"]["w1"][:, :, :2 * ch, :])   # upsampled part
    w_d2s = _w9(params["dec2"]["w1"][:, :, 2 * ch:, :])   # skip part
    w_d2b = _w9(params["dec2"]["w2"])
    w_up1 = _wup(params["up1"])
    w_d1u = _w9(params["dec1"]["w1"][:, :, :ch, :])
    w_d1s = _w9(params["dec1"]["w1"][:, :, ch:, :])
    w_d1b = _w9(params["dec1"]["w2"])
    w_fin = jnp.transpose(params["final_w"]).astype(MXU_DTYPE)     # (out_ch, ch)
    b_fin = params["final_b"].reshape(out_ch, 1).astype(jnp.float32)

    consts = [m0, m1, m2, p0, p1, s1, s0,
              w_e1a, w_e1b, w_e2a, w_e2b, w_bta, w_btb,
              w_up2, w_d2u, w_d2s, w_d2b,
              w_up1, w_d1u, w_d1s, w_d1b, w_fin, b_fin]

    def _bcast_spec(a):
        nd = a.ndim
        return pl.BlockSpec(a.shape, lambda b, _n=nd: (0,) * _n)

    kernel = functools.partial(_norm_unet_kernel, ch=ch, H0=H0, W0=W0)
    return pl.pallas_call(
        kernel,
        out_shape=jax.ShapeDtypeStruct((B, out_ch, H0 * W0), jnp.float32),
        grid=(B,),
        in_specs=[pl.BlockSpec((1, in_ch, H0 * W0), lambda b: (b, 0, 0))]
                 + [_bcast_spec(a) for a in consts],
        out_specs=pl.BlockSpec((1, out_ch, H0 * W0), lambda b: (b, 0, 0)),
        compiler_params=pltpu.CompilerParams(
            dimension_semantics=("parallel",)),   # batch across cores (v7x)
    )(xp, *consts)


# ----------------------------------------------------------------------------
# NormUnet wrapper (thin XLA glue: complex packing, norm, 16-multiple pad)
# ----------------------------------------------------------------------------
def norm_unet_forward(x, params):
    """x: (B, C, H, W, 2) complex-last, matching the PyTorch module input."""
    if x.shape[-1] != 2:
        raise ValueError("Last dimension must be 2 for complex.")
    B, Cc, H, W, _ = x.shape
    in_ch = 2 * Cc
    ch = params["enc1"]["w1"].shape[-1]
    out_ch = params["final_w"].shape[-1]

    # complex_to_chan_dim: (B, 2*Cc, H, W), component-major channel order
    xc = jnp.transpose(x, (0, 4, 1, 2, 3)).reshape(B, in_ch, H, W)

    # norm: per (batch, complex-component) mean / std (torch.std -> ddof=1)
    xg = xc.reshape(B, 2, -1)
    mean = jnp.mean(xg, axis=2).reshape(B, 2, 1, 1, 1)
    std = jnp.std(xg, axis=2, ddof=1).reshape(B, 2, 1, 1, 1)
    xn = ((xc.reshape(B, 2, Cc, H, W) - mean) / std).reshape(B, in_ch, H, W)

    # pad H, W to multiples of 16 (centered zero pad), like NormUnet.pad
    w_mult = ((W - 1) | 15) + 1
    h_mult = ((H - 1) | 15) + 1
    w_pad = ((w_mult - W) // 2, (w_mult - W) - (w_mult - W) // 2)
    h_pad = ((h_mult - H) // 2, (h_mult - H) - (h_mult - H) // 2)
    xp = jnp.pad(xn, ((0, 0), (0, 0), h_pad, w_pad))
    xp = xp.reshape(B, in_ch, h_mult * w_mult)            # flat, lane-dense

    # fused UNet on TPU
    y = _unet_fused(xp, params, ch, in_ch, out_ch, h_mult, w_mult)

    # unpad, unnorm, chan_complex_to_last_dim
    y = y.reshape(B, out_ch, h_mult, w_mult)
    y = y[:, :, h_pad[0]:h_mult - h_pad[1], w_pad[0]:w_mult - w_pad[1]]
    y = y.reshape(B, 2, out_ch // 2, H, W) * std + mean
    return jnp.transpose(y, (0, 2, 3, 4, 1))


# ----------------------------------------------------------------------------
# Deterministic parameter init (synthetic, kaiming-like scaling)
# TODO(synk): when loading real PyTorch weights, convert Conv2d OIHW -> HWIO and
# ConvTranspose2d (Cin, Cout, kh, kw) -> (kh, kw, Cin, Cout) first.
# ----------------------------------------------------------------------------
def _init_conv3(key, cin, cout):
    std = math.sqrt(2.0 / (9 * cin))
    return jax.random.normal(key, (3, 3, cin, cout), jnp.float32) * std


def _init_conv_block(key, cin, cout):
    k1, k2 = jax.random.split(key)
    return {"w1": _init_conv3(k1, cin, cout), "w2": _init_conv3(k2, cout, cout)}


def _init_upconv(key, cin, cout):
    std = math.sqrt(2.0 / (4 * cin))
    return jax.random.normal(key, (2, 2, cin, cout), jnp.float32) * std


def init_params(key, in_ch, out_ch, ch):
    ks = jax.random.split(key, 8)
    return {
        "enc1": _init_conv_block(ks[0], in_ch, ch),
        "enc2": _init_conv_block(ks[1], ch, 2 * ch),
        "bottleneck": _init_conv_block(ks[2], 2 * ch, 4 * ch),
        "up2": _init_upconv(ks[3], 4 * ch, 2 * ch),
        "dec2": _init_conv_block(ks[4], 4 * ch, 2 * ch),
        "up1": _init_upconv(ks[5], 2 * ch, ch),
        "dec1": _init_conv_block(ks[6], 2 * ch, ch),
        "final_w": jax.random.normal(ks[7], (ch, out_ch), jnp.float32)
                   * math.sqrt(1.0 / ch),
        "final_b": jnp.zeros((out_ch,), jnp.float32),
    }


# ----------------------------------------------------------------------------
if __name__ == "__main__":
    key = jax.random.PRNGKey(0)
    k_x, k_p = jax.random.split(key)

    # NormUnet(chans=8, in_chans=2, out_chans=2); input (B, C, H, W, 2) with C=1
    B, Cc, H, W = 2, 1, 13, 10
    chans, in_chans, out_chans = 8, 2 * Cc, 2

    x = jax.random.normal(k_x, (B, Cc, H, W, 2), jnp.float32)
    params = init_params(k_p, in_chans, out_chans, chans)

    fwd = jax.jit(functools.partial(norm_unet_forward, params=params))
    out = jax.block_until_ready(fwd(x))

    assert out.shape == (B, Cc, H, W, 2), out.shape
    assert jnp.all(jnp.isfinite(out))
    print("KERNEL_OK")
</pallas_src>

<mosaic_0001>
module attributes {stable_mosaic.version = 11 : i64} {
  func.func @_norm_unet_kernel(%arg0: i32, %arg1: memref<1x2x256xf32, #tpu.memory_space<vmem>>, %arg2: memref<9x1x256xf32, #tpu.memory_space<vmem>>, %arg3: memref<9x1x64xf32, #tpu.memory_space<vmem>>, %arg4: memref<9x1x16xf32, #tpu.memory_space<vmem>>, %arg5: memref<256x64xbf16, #tpu.memory_space<vmem>>, %arg6: memref<64x16xbf16, #tpu.memory_space<vmem>>, %arg7: memref<4x16x64xbf16, #tpu.memory_space<vmem>>, %arg8: memref<4x64x256xbf16, #tpu.memory_space<vmem>>, %arg9: memref<8x18xbf16, #tpu.memory_space<vmem>>, %arg10: memref<8x72xbf16, #tpu.memory_space<vmem>>, %arg11: memref<16x72xbf16, #tpu.memory_space<vmem>>, %arg12: memref<16x144xbf16, #tpu.memory_space<vmem>>, %arg13: memref<32x144xbf16, #tpu.memory_space<vmem>>, %arg14: memref<32x288xbf16, #tpu.memory_space<vmem>>, %arg15: memref<64x32xbf16, #tpu.memory_space<vmem>>, %arg16: memref<16x144xbf16, #tpu.memory_space<vmem>>, %arg17: memref<16x144xbf16, #tpu.memory_space<vmem>>, %arg18: memref<16x144xbf16, #tpu.memory_space<vmem>>, %arg19: memref<32x16xbf16, #tpu.memory_space<vmem>>, %arg20: memref<8x72xbf16, #tpu.memory_space<vmem>>, %arg21: memref<8x72xbf16, #tpu.memory_space<vmem>>, %arg22: memref<8x72xbf16, #tpu.memory_space<vmem>>, %arg23: memref<2x8xbf16, #tpu.memory_space<vmem>>, %arg24: memref<2x1xf32, #tpu.memory_space<vmem>>, %arg25: memref<1x2x256xf32, #tpu.memory_space<vmem>>) attributes {dimension_semantics = [#tpu.dimension_semantics<parallel>], iteration_bounds = array<i64: 2>, scalar_prefetch = 0 : i64, scratch_operands = 0 : i64, tpu.core_type = #tpu.core_type<tc>, window_params = [{transform_indices = @transform_0, window_bounds = array<i64: 1, 2, 256>}, {pipeline_mode = #tpu.pipeline_mode<synchronous>, transform_indices = @transform_1, window_bounds = array<i64: 9, 1, 256>}, {pipeline_mode = #tpu.pipeline_mode<synchronous>, transform_indices = @transform_2, window_bounds = array<i64: 9, 1, 64>}, {pipeline_mode = #tpu.pipeline_mode<synchronous>, transform_indices = @transform_3, window_bounds = array<i64: 9, 1, 16>}, {pipeline_mode = #tpu.pipeline_mode<synchronous>, transform_indices = @transform_4, window_bounds = array<i64: 256, 64>}, {pipeline_mode = #tpu.pipeline_mode<synchronous>, transform_indices = @transform_5, window_bounds = array<i64: 64, 16>}, {pipeline_mode = #tpu.pipeline_mode<synchronous>, transform_indices = @transform_6, window_bounds = array<i64: 4, 16, 64>}, {pipeline_mode = #tpu.pipeline_mode<synchronous>, transform_indices = @transform_7, window_bounds = array<i64: 4, 64, 256>}, {pipeline_mode = #tpu.pipeline_mode<synchronous>, transform_indices = @transform_8, window_bounds = array<i64: 8, 18>}, {pipeline_mode = #tpu.pipeline_mode<synchronous>, transform_indices = @transform_9, window_bounds = array<i64: 8, 72>}, {pipeline_mode = #tpu.pipeline_mode<synchronous>, transform_indices = @transform_10, window_bounds = array<i64: 16, 72>}, {pipeline_mode = #tpu.pipeline_mode<synchronous>, transform_indices = @transform_11, window_bounds = array<i64: 16, 144>}, {pipeline_mode = #tpu.pipeline_mode<synchronous>, transform_indices = @transform_12, window_bounds = array<i64: 32, 144>}, {pipeline_mode = #tpu.pipeline_mode<synchronous>, transform_indices = @transform_13, window_bounds = array<i64: 32, 288>}, {pipeline_mode = #tpu.pipeline_mode<synchronous>, transform_indices = @transform_14, window_bounds = array<i64: 64, 32>}, {pipeline_mode = #tpu.pipeline_mode<synchronous>, transform_indices = @transform_15, window_bounds = array<i64: 16, 144>}, {pipeline_mode = #tpu.pipeline_mode<synchronous>, transform_indices = @transform_16, window_bounds = array<i64: 16, 144>}, {pipeline_mode = #tpu.pipeline_mode<synchronous>, transform_indices = @transform_17, window_bounds = array<i64: 16, 144>}, {pipeline_mode = #tpu.pipeline_mode<synchronous>, transform_indices = @transform_18, window_bounds = array<i64: 32, 16>}, {pipeline_mode = #tpu.pipeline_mode<synchronous>, transform_indices = @transform_19, window_bounds = array<i64: 8, 72>}, {pipeline_mode = #tpu.pipeline_mode<synchronous>, transform_indices = @transform_20, window_bounds = array<i64: 8, 72>}, {pipeline_mode = #tpu.pipeline_mode<synchronous>, transform_indices = @transform_21, window_bounds = array<i64: 8, 72>}, {pipeline_mode = #tpu.pipeline_mode<synchronous>, transform_indices = @transform_22, window_bounds = array<i64: 2, 8>}, {pipeline_mode = #tpu.pipeline_mode<synchronous>, transform_indices = @transform_23, window_bounds = array<i64: 2, 1>}, {transform_indices = @transform_24, window_bounds = array<i64: 1, 2, 256>}]} {
    %c0 = arith.constant 0 : index
    %c0_0 = arith.constant 0 : index
    %c0_1 = arith.constant 0 : index
    %0 = vector.load %arg1[%c0, %c0_0, %c0_1] : memref<1x2x256xf32, #tpu.memory_space<vmem>>, vector<1x2x256xf32>
    %1 = vector.shape_cast %0 : vector<1x2x256xf32> to vector<2x256xf32>
    %cst = arith.constant 0.000000e+00 : f32
    %2 = vector.broadcast %cst : f32 to vector<8x256xf32>
    %3 = vector.extract_strided_slice %1 {offsets = [0, 239], sizes = [2, 17], strides = [1, 1]} : vector<2x256xf32> to vector<2x17xf32>
    %4 = vector.extract_strided_slice %1 {offsets = [0, 0], sizes = [2, 239], strides = [1, 1]} : vector<2x256xf32> to vector<2x239xf32>
    %5 = tpu.concatenate %3, %4 in 1 : vector<2x17xf32>, vector<2x239xf32> -> vector<2x256xf32>
    %c0_2 = arith.constant 0 : index
    %c0_3 = arith.constant 0 : index
    %c0_4 = arith.constant 0 : index
    %6 = vector.load %arg2[%c0_2, %c0_3, %c0_4] : memref<9x1x256xf32, #tpu.memory_space<vmem>>, vector<1x1x256xf32>
    %7 = vector.shape_cast %6 : vector<1x1x256xf32> to vector<1x256xf32>
    %8 = vector.broadcast %7 : vector<1x256xf32> to vector<2x256xf32>
    %9 = arith.mulf %5, %8 : vector<2x256xf32>
    %10 = vector.extract_strided_slice %1 {offsets = [0, 240], sizes = [2, 16], strides = [1, 1]} : vector<2x256xf32> to vector<2x16xf32>
    %11 = vector.extract_strided_slice %1 {offsets = [0, 0], sizes = [2, 240], strides = [1, 1]} : vector<2x256xf32> to vector<2x240xf32>
    %12 = tpu.concatenate %10, %11 in 1 : vector<2x16xf32>, vector<2x240xf32> -> vector<2x256xf32>
    %c1 = arith.constant 1 : index
    %c0_5 = arith.constant 0 : index
    %c0_6 = arith.constant 0 : index
    %13 = vector.load %arg2[%c1, %c0_5, %c0_6] : memref<9x1x256xf32, #tpu.memory_space<vmem>>, vector<1x1x256xf32>
    %14 = vector.shape_cast %13 : vector<1x1x256xf32> to vector<1x256xf32>
    %15 = vector.broadcast %14 : vector<1x256xf32> to vector<2x256xf32>
    %16 = arith.mulf %12, %15 : vector<2x256xf32>
    %17 = vector.extract_strided_slice %1 {offsets = [0, 241], sizes = [2, 15], strides = [1, 1]} : vector<2x256xf32> to vector<2x15xf32>
    %18 = vector.extract_strided_slice %1 {offsets = [0, 0], sizes = [2, 241], strides = [1, 1]} : vector<2x256xf32> to vector<2x241xf32>
    %19 = tpu.concatenate %17, %18 in 1 : vector<2x15xf32>, vector<2x241xf32> -> vector<2x256xf32>
    %c2 = arith.constant 2 : index
    %c0_7 = arith.constant 0 : index
    %c0_8 = arith.constant 0 : index
    %20 = vector.load %arg2[%c2, %c0_7, %c0_8] : memref<9x1x256xf32, #tpu.memory_space<vmem>>, vector<1x1x256xf32>
    %21 = vector.shape_cast %20 : vector<1x1x256xf32> to vector<1x256xf32>
    %22 = vector.broadcast %21 : vector<1x256xf32> to vector<2x256xf32>
    %23 = arith.mulf %19, %22 : vector<2x256xf32>
    %24 = vector.extract_strided_slice %1 {offsets = [0, 255], sizes = [2, 1], strides = [1, 1]} : vector<2x256xf32> to vector<2x1xf32>
    %25 = vector.extract_strided_slice %1 {offsets = [0, 0], sizes = [2, 255], strides = [1, 1]} : vector<2x256xf32> to vector<2x255xf32>
    %26 = tpu.concatenate %24, %25 in 1 : vector<2x1xf32>, vector<2x255xf32> -> vector<2x256xf32>
    %c3 = arith.constant 3 : index
    %c0_9 = arith.constant 0 : index
    %c0_10 = arith.constant 0 : index
    %27 = vector.load %arg2[%c3, %c0_9, %c0_10] : memref<9x1x256xf32, #tpu.memory_space<vmem>>, vector<1x1x256xf32>
    %28 = vector.shape_cast %27 : vector<1x1x256xf32> to vector<1x256xf32>
    %29 = vector.broadcast %28 : vector<1x256xf32> to vector<2x256xf32>
    %30 = arith.mulf %26, %29 : vector<2x256xf32>
    %31 = vector.extract_strided_slice %1 {offsets = [0, 1], sizes = [2, 255], strides = [1, 1]} : vector<2x256xf32> to vector<2x255xf32>
    %32 = vector.extract_strided_slice %1 {offsets = [0, 0], sizes = [2, 1], strides = [1, 1]} : vector<2x256xf32> to vector<2x1xf32>
    %33 = tpu.concatenate %31, %32 in 1 : vector<2x255xf32>, vector<2x1xf32> -> vector<2x256xf32>
    %c5 = arith.constant 5 : index
    %c0_11 = arith.constant 0 : index
    %c0_12 = arith.constant 0 : index
    %34 = vector.load %arg2[%c5, %c0_11, %c0_12] : memref<9x1x256xf32, #tpu.memory_space<vmem>>, vector<1x1x256xf32>
    %35 = vector.shape_cast %34 : vector<1x1x256xf32> to vector<1x256xf32>
    %36 = vector.broadcast %35 : vector<1x256xf32> to vector<2x256xf32>
    %37 = arith.mulf %33, %36 : vector<2x256xf32>
    %38 = vector.extract_strided_slice %1 {offsets = [0, 15], sizes = [2, 241], strides = [1, 1]} : vector<2x256xf32> to vector<2x241xf32>
    %39 = vector.extract_strided_slice %1 {offsets = [0, 0], sizes = [2, 15], strides = [1, 1]} : vector<2x256xf32> to vector<2x15xf32>
    %40 = tpu.concatenate %38, %39 in 1 : vector<2x241xf32>, vector<2x15xf32> -> vector<2x256xf32>
    %c6 = arith.constant 6 : index
    %c0_13 = arith.constant 0 : index
    %c0_14 = arith.constant 0 : index
    %41 = vector.load %arg2[%c6, %c0_13, %c0_14] : memref<9x1x256xf32, #tpu.memory_space<vmem>>, vector<1x1x256xf32>
    %42 = vector.shape_cast %41 : vector<1x1x256xf32> to vector<1x256xf32>
    %43 = vector.broadcast %42 : vector<1x256xf32> to vector<2x256xf32>
    %44 = arith.mulf %40, %43 : vector<2x256xf32>
    %45 = vector.extract_strided_slice %1 {offsets = [0, 16], sizes = [2, 240], strides = [1, 1]} : vector<2x256xf32> to vector<2x240xf32>
    %46 = vector.extract_strided_slice %1 {offsets = [0, 0], sizes = [2, 16], strides = [1, 1]} : vector<2x256xf32> to vector<2x16xf32>
    %47 = tpu.concatenate %45, %46 in 1 : vector<2x240xf32>, vector<2x16xf32> -> vector<2x256xf32>
    %c7 = arith.constant 7 : index
    %c0_15 = arith.constant 0 : index
    %c0_16 = arith.constant 0 : index
    %48 = vector.load %arg2[%c7, %c0_15, %c0_16] : memref<9x1x256xf32, #tpu.memory_space<vmem>>, vector<1x1x256xf32>
    %49 = vector.shape_cast %48 : vector<1x1x256xf32> to vector<1x256xf32>
    %50 = vector.broadcast %49 : vector<1x256xf32> to vector<2x256xf32>
    %51 = arith.mulf %47, %50 : vector<2x256xf32>
    %52 = vector.extract_strided_slice %1 {offsets = [0, 17], sizes = [2, 239], strides = [1, 1]} : vector<2x256xf32> to vector<2x239xf32>
    %53 = vector.extract_strided_slice %1 {offsets = [0, 0], sizes = [2, 17], strides = [1, 1]} : vector<2x256xf32> to vector<2x17xf32>
    %54 = tpu.concatenate %52, %53 in 1 : vector<2x239xf32>, vector<2x17xf32> -> vector<2x256xf32>
    %c8 = arith.constant 8 : index
    %c0_17 = arith.constant 0 : index
    %c0_18 = arith.constant 0 : index
    %55 = vector.load %arg2[%c8, %c0_17, %c0_18] : memref<9x1x256xf32, #tpu.memory_space<vmem>>, vector<1x1x256xf32>
    %56 = vector.shape_cast %55 : vector<1x1x256xf32> to vector<1x256xf32>
    %57 = vector.broadcast %56 : vector<1x256xf32> to vector<2x256xf32>
    %58 = arith.mulf %54, %57 : vector<2x256xf32>
    %59 = tpu.concatenate %9, %16, %23, %30, %1, %37, %44, %51, %58 in 0 : vector<2x256xf32>, vector<2x256xf32>, vector<2x256xf32>, vector<2x256xf32>, vector<2x256xf32>, vector<2x256xf32>, vector<2x256xf32>, vector<2x256xf32>, vector<2x256xf32> -> vector<18x256xf32>
    %60 = arith.truncf %59 : vector<18x256xf32> to vector<18x256xbf16>
    %c0_19 = arith.constant 0 : index
    %c0_20 = arith.constant 0 : index
    %61 = vector.load %arg9[%c0_19, %c0_20] : memref<8x18xbf16, #tpu.memory_space<vmem>>, vector<8x18xbf16>
    %cst_21 = arith.constant dense<0.000000e+00> : vector<8x256xf32>
    %62 = tpu.matmul %61, %60, %cst_21 {dimension_numbers = #tpu.dot_dimension_numbers<[1], [0], [0], [1], [0, 0, 1, 1], [], []>} : vector<8x18xbf16>, vector<18x256xbf16>, vector<8x256xf32> -> vector<8x256xf32>
    %63 = arith.addf %2, %62 : vector<8x256xf32>
    %cst_22 = arith.constant dense<0.000000e+00> : vector<8xf32>
    %64 = vector.multi_reduction <add>, %63, %cst_22 [1] : vector<8x256xf32> to vector<8xf32>
    %65 = vector.shape_cast %64 : vector<8xf32> to vector<8x1xf32>
    %cst_23 = arith.constant 2.560000e+02 : f32
    %66 = vector.broadcast %cst_23 : f32 to vector<8x1xf32>
    %67 = arith.divf %65, %66 : vector<8x1xf32>
    %68 = vector.broadcast %67 : vector<8x1xf32> to vector<8x256xf32>
    %69 = arith.subf %63, %68 : vector<8x256xf32>
    %70 = arith.mulf %69, %69 : vector<8x256xf32>
    %cst_24 = arith.constant dense<0.000000e+00> : vector<8xf32>
    %71 = vector.multi_reduction <add>, %70, %cst_24 [1] : vector<8x256xf32> to vector<8xf32>
    %72 = vector.shape_cast %71 : vector<8xf32> to vector<8x1xf32>
    %cst_25 = arith.constant 2.560000e+02 : f32
    %73 = vector.broadcast %cst_25 : f32 to vector<8x1xf32>
    %74 = arith.divf %72, %73 : vector<8x1xf32>
    %75 = vector.broadcast %67 : vector<8x1xf32> to vector<8x256xf32>
    %76 = arith.subf %63, %75 : vector<8x256xf32>
    %cst_26 = arith.constant 9.99999974E-6 : f32
    %77 = vector.broadcast %cst_26 : f32 to vector<8x1xf32>
    %78 = arith.addf %74, %77 : vector<8x1xf32>
    %79 = math.rsqrt %78 : vector<8x1xf32>
    %80 = vector.broadcast %79 : vector<8x1xf32> to vector<8x256xf32>
    %81 = arith.mulf %76, %80 : vector<8x256xf32>
    %cst_27 = arith.constant 0.000000e+00 : f32
    %82 = vector.broadcast %cst_27 : f32 to vector<8x256xf32>
    %83 = arith.cmpf oge, %81, %82 : vector<8x256xf32>
    %cst_28 = arith.constant 2.000000e-01 : f32
    %84 = vector.broadcast %cst_28 : f32 to vector<8x256xf32>
    %85 = arith.mulf %84, %81 : vector<8x256xf32>
    %86 = arith.select %83, %81, %85 : vector<8x256xi1>, vector<8x256xf32>
    %cst_29 = arith.constant 0.000000e+00 : f32
    %87 = vector.broadcast %cst_29 : f32 to vector<8x256xf32>
    %88 = vector.extract_strided_slice %86 {offsets = [0, 239], sizes = [8, 17], strides = [1, 1]} : vector<8x256xf32> to vector<8x17xf32>
    %89 = vector.extract_strided_slice %86 {offsets = [0, 0], sizes = [8, 239], strides = [1, 1]} : vector<8x256xf32> to vector<8x239xf32>
    %90 = tpu.concatenate %88, %89 in 1 : vector<8x17xf32>, vector<8x239xf32> -> vector<8x256xf32>
    %c0_30 = arith.constant 0 : index
    %c0_31 = arith.constant 0 : index
    %c0_32 = arith.constant 0 : index
    %91 = vector.load %arg2[%c0_30, %c0_31, %c0_32] : memref<9x1x256xf32, #tpu.memory_space<vmem>>, vector<1x1x256xf32>
    %92 = vector.shape_cast %91 : vector<1x1x256xf32> to vector<1x256xf32>
    %93 = vector.broadcast %92 : vector<1x256xf32> to vector<8x256xf32>
    %94 = arith.mulf %90, %93 : vector<8x256xf32>
    %95 = vector.extract_strided_slice %86 {offsets = [0, 240], sizes = [8, 16], strides = [1, 1]} : vector<8x256xf32> to vector<8x16xf32>
    %96 = vector.extract_strided_slice %86 {offsets = [0, 0], sizes = [8, 240], strides = [1, 1]} : vector<8x256xf32> to vector<8x240xf32>
    %97 = tpu.concatenate %95, %96 in 1 : vector<8x16xf32>, vector<8x240xf32> -> vector<8x256xf32>
    %c1_33 = arith.constant 1 : index
    %c0_34 = arith.constant 0 : index
    %c0_35 = arith.constant 0 : index
    %98 = vector.load %arg2[%c1_33, %c0_34, %c0_35] : memref<9x1x256xf32, #tpu.memory_space<vmem>>, vector<1x1x256xf32>
    %99 = vector.shape_cast %98 : vector<1x1x256xf32> to vector<1x256xf32>
    %100 = vector.broadcast %99 : vector<1x256xf32> to vector<8x256xf32>
    %101 = arith.mulf %97, %100 : vector<8x256xf32>
    %102 = vector.extract_strided_slice %86 {offsets = [0, 241], sizes = [8, 15], strides = [1, 1]} : vector<8x256xf32> to vector<8x15xf32>
    %103 = vector.extract_strided_slice %86 {offsets = [0, 0], sizes = [8, 241], strides = [1, 1]} : vector<8x256xf32> to vector<8x241xf32>
    %104 = tpu.concatenate %102, %103 in 1 : vector<8x15xf32>, vector<8x241xf32> -> vector<8x256xf32>
    %c2_36 = arith.constant 2 : index
    %c0_37 = arith.constant 0 : index
    %c0_38 = arith.constant 0 : index
    %105 = vector.load %arg2[%c2_36, %c0_37, %c0_38] : memref<9x1x256xf32, #tpu.memory_space<vmem>>, vector<1x1x256xf32>
    %106 = vector.shape_cast %105 : vector<1x1x256xf32> to vector<1x256xf32>
    %107 = vector.broadcast %106 : vector<1x256xf32> to vector<8x256xf32>
    %108 = arith.mulf %104, %107 : vector<8x256xf32>
    %109 = vector.extract_strided_slice %86 {offsets = [0, 255], sizes = [8, 1], strides = [1, 1]} : vector<8x256xf32> to vector<8x1xf32>
    %110 = vector.extract_strided_slice %86 {offsets = [0, 0], sizes = [8, 255], strides = [1, 1]} : vector<8x256xf32> to vector<8x255xf32>
    %111 = tpu.concatenate %109, %110 in 1 : vector<8x1xf32>, vector<8x255xf32> -> vector<8x256xf32>
    %c3_39 = arith.constant 3 : index
    %c0_40 = arith.constant 0 : index
    %c0_41 = arith.constant 0 : index
    %112 = vector.load %arg2[%c3_39, %c0_40, %c0_41] : memref<9x1x256xf32, #tpu.memory_space<vmem>>, vector<1x1x256xf32>
    %113 = vector.shape_cast %112 : vector<1x1x256xf32> to vector<1x256xf32>
    %114 = vector.broadcast %113 : vector<1x256xf32> to vector<8x256xf32>
    %115 = arith.mulf %111, %114 : vector<8x256xf32>
    %116 = vector.extract_strided_slice %86 {offsets = [0, 1], sizes = [8, 255], strides = [1, 1]} : vector<8x256xf32> to vector<8x255xf32>
    %117 = vector.extract_strided_slice %86 {offsets = [0, 0], sizes = [8, 1], strides = [1, 1]} : vector<8x256xf32> to vector<8x1xf32>
    %118 = tpu.concatenate %116, %117 in 1 : vector<8x255xf32>, vector<8x1xf32> -> vector<8x256xf32>
    %c5_42 = arith.constant 5 : index
    %c0_43 = arith.constant 0 : index
    %c0_44 = arith.constant 0 : index
    %119 = vector.load %arg2[%c5_42, %c0_43, %c0_44] : memref<9x1x256xf32, #tpu.memory_space<vmem>>, vector<1x1x256xf32>
    %120 = vector.shape_cast %119 : vector<1x1x256xf32> to vector<1x256xf32>
    %121 = vector.broadcast %120 : vector<1x256xf32> to vector<8x256xf32>
    %122 = arith.mulf %118, %121 : vector<8x256xf32>
    %123 = vector.extract_strided_slice %86 {offsets = [0, 15], sizes = [8, 241], strides = [1, 1]} : vector<8x256xf32> to vector<8x241xf32>
    %124 = vector.extract_strided_slice %86 {offsets = [0, 0], sizes = [8, 15], strides = [1, 1]} : vector<8x256xf32> to vector<8x15xf32>
    %125 = tpu.concatenate %123, %124 in 1 : vector<8x241xf32>, vector<8x15xf32> -> vector<8x256xf32>
    %c6_45 = arith.constant 6 : index
    %c0_46 = arith.constant 0 : index
    %c0_47 = arith.constant 0 : index
    %126 = vector.load %arg2[%c6_45, %c0_46, %c0_47] : memref<9x1x256xf32, #tpu.memory_space<vmem>>, vector<1x1x256xf32>
    %127 = vector.shape_cast %126 : vector<1x1x256xf32> to vector<1x256xf32>
    %128 = vector.broadcast %127 : vector<1x256xf32> to vector<8x256xf32>
    %129 = arith.mulf %125, %128 : vector<8x256xf32>
    %130 = vector.extract_strided_slice %86 {offsets = [0, 16], sizes = [8, 240], strides = [1, 1]} : vector<8x256xf32> to vector<8x240xf32>
    %131 = vector.extract_strided_slice %86 {offsets = [0, 0], sizes = [8, 16], strides = [1, 1]} : vector<8x256xf32> to vector<8x16xf32>
    %132 = tpu.concatenate %130, %131 in 1 : vector<8x240xf32>, vector<8x16xf32> -> vector<8x256xf32>
    %c7_48 = arith.constant 7 : index
    %c0_49 = arith.constant 0 : index
    %c0_50 = arith.constant 0 : index
    %133 = vector.load %arg2[%c7_48, %c0_49, %c0_50] : memref<9x1x256xf32, #tpu.memory_space<vmem>>, vector<1x1x256xf32>
    %134 = vector.shape_cast %133 : vector<1x1x256xf32> to vector<1x256xf32>
    %135 = vector.broadcast %134 : vector<1x256xf32> to vector<8x256xf32>
    %136 = arith.mulf %132, %135 : vector<8x256xf32>
    %137 = vector.extract_strided_slice %86 {offsets = [0, 17], sizes = [8, 239], strides = [1, 1]} : vector<8x256xf32> to vector<8x239xf32>
    %138 = vector.extract_strided_slice %86 {offsets = [0, 0], sizes = [8, 17], strides = [1, 1]} : vector<8x256xf32> to vector<8x17xf32>
    %139 = tpu.concatenate %137, %138 in 1 : vector<8x239xf32>, vector<8x17xf32> -> vector<8x256xf32>
    %c8_51 = arith.constant 8 : index
    %c0_52 = arith.constant 0 : index
    %c0_53 = arith.constant 0 : index
    %140 = vector.load %arg2[%c8_51, %c0_52, %c0_53] : memref<9x1x256xf32, #tpu.memory_space<vmem>>, vector<1x1x256xf32>
    %141 = vector.shape_cast %140 : vector<1x1x256xf32> to vector<1x256xf32>
    %142 = vector.broadcast %141 : vector<1x256xf32> to vector<8x256xf32>
    %143 = arith.mulf %139, %142 : vector<8x256xf32>
    %144 = tpu.concatenate %94, %101, %108, %115, %86, %122, %129, %136, %143 in 0 : vector<8x256xf32>, vector<8x256xf32>, vector<8x256xf32>, vector<8x256xf32>, vector<8x256xf32>, vector<8x256xf32>, vector<8x256xf32>, vector<8x256xf32>, vector<8x256xf32> -> vector<72x256xf32>
    %145 = arith.truncf %144 : vector<72x256xf32> to vector<72x256xbf16>
    %c0_54 = arith.constant 0 : index
    %c0_55 = arith.constant 0 : index
    %146 = vector.load %arg10[%c0_54, %c0_55] : memref<8x72xbf16, #tpu.memory_space<vmem>>, vector<8x72xbf16>
    %cst_56 = arith.constant dense<0.000000e+00> : vector<8x256xf32>
    %147 = tpu.matmul %146, %145, %cst_56 {dimension_numbers = #tpu.dot_dimension_numbers<[1], [0], [0], [1], [0, 0, 1, 1], [], []>} : vector<8x72xbf16>, vector<72x256xbf16>, vector<8x256xf32> -> vector<8x256xf32>
    %148 = arith.addf %87, %147 : vector<8x256xf32>
    %cst_57 = arith.constant dense<0.000000e+00> : vector<8xf32>
    %149 = vector.multi_reduction <add>, %148, %cst_57 [1] : vector<8x256xf32> to vector<8xf32>
    %150 = vector.shape_cast %149 : vector<8xf32> to vector<8x1xf32>
    %cst_58 = arith.constant 2.560000e+02 : f32
    %151 = vector.broadcast %cst_58 : f32 to vector<8x1xf32>
    %152 = arith.divf %150, %151 : vector<8x1xf32>
    %153 = vector.broadcast %152 : vector<8x1xf32> to vector<8x256xf32>
    %154 = arith.subf %148, %153 : vector<8x256xf32>
    %155 = arith.mulf %154, %154 : vector<8x256xf32>
    %cst_59 = arith.constant dense<0.000000e+00> : vector<8xf32>
    %156 = vector.multi_reduction <add>, %155, %cst_59 [1] : vector<8x256xf32> to vector<8xf32>
    %157 = vector.shape_cast %156 : vector<8xf32> to vector<8x1xf32>
    %cst_60 = arith.constant 2.560000e+02 : f32
    %158 = vector.broadcast %cst_60 : f32 to vector<8x1xf32>
    %159 = arith.divf %157, %158 : vector<8x1xf32>
    %160 = vector.broadcast %152 : vector<8x1xf32> to vector<8x256xf32>
    %161 = arith.subf %148, %160 : vector<8x256xf32>
    %cst_61 = arith.constant 9.99999974E-6 : f32
    %162 = vector.broadcast %cst_61 : f32 to vector<8x1xf32>
    %163 = arith.addf %159, %162 : vector<8x1xf32>
    %164 = math.rsqrt %163 : vector<8x1xf32>
    %165 = vector.broadcast %164 : vector<8x1xf32> to vector<8x256xf32>
    %166 = arith.mulf %161, %165 : vector<8x256xf32>
    %cst_62 = arith.constant 0.000000e+00 : f32
    %167 = vector.broadcast %cst_62 : f32 to vector<8x256xf32>
    %168 = arith.cmpf oge, %166, %167 : vector<8x256xf32>
    %cst_63 = arith.constant 2.000000e-01 : f32
    %169 = vector.broadcast %cst_63 : f32 to vector<8x256xf32>
    %170 = arith.mulf %169, %166 : vector<8x256xf32>
    %171 = arith.select %168, %166, %170 : vector<8x256xi1>, vector<8x256xf32>
    %172 = arith.truncf %171 : vector<8x256xf32> to vector<8x256xbf16>
    %c0_64 = arith.constant 0 : index
    %c0_65 = arith.constant 0 : index
    %173 = vector.load %arg5[%c0_64, %c0_65] : memref<256x64xbf16, #tpu.memory_space<vmem>>, vector<256x64xbf16>
    %cst_66 = arith.constant dense<0.000000e+00> : vector<8x64xf32>
    %174 = tpu.matmul %172, %173, %cst_66 {dimension_numbers = #tpu.dot_dimension_numbers<[1], [0], [0], [1], [0, 0, 1, 1], [], []>} : vector<8x256xbf16>, vector<256x64xbf16>, vector<8x64xf32> -> vector<8x64xf32>
    %cst_67 = arith.constant 0.000000e+00 : f32
    %175 = vector.broadcast %cst_67 : f32 to vector<16x64xf32>
    %176 = vector.extract_strided_slice %174 {offsets = [0, 55], sizes = [8, 9], strides = [1, 1]} : vector<8x64xf32> to vector<8x9xf32>
    %177 = vector.extract_strided_slice %174 {offsets = [0, 0], sizes = [8, 55], strides = [1, 1]} : vector<8x64xf32> to vector<8x55xf32>
    %178 = tpu.concatenate %176, %177 in 1 : vector<8x9xf32>, vector<8x55xf32> -> vector<8x64xf32>
    %c0_68 = arith.constant 0 : index
    %c0_69 = arith.constant 0 : index
    %c0_70 = arith.constant 0 : index
    %179 = vector.load %arg3[%c0_68, %c0_69, %c0_70] : memref<9x1x64xf32, #tpu.memory_space<vmem>>, vector<1x1x64xf32>
    %180 = vector.shape_cast %179 : vector<1x1x64xf32> to vector<1x64xf32>
    %181 = vector.broadcast %180 : vector<1x64xf32> to vector<8x64xf32>
    %182 = arith.mulf %178, %181 : vector<8x64xf32>
    %183 = vector.extract_strided_slice %174 {offsets = [0, 56], sizes = [8, 8], strides = [1, 1]} : vector<8x64xf32> to vector<8x8xf32>
    %184 = vector.extract_strided_slice %174 {offsets = [0, 0], sizes = [8, 56], strides = [1, 1]} : vector<8x64xf32> to vector<8x56xf32>
    %185 = tpu.concatenate %183, %184 in 1 : vector<8x8xf32>, vector<8x56xf32> -> vector<8x64xf32>
    %c1_71 = arith.constant 1 : index
    %c0_72 = arith.constant 0 : index
    %c0_73 = arith.constant 0 : index
    %186 = vector.load %arg3[%c1_71, %c0_72, %c0_73] : memref<9x1x64xf32, #tpu.memory_space<vmem>>, vector<1x1x64xf32>
    %187 = vector.shape_cast %186 : vector<1x1x64xf32> to vector<1x64xf32>
    %188 = vector.broadcast %187 : vector<1x64xf32> to vector<8x64xf32>
    %189 = arith.mulf %185, %188 : vector<8x64xf32>
    %190 = vector.extract_strided_slice %174 {offsets = [0, 57], sizes = [8, 7], strides = [1, 1]} : vector<8x64xf32> to vector<8x7xf32>
    %191 = vector.extract_strided_slice %174 {offsets = [0, 0], sizes = [8, 57], strides = [1, 1]} : vector<8x64xf32> to vector<8x57xf32>
    %192 = tpu.concatenate %190, %191 in 1 : vector<8x7xf32>, vector<8x57xf32> -> vector<8x64xf32>
    %c2_74 = arith.constant 2 : index
    %c0_75 = arith.constant 0 : index
    %c0_76 = arith.constant 0 : index
    %193 = vector.load %arg3[%c2_74, %c0_75, %c0_76] : memref<9x1x64xf32, #tpu.memory_space<vmem>>, vector<1x1x64xf32>
    %194 = vector.shape_cast %193 : vector<1x1x64xf32> to vector<1x64xf32>
    %195 = vector.broadcast %194 : vector<1x64xf32> to vector<8x64xf32>
    %196 = arith.mulf %192, %195 : vector<8x64xf32>
    %197 = vector.extract_strided_slice %174 {offsets = [0, 63], sizes = [8, 1], strides = [1, 1]} : vector<8x64xf32> to vector<8x1xf32>
    %198 = vector.extract_strided_slice %174 {offsets = [0, 0], sizes = [8, 63], strides = [1, 1]} : vector<8x64xf32> to vector<8x63xf32>
    %199 = tpu.concatenate %197, %198 in 1 : vector<8x1xf32>, vector<8x63xf32> -> vector<8x64xf32>
    %c3_77 = arith.constant 3 : index
    %c0_78 = arith.constant 0 : index
    %c0_79 = arith.constant 0 : index
    %200 = vector.load %arg3[%c3_77, %c0_78, %c0_79] : memref<9x1x64xf32, #tpu.memory_space<vmem>>, vector<1x1x64xf32>
    %201 = vector.shape_cast %200 : vector<1x1x64xf32> to vector<1x64xf32>
    %202 = vector.broadcast %201 : vector<1x64xf32> to vector<8x64xf32>
    %203 = arith.mulf %199, %202 : vector<8x64xf32>
    %204 = vector.extract_strided_slice %174 {offsets = [0, 1], sizes = [8, 63], strides = [1, 1]} : vector<8x64xf32> to vector<8x63xf32>
    %205 = vector.extract_strided_slice %174 {offsets = [0, 0], sizes = [8, 1], strides = [1, 1]} : vector<8x64xf32> to vector<8x1xf32>
    %206 = tpu.concatenate %204, %205 in 1 : vector<8x63xf32>, vector<8x1xf32> -> vector<8x64xf32>
    %c5_80 = arith.constant 5 : index
    %c0_81 = arith.constant 0 : index
    %c0_82 = arith.constant 0 : index
    %207 = vector.load %arg3[%c5_80, %c0_81, %c0_82] : memref<9x1x64xf32, #tpu.memory_space<vmem>>, vector<1x1x64xf32>
    %208 = vector.shape_cast %207 : vector<1x1x64xf32> to vector<1x64xf32>
    %209 = vector.broadcast %208 : vector<1x64xf32> to vector<8x64xf32>
    %210 = arith.mulf %206, %209 : vector<8x64xf32>
    %211 = vector.extract_strided_slice %174 {offsets = [0, 7], sizes = [8, 57], strides = [1, 1]} : vector<8x64xf32> to vector<8x57xf32>
    %212 = vector.extract_strided_slice %174 {offsets = [0, 0], sizes = [8, 7], strides = [1, 1]} : vector<8x64xf32> to vector<8x7xf32>
    %213 = tpu.concatenate %211, %212 in 1 : vector<8x57xf32>, vector<8x7xf32> -> vector<8x64xf32>
    %c6_83 = arith.constant 6 : index
    %c0_84 = arith.constant 0 : index
    %c0_85 = arith.constant 0 : index
    %214 = vector.load %arg3[%c6_83, %c0_84, %c0_85] : memref<9x1x64xf32, #tpu.memory_space<vmem>>, vector<1x1x64xf32>
    %215 = vector.shape_cast %214 : vector<1x1x64xf32> to vector<1x64xf32>
    %216 = vector.broadcast %215 : vector<1x64xf32> to vector<8x64xf32>
    %217 = arith.mulf %213, %216 : vector<8x64xf32>
    %218 = vector.extract_strided_slice %174 {offsets = [0, 8], sizes = [8, 56], strides = [1, 1]} : vector<8x64xf32> to vector<8x56xf32>
    %219 = vector.extract_strided_slice %174 {offsets = [0, 0], sizes = [8, 8], strides = [1, 1]} : vector<8x64xf32> to vector<8x8xf32>
    %220 = tpu.concatenate %218, %219 in 1 : vector<8x56xf32>, vector<8x8xf32> -> vector<8x64xf32>
    %c7_86 = arith.constant 7 : index
    %c0_87 = arith.constant 0 : index
    %c0_88 = arith.constant 0 : index
    %221 = vector.load %arg3[%c7_86, %c0_87, %c0_88] : memref<9x1x64xf32, #tpu.memory_space<vmem>>, vector<1x1x64xf32>
    %222 = vector.shape_cast %221 : vector<1x1x64xf32> to vector<1x64xf32>
    %223 = vector.broadcast %222 : vector<1x64xf32> to vector<8x64xf32>
    %224 = arith.mulf %220, %223 : vector<8x64xf32>
    %225 = vector.extract_strided_slice %174 {offsets = [0, 9], sizes = [8, 55], strides = [1, 1]} : vector<8x64xf32> to vector<8x55xf32>
    %226 = vector.extract_strided_slice %174 {offsets = [0, 0], sizes = [8, 9], strides = [1, 1]} : vector<8x64xf32> to vector<8x9xf32>
    %227 = tpu.concatenate %225, %226 in 1 : vector<8x55xf32>, vector<8x9xf32> -> vector<8x64xf32>
    %c8_89 = arith.constant 8 : index
    %c0_90 = arith.constant 0 : index
    %c0_91 = arith.constant 0 : index
    %228 = vector.load %arg3[%c8_89, %c0_90, %c0_91] : memref<9x1x64xf32, #tpu.memory_space<vmem>>, vector<1x1x64xf32>
    %229 = vector.shape_cast %228 : vector<1x1x64xf32> to vector<1x64xf32>
    %230 = vector.broadcast %229 : vector<1x64xf32> to vector<8x64xf32>
    %231 = arith.mulf %227, %230 : vector<8x64xf32>
    %232 = tpu.concatenate %182, %189, %196, %203, %174, %210, %217, %224, %231 in 0 : vector<8x64xf32>, vector<8x64xf32>, vector<8x64xf32>, vector<8x64xf32>, vector<8x64xf32>, vector<8x64xf32>, vector<8x64xf32>, vector<8x64xf32>, vector<8x64xf32> -> vector<72x64xf32>
    %233 = arith.truncf %232 : vector<72x64xf32> to vector<72x64xbf16>
    %c0_92 = arith.constant 0 : index
    %c0_93 = arith.constant 0 : index
    %234 = vector.load %arg11[%c0_92, %c0_93] : memref<16x72xbf16, #tpu.memory_space<vmem>>, vector<16x72xbf16>
    %cst_94 = arith.constant dense<0.000000e+00> : vector<16x64xf32>
    %235 = tpu.matmul %234, %233, %cst_94 {dimension_numbers = #tpu.dot_dimension_numbers<[1], [0], [0], [1], [0, 0, 1, 1], [], []>} : vector<16x72xbf16>, vector<72x64xbf16>, vector<16x64xf32> -> vector<16x64xf32>
    %236 = arith.addf %175, %235 : vector<16x64xf32>
    %cst_95 = arith.constant dense<0.000000e+00> : vector<16xf32>
    %237 = vector.multi_reduction <add>, %236, %cst_95 [1] : vector<16x64xf32> to vector<16xf32>
    %238 = vector.shape_cast %237 : vector<16xf32> to vector<16x1xf32>
    %cst_96 = arith.constant 6.400000e+01 : f32
    %239 = vector.broadcast %cst_96 : f32 to vector<16x1xf32>
    %240 = arith.divf %238, %239 : vector<16x1xf32>
    %241 = vector.broadcast %240 : vector<16x1xf32> to vector<16x64xf32>
    %242 = arith.subf %236, %241 : vector<16x64xf32>
    %243 = arith.mulf %242, %242 : vector<16x64xf32>
    %cst_97 = arith.constant dense<0.000000e+00> : vector<16xf32>
    %244 = vector.multi_reduction <add>, %243, %cst_97 [1] : vector<16x64xf32> to vector<16xf32>
    %245 = vector.shape_cast %244 : vector<16xf32> to vector<16x1xf32>
    %cst_98 = arith.constant 6.400000e+01 : f32
    %246 = vector.broadcast %cst_98 : f32 to vector<16x1xf32>
    %247 = arith.divf %245, %246 : vector<16x1xf32>
    %248 = vector.broadcast %240 : vector<16x1xf32> to vector<16x64xf32>
    %249 = arith.subf %236, %248 : vector<16x64xf32>
    %cst_99 = arith.constant 9.99999974E-6 : f32
    %250 = vector.broadcast %cst_99 : f32 to vector<16x1xf32>
    %251 = arith.addf %247, %250 : vector<16x1xf32>
    %252 = math.rsqrt %251 : vector<16x1xf32>
    %253 = vector.broadcast %252 : vector<16x1xf32> to vector<16x64xf32>
    %254 = arith.mulf %249, %253 : vector<16x64xf32>
    %cst_100 = arith.constant 0.000000e+00 : f32
    %255 = vector.broadcast %cst_100 : f32 to vector<16x64xf32>
    %256 = arith.cmpf oge, %254, %255 : vector<16x64xf32>
    %cst_101 = arith.constant 2.000000e-01 : f32
    %257 = vector.broadcast %cst_101 : f32 to vector<16x64xf32>
    %258 = arith.mulf %257, %254 : vector<16x64xf32>
    %259 = arith.select %256, %254, %258 : vector<16x64xi1>, vector<16x64xf32>
    %cst_102 = arith.constant 0.000000e+00 : f32
    %260 = vector.broadcast %cst_102 : f32 to vector<16x64xf32>
    %261 = vector.extract_strided_slice %259 {offsets = [0, 55], sizes = [16, 9], strides = [1, 1]} : vector<16x64xf32> to vector<16x9xf32>
    %262 = vector.extract_strided_slice %259 {offsets = [0, 0], sizes = [16, 55], strides = [1, 1]} : vector<16x64xf32> to vector<16x55xf32>
    %263 = tpu.concatenate %261, %262 in 1 : vector<16x9xf32>, vector<16x55xf32> -> vector<16x64xf32>
    %c0_103 = arith.constant 0 : index
    %c0_104 = arith.constant 0 : index
    %c0_105 = arith.constant 0 : index
    %264 = vector.load %arg3[%c0_103, %c0_104, %c0_105] : memref<9x1x64xf32, #tpu.memory_space<vmem>>, vector<1x1x64xf32>
    %265 = vector.shape_cast %264 : vector<1x1x64xf32> to vector<1x64xf32>
    %266 = vector.broadcast %265 : vector<1x64xf32> to vector<16x64xf32>
    %267 = arith.mulf %263, %266 : vector<16x64xf32>
    %268 = vector.extract_strided_slice %259 {offsets = [0, 56], sizes = [16, 8], strides = [1, 1]} : vector<16x64xf32> to vector<16x8xf32>
    %269 = vector.extract_strided_slice %259 {offsets = [0, 0], sizes = [16, 56], strides = [1, 1]} : vector<16x64xf32> to vector<16x56xf32>
    %270 = tpu.concatenate %268, %269 in 1 : vector<16x8xf32>, vector<16x56xf32> -> vector<16x64xf32>
    %c1_106 = arith.constant 1 : index
    %c0_107 = arith.constant 0 : index
    %c0_108 = arith.constant 0 : index
    %271 = vector.load %arg3[%c1_106, %c0_107, %c0_108] : memref<9x1x64xf32, #tpu.memory_space<vmem>>, vector<1x1x64xf32>
    %272 = vector.shape_cast %271 : vector<1x1x64xf32> to vector<1x64xf32>
    %273 = vector.broadcast %272 : vector<1x64xf32> to vector<16x64xf32>
    %274 = arith.mulf %270, %273 : vector<16x64xf32>
    %275 = vector.extract_strided_slice %259 {offsets = [0, 57], sizes = [16, 7], strides = [1, 1]} : vector<16x64xf32> to vector<16x7xf32>
    %276 = vector.extract_strided_slice %259 {offsets = [0, 0], sizes = [16, 57], strides = [1, 1]} : vector<16x64xf32> to vector<16x57xf32>
    %277 = tpu.concatenate %275, %276 in 1 : vector<16x7xf32>, vector<16x57xf32> -> vector<16x64xf32>
    %c2_109 = arith.constant 2 : index
    %c0_110 = arith.constant 0 : index
    %c0_111 = arith.constant 0 : index
    %278 = vector.load %arg3[%c2_109, %c0_110, %c0_111] : memref<9x1x64xf32, #tpu.memory_space<vmem>>, vector<1x1x64xf32>
    %279 = vector.shape_cast %278 : vector<1x1x64xf32> to vector<1x64xf32>
    %280 = vector.broadcast %279 : vector<1x64xf32> to vector<16x64xf32>
    %281 = arith.mulf %277, %280 : vector<16x64xf32>
    %282 = vector.extract_strided_slice %259 {offsets = [0, 63], sizes = [16, 1], strides = [1, 1]} : vector<16x64xf32> to vector<16x1xf32>
    %283 = vector.extract_strided_slice %259 {offsets = [0, 0], sizes = [16, 63], strides = [1, 1]} : vector<16x64xf32> to vector<16x63xf32>
    %284 = tpu.concatenate %282, %283 in 1 : vector<16x1xf32>, vector<16x63xf32> -> vector<16x64xf32>
    %c3_112 = arith.constant 3 : index
    %c0_113 = arith.constant 0 : index
    %c0_114 = arith.constant 0 : index
    %285 = vector.load %arg3[%c3_112, %c0_113, %c0_114] : memref<9x1x64xf32, #tpu.memory_space<vmem>>, vector<1x1x64xf32>
    %286 = vector.shape_cast %285 : vector<1x1x64xf32> to vector<1x64xf32>
    %287 = vector.broadcast %286 : vector<1x64xf32> to vector<16x64xf32>
    %288 = arith.mulf %284, %287 : vector<16x64xf32>
    %289 = vector.extract_strided_slice %259 {offsets = [0, 1], sizes = [16, 63], strides = [1, 1]} : vector<16x64xf32> to vector<16x63xf32>
    %290 = vector.extract_strided_slice %259 {offsets = [0, 0], sizes = [16, 1], strides = [1, 1]} : vector<16x64xf32> to vector<16x1xf32>
    %291 = tpu.concatenate %289, %290 in 1 : vector<16x63xf32>, vector<16x1xf32> -> vector<16x64xf32>
    %c5_115 = arith.constant 5 : index
    %c0_116 = arith.constant 0 : index
    %c0_117 = arith.constant 0 : index
    %292 = vector.load %arg3[%c5_115, %c0_116, %c0_117] : memref<9x1x64xf32, #tpu.memory_space<vmem>>, vector<1x1x64xf32>
    %293 = vector.shape_cast %292 : vector<1x1x64xf32> to vector<1x64xf32>
    %294 = vector.broadcast %293 : vector<1x64xf32> to vector<16x64xf32>
    %295 = arith.mulf %291, %294 : vector<16x64xf32>
    %296 = vector.extract_strided_slice %259 {offsets = [0, 7], sizes = [16, 57], strides = [1, 1]} : vector<16x64xf32> to vector<16x57xf32>
    %297 = vector.extract_strided_slice %259 {offsets = [0, 0], sizes = [16, 7], strides = [1, 1]} : vector<16x64xf32> to vector<16x7xf32>
    %298 = tpu.concatenate %296, %297 in 1 : vector<16x57xf32>, vector<16x7xf32> -> vector<16x64xf32>
    %c6_118 = arith.constant 6 : index
    %c0_119 = arith.constant 0 : index
    %c0_120 = arith.constant 0 : index
    %299 = vector.load %arg3[%c6_118, %c0_119, %c0_120] : memref<9x1x64xf32, #tpu.memory_space<vmem>>, vector<1x1x64xf32>
    %300 = vector.shape_cast %299 : vector<1x1x64xf32> to vector<1x64xf32>
    %301 = vector.broadcast %300 : vector<1x64xf32> to vector<16x64xf32>
    %302 = arith.mulf %298, %301 : vector<16x64xf32>
    %303 = vector.extract_strided_slice %259 {offsets = [0, 8], sizes = [16, 56], strides = [1, 1]} : vector<16x64xf32> to vector<16x56xf32>
    %304 = vector.extract_strided_slice %259 {offsets = [0, 0], sizes = [16, 8], strides = [1, 1]} : vector<16x64xf32> to vector<16x8xf32>
    %305 = tpu.concatenate %303, %304 in 1 : vector<16x56xf32>, vector<16x8xf32> -> vector<16x64xf32>
    %c7_121 = arith.constant 7 : index
    %c0_122 = arith.constant 0 : index
    %c0_123 = arith.constant 0 : index
    %306 = vector.load %arg3[%c7_121, %c0_122, %c0_123] : memref<9x1x64xf32, #tpu.memory_space<vmem>>, vector<1x1x64xf32>
    %307 = vector.shape_cast %306 : vector<1x1x64xf32> to vector<1x64xf32>
    %308 = vector.broadcast %307 : vector<1x64xf32> to vector<16x64xf32>
    %309 = arith.mulf %305, %308 : vector<16x64xf32>
    %310 = vector.extract_strided_slice %259 {offsets = [0, 9], sizes = [16, 55], strides = [1, 1]} : vector<16x64xf32> to vector<16x55xf32>
    %311 = vector.extract_strided_slice %259 {offsets = [0, 0], sizes = [16, 9], strides = [1, 1]} : vector<16x64xf32> to vector<16x9xf32>
    %312 = tpu.concatenate %310, %311 in 1 : vector<16x55xf32>, vector<16x9xf32> -> vector<16x64xf32>
    %c8_124 = arith.constant 8 : index
    %c0_125 = arith.constant 0 : index
    %c0_126 = arith.constant 0 : index
    %313 = vector.load %arg3[%c8_124, %c0_125, %c0_126] : memref<9x1x64xf32, #tpu.memory_space<vmem>>, vector<1x1x64xf32>
    %314 = vector.shape_cast %313 : vector<1x1x64xf32> to vector<1x64xf32>
    %315 = vector.broadcast %314 : vector<1x64xf32> to vector<16x64xf32>
    %316 = arith.mulf %312, %315 : vector<16x64xf32>
    %317 = tpu.concatenate %267, %274, %281, %288, %259, %295, %302, %309, %316 in 0 : vector<16x64xf32>, vector<16x64xf32>, vector<16x64xf32>, vector<16x64xf32>, vector<16x64xf32>, vector<16x64xf32>, vector<16x64xf32>, vector<16x64xf32>, vector<16x64xf32> -> vector<144x64xf32>
    %318 = arith.truncf %317 : vector<144x64xf32> to vector<144x64xbf16>
    %c0_127 = arith.constant 0 : index
    %c0_128 = arith.constant 0 : index
    %319 = vector.load %arg12[%c0_127, %c0_128] : memref<16x144xbf16, #tpu.memory_space<vmem>>, vector<16x144xbf16>
    %cst_129 = arith.constant dense<0.000000e+00> : vector<16x64xf32>
    %320 = tpu.matmul %319, %318, %cst_129 {dimension_numbers = #tpu.dot_dimension_numbers<[1], [0], [0], [1], [0, 0, 1, 1], [], []>} : vector<16x144xbf16>, vector<144x64xbf16>, vector<16x64xf32> -> vector<16x64xf32>
    %321 = arith.addf %260, %320 : vector<16x64xf32>
    %cst_130 = arith.constant dense<0.000000e+00> : vector<16xf32>
    %322 = vector.multi_reduction <add>, %321, %cst_130 [1] : vector<16x64xf32> to vector<16xf32>
    %323 = vector.shape_cast %322 : vector<16xf32> to vector<16x1xf32>
    %cst_131 = arith.constant 6.400000e+01 : f32
    %324 = vector.broadcast %cst_131 : f32 to vector<16x1xf32>
    %325 = arith.divf %323, %324 : vector<16x1xf32>
    %326 = vector.broadcast %325 : vector<16x1xf32> to vector<16x64xf32>
    %327 = arith.subf %321, %326 : vector<16x64xf32>
    %328 = arith.mulf %327, %327 : vector<16x64xf32>
    %cst_132 = arith.constant dense<0.000000e+00> : vector<16xf32>
    %329 = vector.multi_reduction <add>, %328, %cst_132 [1] : vector<16x64xf32> to vector<16xf32>
    %330 = vector.shape_cast %329 : vector<16xf32> to vector<16x1xf32>
    %cst_133 = arith.constant 6.400000e+01 : f32
    %331 = vector.broadcast %cst_133 : f32 to vector<16x1xf32>
    %332 = arith.divf %330, %331 : vector<16x1xf32>
    %333 = vector.broadcast %325 : vector<16x1xf32> to vector<16x64xf32>
    %334 = arith.subf %321, %333 : vector<16x64xf32>
    %cst_134 = arith.constant 9.99999974E-6 : f32
    %335 = vector.broadcast %cst_134 : f32 to vector<16x1xf32>
    %336 = arith.addf %332, %335 : vector<16x1xf32>
    %337 = math.rsqrt %336 : vector<16x1xf32>
    %338 = vector.broadcast %337 : vector<16x1xf32> to vector<16x64xf32>
    %339 = arith.mulf %334, %338 : vector<16x64xf32>
    %cst_135 = arith.constant 0.000000e+00 : f32
    %340 = vector.broadcast %cst_135 : f32 to vector<16x64xf32>
    %341 = arith.cmpf oge, %339, %340 : vector<16x64xf32>
    %cst_136 = arith.constant 2.000000e-01 : f32
    %342 = vector.broadcast %cst_136 : f32 to vector<16x64xf32>
    %343 = arith.mulf %342, %339 : vector<16x64xf32>
    %344 = arith.select %341, %339, %343 : vector<16x64xi1>, vector<16x64xf32>
    %345 = arith.truncf %344 : vector<16x64xf32> to vector<16x64xbf16>
    %c0_137 = arith.constant 0 : index
    %c0_138 = arith.constant 0 : index
    %346 = vector.load %arg6[%c0_137, %c0_138] : memref<64x16xbf16, #tpu.memory_space<vmem>>, vector<64x16xbf16>
    %cst_139 = arith.constant dense<0.000000e+00> : vector<16x16xf32>
    %347 = tpu.matmul %345, %346, %cst_139 {dimension_numbers = #tpu.dot_dimension_numbers<[1], [0], [0], [1], [0, 0, 1, 1], [], []>} : vector<16x64xbf16>, vector<64x16xbf16>, vector<16x16xf32> -> vector<16x16xf32>
    %cst_140 = arith.constant 0.000000e+00 : f32
    %348 = vector.broadcast %cst_140 : f32 to vector<32x16xf32>
    %349 = vector.extract_strided_slice %347 {offsets = [0, 11], sizes = [16, 5], strides = [1, 1]} : vector<16x16xf32> to vector<16x5xf32>
    %350 = vector.extract_strided_slice %347 {offsets = [0, 0], sizes = [16, 11], strides = [1, 1]} : vector<16x16xf32> to vector<16x11xf32>
    %351 = tpu.concatenate %349, %350 in 1 : vector<16x5xf32>, vector<16x11xf32> -> vector<16x16xf32>
    %c0_141 = arith.constant 0 : index
    %c0_142 = arith.constant 0 : index
    %c0_143 = arith.constant 0 : index
    %352 = vector.load %arg4[%c0_141, %c0_142, %c0_143] : memref<9x1x16xf32, #tpu.memory_space<vmem>>, vector<1x1x16xf32>
    %353 = vector.shape_cast %352 : vector<1x1x16xf32> to vector<1x16xf32>
    %354 = vector.broadcast %353 : vector<1x16xf32> to vector<16x16xf32>
    %355 = arith.mulf %351, %354 : vector<16x16xf32>
    %356 = vector.extract_strided_slice %347 {offsets = [0, 12], sizes = [16, 4], strides = [1, 1]} : vector<16x16xf32> to vector<16x4xf32>
    %357 = vector.extract_strided_slice %347 {offsets = [0, 0], sizes = [16, 12], strides = [1, 1]} : vector<16x16xf32> to vector<16x12xf32>
    %358 = tpu.concatenate %356, %357 in 1 : vector<16x4xf32>, vector<16x12xf32> -> vector<16x16xf32>
    %c1_144 = arith.constant 1 : index
    %c0_145 = arith.constant 0 : index
    %c0_146 = arith.constant 0 : index
    %359 = vector.load %arg4[%c1_144, %c0_145, %c0_146] : memref<9x1x16xf32, #tpu.memory_space<vmem>>, vector<1x1x16xf32>
    %360 = vector.shape_cast %359 : vector<1x1x16xf32> to vector<1x16xf32>
    %361 = vector.broadcast %360 : vector<1x16xf32> to vector<16x16xf32>
    %362 = arith.mulf %358, %361 : vector<16x16xf32>
    %363 = vector.extract_strided_slice %347 {offsets = [0, 13], sizes = [16, 3], strides = [1, 1]} : vector<16x16xf32> to vector<16x3xf32>
    %364 = vector.extract_strided_slice %347 {offsets = [0, 0], sizes = [16, 13], strides = [1, 1]} : vector<16x16xf32> to vector<16x13xf32>
    %365 = tpu.concatenate %363, %364 in 1 : vector<16x3xf32>, vector<16x13xf32> -> vector<16x16xf32>
    %c2_147 = arith.constant 2 : index
    %c0_148 = arith.constant 0 : index
    %c0_149 = arith.constant 0 : index
    %366 = vector.load %arg4[%c2_147, %c0_148, %c0_149] : memref<9x1x16xf32, #tpu.memory_space<vmem>>, vector<1x1x16xf32>
    %367 = vector.shape_cast %366 : vector<1x1x16xf32> to vector<1x16xf32>
    %368 = vector.broadcast %367 : vector<1x16xf32> to vector<16x16xf32>
    %369 = arith.mulf %365, %368 : vector<16x16xf32>
    %370 = vector.extract_strided_slice %347 {offsets = [0, 15], sizes = [16, 1], strides = [1, 1]} : vector<16x16xf32> to vector<16x1xf32>
    %371 = vector.extract_strided_slice %347 {offsets = [0, 0], sizes = [16, 15], strides = [1, 1]} : vector<16x16xf32> to vector<16x15xf32>
    %372 = tpu.concatenate %370, %371 in 1 : vector<16x1xf32>, vector<16x15xf32> -> vector<16x16xf32>
    %c3_150 = arith.constant 3 : index
    %c0_151 = arith.constant 0 : index
    %c0_152 = arith.constant 0 : index
    %373 = vector.load %arg4[%c3_150, %c0_151, %c0_152] : memref<9x1x16xf32, #tpu.memory_space<vmem>>, vector<1x1x16xf32>
    %374 = vector.shape_cast %373 : vector<1x1x16xf32> to vector<1x16xf32>
    %375 = vector.broadcast %374 : vector<1x16xf32> to vector<16x16xf32>
    %376 = arith.mulf %372, %375 : vector<16x16xf32>
    %377 = vector.extract_strided_slice %347 {offsets = [0, 1], sizes = [16, 15], strides = [1, 1]} : vector<16x16xf32> to vector<16x15xf32>
    %378 = vector.extract_strided_slice %347 {offsets = [0, 0], sizes = [16, 1], strides = [1, 1]} : vector<16x16xf32> to vector<16x1xf32>
    %379 = tpu.concatenate %377, %378 in 1 : vector<16x15xf32>, vector<16x1xf32> -> vector<16x16xf32>
    %c5_153 = arith.constant 5 : index
    %c0_154 = arith.constant 0 : index
    %c0_155 = arith.constant 0 : index
    %380 = vector.load %arg4[%c5_153, %c0_154, %c0_155] : memref<9x1x16xf32, #tpu.memory_space<vmem>>, vector<1x1x16xf32>
    %381 = vector.shape_cast %380 : vector<1x1x16xf32> to vector<1x16xf32>
    %382 = vector.broadcast %381 : vector<1x16xf32> to vector<16x16xf32>
    %383 = arith.mulf %379, %382 : vector<16x16xf32>
    %384 = vector.extract_strided_slice %347 {offsets = [0, 3], sizes = [16, 13], strides = [1, 1]} : vector<16x16xf32> to vector<16x13xf32>
    %385 = vector.extract_strided_slice %347 {offsets = [0, 0], sizes = [16, 3], strides = [1, 1]} : vector<16x16xf32> to vector<16x3xf32>
    %386 = tpu.concatenate %384, %385 in 1 : vector<16x13xf32>, vector<16x3xf32> -> vector<16x16xf32>
    %c6_156 = arith.constant 6 : index
    %c0_157 = arith.constant 0 : index
    %c0_158 = arith.constant 0 : index
    %387 = vector.load %arg4[%c6_156, %c0_157, %c0_158] : memref<9x1x16xf32, #tpu.memory_space<vmem>>, vector<1x1x16xf32>
    %388 = vector.shape_cast %387 : vector<1x1x16xf32> to vector<1x16xf32>
    %389 = vector.broadcast %388 : vector<1x16xf32> to vector<16x16xf32>
    %390 = arith.mulf %386, %389 : vector<16x16xf32>
    %391 = vector.extract_strided_slice %347 {offsets = [0, 4], sizes = [16, 12], strides = [1, 1]} : vector<16x16xf32> to vector<16x12xf32>
    %392 = vector.extract_strided_slice %347 {offsets = [0, 0], sizes = [16, 4], strides = [1, 1]} : vector<16x16xf32> to vector<16x4xf32>
    %393 = tpu.concatenate %391, %392 in 1 : vector<16x12xf32>, vector<16x4xf32> -> vector<16x16xf32>
    %c7_159 = arith.constant 7 : index
    %c0_160 = arith.constant 0 : index
    %c0_161 = arith.constant 0 : index
    %394 = vector.load %arg4[%c7_159, %c0_160, %c0_161] : memref<9x1x16xf32, #tpu.memory_space<vmem>>, vector<1x1x16xf32>
    %395 = vector.shape_cast %394 : vector<1x1x16xf32> to vector<1x16xf32>
    %396 = vector.broadcast %395 : vector<1x16xf32> to vector<16x16xf32>
    %397 = arith.mulf %393, %396 : vector<16x16xf32>
    %398 = vector.extract_strided_slice %347 {offsets = [0, 5], sizes = [16, 11], strides = [1, 1]} : vector<16x16xf32> to vector<16x11xf32>
    %399 = vector.extract_strided_slice %347 {offsets = [0, 0], sizes = [16, 5], strides = [1, 1]} : vector<16x16xf32> to vector<16x5xf32>
    %400 = tpu.concatenate %398, %399 in 1 : vector<16x11xf32>, vector<16x5xf32> -> vector<16x16xf32>
    %c8_162 = arith.constant 8 : index
    %c0_163 = arith.constant 0 : index
    %c0_164 = arith.constant 0 : index
    %401 = vector.load %arg4[%c8_162, %c0_163, %c0_164] : memref<9x1x16xf32, #tpu.memory_space<vmem>>, vector<1x1x16xf32>
    %402 = vector.shape_cast %401 : vector<1x1x16xf32> to vector<1x16xf32>
    %403 = vector.broadcast %402 : vector<1x16xf32> to vector<16x16xf32>
    %404 = arith.mulf %400, %403 : vector<16x16xf32>
    %405 = tpu.concatenate %355, %362, %369, %376, %347, %383, %390, %397, %404 in 0 : vector<16x16xf32>, vector<16x16xf32>, vector<16x16xf32>, vector<16x16xf32>, vector<16x16xf32>, vector<16x16xf32>, vector<16x16xf32>, vector<16x16xf32>, vector<16x16xf32> -> vector<144x16xf32>
    %406 = arith.truncf %405 : vector<144x16xf32> to vector<144x16xbf16>
    %c0_165 = arith.constant 0 : index
    %c0_166 = arith.constant 0 : index
    %407 = vector.load %arg13[%c0_165, %c0_166] : memref<32x144xbf16, #tpu.memory_space<vmem>>, vector<32x144xbf16>
    %cst_167 = arith.constant dense<0.000000e+00> : vector<32x16xf32>
    %408 = tpu.matmul %407, %406, %cst_167 {dimension_numbers = #tpu.dot_dimension_numbers<[1], [0], [0], [1], [0, 0, 1, 1], [], []>} : vector<32x144xbf16>, vector<144x16xbf16>, vector<32x16xf32> -> vector<32x16xf32>
    %409 = arith.addf %348, %408 : vector<32x16xf32>
    %cst_168 = arith.constant dense<0.000000e+00> : vector<32xf32>
    %410 = vector.multi_reduction <add>, %409, %cst_168 [1] : vector<32x16xf32> to vector<32xf32>
    %411 = vector.shape_cast %410 : vector<32xf32> to vector<32x1xf32>
    %cst_169 = arith.constant 1.600000e+01 : f32
    %412 = vector.broadcast %cst_169 : f32 to vector<32x1xf32>
    %413 = arith.divf %411, %412 : vector<32x1xf32>
    %414 = vector.broadcast %413 : vector<32x1xf32> to vector<32x16xf32>
    %415 = arith.subf %409, %414 : vector<32x16xf32>
    %416 = arith.mulf %415, %415 : vector<32x16xf32>
    %cst_170 = arith.constant dense<0.000000e+00> : vector<32xf32>
    %417 = vector.multi_reduction <add>, %416, %cst_170 [1] : vector<32x16xf32> to vector<32xf32>
    %418 = vector.shape_cast %417 : vector<32xf32> to vector<32x1xf32>
    %cst_171 = arith.constant 1.600000e+01 : f32
    %419 = vector.broadcast %cst_171 : f32 to vector<32x1xf32>
    %420 = arith.divf %418, %419 : vector<32x1xf32>
    %421 = vector.broadcast %413 : vector<32x1xf32> to vector<32x16xf32>
    %422 = arith.subf %409, %421 : vector<32x16xf32>
    %cst_172 = arith.constant 9.99999974E-6 : f32
    %423 = vector.broadcast %cst_172 : f32 to vector<32x1xf32>
    %424 = arith.addf %420, %423 : vector<32x1xf32>
    %425 = math.rsqrt %424 : vector<32x1xf32>
    %426 = vector.broadcast %425 : vector<32x1xf32> to vector<32x16xf32>
    %427 = arith.mulf %422, %426 : vector<32x16xf32>
    %cst_173 = arith.constant 0.000000e+00 : f32
    %428 = vector.broadcast %cst_173 : f32 to vector<32x16xf32>
    %429 = arith.cmpf oge, %427, %428 : vector<32x16xf32>
    %cst_174 = arith.constant 2.000000e-01 : f32
    %430 = vector.broadcast %cst_174 : f32 to vector<32x16xf32>
    %431 = arith.mulf %430, %427 : vector<32x16xf32>
    %432 = arith.select %429, %427, %431 : vector<32x16xi1>, vector<32x16xf32>
    %cst_175 = arith.constant 0.000000e+00 : f32
    %433 = vector.broadcast %cst_175 : f32 to vector<32x16xf32>
    %434 = vector.extract_strided_slice %432 {offsets = [0, 11], sizes = [32, 5], strides = [1, 1]} : vector<32x16xf32> to vector<32x5xf32>
    %435 = vector.extract_strided_slice %432 {offsets = [0, 0], sizes = [32, 11], strides = [1, 1]} : vector<32x16xf32> to vector<32x11xf32>
    %436 = tpu.concatenate %434, %435 in 1 : vector<32x5xf32>, vector<32x11xf32> -> vector<32x16xf32>
    %c0_176 = arith.constant 0 : index
    %c0_177 = arith.constant 0 : index
    %c0_178 = arith.constant 0 : index
    %437 = vector.load %arg4[%c0_176, %c0_177, %c0_178] : memref<9x1x16xf32, #tpu.memory_space<vmem>>, vector<1x1x16xf32>
    %438 = vector.shape_cast %437 : vector<1x1x16xf32> to vector<1x16xf32>
    %439 = vector.broadcast %438 : vector<1x16xf32> to vector<32x16xf32>
    %440 = arith.mulf %436, %439 : vector<32x16xf32>
    %441 = vector.extract_strided_slice %432 {offsets = [0, 12], sizes = [32, 4], strides = [1, 1]} : vector<32x16xf32> to vector<32x4xf32>
    %442 = vector.extract_strided_slice %432 {offsets = [0, 0], sizes = [32, 12], strides = [1, 1]} : vector<32x16xf32> to vector<32x12xf32>
    %443 = tpu.concatenate %441, %442 in 1 : vector<32x4xf32>, vector<32x12xf32> -> vector<32x16xf32>
    %c1_179 = arith.constant 1 : index
    %c0_180 = arith.constant 0 : index
    %c0_181 = arith.constant 0 : index
    %444 = vector.load %arg4[%c1_179, %c0_180, %c0_181] : memref<9x1x16xf32, #tpu.memory_space<vmem>>, vector<1x1x16xf32>
    %445 = vector.shape_cast %444 : vector<1x1x16xf32> to vector<1x16xf32>
    %446 = vector.broadcast %445 : vector<1x16xf32> to vector<32x16xf32>
    %447 = arith.mulf %443, %446 : vector<32x16xf32>
    %448 = vector.extract_strided_slice %432 {offsets = [0, 13], sizes = [32, 3], strides = [1, 1]} : vector<32x16xf32> to vector<32x3xf32>
    %449 = vector.extract_strided_slice %432 {offsets = [0, 0], sizes = [32, 13], strides = [1, 1]} : vector<32x16xf32> to vector<32x13xf32>
    %450 = tpu.concatenate %448, %449 in 1 : vector<32x3xf32>, vector<32x13xf32> -> vector<32x16xf32>
    %c2_182 = arith.constant 2 : index
    %c0_183 = arith.constant 0 : index
    %c0_184 = arith.constant 0 : index
    %451 = vector.load %arg4[%c2_182, %c0_183, %c0_184] : memref<9x1x16xf32, #tpu.memory_space<vmem>>, vector<1x1x16xf32>
    %452 = vector.shape_cast %451 : vector<1x1x16xf32> to vector<1x16xf32>
    %453 = vector.broadcast %452 : vector<1x16xf32> to vector<32x16xf32>
    %454 = arith.mulf %450, %453 : vector<32x16xf32>
    %455 = vector.extract_strided_slice %432 {offsets = [0, 15], sizes = [32, 1], strides = [1, 1]} : vector<32x16xf32> to vector<32x1xf32>
    %456 = vector.extract_strided_slice %432 {offsets = [0, 0], sizes = [32, 15], strides = [1, 1]} : vector<32x16xf32> to vector<32x15xf32>
    %457 = tpu.concatenate %455, %456 in 1 : vector<32x1xf32>, vector<32x15xf32> -> vector<32x16xf32>
    %c3_185 = arith.constant 3 : index
    %c0_186 = arith.constant 0 : index
    %c0_187 = arith.constant 0 : index
    %458 = vector.load %arg4[%c3_185, %c0_186, %c0_187] : memref<9x1x16xf32, #tpu.memory_space<vmem>>, vector<1x1x16xf32>
    %459 = vector.shape_cast %458 : vector<1x1x16xf32> to vector<1x16xf32>
    %460 = vector.broadcast %459 : vector<1x16xf32> to vector<32x16xf32>
    %461 = arith.mulf %457, %460 : vector<32x16xf32>
    %462 = vector.extract_strided_slice %432 {offsets = [0, 1], sizes = [32, 15], strides = [1, 1]} : vector<32x16xf32> to vector<32x15xf32>
    %463 = vector.extract_strided_slice %432 {offsets = [0, 0], sizes = [32, 1], strides = [1, 1]} : vector<32x16xf32> to vector<32x1xf32>
    %464 = tpu.concatenate %462, %463 in 1 : vector<32x15xf32>, vector<32x1xf32> -> vector<32x16xf32>
    %c5_188 = arith.constant 5 : index
    %c0_189 = arith.constant 0 : index
    %c0_190 = arith.constant 0 : index
    %465 = vector.load %arg4[%c5_188, %c0_189, %c0_190] : memref<9x1x16xf32, #tpu.memory_space<vmem>>, vector<1x1x16xf32>
    %466 = vector.shape_cast %465 : vector<1x1x16xf32> to vector<1x16xf32>
    %467 = vector.broadcast %466 : vector<1x16xf32> to vector<32x16xf32>
    %468 = arith.mulf %464, %467 : vector<32x16xf32>
    %469 = vector.extract_strided_slice %432 {offsets = [0, 3], sizes = [32, 13], strides = [1, 1]} : vector<32x16xf32> to vector<32x13xf32>
    %470 = vector.extract_strided_slice %432 {offsets = [0, 0], sizes = [32, 3], strides = [1, 1]} : vector<32x16xf32> to vector<32x3xf32>
    %471 = tpu.concatenate %469, %470 in 1 : vector<32x13xf32>, vector<32x3xf32> -> vector<32x16xf32>
    %c6_191 = arith.constant 6 : index
    %c0_192 = arith.constant 0 : index
    %c0_193 = arith.constant 0 : index
    %472 = vector.load %arg4[%c6_191, %c0_192, %c0_193] : memref<9x1x16xf32, #tpu.memory_space<vmem>>, vector<1x1x16xf32>
    %473 = vector.shape_cast %472 : vector<1x1x16xf32> to vector<1x16xf32>
    %474 = vector.broadcast %473 : vector<1x16xf32> to vector<32x16xf32>
    %475 = arith.mulf %471, %474 : vector<32x16xf32>
    %476 = vector.extract_strided_slice %432 {offsets = [0, 4], sizes = [32, 12], strides = [1, 1]} : vector<32x16xf32> to vector<32x12xf32>
    %477 = vector.extract_strided_slice %432 {offsets = [0, 0], sizes = [32, 4], strides = [1, 1]} : vector<32x16xf32> to vector<32x4xf32>
    %478 = tpu.concatenate %476, %477 in 1 : vector<32x12xf32>, vector<32x4xf32> -> vector<32x16xf32>
    %c7_194 = arith.constant 7 : index
    %c0_195 = arith.constant 0 : index
    %c0_196 = arith.constant 0 : index
    %479 = vector.load %arg4[%c7_194, %c0_195, %c0_196] : memref<9x1x16xf32, #tpu.memory_space<vmem>>, vector<1x1x16xf32>
    %480 = vector.shape_cast %479 : vector<1x1x16xf32> to vector<1x16xf32>
    %481 = vector.broadcast %480 : vector<1x16xf32> to vector<32x16xf32>
    %482 = arith.mulf %478, %481 : vector<32x16xf32>
    %483 = vector.extract_strided_slice %432 {offsets = [0, 5], sizes = [32, 11], strides = [1, 1]} : vector<32x16xf32> to vector<32x11xf32>
    %484 = vector.extract_strided_slice %432 {offsets = [0, 0], sizes = [32, 5], strides = [1, 1]} : vector<32x16xf32> to vector<32x5xf32>
    %485 = tpu.concatenate %483, %484 in 1 : vector<32x11xf32>, vector<32x5xf32> -> vector<32x16xf32>
    %c8_197 = arith.constant 8 : index
    %c0_198 = arith.constant 0 : index
    %c0_199 = arith.constant 0 : index
    %486 = vector.load %arg4[%c8_197, %c0_198, %c0_199] : memref<9x1x16xf32, #tpu.memory_space<vmem>>, vector<1x1x16xf32>
    %487 = vector.shape_cast %486 : vector<1x1x16xf32> to vector<1x16xf32>
    %488 = vector.broadcast %487 : vector<1x16xf32> to vector<32x16xf32>
    %489 = arith.mulf %485, %488 : vector<32x16xf32>
    %490 = tpu.concatenate %440, %447, %454, %461, %432, %468, %475, %482, %489 in 0 : vector<32x16xf32>, vector<32x16xf32>, vector<32x16xf32>, vector<32x16xf32>, vector<32x16xf32>, vector<32x16xf32>, vector<32x16xf32>, vector<32x16xf32>, vector<32x16xf32> -> vector<288x16xf32>
    %491 = arith.truncf %490 : vector<288x16xf32> to vector<288x16xbf16>
    %c0_200 = arith.constant 0 : index
    %c0_201 = arith.constant 0 : index
    %492 = vector.load %arg14[%c0_200, %c0_201] : memref<32x288xbf16, #tpu.memory_space<vmem>>, vector<32x288xbf16>
    %cst_202 = arith.constant dense<0.000000e+00> : vector<32x16xf32>
    %493 = tpu.matmul %492, %491, %cst_202 {dimension_numbers = #tpu.dot_dimension_numbers<[1], [0], [0], [1], [0, 0, 1, 1], [], []>} : vector<32x288xbf16>, vector<288x16xbf16>, vector<32x16xf32> -> vector<32x16xf32>
    %494 = arith.addf %433, %493 : vector<32x16xf32>
    %cst_203 = arith.constant dense<0.000000e+00> : vector<32xf32>
    %495 = vector.multi_reduction <add>, %494, %cst_203 [1] : vector<32x16xf32> to vector<32xf32>
    %496 = vector.shape_cast %495 : vector<32xf32> to vector<32x1xf32>
    %cst_204 = arith.constant 1.600000e+01 : f32
    %497 = vector.broadcast %cst_204 : f32 to vector<32x1xf32>
    %498 = arith.divf %496, %497 : vector<32x1xf32>
    %499 = vector.broadcast %498 : vector<32x1xf32> to vector<32x16xf32>
    %500 = arith.subf %494, %499 : vector<32x16xf32>
    %501 = arith.mulf %500, %500 : vector<32x16xf32>
    %cst_205 = arith.constant dense<0.000000e+00> : vector<32xf32>
    %502 = vector.multi_reduction <add>, %501, %cst_205 [1] : vector<32x16xf32> to vector<32xf32>
    %503 = vector.shape_cast %502 : vector<32xf32> to vector<32x1xf32>
    %cst_206 = arith.constant 1.600000e+01 : f32
    %504 = vector.broadcast %cst_206 : f32 to vector<32x1xf32>
    %505 = arith.divf %503, %504 : vector<32x1xf32>
    %506 = vector.broadcast %498 : vector<32x1xf32> to vector<32x16xf32>
    %507 = arith.subf %494, %506 : vector<32x16xf32>
    %cst_207 = arith.constant 9.99999974E-6 : f32
    %508 = vector.broadcast %cst_207 : f32 to vector<32x1xf32>
    %509 = arith.addf %505, %508 : vector<32x1xf32>
    %510 = math.rsqrt %509 : vector<32x1xf32>
    %511 = vector.broadcast %510 : vector<32x1xf32> to vector<32x16xf32>
    %512 = arith.mulf %507, %511 : vector<32x16xf32>
    %cst_208 = arith.constant 0.000000e+00 : f32
    %513 = vector.broadcast %cst_208 : f32 to vector<32x16xf32>
    %514 = arith.cmpf oge, %512, %513 : vector<32x16xf32>
    %cst_209 = arith.constant 2.000000e-01 : f32
    %515 = vector.broadcast %cst_209 : f32 to vector<32x16xf32>
    %516 = arith.mulf %515, %512 : vector<32x16xf32>
    %517 = arith.select %514, %512, %516 : vector<32x16xi1>, vector<32x16xf32>
    %c0_210 = arith.constant 0 : index
    %c0_211 = arith.constant 0 : index
    %518 = vector.load %arg15[%c0_210, %c0_211] : memref<64x32xbf16, #tpu.memory_space<vmem>>, vector<64x32xbf16>
    %519 = arith.truncf %517 : vector<32x16xf32> to vector<32x16xbf16>
    %cst_212 = arith.constant dense<0.000000e+00> : vector<64x16xf32>
    %520 = tpu.matmul %518, %519, %cst_212 {dimension_numbers = #tpu.dot_dimension_numbers<[1], [0], [0], [1], [0, 0, 1, 1], [], []>} : vector<64x32xbf16>, vector<32x16xbf16>, vector<64x16xf32> -> vector<64x16xf32>
    %521 = vector.extract_strided_slice %520 {offsets = [0, 0], sizes = [16, 16], strides = [1, 1]} : vector<64x16xf32> to vector<16x16xf32>
    %522 = vector.extract_strided_slice %520 {offsets = [16, 0], sizes = [16, 16], strides = [1, 1]} : vector<64x16xf32> to vector<16x16xf32>
    %523 = vector.extract_strided_slice %520 {offsets = [32, 0], sizes = [16, 16], strides = [1, 1]} : vector<64x16xf32> to vector<16x16xf32>
    %524 = vector.extract_strided_slice %520 {offsets = [48, 0], sizes = [16, 16], strides = [1, 1]} : vector<64x16xf32> to vector<16x16xf32>
    %525 = arith.addf %521, %522 : vector<16x16xf32>
    %526 = arith.addf %525, %523 : vector<16x16xf32>
    %527 = arith.addf %526, %524 : vector<16x16xf32>
    %cst_213 = arith.constant dense<0.000000e+00> : vector<16xf32>
    %528 = vector.multi_reduction <add>, %527, %cst_213 [1] : vector<16x16xf32> to vector<16xf32>
    %529 = vector.shape_cast %528 : vector<16xf32> to vector<16x1xf32>
    %cst_214 = arith.constant 1.562500e-02 : f32
    %530 = vector.broadcast %cst_214 : f32 to vector<16x1xf32>
    %531 = arith.mulf %529, %530 : vector<16x1xf32>
    %532 = vector.broadcast %531 : vector<16x1xf32> to vector<16x16xf32>
    %533 = arith.subf %521, %532 : vector<16x16xf32>
    %534 = arith.mulf %533, %533 : vector<16x16xf32>
    %cst_215 = arith.constant dense<0.000000e+00> : vector<16xf32>
    %535 = vector.multi_reduction <add>, %534, %cst_215 [1] : vector<16x16xf32> to vector<16xf32>
    %536 = vector.shape_cast %535 : vector<16xf32> to vector<16x1xf32>
    %cst_216 = arith.constant 0.000000e+00 : f32
    %537 = vector.broadcast %cst_216 : f32 to vector<16x1xf32>
    %538 = arith.addf %537, %536 : vector<16x1xf32>
    %539 = vector.broadcast %531 : vector<16x1xf32> to vector<16x16xf32>
    %540 = arith.subf %522, %539 : vector<16x16xf32>
    %541 = arith.mulf %540, %540 : vector<16x16xf32>
    %cst_217 = arith.constant dense<0.000000e+00> : vector<16xf32>
    %542 = vector.multi_reduction <add>, %541, %cst_217 [1] : vector<16x16xf32> to vector<16xf32>
    %543 = vector.shape_cast %542 : vector<16xf32> to vector<16x1xf32>
    %544 = arith.addf %538, %543 : vector<16x1xf32>
    %545 = vector.broadcast %531 : vector<16x1xf32> to vector<16x16xf32>
    %546 = arith.subf %523, %545 : vector<16x16xf32>
    %547 = arith.mulf %546, %546 : vector<16x16xf32>
    %cst_218 = arith.constant dense<0.000000e+00> : vector<16xf32>
    %548 = vector.multi_reduction <add>, %547, %cst_218 [1] : vector<16x16xf32> to vector<16xf32>
    %549 = vector.shape_cast %548 : vector<16xf32> to vector<16x1xf32>
    %550 = arith.addf %544, %549 : vector<16x1xf32>
    %551 = vector.broadcast %531 : vector<16x1xf32> to vector<16x16xf32>
    %552 = arith.subf %524, %551 : vector<16x16xf32>
    %553 = arith.mulf %552, %552 : vector<16x16xf32>
    %cst_219 = arith.constant dense<0.000000e+00> : vector<16xf32>
    %554 = vector.multi_reduction <add>, %553, %cst_219 [1] : vector<16x16xf32> to vector<16xf32>
    %555 = vector.shape_cast %554 : vector<16xf32> to vector<16x1xf32>
    %556 = arith.addf %550, %555 : vector<16x1xf32>
    %cst_220 = arith.constant 1.562500e-02 : f32
    %557 = vector.broadcast %cst_220 : f32 to vector<16x1xf32>
    %558 = arith.mulf %556, %557 : vector<16x1xf32>
    %cst_221 = arith.constant 9.99999974E-6 : f32
    %559 = vector.broadcast %cst_221 : f32 to vector<16x1xf32>
    %560 = arith.addf %558, %559 : vector<16x1xf32>
    %561 = math.rsqrt %560 : vector<16x1xf32>
    %cst_222 = arith.constant 0.000000e+00 : f32
    %562 = vector.broadcast %cst_222 : f32 to vector<16x64xf32>
    %563 = vector.broadcast %531 : vector<16x1xf32> to vector<16x16xf32>
    %564 = arith.subf %521, %563 : vector<16x16xf32>
    %565 = vector.broadcast %561 : vector<16x1xf32> to vector<16x16xf32>
    %566 = arith.mulf %564, %565 : vector<16x16xf32>
    %cst_223 = arith.constant 0.000000e+00 : f32
    %567 = vector.broadcast %cst_223 : f32 to vector<16x16xf32>
    %568 = arith.cmpf oge, %566, %567 : vector<16x16xf32>
    %cst_224 = arith.constant 2.000000e-01 : f32
    %569 = vector.broadcast %cst_224 : f32 to vector<16x16xf32>
    %570 = arith.mulf %569, %566 : vector<16x16xf32>
    %571 = arith.select %568, %566, %570 : vector<16x16xi1>, vector<16x16xf32>
    %572 = arith.truncf %571 : vector<16x16xf32> to vector<16x16xbf16>
    %c0_225 = arith.constant 0 : index
    %c0_226 = arith.constant 0 : index
    %c0_227 = arith.constant 0 : index
    %573 = vector.load %arg7[%c0_225, %c0_226, %c0_227] : memref<4x16x64xbf16, #tpu.memory_space<vmem>>, vector<1x16x64xbf16>
    %574 = vector.shape_cast %573 : vector<1x16x64xbf16> to vector<16x64xbf16>
    %cst_228 = arith.constant dense<0.000000e+00> : vector<16x64xf32>
    %575 = tpu.matmul %572, %574, %cst_228 {dimension_numbers = #tpu.dot_dimension_numbers<[1], [0], [0], [1], [0, 0, 1, 1], [], []>} : vector<16x16xbf16>, vector<16x64xbf16>, vector<16x64xf32> -> vector<16x64xf32>
    %576 = arith.addf %562, %575 : vector<16x64xf32>
    %577 = vector.broadcast %531 : vector<16x1xf32> to vector<16x16xf32>
    %578 = arith.subf %522, %577 : vector<16x16xf32>
    %579 = vector.broadcast %561 : vector<16x1xf32> to vector<16x16xf32>
    %580 = arith.mulf %578, %579 : vector<16x16xf32>
    %cst_229 = arith.constant 0.000000e+00 : f32
    %581 = vector.broadcast %cst_229 : f32 to vector<16x16xf32>
    %582 = arith.cmpf oge, %580, %581 : vector<16x16xf32>
    %cst_230 = arith.constant 2.000000e-01 : f32
    %583 = vector.broadcast %cst_230 : f32 to vector<16x16xf32>
    %584 = arith.mulf %583, %580 : vector<16x16xf32>
    %585 = arith.select %582, %580, %584 : vector<16x16xi1>, vector<16x16xf32>
    %586 = arith.truncf %585 : vector<16x16xf32> to vector<16x16xbf16>
    %c1_231 = arith.constant 1 : index
    %c0_232 = arith.constant 0 : index
    %c0_233 = arith.constant 0 : index
    %587 = vector.load %arg7[%c1_231, %c0_232, %c0_233] : memref<4x16x64xbf16, #tpu.memory_space<vmem>>, vector<1x16x64xbf16>
    %588 = vector.shape_cast %587 : vector<1x16x64xbf16> to vector<16x64xbf16>
    %cst_234 = arith.constant dense<0.000000e+00> : vector<16x64xf32>
    %589 = tpu.matmul %586, %588, %cst_234 {dimension_numbers = #tpu.dot_dimension_numbers<[1], [0], [0], [1], [0, 0, 1, 1], [], []>} : vector<16x16xbf16>, vector<16x64xbf16>, vector<16x64xf32> -> vector<16x64xf32>
    %590 = arith.addf %576, %589 : vector<16x64xf32>
    %591 = vector.broadcast %531 : vector<16x1xf32> to vector<16x16xf32>
    %592 = arith.subf %523, %591 : vector<16x16xf32>
    %593 = vector.broadcast %561 : vector<16x1xf32> to vector<16x16xf32>
    %594 = arith.mulf %592, %593 : vector<16x16xf32>
    %cst_235 = arith.constant 0.000000e+00 : f32
    %595 = vector.broadcast %cst_235 : f32 to vector<16x16xf32>
    %596 = arith.cmpf oge, %594, %595 : vector<16x16xf32>
    %cst_236 = arith.constant 2.000000e-01 : f32
    %597 = vector.broadcast %cst_236 : f32 to vector<16x16xf32>
    %598 = arith.mulf %597, %594 : vector<16x16xf32>
    %599 = arith.select %596, %594, %598 : vector<16x16xi1>, vector<16x16xf32>
    %600 = arith.truncf %599 : vector<16x16xf32> to vector<16x16xbf16>
    %c2_237 = arith.constant 2 : index
    %c0_238 = arith.constant 0 : index
    %c0_239 = arith.constant 0 : index
    %601 = vector.load %arg7[%c2_237, %c0_238, %c0_239] : memref<4x16x64xbf16, #tpu.memory_space<vmem>>, vector<1x16x64xbf16>
    %602 = vector.shape_cast %601 : vector<1x16x64xbf16> to vector<16x64xbf16>
    %cst_240 = arith.constant dense<0.000000e+00> : vector<16x64xf32>
    %603 = tpu.matmul %600, %602, %cst_240 {dimension_numbers = #tpu.dot_dimension_numbers<[1], [0], [0], [1], [0, 0, 1, 1], [], []>} : vector<16x16xbf16>, vector<16x64xbf16>, vector<16x64xf32> -> vector<16x64xf32>
    %604 = arith.addf %590, %603 : vector<16x64xf32>
    %605 = vector.broadcast %531 : vector<16x1xf32> to vector<16x16xf32>
    %606 = arith.subf %524, %605 : vector<16x16xf32>
    %607 = vector.broadcast %561 : vector<16x1xf32> to vector<16x16xf32>
    %608 = arith.mulf %606, %607 : vector<16x16xf32>
    %cst_241 = arith.constant 0.000000e+00 : f32
    %609 = vector.broadcast %cst_241 : f32 to vector<16x16xf32>
    %610 = arith.cmpf oge, %608, %609 : vector<16x16xf32>
    %cst_242 = arith.constant 2.000000e-01 : f32
    %611 = vector.broadcast %cst_242 : f32 to vector<16x16xf32>
    %612 = arith.mulf %611, %608 : vector<16x16xf32>
    %613 = arith.select %610, %608, %612 : vector<16x16xi1>, vector<16x16xf32>
    %614 = arith.truncf %613 : vector<16x16xf32> to vector<16x16xbf16>
    %c3_243 = arith.constant 3 : index
    %c0_244 = arith.constant 0 : index
    %c0_245 = arith.constant 0 : index
    %615 = vector.load %arg7[%c3_243, %c0_244, %c0_245] : memref<4x16x64xbf16, #tpu.memory_space<vmem>>, vector<1x16x64xbf16>
    %616 = vector.shape_cast %615 : vector<1x16x64xbf16> to vector<16x64xbf16>
    %cst_246 = arith.constant dense<0.000000e+00> : vector<16x64xf32>
    %617 = tpu.matmul %614, %616, %cst_246 {dimension_numbers = #tpu.dot_dimension_numbers<[1], [0], [0], [1], [0, 0, 1, 1], [], []>} : vector<16x16xbf16>, vector<16x64xbf16>, vector<16x64xf32> -> vector<16x64xf32>
    %618 = arith.addf %604, %617 : vector<16x64xf32>
    %cst_247 = arith.constant 0.000000e+00 : f32
    %619 = vector.broadcast %cst_247 : f32 to vector<16x64xf32>
    %620 = vector.extract_strided_slice %618 {offsets = [0, 55], sizes = [16, 9], strides = [1, 1]} : vector<16x64xf32> to vector<16x9xf32>
    %621 = vector.extract_strided_slice %618 {offsets = [0, 0], sizes = [16, 55], strides = [1, 1]} : vector<16x64xf32> to vector<16x55xf32>
    %622 = tpu.concatenate %620, %621 in 1 : vector<16x9xf32>, vector<16x55xf32> -> vector<16x64xf32>
    %c0_248 = arith.constant 0 : index
    %c0_249 = arith.constant 0 : index
    %c0_250 = arith.constant 0 : index
    %623 = vector.load %arg3[%c0_248, %c0_249, %c0_250] : memref<9x1x64xf32, #tpu.memory_space<vmem>>, vector<1x1x64xf32>
    %624 = vector.shape_cast %623 : vector<1x1x64xf32> to vector<1x64xf32>
    %625 = vector.broadcast %624 : vector<1x64xf32> to vector<16x64xf32>
    %626 = arith.mulf %622, %625 : vector<16x64xf32>
    %627 = vector.extract_strided_slice %618 {offsets = [0, 56], sizes = [16, 8], strides = [1, 1]} : vector<16x64xf32> to vector<16x8xf32>
    %628 = vector.extract_strided_slice %618 {offsets = [0, 0], sizes = [16, 56], strides = [1, 1]} : vector<16x64xf32> to vector<16x56xf32>
    %629 = tpu.concatenate %627, %628 in 1 : vector<16x8xf32>, vector<16x56xf32> -> vector<16x64xf32>
    %c1_251 = arith.constant 1 : index
    %c0_252 = arith.constant 0 : index
    %c0_253 = arith.constant 0 : index
    %630 = vector.load %arg3[%c1_251, %c0_252, %c0_253] : memref<9x1x64xf32, #tpu.memory_space<vmem>>, vector<1x1x64xf32>
    %631 = vector.shape_cast %630 : vector<1x1x64xf32> to vector<1x64xf32>
    %632 = vector.broadcast %631 : vector<1x64xf32> to vector<16x64xf32>
    %633 = arith.mulf %629, %632 : vector<16x64xf32>
    %634 = vector.extract_strided_slice %618 {offsets = [0, 57], sizes = [16, 7], strides = [1, 1]} : vector<16x64xf32> to vector<16x7xf32>
    %635 = vector.extract_strided_slice %618 {offsets = [0, 0], sizes = [16, 57], strides = [1, 1]} : vector<16x64xf32> to vector<16x57xf32>
    %636 = tpu.concatenate %634, %635 in 1 : vector<16x7xf32>, vector<16x57xf32> -> vector<16x64xf32>
    %c2_254 = arith.constant 2 : index
    %c0_255 = arith.constant 0 : index
    %c0_256 = arith.constant 0 : index
    %637 = vector.load %arg3[%c2_254, %c0_255, %c0_256] : memref<9x1x64xf32, #tpu.memory_space<vmem>>, vector<1x1x64xf32>
    %638 = vector.shape_cast %637 : vector<1x1x64xf32> to vector<1x64xf32>
    %639 = vector.broadcast %638 : vector<1x64xf32> to vector<16x64xf32>
    %640 = arith.mulf %636, %639 : vector<16x64xf32>
    %641 = vector.extract_strided_slice %618 {offsets = [0, 63], sizes = [16, 1], strides = [1, 1]} : vector<16x64xf32> to vector<16x1xf32>
    %642 = vector.extract_strided_slice %618 {offsets = [0, 0], sizes = [16, 63], strides = [1, 1]} : vector<16x64xf32> to vector<16x63xf32>
    %643 = tpu.concatenate %641, %642 in 1 : vector<16x1xf32>, vector<16x63xf32> -> vector<16x64xf32>
    %c3_257 = arith.constant 3 : index
    %c0_258 = arith.constant 0 : index
    %c0_259 = arith.constant 0 : index
    %644 = vector.load %arg3[%c3_257, %c0_258, %c0_259] : memref<9x1x64xf32, #tpu.memory_space<vmem>>, vector<1x1x64xf32>
    %645 = vector.shape_cast %644 : vector<1x1x64xf32> to vector<1x64xf32>
    %646 = vector.broadcast %645 : vector<1x64xf32> to vector<16x64xf32>
    %647 = arith.mulf %643, %646 : vector<16x64xf32>
    %648 = vector.extract_strided_slice %618 {offsets = [0, 1], sizes = [16, 63], strides = [1, 1]} : vector<16x64xf32> to vector<16x63xf32>
    %649 = vector.extract_strided_slice %618 {offsets = [0, 0], sizes = [16, 1], strides = [1, 1]} : vector<16x64xf32> to vector<16x1xf32>
    %650 = tpu.concatenate %648, %649 in 1 : vector<16x63xf32>, vector<16x1xf32> -> vector<16x64xf32>
    %c5_260 = arith.constant 5 : index
    %c0_261 = arith.constant 0 : index
    %c0_262 = arith.constant 0 : index
    %651 = vector.load %arg3[%c5_260, %c0_261, %c0_262] : memref<9x1x64xf32, #tpu.memory_space<vmem>>, vector<1x1x64xf32>
    %652 = vector.shape_cast %651 : vector<1x1x64xf32> to vector<1x64xf32>
    %653 = vector.broadcast %652 : vector<1x64xf32> to vector<16x64xf32>
    %654 = arith.mulf %650, %653 : vector<16x64xf32>
    %655 = vector.extract_strided_slice %618 {offsets = [0, 7], sizes = [16, 57], strides = [1, 1]} : vector<16x64xf32> to vector<16x57xf32>
    %656 = vector.extract_strided_slice %618 {offsets = [0, 0], sizes = [16, 7], strides = [1, 1]} : vector<16x64xf32> to vector<16x7xf32>
    %657 = tpu.concatenate %655, %656 in 1 : vector<16x57xf32>, vector<16x7xf32> -> vector<16x64xf32>
    %c6_263 = arith.constant 6 : index
    %c0_264 = arith.constant 0 : index
    %c0_265 = arith.constant 0 : index
    %658 = vector.load %arg3[%c6_263, %c0_264, %c0_265] : memref<9x1x64xf32, #tpu.memory_space<vmem>>, vector<1x1x64xf32>
    %659 = vector.shape_cast %658 : vector<1x1x64xf32> to vector<1x64xf32>
    %660 = vector.broadcast %659 : vector<1x64xf32> to vector<16x64xf32>
    %661 = arith.mulf %657, %660 : vector<16x64xf32>
    %662 = vector.extract_strided_slice %618 {offsets = [0, 8], sizes = [16, 56], strides = [1, 1]} : vector<16x64xf32> to vector<16x56xf32>
    %663 = vector.extract_strided_slice %618 {offsets = [0, 0], sizes = [16, 8], strides = [1, 1]} : vector<16x64xf32> to vector<16x8xf32>
    %664 = tpu.concatenate %662, %663 in 1 : vector<16x56xf32>, vector<16x8xf32> -> vector<16x64xf32>
    %c7_266 = arith.constant 7 : index
    %c0_267 = arith.constant 0 : index
    %c0_268 = arith.constant 0 : index
    %665 = vector.load %arg3[%c7_266, %c0_267, %c0_268] : memref<9x1x64xf32, #tpu.memory_space<vmem>>, vector<1x1x64xf32>
    %666 = vector.shape_cast %665 : vector<1x1x64xf32> to vector<1x64xf32>
    %667 = vector.broadcast %666 : vector<1x64xf32> to vector<16x64xf32>
    %668 = arith.mulf %664, %667 : vector<16x64xf32>
    %669 = vector.extract_strided_slice %618 {offsets = [0, 9], sizes = [16, 55], strides = [1, 1]} : vector<16x64xf32> to vector<16x55xf32>
    %670 = vector.extract_strided_slice %618 {offsets = [0, 0], sizes = [16, 9], strides = [1, 1]} : vector<16x64xf32> to vector<16x9xf32>
    %671 = tpu.concatenate %669, %670 in 1 : vector<16x55xf32>, vector<16x9xf32> -> vector<16x64xf32>
    %c8_269 = arith.constant 8 : index
    %c0_270 = arith.constant 0 : index
    %c0_271 = arith.constant 0 : index
    %672 = vector.load %arg3[%c8_269, %c0_270, %c0_271] : memref<9x1x64xf32, #tpu.memory_space<vmem>>, vector<1x1x64xf32>
    %673 = vector.shape_cast %672 : vector<1x1x64xf32> to vector<1x64xf32>
    %674 = vector.broadcast %673 : vector<1x64xf32> to vector<16x64xf32>
    %675 = arith.mulf %671, %674 : vector<16x64xf32>
    %676 = tpu.concatenate %626, %633, %640, %647, %618, %654, %661, %668, %675 in 0 : vector<16x64xf32>, vector<16x64xf32>, vector<16x64xf32>, vector<16x64xf32>, vector<16x64xf32>, vector<16x64xf32>, vector<16x64xf32>, vector<16x64xf32>, vector<16x64xf32> -> vector<144x64xf32>
    %677 = arith.truncf %676 : vector<144x64xf32> to vector<144x64xbf16>
    %c0_272 = arith.constant 0 : index
    %c0_273 = arith.constant 0 : index
    %678 = vector.load %arg16[%c0_272, %c0_273] : memref<16x144xbf16, #tpu.memory_space<vmem>>, vector<16x144xbf16>
    %cst_274 = arith.constant dense<0.000000e+00> : vector<16x64xf32>
    %679 = tpu.matmul %678, %677, %cst_274 {dimension_numbers = #tpu.dot_dimension_numbers<[1], [0], [0], [1], [0, 0, 1, 1], [], []>} : vector<16x144xbf16>, vector<144x64xbf16>, vector<16x64xf32> -> vector<16x64xf32>
    %680 = arith.addf %619, %679 : vector<16x64xf32>
    %681 = vector.extract_strided_slice %344 {offsets = [0, 55], sizes = [16, 9], strides = [1, 1]} : vector<16x64xf32> to vector<16x9xf32>
    %682 = vector.extract_strided_slice %344 {offsets = [0, 0], sizes = [16, 55], strides = [1, 1]} : vector<16x64xf32> to vector<16x55xf32>
    %683 = tpu.concatenate %681, %682 in 1 : vector<16x9xf32>, vector<16x55xf32> -> vector<16x64xf32>
    %c0_275 = arith.constant 0 : index
    %c0_276 = arith.constant 0 : index
    %c0_277 = arith.constant 0 : index
    %684 = vector.load %arg3[%c0_275, %c0_276, %c0_277] : memref<9x1x64xf32, #tpu.memory_space<vmem>>, vector<1x1x64xf32>
    %685 = vector.shape_cast %684 : vector<1x1x64xf32> to vector<1x64xf32>
    %686 = vector.broadcast %685 : vector<1x64xf32> to vector<16x64xf32>
    %687 = arith.mulf %683, %686 : vector<16x64xf32>
    %688 = vector.extract_strided_slice %344 {offsets = [0, 56], sizes = [16, 8], strides = [1, 1]} : vector<16x64xf32> to vector<16x8xf32>
    %689 = vector.extract_strided_slice %344 {offsets = [0, 0], sizes = [16, 56], strides = [1, 1]} : vector<16x64xf32> to vector<16x56xf32>
    %690 = tpu.concatenate %688, %689 in 1 : vector<16x8xf32>, vector<16x56xf32> -> vector<16x64xf32>
    %c1_278 = arith.constant 1 : index
    %c0_279 = arith.constant 0 : index
    %c0_280 = arith.constant 0 : index
    %691 = vector.load %arg3[%c1_278, %c0_279, %c0_280] : memref<9x1x64xf32, #tpu.memory_space<vmem>>, vector<1x1x64xf32>
    %692 = vector.shape_cast %691 : vector<1x1x64xf32> to vector<1x64xf32>
    %693 = vector.broadcast %692 : vector<1x64xf32> to vector<16x64xf32>
    %694 = arith.mulf %690, %693 : vector<16x64xf32>
    %695 = vector.extract_strided_slice %344 {offsets = [0, 57], sizes = [16, 7], strides = [1, 1]} : vector<16x64xf32> to vector<16x7xf32>
    %696 = vector.extract_strided_slice %344 {offsets = [0, 0], sizes = [16, 57], strides = [1, 1]} : vector<16x64xf32> to vector<16x57xf32>
    %697 = tpu.concatenate %695, %696 in 1 : vector<16x7xf32>, vector<16x57xf32> -> vector<16x64xf32>
    %c2_281 = arith.constant 2 : index
    %c0_282 = arith.constant 0 : index
    %c0_283 = arith.constant 0 : index
    %698 = vector.load %arg3[%c2_281, %c0_282, %c0_283] : memref<9x1x64xf32, #tpu.memory_space<vmem>>, vector<1x1x64xf32>
    %699 = vector.shape_cast %698 : vector<1x1x64xf32> to vector<1x64xf32>
    %700 = vector.broadcast %699 : vector<1x64xf32> to vector<16x64xf32>
    %701 = arith.mulf %697, %700 : vector<16x64xf32>
    %702 = vector.extract_strided_slice %344 {offsets = [0, 63], sizes = [16, 1], strides = [1, 1]} : vector<16x64xf32> to vector<16x1xf32>
    %703 = vector.extract_strided_slice %344 {offsets = [0, 0], sizes = [16, 63], strides = [1, 1]} : vector<16x64xf32> to vector<16x63xf32>
    %704 = tpu.concatenate %702, %703 in 1 : vector<16x1xf32>, vector<16x63xf32> -> vector<16x64xf32>
    %c3_284 = arith.constant 3 : index
    %c0_285 = arith.constant 0 : index
    %c0_286 = arith.constant 0 : index
    %705 = vector.load %arg3[%c3_284, %c0_285, %c0_286] : memref<9x1x64xf32, #tpu.memory_space<vmem>>, vector<1x1x64xf32>
    %706 = vector.shape_cast %705 : vector<1x1x64xf32> to vector<1x64xf32>
    %707 = vector.broadcast %706 : vector<1x64xf32> to vector<16x64xf32>
    %708 = arith.mulf %704, %707 : vector<16x64xf32>
    %709 = vector.extract_strided_slice %344 {offsets = [0, 1], sizes = [16, 63], strides = [1, 1]} : vector<16x64xf32> to vector<16x63xf32>
    %710 = vector.extract_strided_slice %344 {offsets = [0, 0], sizes = [16, 1], strides = [1, 1]} : vector<16x64xf32> to vector<16x1xf32>
    %711 = tpu.concatenate %709, %710 in 1 : vector<16x63xf32>, vector<16x1xf32> -> vector<16x64xf32>
    %c5_287 = arith.constant 5 : index
    %c0_288 = arith.constant 0 : index
    %c0_289 = arith.constant 0 : index
    %712 = vector.load %arg3[%c5_287, %c0_288, %c0_289] : memref<9x1x64xf32, #tpu.memory_space<vmem>>, vector<1x1x64xf32>
    %713 = vector.shape_cast %712 : vector<1x1x64xf32> to vector<1x64xf32>
    %714 = vector.broadcast %713 : vector<1x64xf32> to vector<16x64xf32>
    %715 = arith.mulf %711, %714 : vector<16x64xf32>
    %716 = vector.extract_strided_slice %344 {offsets = [0, 7], sizes = [16, 57], strides = [1, 1]} : vector<16x64xf32> to vector<16x57xf32>
    %717 = vector.extract_strided_slice %344 {offsets = [0, 0], sizes = [16, 7], strides = [1, 1]} : vector<16x64xf32> to vector<16x7xf32>
    %718 = tpu.concatenate %716, %717 in 1 : vector<16x57xf32>, vector<16x7xf32> -> vector<16x64xf32>
    %c6_290 = arith.constant 6 : index
    %c0_291 = arith.constant 0 : index
    %c0_292 = arith.constant 0 : index
    %719 = vector.load %arg3[%c6_290, %c0_291, %c0_292] : memref<9x1x64xf32, #tpu.memory_space<vmem>>, vector<1x1x64xf32>
    %720 = vector.shape_cast %719 : vector<1x1x64xf32> to vector<1x64xf32>
    %721 = vector.broadcast %720 : vector<1x64xf32> to vector<16x64xf32>
    %722 = arith.mulf %718, %721 : vector<16x64xf32>
    %723 = vector.extract_strided_slice %344 {offsets = [0, 8], sizes = [16, 56], strides = [1, 1]} : vector<16x64xf32> to vector<16x56xf32>
    %724 = vector.extract_strided_slice %344 {offsets = [0, 0], sizes = [16, 8], strides = [1, 1]} : vector<16x64xf32> to vector<16x8xf32>
    %725 = tpu.concatenate %723, %724 in 1 : vector<16x56xf32>, vector<16x8xf32> -> vector<16x64xf32>
    %c7_293 = arith.constant 7 : index
    %c0_294 = arith.constant 0 : index
    %c0_295 = arith.constant 0 : index
    %726 = vector.load %arg3[%c7_293, %c0_294, %c0_295] : memref<9x1x64xf32, #tpu.memory_space<vmem>>, vector<1x1x64xf32>
    %727 = vector.shape_cast %726 : vector<1x1x64xf32> to vector<1x64xf32>
    %728 = vector.broadcast %727 : vector<1x64xf32> to vector<16x64xf32>
    %729 = arith.mulf %725, %728 : vector<16x64xf32>
    %730 = vector.extract_strided_slice %344 {offsets = [0, 9], sizes = [16, 55], strides = [1, 1]} : vector<16x64xf32> to vector<16x55xf32>
    %731 = vector.extract_strided_slice %344 {offsets = [0, 0], sizes = [16, 9], strides = [1, 1]} : vector<16x64xf32> to vector<16x9xf32>
    %732 = tpu.concatenate %730, %731 in 1 : vector<16x55xf32>, vector<16x9xf32> -> vector<16x64xf32>
    %c8_296 = arith.constant 8 : index
    %c0_297 = arith.constant 0 : index
    %c0_298 = arith.constant 0 : index
    %733 = vector.load %arg3[%c8_296, %c0_297, %c0_298] : memref<9x1x64xf32, #tpu.memory_space<vmem>>, vector<1x1x64xf32>
    %734 = vector.shape_cast %733 : vector<1x1x64xf32> to vector<1x64xf32>
    %735 = vector.broadcast %734 : vector<1x64xf32> to vector<16x64xf32>
    %736 = arith.mulf %732, %735 : vector<16x64xf32>
    %737 = tpu.concatenate %687, %694, %701, %708, %344, %715, %722, %729, %736 in 0 : vector<16x64xf32>, vector<16x64xf32>, vector<16x64xf32>, vector<16x64xf32>, vector<16x64xf32>, vector<16x64xf32>, vector<16x64xf32>, vector<16x64xf32>, vector<16x64xf32> -> vector<144x64xf32>
    %738 = arith.truncf %737 : vector<144x64xf32> to vector<144x64xbf16>
    %c0_299 = arith.constant 0 : index
    %c0_300 = arith.constant 0 : index
    %739 = vector.load %arg17[%c0_299, %c0_300] : memref<16x144xbf16, #tpu.memory_space<vmem>>, vector<16x144xbf16>
    %cst_301 = arith.constant dense<0.000000e+00> : vector<16x64xf32>
    %740 = tpu.matmul %739, %738, %cst_301 {dimension_numbers = #tpu.dot_dimension_numbers<[1], [0], [0], [1], [0, 0, 1, 1], [], []>} : vector<16x144xbf16>, vector<144x64xbf16>, vector<16x64xf32> -> vector<16x64xf32>
    %741 = arith.addf %680, %740 : vector<16x64xf32>
    %cst_302 = arith.constant dense<0.000000e+00> : vector<16xf32>
    %742 = vector.multi_reduction <add>, %741, %cst_302 [1] : vector<16x64xf32> to vector<16xf32>
    %743 = vector.shape_cast %742 : vector<16xf32> to vector<16x1xf32>
    %cst_303 = arith.constant 6.400000e+01 : f32
    %744 = vector.broadcast %cst_303 : f32 to vector<16x1xf32>
    %745 = arith.divf %743, %744 : vector<16x1xf32>
    %746 = vector.broadcast %745 : vector<16x1xf32> to vector<16x64xf32>
    %747 = arith.subf %741, %746 : vector<16x64xf32>
    %748 = arith.mulf %747, %747 : vector<16x64xf32>
    %cst_304 = arith.constant dense<0.000000e+00> : vector<16xf32>
    %749 = vector.multi_reduction <add>, %748, %cst_304 [1] : vector<16x64xf32> to vector<16xf32>
    %750 = vector.shape_cast %749 : vector<16xf32> to vector<16x1xf32>
    %cst_305 = arith.constant 6.400000e+01 : f32
    %751 = vector.broadcast %cst_305 : f32 to vector<16x1xf32>
    %752 = arith.divf %750, %751 : vector<16x1xf32>
    %753 = vector.broadcast %745 : vector<16x1xf32> to vector<16x64xf32>
    %754 = arith.subf %741, %753 : vector<16x64xf32>
    %cst_306 = arith.constant 9.99999974E-6 : f32
    %755 = vector.broadcast %cst_306 : f32 to vector<16x1xf32>
    %756 = arith.addf %752, %755 : vector<16x1xf32>
    %757 = math.rsqrt %756 : vector<16x1xf32>
    %758 = vector.broadcast %757 : vector<16x1xf32> to vector<16x64xf32>
    %759 = arith.mulf %754, %758 : vector<16x64xf32>
    %cst_307 = arith.constant 0.000000e+00 : f32
    %760 = vector.broadcast %cst_307 : f32 to vector<16x64xf32>
    %761 = arith.cmpf oge, %759, %760 : vector<16x64xf32>
    %cst_308 = arith.constant 2.000000e-01 : f32
    %762 = vector.broadcast %cst_308 : f32 to vector<16x64xf32>
    %763 = arith.mulf %762, %759 : vector<16x64xf32>
    %764 = arith.select %761, %759, %763 : vector<16x64xi1>, vector<16x64xf32>
    %cst_309 = arith.constant 0.000000e+00 : f32
    %765 = vector.broadcast %cst_309 : f32 to vector<16x64xf32>
    %766 = vector.extract_strided_slice %764 {offsets = [0, 55], sizes = [16, 9], strides = [1, 1]} : vector<16x64xf32> to vector<16x9xf32>
    %767 = vector.extract_strided_slice %764 {offsets = [0, 0], sizes = [16, 55], strides = [1, 1]} : vector<16x64xf32> to vector<16x55xf32>
    %768 = tpu.concatenate %766, %767 in 1 : vector<16x9xf32>, vector<16x55xf32> -> vector<16x64xf32>
    %c0_310 = arith.constant 0 : index
    %c0_311 = arith.constant 0 : index
    %c0_312 = arith.constant 0 : index
    %769 = vector.load %arg3[%c0_310, %c0_311, %c0_312] : memref<9x1x64xf32, #tpu.memory_space<vmem>>, vector<1x1x64xf32>
    %770 = vector.shape_cast %769 : vector<1x1x64xf32> to vector<1x64xf32>
    %771 = vector.broadcast %770 : vector<1x64xf32> to vector<16x64xf32>
    %772 = arith.mulf %768, %771 : vector<16x64xf32>
    %773 = vector.extract_strided_slice %764 {offsets = [0, 56], sizes = [16, 8], strides = [1, 1]} : vector<16x64xf32> to vector<16x8xf32>
    %774 = vector.extract_strided_slice %764 {offsets = [0, 0], sizes = [16, 56], strides = [1, 1]} : vector<16x64xf32> to vector<16x56xf32>
    %775 = tpu.concatenate %773, %774 in 1 : vector<16x8xf32>, vector<16x56xf32> -> vector<16x64xf32>
    %c1_313 = arith.constant 1 : index
    %c0_314 = arith.constant 0 : index
    %c0_315 = arith.constant 0 : index
    %776 = vector.load %arg3[%c1_313, %c0_314, %c0_315] : memref<9x1x64xf32, #tpu.memory_space<vmem>>, vector<1x1x64xf32>
    %777 = vector.shape_cast %776 : vector<1x1x64xf32> to vector<1x64xf32>
    %778 = vector.broadcast %777 : vector<1x64xf32> to vector<16x64xf32>
    %779 = arith.mulf %775, %778 : vector<16x64xf32>
    %780 = vector.extract_strided_slice %764 {offsets = [0, 57], sizes = [16, 7], strides = [1, 1]} : vector<16x64xf32> to vector<16x7xf32>
    %781 = vector.extract_strided_slice %764 {offsets = [0, 0], sizes = [16, 57], strides = [1, 1]} : vector<16x64xf32> to vector<16x57xf32>
    %782 = tpu.concatenate %780, %781 in 1 : vector<16x7xf32>, vector<16x57xf32> -> vector<16x64xf32>
    %c2_316 = arith.constant 2 : index
    %c0_317 = arith.constant 0 : index
    %c0_318 = arith.constant 0 : index
    %783 = vector.load %arg3[%c2_316, %c0_317, %c0_318] : memref<9x1x64xf32, #tpu.memory_space<vmem>>, vector<1x1x64xf32>
    %784 = vector.shape_cast %783 : vector<1x1x64xf32> to vector<1x64xf32>
    %785 = vector.broadcast %784 : vector<1x64xf32> to vector<16x64xf32>
    %786 = arith.mulf %782, %785 : vector<16x64xf32>
    %787 = vector.extract_strided_slice %764 {offsets = [0, 63], sizes = [16, 1], strides = [1, 1]} : vector<16x64xf32> to vector<16x1xf32>
    %788 = vector.extract_strided_slice %764 {offsets = [0, 0], sizes = [16, 63], strides = [1, 1]} : vector<16x64xf32> to vector<16x63xf32>
    %789 = tpu.concatenate %787, %788 in 1 : vector<16x1xf32>, vector<16x63xf32> -> vector<16x64xf32>
    %c3_319 = arith.constant 3 : index
    %c0_320 = arith.constant 0 : index
    %c0_321 = arith.constant 0 : index
    %790 = vector.load %arg3[%c3_319, %c0_320, %c0_321] : memref<9x1x64xf32, #tpu.memory_space<vmem>>, vector<1x1x64xf32>
    %791 = vector.shape_cast %790 : vector<1x1x64xf32> to vector<1x64xf32>
    %792 = vector.broadcast %791 : vector<1x64xf32> to vector<16x64xf32>
    %793 = arith.mulf %789, %792 : vector<16x64xf32>
    %794 = vector.extract_strided_slice %764 {offsets = [0, 1], sizes = [16, 63], strides = [1, 1]} : vector<16x64xf32> to vector<16x63xf32>
    %795 = vector.extract_strided_slice %764 {offsets = [0, 0], sizes = [16, 1], strides = [1, 1]} : vector<16x64xf32> to vector<16x1xf32>
    %796 = tpu.concatenate %794, %795 in 1 : vector<16x63xf32>, vector<16x1xf32> -> vector<16x64xf32>
    %c5_322 = arith.constant 5 : index
    %c0_323 = arith.constant 0 : index
    %c0_324 = arith.constant 0 : index
    %797 = vector.load %arg3[%c5_322, %c0_323, %c0_324] : memref<9x1x64xf32, #tpu.memory_space<vmem>>, vector<1x1x64xf32>
    %798 = vector.shape_cast %797 : vector<1x1x64xf32> to vector<1x64xf32>
    %799 = vector.broadcast %798 : vector<1x64xf32> to vector<16x64xf32>
    %800 = arith.mulf %796, %799 : vector<16x64xf32>
    %801 = vector.extract_strided_slice %764 {offsets = [0, 7], sizes = [16, 57], strides = [1, 1]} : vector<16x64xf32> to vector<16x57xf32>
    %802 = vector.extract_strided_slice %764 {offsets = [0, 0], sizes = [16, 7], strides = [1, 1]} : vector<16x64xf32> to vector<16x7xf32>
    %803 = tpu.concatenate %801, %802 in 1 : vector<16x57xf32>, vector<16x7xf32> -> vector<16x64xf32>
    %c6_325 = arith.constant 6 : index
    %c0_326 = arith.constant 0 : index
    %c0_327 = arith.constant 0 : index
    %804 = vector.load %arg3[%c6_325, %c0_326, %c0_327] : memref<9x1x64xf32, #tpu.memory_space<vmem>>, vector<1x1x64xf32>
    %805 = vector.shape_cast %804 : vector<1x1x64xf32> to vector<1x64xf32>
    %806 = vector.broadcast %805 : vector<1x64xf32> to vector<16x64xf32>
    %807 = arith.mulf %803, %806 : vector<16x64xf32>
    %808 = vector.extract_strided_slice %764 {offsets = [0, 8], sizes = [16, 56], strides = [1, 1]} : vector<16x64xf32> to vector<16x56xf32>
    %809 = vector.extract_strided_slice %764 {offsets = [0, 0], sizes = [16, 8], strides = [1, 1]} : vector<16x64xf32> to vector<16x8xf32>
    %810 = tpu.concatenate %808, %809 in 1 : vector<16x56xf32>, vector<16x8xf32> -> vector<16x64xf32>
    %c7_328 = arith.constant 7 : index
    %c0_329 = arith.constant 0 : index
    %c0_330 = arith.constant 0 : index
    %811 = vector.load %arg3[%c7_328, %c0_329, %c0_330] : memref<9x1x64xf32, #tpu.memory_space<vmem>>, vector<1x1x64xf32>
    %812 = vector.shape_cast %811 : vector<1x1x64xf32> to vector<1x64xf32>
    %813 = vector.broadcast %812 : vector<1x64xf32> to vector<16x64xf32>
    %814 = arith.mulf %810, %813 : vector<16x64xf32>
    %815 = vector.extract_strided_slice %764 {offsets = [0, 9], sizes = [16, 55], strides = [1, 1]} : vector<16x64xf32> to vector<16x55xf32>
    %816 = vector.extract_strided_slice %764 {offsets = [0, 0], sizes = [16, 9], strides = [1, 1]} : vector<16x64xf32> to vector<16x9xf32>
    %817 = tpu.concatenate %815, %816 in 1 : vector<16x55xf32>, vector<16x9xf32> -> vector<16x64xf32>
    %c8_331 = arith.constant 8 : index
    %c0_332 = arith.constant 0 : index
    %c0_333 = arith.constant 0 : index
    %818 = vector.load %arg3[%c8_331, %c0_332, %c0_333] : memref<9x1x64xf32, #tpu.memory_space<vmem>>, vector<1x1x64xf32>
    %819 = vector.shape_cast %818 : vector<1x1x64xf32> to vector<1x64xf32>
    %820 = vector.broadcast %819 : vector<1x64xf32> to vector<16x64xf32>
    %821 = arith.mulf %817, %820 : vector<16x64xf32>
    %822 = tpu.concatenate %772, %779, %786, %793, %764, %800, %807, %814, %821 in 0 : vector<16x64xf32>, vector<16x64xf32>, vector<16x64xf32>, vector<16x64xf32>, vector<16x64xf32>, vector<16x64xf32>, vector<16x64xf32>, vector<16x64xf32>, vector<16x64xf32> -> vector<144x64xf32>
    %823 = arith.truncf %822 : vector<144x64xf32> to vector<144x64xbf16>
    %c0_334 = arith.constant 0 : index
    %c0_335 = arith.constant 0 : index
    %824 = vector.load %arg18[%c0_334, %c0_335] : memref<16x144xbf16, #tpu.memory_space<vmem>>, vector<16x144xbf16>
    %cst_336 = arith.constant dense<0.000000e+00> : vector<16x64xf32>
    %825 = tpu.matmul %824, %823, %cst_336 {dimension_numbers = #tpu.dot_dimension_numbers<[1], [0], [0], [1], [0, 0, 1, 1], [], []>} : vector<16x144xbf16>, vector<144x64xbf16>, vector<16x64xf32> -> vector<16x64xf32>
    %826 = arith.addf %765, %825 : vector<16x64xf32>
    %cst_337 = arith.constant dense<0.000000e+00> : vector<16xf32>
    %827 = vector.multi_reduction <add>, %826, %cst_337 [1] : vector<16x64xf32> to vector<16xf32>
    %828 = vector.shape_cast %827 : vector<16xf32> to vector<16x1xf32>
    %cst_338 = arith.constant 6.400000e+01 : f32
    %829 = vector.broadcast %cst_338 : f32 to vector<16x1xf32>
    %830 = arith.divf %828, %829 : vector<16x1xf32>
    %831 = vector.broadcast %830 : vector<16x1xf32> to vector<16x64xf32>
    %832 = arith.subf %826, %831 : vector<16x64xf32>
    %833 = arith.mulf %832, %832 : vector<16x64xf32>
    %cst_339 = arith.constant dense<0.000000e+00> : vector<16xf32>
    %834 = vector.multi_reduction <add>, %833, %cst_339 [1] : vector<16x64xf32> to vector<16xf32>
    %835 = vector.shape_cast %834 : vector<16xf32> to vector<16x1xf32>
    %cst_340 = arith.constant 6.400000e+01 : f32
    %836 = vector.broadcast %cst_340 : f32 to vector<16x1xf32>
    %837 = arith.divf %835, %836 : vector<16x1xf32>
    %838 = vector.broadcast %830 : vector<16x1xf32> to vector<16x64xf32>
    %839 = arith.subf %826, %838 : vector<16x64xf32>
    %cst_341 = arith.constant 9.99999974E-6 : f32
    %840 = vector.broadcast %cst_341 : f32 to vector<16x1xf32>
    %841 = arith.addf %837, %840 : vector<16x1xf32>
    %842 = math.rsqrt %841 : vector<16x1xf32>
    %843 = vector.broadcast %842 : vector<16x1xf32> to vector<16x64xf32>
    %844 = arith.mulf %839, %843 : vector<16x64xf32>
    %cst_342 = arith.constant 0.000000e+00 : f32
    %845 = vector.broadcast %cst_342 : f32 to vector<16x64xf32>
    %846 = arith.cmpf oge, %844, %845 : vector<16x64xf32>
    %cst_343 = arith.constant 2.000000e-01 : f32
    %847 = vector.broadcast %cst_343 : f32 to vector<16x64xf32>
    %848 = arith.mulf %847, %844 : vector<16x64xf32>
    %849 = arith.select %846, %844, %848 : vector<16x64xi1>, vector<16x64xf32>
    %c0_344 = arith.constant 0 : index
    %c0_345 = arith.constant 0 : index
    %850 = vector.load %arg19[%c0_344, %c0_345] : memref<32x16xbf16, #tpu.memory_space<vmem>>, vector<32x16xbf16>
    %851 = arith.truncf %849 : vector<16x64xf32> to vector<16x64xbf16>
    %cst_346 = arith.constant dense<0.000000e+00> : vector<32x64xf32>
    %852 = tpu.matmul %850, %851, %cst_346 {dimension_numbers = #tpu.dot_dimension_numbers<[1], [0], [0], [1], [0, 0, 1, 1], [], []>} : vector<32x16xbf16>, vector<16x64xbf16>, vector<32x64xf32> -> vector<32x64xf32>
    %853 = vector.extract_strided_slice %852 {offsets = [0, 0], sizes = [8, 64], strides = [1, 1]} : vector<32x64xf32> to vector<8x64xf32>
    %854 = vector.extract_strided_slice %852 {offsets = [8, 0], sizes = [8, 64], strides = [1, 1]} : vector<32x64xf32> to vector<8x64xf32>
    %855 = vector.extract_strided_slice %852 {offsets = [16, 0], sizes = [8, 64], strides = [1, 1]} : vector<32x64xf32> to vector<8x64xf32>
    %856 = vector.extract_strided_slice %852 {offsets = [24, 0], sizes = [8, 64], strides = [1, 1]} : vector<32x64xf32> to vector<8x64xf32>
    %857 = arith.addf %853, %854 : vector<8x64xf32>
    %858 = arith.addf %857, %855 : vector<8x64xf32>
    %859 = arith.addf %858, %856 : vector<8x64xf32>
    %cst_347 = arith.constant dense<0.000000e+00> : vector<8xf32>
    %860 = vector.multi_reduction <add>, %859, %cst_347 [1] : vector<8x64xf32> to vector<8xf32>
    %861 = vector.shape_cast %860 : vector<8xf32> to vector<8x1xf32>
    %cst_348 = arith.constant 3.906250e-03 : f32
    %862 = vector.broadcast %cst_348 : f32 to vector<8x1xf32>
    %863 = arith.mulf %861, %862 : vector<8x1xf32>
    %864 = vector.broadcast %863 : vector<8x1xf32> to vector<8x64xf32>
    %865 = arith.subf %853, %864 : vector<8x64xf32>
    %866 = arith.mulf %865, %865 : vector<8x64xf32>
    %cst_349 = arith.constant dense<0.000000e+00> : vector<8xf32>
    %867 = vector.multi_reduction <add>, %866, %cst_349 [1] : vector<8x64xf32> to vector<8xf32>
    %868 = vector.shape_cast %867 : vector<8xf32> to vector<8x1xf32>
    %cst_350 = arith.constant 0.000000e+00 : f32
    %869 = vector.broadcast %cst_350 : f32 to vector<8x1xf32>
    %870 = arith.addf %869, %868 : vector<8x1xf32>
    %871 = vector.broadcast %863 : vector<8x1xf32> to vector<8x64xf32>
    %872 = arith.subf %854, %871 : vector<8x64xf32>
    %873 = arith.mulf %872, %872 : vector<8x64xf32>
    %cst_351 = arith.constant dense<0.000000e+00> : vector<8xf32>
    %874 = vector.multi_reduction <add>, %873, %cst_351 [1] : vector<8x64xf32> to vector<8xf32>
    %875 = vector.shape_cast %874 : vector<8xf32> to vector<8x1xf32>
    %876 = arith.addf %870, %875 : vector<8x1xf32>
    %877 = vector.broadcast %863 : vector<8x1xf32> to vector<8x64xf32>
    %878 = arith.subf %855, %877 : vector<8x64xf32>
    %879 = arith.mulf %878, %878 : vector<8x64xf32>
    %cst_352 = arith.constant dense<0.000000e+00> : vector<8xf32>
    %880 = vector.multi_reduction <add>, %879, %cst_352 [1] : vector<8x64xf32> to vector<8xf32>
    %881 = vector.shape_cast %880 : vector<8xf32> to vector<8x1xf32>
    %882 = arith.addf %876, %881 : vector<8x1xf32>
    %883 = vector.broadcast %863 : vector<8x1xf32> to vector<8x64xf32>
    %884 = arith.subf %856, %883 : vector<8x64xf32>
    %885 = arith.mulf %884, %884 : vector<8x64xf32>
    %cst_353 = arith.constant dense<0.000000e+00> : vector<8xf32>
    %886 = vector.multi_reduction <add>, %885, %cst_353 [1] : vector<8x64xf32> to vector<8xf32>
    %887 = vector.shape_cast %886 : vector<8xf32> to vector<8x1xf32>
    %888 = arith.addf %882, %887 : vector<8x1xf32>
    %cst_354 = arith.constant 3.906250e-03 : f32
    %889 = vector.broadcast %cst_354 : f32 to vector<8x1xf32>
    %890 = arith.mulf %888, %889 : vector<8x1xf32>
    %cst_355 = arith.constant 9.99999974E-6 : f32
    %891 = vector.broadcast %cst_355 : f32 to vector<8x1xf32>
    %892 = arith.addf %890, %891 : vector<8x1xf32>
    %893 = math.rsqrt %892 : vector<8x1xf32>
    %cst_356 = arith.constant 0.000000e+00 : f32
    %894 = vector.broadcast %cst_356 : f32 to vector<8x256xf32>
    %895 = vector.broadcast %863 : vector<8x1xf32> to vector<8x64xf32>
    %896 = arith.subf %853, %895 : vector<8x64xf32>
    %897 = vector.broadcast %893 : vector<8x1xf32> to vector<8x64xf32>
    %898 = arith.mulf %896, %897 : vector<8x64xf32>
    %cst_357 = arith.constant 0.000000e+00 : f32
    %899 = vector.broadcast %cst_357 : f32 to vector<8x64xf32>
    %900 = arith.cmpf oge, %898, %899 : vector<8x64xf32>
    %cst_358 = arith.constant 2.000000e-01 : f32
    %901 = vector.broadcast %cst_358 : f32 to vector<8x64xf32>
    %902 = arith.mulf %901, %898 : vector<8x64xf32>
    %903 = arith.select %900, %898, %902 : vector<8x64xi1>, vector<8x64xf32>
    %904 = arith.truncf %903 : vector<8x64xf32> to vector<8x64xbf16>
    %c0_359 = arith.constant 0 : index
    %c0_360 = arith.constant 0 : index
    %c0_361 = arith.constant 0 : index
    %905 = vector.load %arg8[%c0_359, %c0_360, %c0_361] : memref<4x64x256xbf16, #tpu.memory_space<vmem>>, vector<1x64x256xbf16>
    %906 = vector.shape_cast %905 : vector<1x64x256xbf16> to vector<64x256xbf16>
    %cst_362 = arith.constant dense<0.000000e+00> : vector<8x256xf32>
    %907 = tpu.matmul %904, %906, %cst_362 {dimension_numbers = #tpu.dot_dimension_numbers<[1], [0], [0], [1], [0, 0, 1, 1], [], []>} : vector<8x64xbf16>, vector<64x256xbf16>, vector<8x256xf32> -> vector<8x256xf32>
    %908 = arith.addf %894, %907 : vector<8x256xf32>
    %909 = vector.broadcast %863 : vector<8x1xf32> to vector<8x64xf32>
    %910 = arith.subf %854, %909 : vector<8x64xf32>
    %911 = vector.broadcast %893 : vector<8x1xf32> to vector<8x64xf32>
    %912 = arith.mulf %910, %911 : vector<8x64xf32>
    %cst_363 = arith.constant 0.000000e+00 : f32
    %913 = vector.broadcast %cst_363 : f32 to vector<8x64xf32>
    %914 = arith.cmpf oge, %912, %913 : vector<8x64xf32>
    %cst_364 = arith.constant 2.000000e-01 : f32
    %915 = vector.broadcast %cst_364 : f32 to vector<8x64xf32>
    %916 = arith.mulf %915, %912 : vector<8x64xf32>
    %917 = arith.select %914, %912, %916 : vector<8x64xi1>, vector<8x64xf32>
    %918 = arith.truncf %917 : vector<8x64xf32> to vector<8x64xbf16>
    %c1_365 = arith.constant 1 : index
    %c0_366 = arith.constant 0 : index
    %c0_367 = arith.constant 0 : index
    %919 = vector.load %arg8[%c1_365, %c0_366, %c0_367] : memref<4x64x256xbf16, #tpu.memory_space<vmem>>, vector<1x64x256xbf16>
    %920 = vector.shape_cast %919 : vector<1x64x256xbf16> to vector<64x256xbf16>
    %cst_368 = arith.constant dense<0.000000e+00> : vector<8x256xf32>
    %921 = tpu.matmul %918, %920, %cst_368 {dimension_numbers = #tpu.dot_dimension_numbers<[1], [0], [0], [1], [0, 0, 1, 1], [], []>} : vector<8x64xbf16>, vector<64x256xbf16>, vector<8x256xf32> -> vector<8x256xf32>
    %922 = arith.addf %908, %921 : vector<8x256xf32>
    %923 = vector.broadcast %863 : vector<8x1xf32> to vector<8x64xf32>
    %924 = arith.subf %855, %923 : vector<8x64xf32>
    %925 = vector.broadcast %893 : vector<8x1xf32> to vector<8x64xf32>
    %926 = arith.mulf %924, %925 : vector<8x64xf32>
    %cst_369 = arith.constant 0.000000e+00 : f32
    %927 = vector.broadcast %cst_369 : f32 to vector<8x64xf32>
    %928 = arith.cmpf oge, %926, %927 : vector<8x64xf32>
    %cst_370 = arith.constant 2.000000e-01 : f32
    %929 = vector.broadcast %cst_370 : f32 to vector<8x64xf32>
    %930 = arith.mulf %929, %926 : vector<8x64xf32>
    %931 = arith.select %928, %926, %930 : vector<8x64xi1>, vector<8x64xf32>
    %932 = arith.truncf %931 : vector<8x64xf32> to vector<8x64xbf16>
    %c2_371 = arith.constant 2 : index
    %c0_372 = arith.constant 0 : index
    %c0_373 = arith.constant 0 : index
    %933 = vector.load %arg8[%c2_371, %c0_372, %c0_373] : memref<4x64x256xbf16, #tpu.memory_space<vmem>>, vector<1x64x256xbf16>
    %934 = vector.shape_cast %933 : vector<1x64x256xbf16> to vector<64x256xbf16>
    %cst_374 = arith.constant dense<0.000000e+00> : vector<8x256xf32>
    %935 = tpu.matmul %932, %934, %cst_374 {dimension_numbers = #tpu.dot_dimension_numbers<[1], [0], [0], [1], [0, 0, 1, 1], [], []>} : vector<8x64xbf16>, vector<64x256xbf16>, vector<8x256xf32> -> vector<8x256xf32>
    %936 = arith.addf %922, %935 : vector<8x256xf32>
    %937 = vector.broadcast %863 : vector<8x1xf32> to vector<8x64xf32>
    %938 = arith.subf %856, %937 : vector<8x64xf32>
    %939 = vector.broadcast %893 : vector<8x1xf32> to vector<8x64xf32>
    %940 = arith.mulf %938, %939 : vector<8x64xf32>
    %cst_375 = arith.constant 0.000000e+00 : f32
    %941 = vector.broadcast %cst_375 : f32 to vector<8x64xf32>
    %942 = arith.cmpf oge, %940, %941 : vector<8x64xf32>
    %cst_376 = arith.constant 2.000000e-01 : f32
    %943 = vector.broadcast %cst_376 : f32 to vector<8x64xf32>
    %944 = arith.mulf %943, %940 : vector<8x64xf32>
    %945 = arith.select %942, %940, %944 : vector<8x64xi1>, vector<8x64xf32>
    %946 = arith.truncf %945 : vector<8x64xf32> to vector<8x64xbf16>
    %c3_377 = arith.constant 3 : index
    %c0_378 = arith.constant 0 : index
    %c0_379 = arith.constant 0 : index
    %947 = vector.load %arg8[%c3_377, %c0_378, %c0_379] : memref<4x64x256xbf16, #tpu.memory_space<vmem>>, vector<1x64x256xbf16>
    %948 = vector.shape_cast %947 : vector<1x64x256xbf16> to vector<64x256xbf16>
    %cst_380 = arith.constant dense<0.000000e+00> : vector<8x256xf32>
    %949 = tpu.matmul %946, %948, %cst_380 {dimension_numbers = #tpu.dot_dimension_numbers<[1], [0], [0], [1], [0, 0, 1, 1], [], []>} : vector<8x64xbf16>, vector<64x256xbf16>, vector<8x256xf32> -> vector<8x256xf32>
    %950 = arith.addf %936, %949 : vector<8x256xf32>
    %cst_381 = arith.constant 0.000000e+00 : f32
    %951 = vector.broadcast %cst_381 : f32 to vector<8x256xf32>
    %952 = vector.extract_strided_slice %950 {offsets = [0, 239], sizes = [8, 17], strides = [1, 1]} : vector<8x256xf32> to vector<8x17xf32>
    %953 = vector.extract_strided_slice %950 {offsets = [0, 0], sizes = [8, 239], strides = [1, 1]} : vector<8x256xf32> to vector<8x239xf32>
    %954 = tpu.concatenate %952, %953 in 1 : vector<8x17xf32>, vector<8x239xf32> -> vector<8x256xf32>
    %c0_382 = arith.constant 0 : index
    %c0_383 = arith.constant 0 : index
    %c0_384 = arith.constant 0 : index
    %955 = vector.load %arg2[%c0_382, %c0_383, %c0_384] : memref<9x1x256xf32, #tpu.memory_space<vmem>>, vector<1x1x256xf32>
    %956 = vector.shape_cast %955 : vector<1x1x256xf32> to vector<1x256xf32>
    %957 = vector.broadcast %956 : vector<1x256xf32> to vector<8x256xf32>
    %958 = arith.mulf %954, %957 : vector<8x256xf32>
    %959 = vector.extract_strided_slice %950 {offsets = [0, 240], sizes = [8, 16], strides = [1, 1]} : vector<8x256xf32> to vector<8x16xf32>
    %960 = vector.extract_strided_slice %950 {offsets = [0, 0], sizes = [8, 240], strides = [1, 1]} : vector<8x256xf32> to vector<8x240xf32>
    %961 = tpu.concatenate %959, %960 in 1 : vector<8x16xf32>, vector<8x240xf32> -> vector<8x256xf32>
    %c1_385 = arith.constant 1 : index
    %c0_386 = arith.constant 0 : index
    %c0_387 = arith.constant 0 : index
    %962 = vector.load %arg2[%c1_385, %c0_386, %c0_387] : memref<9x1x256xf32, #tpu.memory_space<vmem>>, vector<1x1x256xf32>
    %963 = vector.shape_cast %962 : vector<1x1x256xf32> to vector<1x256xf32>
    %964 = vector.broadcast %963 : vector<1x256xf32> to vector<8x256xf32>
    %965 = arith.mulf %961, %964 : vector<8x256xf32>
    %966 = vector.extract_strided_slice %950 {offsets = [0, 241], sizes = [8, 15], strides = [1, 1]} : vector<8x256xf32> to vector<8x15xf32>
    %967 = vector.extract_strided_slice %950 {offsets = [0, 0], sizes = [8, 241], strides = [1, 1]} : vector<8x256xf32> to vector<8x241xf32>
    %968 = tpu.concatenate %966, %967 in 1 : vector<8x15xf32>, vector<8x241xf32> -> vector<8x256xf32>
    %c2_388 = arith.constant 2 : index
    %c0_389 = arith.constant 0 : index
    %c0_390 = arith.constant 0 : index
    %969 = vector.load %arg2[%c2_388, %c0_389, %c0_390] : memref<9x1x256xf32, #tpu.memory_space<vmem>>, vector<1x1x256xf32>
    %970 = vector.shape_cast %969 : vector<1x1x256xf32> to vector<1x256xf32>
    %971 = vector.broadcast %970 : vector<1x256xf32> to vector<8x256xf32>
    %972 = arith.mulf %968, %971 : vector<8x256xf32>
    %973 = vector.extract_strided_slice %950 {offsets = [0, 255], sizes = [8, 1], strides = [1, 1]} : vector<8x256xf32> to vector<8x1xf32>
    %974 = vector.extract_strided_slice %950 {offsets = [0, 0], sizes = [8, 255], strides = [1, 1]} : vector<8x256xf32> to vector<8x255xf32>
    %975 = tpu.concatenate %973, %974 in 1 : vector<8x1xf32>, vector<8x255xf32> -> vector<8x256xf32>
    %c3_391 = arith.constant 3 : index
    %c0_392 = arith.constant 0 : index
    %c0_393 = arith.constant 0 : index
    %976 = vector.load %arg2[%c3_391, %c0_392, %c0_393] : memref<9x1x256xf32, #tpu.memory_space<vmem>>, vector<1x1x256xf32>
    %977 = vector.shape_cast %976 : vector<1x1x256xf32> to vector<1x256xf32>
    %978 = vector.broadcast %977 : vector<1x256xf32> to vector<8x256xf32>
    %979 = arith.mulf %975, %978 : vector<8x256xf32>
    %980 = vector.extract_strided_slice %950 {offsets = [0, 1], sizes = [8, 255], strides = [1, 1]} : vector<8x256xf32> to vector<8x255xf32>
    %981 = vector.extract_strided_slice %950 {offsets = [0, 0], sizes = [8, 1], strides = [1, 1]} : vector<8x256xf32> to vector<8x1xf32>
    %982 = tpu.concatenate %980, %981 in 1 : vector<8x255xf32>, vector<8x1xf32> -> vector<8x256xf32>
    %c5_394 = arith.constant 5 : index
    %c0_395 = arith.constant 0 : index
    %c0_396 = arith.constant 0 : index
    %983 = vector.load %arg2[%c5_394, %c0_395, %c0_396] : memref<9x1x256xf32, #tpu.memory_space<vmem>>, vector<1x1x256xf32>
    %984 = vector.shape_cast %983 : vector<1x1x256xf32> to vector<1x256xf32>
    %985 = vector.broadcast %984 : vector<1x256xf32> to vector<8x256xf32>
    %986 = arith.mulf %982, %985 : vector<8x256xf32>
    %987 = vector.extract_strided_slice %950 {offsets = [0, 15], sizes = [8, 241], strides = [1, 1]} : vector<8x256xf32> to vector<8x241xf32>
    %988 = vector.extract_strided_slice %950 {offsets = [0, 0], sizes = [8, 15], strides = [1, 1]} : vector<8x256xf32> to vector<8x15xf32>
    %989 = tpu.concatenate %987, %988 in 1 : vector<8x241xf32>, vector<8x15xf32> -> vector<8x256xf32>
    %c6_397 = arith.constant 6 : index
    %c0_398 = arith.constant 0 : index
    %c0_399 = arith.constant 0 : index
    %990 = vector.load %arg2[%c6_397, %c0_398, %c0_399] : memref<9x1x256xf32, #tpu.memory_space<vmem>>, vector<1x1x256xf32>
    %991 = vector.shape_cast %990 : vector<1x1x256xf32> to vector<1x256xf32>
    %992 = vector.broadcast %991 : vector<1x256xf32> to vector<8x256xf32>
    %993 = arith.mulf %989, %992 : vector<8x256xf32>
    %994 = vector.extract_strided_slice %950 {offsets = [0, 16], sizes = [8, 240], strides = [1, 1]} : vector<8x256xf32> to vector<8x240xf32>
    %995 = vector.extract_strided_slice %950 {offsets = [0, 0], sizes = [8, 16], strides = [1, 1]} : vector<8x256xf32> to vector<8x16xf32>
    %996 = tpu.concatenate %994, %995 in 1 : vector<8x240xf32>, vector<8x16xf32> -> vector<8x256xf32>
    %c7_400 = arith.constant 7 : index
    %c0_401 = arith.constant 0 : index
    %c0_402 = arith.constant 0 : index
    %997 = vector.load %arg2[%c7_400, %c0_401, %c0_402] : memref<9x1x256xf32, #tpu.memory_space<vmem>>, vector<1x1x256xf32>
    %998 = vector.shape_cast %997 : vector<1x1x256xf32> to vector<1x256xf32>
    %999 = vector.broadcast %998 : vector<1x256xf32> to vector<8x256xf32>
    %1000 = arith.mulf %996, %999 : vector<8x256xf32>
    %1001 = vector.extract_strided_slice %950 {offsets = [0, 17], sizes = [8, 239], strides = [1, 1]} : vector<8x256xf32> to vector<8x239xf32>
    %1002 = vector.extract_strided_slice %950 {offsets = [0, 0], sizes = [8, 17], strides = [1, 1]} : vector<8x256xf32> to vector<8x17xf32>
    %1003 = tpu.concatenate %1001, %1002 in 1 : vector<8x239xf32>, vector<8x17xf32> -> vector<8x256xf32>
    %c8_403 = arith.constant 8 : index
    %c0_404 = arith.constant 0 : index
    %c0_405 = arith.constant 0 : index
    %1004 = vector.load %arg2[%c8_403, %c0_404, %c0_405] : memref<9x1x256xf32, #tpu.memory_space<vmem>>, vector<1x1x256xf32>
    %1005 = vector.shape_cast %1004 : vector<1x1x256xf32> to vector<1x256xf32>
    %1006 = vector.broadcast %1005 : vector<1x256xf32> to vector<8x256xf32>
    %1007 = arith.mulf %1003, %1006 : vector<8x256xf32>
    %1008 = tpu.concatenate %958, %965, %972, %979, %950, %986, %993, %1000, %1007 in 0 : vector<8x256xf32>, vector<8x256xf32>, vector<8x256xf32>, vector<8x256xf32>, vector<8x256xf32>, vector<8x256xf32>, vector<8x256xf32>, vector<8x256xf32>, vector<8x256xf32> -> vector<72x256xf32>
    %1009 = arith.truncf %1008 : vector<72x256xf32> to vector<72x256xbf16>
    %c0_406 = arith.constant 0 : index
    %c0_407 = arith.constant 0 : index
    %1010 = vector.load %arg20[%c0_406, %c0_407] : memref<8x72xbf16, #tpu.memory_space<vmem>>, vector<8x72xbf16>
    %cst_408 = arith.constant dense<0.000000e+00> : vector<8x256xf32>
    %1011 = tpu.matmul %1010, %1009, %cst_408 {dimension_numbers = #tpu.dot_dimension_numbers<[1], [0], [0], [1], [0, 0, 1, 1], [], []>} : vector<8x72xbf16>, vector<72x256xbf16>, vector<8x256xf32> -> vector<8x256xf32>
    %1012 = arith.addf %951, %1011 : vector<8x256xf32>
    %1013 = vector.extract_strided_slice %171 {offsets = [0, 239], sizes = [8, 17], strides = [1, 1]} : vector<8x256xf32> to vector<8x17xf32>
    %1014 = vector.extract_strided_slice %171 {offsets = [0, 0], sizes = [8, 239], strides = [1, 1]} : vector<8x256xf32> to vector<8x239xf32>
    %1015 = tpu.concatenate %1013, %1014 in 1 : vector<8x17xf32>, vector<8x239xf32> -> vector<8x256xf32>
    %c0_409 = arith.constant 0 : index
    %c0_410 = arith.constant 0 : index
    %c0_411 = arith.constant 0 : index
    %1016 = vector.load %arg2[%c0_409, %c0_410, %c0_411] : memref<9x1x256xf32, #tpu.memory_space<vmem>>, vector<1x1x256xf32>
    %1017 = vector.shape_cast %1016 : vector<1x1x256xf32> to vector<1x256xf32>
    %1018 = vector.broadcast %1017 : vector<1x256xf32> to vector<8x256xf32>
    %1019 = arith.mulf %1015, %1018 : vector<8x256xf32>
    %1020 = vector.extract_strided_slice %171 {offsets = [0, 240], sizes = [8, 16], strides = [1, 1]} : vector<8x256xf32> to vector<8x16xf32>
    %1021 = vector.extract_strided_slice %171 {offsets = [0, 0], sizes = [8, 240], strides = [1, 1]} : vector<8x256xf32> to vector<8x240xf32>
    %1022 = tpu.concatenate %1020, %1021 in 1 : vector<8x16xf32>, vector<8x240xf32> -> vector<8x256xf32>
    %c1_412 = arith.constant 1 : index
    %c0_413 = arith.constant 0 : index
    %c0_414 = arith.constant 0 : index
    %1023 = vector.load %arg2[%c1_412, %c0_413, %c0_414] : memref<9x1x256xf32, #tpu.memory_space<vmem>>, vector<1x1x256xf32>
    %1024 = vector.shape_cast %1023 : vector<1x1x256xf32> to vector<1x256xf32>
    %1025 = vector.broadcast %1024 : vector<1x256xf32> to vector<8x256xf32>
    %1026 = arith.mulf %1022, %1025 : vector<8x256xf32>
    %1027 = vector.extract_strided_slice %171 {offsets = [0, 241], sizes = [8, 15], strides = [1, 1]} : vector<8x256xf32> to vector<8x15xf32>
    %1028 = vector.extract_strided_slice %171 {offsets = [0, 0], sizes = [8, 241], strides = [1, 1]} : vector<8x256xf32> to vector<8x241xf32>
    %1029 = tpu.concatenate %1027, %1028 in 1 : vector<8x15xf32>, vector<8x241xf32> -> vector<8x256xf32>
    %c2_415 = arith.constant 2 : index
    %c0_416 = arith.constant 0 : index
    %c0_417 = arith.constant 0 : index
    %1030 = vector.load %arg2[%c2_415, %c0_416, %c0_417] : memref<9x1x256xf32, #tpu.memory_space<vmem>>, vector<1x1x256xf32>
    %1031 = vector.shape_cast %1030 : vector<1x1x256xf32> to vector<1x256xf32>
    %1032 = vector.broadcast %1031 : vector<1x256xf32> to vector<8x256xf32>
    %1033 = arith.mulf %1029, %1032 : vector<8x256xf32>
    %1034 = vector.extract_strided_slice %171 {offsets = [0, 255], sizes = [8, 1], strides = [1, 1]} : vector<8x256xf32> to vector<8x1xf32>
    %1035 = vector.extract_strided_slice %171 {offsets = [0, 0], sizes = [8, 255], strides = [1, 1]} : vector<8x256xf32> to vector<8x255xf32>
    %1036 = tpu.concatenate %1034, %1035 in 1 : vector<8x1xf32>, vector<8x255xf32> -> vector<8x256xf32>
    %c3_418 = arith.constant 3 : index
    %c0_419 = arith.constant 0 : index
    %c0_420 = arith.constant 0 : index
    %1037 = vector.load %arg2[%c3_418, %c0_419, %c0_420] : memref<9x1x256xf32, #tpu.memory_space<vmem>>, vector<1x1x256xf32>
    %1038 = vector.shape_cast %1037 : vector<1x1x256xf32> to vector<1x256xf32>
    %1039 = vector.broadcast %1038 : vector<1x256xf32> to vector<8x256xf32>
    %1040 = arith.mulf %1036, %1039 : vector<8x256xf32>
    %1041 = vector.extract_strided_slice %171 {offsets = [0, 1], sizes = [8, 255], strides = [1, 1]} : vector<8x256xf32> to vector<8x255xf32>
    %1042 = vector.extract_strided_slice %171 {offsets = [0, 0], sizes = [8, 1], strides = [1, 1]} : vector<8x256xf32> to vector<8x1xf32>
    %1043 = tpu.concatenate %1041, %1042 in 1 : vector<8x255xf32>, vector<8x1xf32> -> vector<8x256xf32>
    %c5_421 = arith.constant 5 : index
    %c0_422 = arith.constant 0 : index
    %c0_423 = arith.constant 0 : index
    %1044 = vector.load %arg2[%c5_421, %c0_422, %c0_423] : memref<9x1x256xf32, #tpu.memory_space<vmem>>, vector<1x1x256xf32>
    %1045 = vector.shape_cast %1044 : vector<1x1x256xf32> to vector<1x256xf32>
    %1046 = vector.broadcast %1045 : vector<1x256xf32> to vector<8x256xf32>
    %1047 = arith.mulf %1043, %1046 : vector<8x256xf32>
    %1048 = vector.extract_strided_slice %171 {offsets = [0, 15], sizes = [8, 241], strides = [1, 1]} : vector<8x256xf32> to vector<8x241xf32>
    %1049 = vector.extract_strided_slice %171 {offsets = [0, 0], sizes = [8, 15], strides = [1, 1]} : vector<8x256xf32> to vector<8x15xf32>
    %1050 = tpu.concatenate %1048, %1049 in 1 : vector<8x241xf32>, vector<8x15xf32> -> vector<8x256xf32>
    %c6_424 = arith.constant 6 : index
    %c0_425 = arith.constant 0 : index
    %c0_426 = arith.constant 0 : index
    %1051 = vector.load %arg2[%c6_424, %c0_425, %c0_426] : memref<9x1x256xf32, #tpu.memory_space<vmem>>, vector<1x1x256xf32>
    %1052 = vector.shape_cast %1051 : vector<1x1x256xf32> to vector<1x256xf32>
    %1053 = vector.broadcast %1052 : vector<1x256xf32> to vector<8x256xf32>
    %1054 = arith.mulf %1050, %1053 : vector<8x256xf32>
    %1055 = vector.extract_strided_slice %171 {offsets = [0, 16], sizes = [8, 240], strides = [1, 1]} : vector<8x256xf32> to vector<8x240xf32>
    %1056 = vector.extract_strided_slice %171 {offsets = [0, 0], sizes = [8, 16], strides = [1, 1]} : vector<8x256xf32> to vector<8x16xf32>
    %1057 = tpu.concatenate %1055, %1056 in 1 : vector<8x240xf32>, vector<8x16xf32> -> vector<8x256xf32>
    %c7_427 = arith.constant 7 : index
    %c0_428 = arith.constant 0 : index
    %c0_429 = arith.constant 0 : index
    %1058 = vector.load %arg2[%c7_427, %c0_428, %c0_429] : memref<9x1x256xf32, #tpu.memory_space<vmem>>, vector<1x1x256xf32>
    %1059 = vector.shape_cast %1058 : vector<1x1x256xf32> to vector<1x256xf32>
    %1060 = vector.broadcast %1059 : vector<1x256xf32> to vector<8x256xf32>
    %1061 = arith.mulf %1057, %1060 : vector<8x256xf32>
    %1062 = vector.extract_strided_slice %171 {offsets = [0, 17], sizes = [8, 239], strides = [1, 1]} : vector<8x256xf32> to vector<8x239xf32>
    %1063 = vector.extract_strided_slice %171 {offsets = [0, 0], sizes = [8, 17], strides = [1, 1]} : vector<8x256xf32> to vector<8x17xf32>
    %1064 = tpu.concatenate %1062, %1063 in 1 : vector<8x239xf32>, vector<8x17xf32> -> vector<8x256xf32>
    %c8_430 = arith.constant 8 : index
    %c0_431 = arith.constant 0 : index
    %c0_432 = arith.constant 0 : index
    %1065 = vector.load %arg2[%c8_430, %c0_431, %c0_432] : memref<9x1x256xf32, #tpu.memory_space<vmem>>, vector<1x1x256xf32>
    %1066 = vector.shape_cast %1065 : vector<1x1x256xf32> to vector<1x256xf32>
    %1067 = vector.broadcast %1066 : vector<1x256xf32> to vector<8x256xf32>
    %1068 = arith.mulf %1064, %1067 : vector<8x256xf32>
    %1069 = tpu.concatenate %1019, %1026, %1033, %1040, %171, %1047, %1054, %1061, %1068 in 0 : vector<8x256xf32>, vector<8x256xf32>, vector<8x256xf32>, vector<8x256xf32>, vector<8x256xf32>, vector<8x256xf32>, vector<8x256xf32>, vector<8x256xf32>, vector<8x256xf32> -> vector<72x256xf32>
    %1070 = arith.truncf %1069 : vector<72x256xf32> to vector<72x256xbf16>
    %c0_433 = arith.constant 0 : index
    %c0_434 = arith.constant 0 : index
    %1071 = vector.load %arg21[%c0_433, %c0_434] : memref<8x72xbf16, #tpu.memory_space<vmem>>, vector<8x72xbf16>
    %cst_435 = arith.constant dense<0.000000e+00> : vector<8x256xf32>
    %1072 = tpu.matmul %1071, %1070, %cst_435 {dimension_numbers = #tpu.dot_dimension_numbers<[1], [0], [0], [1], [0, 0, 1, 1], [], []>} : vector<8x72xbf16>, vector<72x256xbf16>, vector<8x256xf32> -> vector<8x256xf32>
    %1073 = arith.addf %1012, %1072 : vector<8x256xf32>
    %cst_436 = arith.constant dense<0.000000e+00> : vector<8xf32>
    %1074 = vector.multi_reduction <add>, %1073, %cst_436 [1] : vector<8x256xf32> to vector<8xf32>
    %1075 = vector.shape_cast %1074 : vector<8xf32> to vector<8x1xf32>
    %cst_437 = arith.constant 2.560000e+02 : f32
    %1076 = vector.broadcast %cst_437 : f32 to vector<8x1xf32>
    %1077 = arith.divf %1075, %1076 : vector<8x1xf32>
    %1078 = vector.broadcast %1077 : vector<8x1xf32> to vector<8x256xf32>
    %1079 = arith.subf %1073, %1078 : vector<8x256xf32>
    %1080 = arith.mulf %1079, %1079 : vector<8x256xf32>
    %cst_438 = arith.constant dense<0.000000e+00> : vector<8xf32>
    %1081 = vector.multi_reduction <add>, %1080, %cst_438 [1] : vector<8x256xf32> to vector<8xf32>
    %1082 = vector.shape_cast %1081 : vector<8xf32> to vector<8x1xf32>
    %cst_439 = arith.constant 2.560000e+02 : f32
    %1083 = vector.broadcast %cst_439 : f32 to vector<8x1xf32>
    %1084 = arith.divf %1082, %1083 : vector<8x1xf32>
    %1085 = vector.broadcast %1077 : vector<8x1xf32> to vector<8x256xf32>
    %1086 = arith.subf %1073, %1085 : vector<8x256xf32>
    %cst_440 = arith.constant 9.99999974E-6 : f32
    %1087 = vector.broadcast %cst_440 : f32 to vector<8x1xf32>
    %1088 = arith.addf %1084, %1087 : vector<8x1xf32>
    %1089 = math.rsqrt %1088 : vector<8x1xf32>
    %1090 = vector.broadcast %1089 : vector<8x1xf32> to vector<8x256xf32>
    %1091 = arith.mulf %1086, %1090 : vector<8x256xf32>
    %cst_441 = arith.constant 0.000000e+00 : f32
    %1092 = vector.broadcast %cst_441 : f32 to vector<8x256xf32>
    %1093 = arith.cmpf oge, %1091, %1092 : vector<8x256xf32>
    %cst_442 = arith.constant 2.000000e-01 : f32
    %1094 = vector.broadcast %cst_442 : f32 to vector<8x256xf32>
    %1095 = arith.mulf %1094, %1091 : vector<8x256xf32>
    %1096 = arith.select %1093, %1091, %1095 : vector<8x256xi1>, vector<8x256xf32>
    %cst_443 = arith.constant 0.000000e+00 : f32
    %1097 = vector.broadcast %cst_443 : f32 to vector<8x256xf32>
    %1098 = vector.extract_strided_slice %1096 {offsets = [0, 239], sizes = [8, 17], strides = [1, 1]} : vector<8x256xf32> to vector<8x17xf32>
    %1099 = vector.extract_strided_slice %1096 {offsets = [0, 0], sizes = [8, 239], strides = [1, 1]} : vector<8x256xf32> to vector<8x239xf32>
    %1100 = tpu.concatenate %1098, %1099 in 1 : vector<8x17xf32>, vector<8x239xf32> -> vector<8x256xf32>
    %c0_444 = arith.constant 0 : index
    %c0_445 = arith.constant 0 : index
    %c0_446 = arith.constant 0 : index
    %1101 = vector.load %arg2[%c0_444, %c0_445, %c0_446] : memref<9x1x256xf32, #tpu.memory_space<vmem>>, vector<1x1x256xf32>
    %1102 = vector.shape_cast %1101 : vector<1x1x256xf32> to vector<1x256xf32>
    %1103 = vector.broadcast %1102 : vector<1x256xf32> to vector<8x256xf32>
    %1104 = arith.mulf %1100, %1103 : vector<8x256xf32>
    %1105 = vector.extract_strided_slice %1096 {offsets = [0, 240], sizes = [8, 16], strides = [1, 1]} : vector<8x256xf32> to vector<8x16xf32>
    %1106 = vector.extract_strided_slice %1096 {offsets = [0, 0], sizes = [8, 240], strides = [1, 1]} : vector<8x256xf32> to vector<8x240xf32>
    %1107 = tpu.concatenate %1105, %1106 in 1 : vector<8x16xf32>, vector<8x240xf32> -> vector<8x256xf32>
    %c1_447 = arith.constant 1 : index
    %c0_448 = arith.constant 0 : index
    %c0_449 = arith.constant 0 : index
    %1108 = vector.load %arg2[%c1_447, %c0_448, %c0_449] : memref<9x1x256xf32, #tpu.memory_space<vmem>>, vector<1x1x256xf32>
    %1109 = vector.shape_cast %1108 : vector<1x1x256xf32> to vector<1x256xf32>
    %1110 = vector.broadcast %1109 : vector<1x256xf32> to vector<8x256xf32>
    %1111 = arith.mulf %1107, %1110 : vector<8x256xf32>
    %1112 = vector.extract_strided_slice %1096 {offsets = [0, 241], sizes = [8, 15], strides = [1, 1]} : vector<8x256xf32> to vector<8x15xf32>
    %1113 = vector.extract_strided_slice %1096 {offsets = [0, 0], sizes = [8, 241], strides = [1, 1]} : vector<8x256xf32> to vector<8x241xf32>
    %1114 = tpu.concatenate %1112, %1113 in 1 : vector<8x15xf32>, vector<8x241xf32> -> vector<8x256xf32>
    %c2_450 = arith.constant 2 : index
    %c0_451 = arith.constant 0 : index
    %c0_452 = arith.constant 0 : index
    %1115 = vector.load %arg2[%c2_450, %c0_451, %c0_452] : memref<9x1x256xf32, #tpu.memory_space<vmem>>, vector<1x1x256xf32>
    %1116 = vector.shape_cast %1115 : vector<1x1x256xf32> to vector<1x256xf32>
    %1117 = vector.broadcast %1116 : vector<1x256xf32> to vector<8x256xf32>
    %1118 = arith.mulf %1114, %1117 : vector<8x256xf32>
    %1119 = vector.extract_strided_slice %1096 {offsets = [0, 255], sizes = [8, 1], strides = [1, 1]} : vector<8x256xf32> to vector<8x1xf32>
    %1120 = vector.extract_strided_slice %1096 {offsets = [0, 0], sizes = [8, 255], strides = [1, 1]} : vector<8x256xf32> to vector<8x255xf32>
    %1121 = tpu.concatenate %1119, %1120 in 1 : vector<8x1xf32>, vector<8x255xf32> -> vector<8x256xf32>
    %c3_453 = arith.constant 3 : index
    %c0_454 = arith.constant 0 : index
    %c0_455 = arith.constant 0 : index
    %1122 = vector.load %arg2[%c3_453, %c0_454, %c0_455] : memref<9x1x256xf32, #tpu.memory_space<vmem>>, vector<1x1x256xf32>
    %1123 = vector.shape_cast %1122 : vector<1x1x256xf32> to vector<1x256xf32>
    %1124 = vector.broadcast %1123 : vector<1x256xf32> to vector<8x256xf32>
    %1125 = arith.mulf %1121, %1124 : vector<8x256xf32>
    %1126 = vector.extract_strided_slice %1096 {offsets = [0, 1], sizes = [8, 255], strides = [1, 1]} : vector<8x256xf32> to vector<8x255xf32>
    %1127 = vector.extract_strided_slice %1096 {offsets = [0, 0], sizes = [8, 1], strides = [1, 1]} : vector<8x256xf32> to vector<8x1xf32>
    %1128 = tpu.concatenate %1126, %1127 in 1 : vector<8x255xf32>, vector<8x1xf32> -> vector<8x256xf32>
    %c5_456 = arith.constant 5 : index
    %c0_457 = arith.constant 0 : index
    %c0_458 = arith.constant 0 : index
    %1129 = vector.load %arg2[%c5_456, %c0_457, %c0_458] : memref<9x1x256xf32, #tpu.memory_space<vmem>>, vector<1x1x256xf32>
    %1130 = vector.shape_cast %1129 : vector<1x1x256xf32> to vector<1x256xf32>
    %1131 = vector.broadcast %1130 : vector<1x256xf32> to vector<8x256xf32>
    %1132 = arith.mulf %1128, %1131 : vector<8x256xf32>
    %1133 = vector.extract_strided_slice %1096 {offsets = [0, 15], sizes = [8, 241], strides = [1, 1]} : vector<8x256xf32> to vector<8x241xf32>
    %1134 = vector.extract_strided_slice %1096 {offsets = [0, 0], sizes = [8, 15], strides = [1, 1]} : vector<8x256xf32> to vector<8x15xf32>
    %1135 = tpu.concatenate %1133, %1134 in 1 : vector<8x241xf32>, vector<8x15xf32> -> vector<8x256xf32>
    %c6_459 = arith.constant 6 : index
    %c0_460 = arith.constant 0 : index
    %c0_461 = arith.constant 0 : index
    %1136 = vector.load %arg2[%c6_459, %c0_460, %c0_461] : memref<9x1x256xf32, #tpu.memory_space<vmem>>, vector<1x1x256xf32>
    %1137 = vector.shape_cast %1136 : vector<1x1x256xf32> to vector<1x256xf32>
    %1138 = vector.broadcast %1137 : vector<1x256xf32> to vector<8x256xf32>
    %1139 = arith.mulf %1135, %1138 : vector<8x256xf32>
    %1140 = vector.extract_strided_slice %1096 {offsets = [0, 16], sizes = [8, 240], strides = [1, 1]} : vector<8x256xf32> to vector<8x240xf32>
    %1141 = vector.extract_strided_slice %1096 {offsets = [0, 0], sizes = [8, 16], strides = [1, 1]} : vector<8x256xf32> to vector<8x16xf32>
    %1142 = tpu.concatenate %1140, %1141 in 1 : vector<8x240xf32>, vector<8x16xf32> -> vector<8x256xf32>
    %c7_462 = arith.constant 7 : index
    %c0_463 = arith.constant 0 : index
    %c0_464 = arith.constant 0 : index
    %1143 = vector.load %arg2[%c7_462, %c0_463, %c0_464] : memref<9x1x256xf32, #tpu.memory_space<vmem>>, vector<1x1x256xf32>
    %1144 = vector.shape_cast %1143 : vector<1x1x256xf32> to vector<1x256xf32>
    %1145 = vector.broadcast %1144 : vector<1x256xf32> to vector<8x256xf32>
    %1146 = arith.mulf %1142, %1145 : vector<8x256xf32>
    %1147 = vector.extract_strided_slice %1096 {offsets = [0, 17], sizes = [8, 239], strides = [1, 1]} : vector<8x256xf32> to vector<8x239xf32>
    %1148 = vector.extract_strided_slice %1096 {offsets = [0, 0], sizes = [8, 17], strides = [1, 1]} : vector<8x256xf32> to vector<8x17xf32>
    %1149 = tpu.concatenate %1147, %1148 in 1 : vector<8x239xf32>, vector<8x17xf32> -> vector<8x256xf32>
    %c8_465 = arith.constant 8 : index
    %c0_466 = arith.constant 0 : index
    %c0_467 = arith.constant 0 : index
    %1150 = vector.load %arg2[%c8_465, %c0_466, %c0_467] : memref<9x1x256xf32, #tpu.memory_space<vmem>>, vector<1x1x256xf32>
    %1151 = vector.shape_cast %1150 : vector<1x1x256xf32> to vector<1x256xf32>
    %1152 = vector.broadcast %1151 : vector<1x256xf32> to vector<8x256xf32>
    %1153 = arith.mulf %1149, %1152 : vector<8x256xf32>
    %1154 = tpu.concatenate %1104, %1111, %1118, %1125, %1096, %1132, %1139, %1146, %1153 in 0 : vector<8x256xf32>, vector<8x256xf32>, vector<8x256xf32>, vector<8x256xf32>, vector<8x256xf32>, vector<8x256xf32>, vector<8x256xf32>, vector<8x256xf32>, vector<8x256xf32> -> vector<72x256xf32>
    %1155 = arith.truncf %1154 : vector<72x256xf32> to vector<72x256xbf16>
    %c0_468 = arith.constant 0 : index
    %c0_469 = arith.constant 0 : index
    %1156 = vector.load %arg22[%c0_468, %c0_469] : memref<8x72xbf16, #tpu.memory_space<vmem>>, vector<8x72xbf16>
    %cst_470 = arith.constant dense<0.000000e+00> : vector<8x256xf32>
    %1157 = tpu.matmul %1156, %1155, %cst_470 {dimension_numbers = #tpu.dot_dimension_numbers<[1], [0], [0], [1], [0, 0, 1, 1], [], []>} : vector<8x72xbf16>, vector<72x256xbf16>, vector<8x256xf32> -> vector<8x256xf32>
    %1158 = arith.addf %1097, %1157 : vector<8x256xf32>
    %cst_471 = arith.constant dense<0.000000e+00> : vector<8xf32>
    %1159 = vector.multi_reduction <add>, %1158, %cst_471 [1] : vector<8x256xf32> to vector<8xf32>
    %1160 = vector.shape_cast %1159 : vector<8xf32> to vector<8x1xf32>
    %cst_472 = arith.constant 2.560000e+02 : f32
    %1161 = vector.broadcast %cst_472 : f32 to vector<8x1xf32>
    %1162 = arith.divf %1160, %1161 : vector<8x1xf32>
    %1163 = vector.broadcast %1162 : vector<8x1xf32> to vector<8x256xf32>
    %1164 = arith.subf %1158, %1163 : vector<8x256xf32>
    %1165 = arith.mulf %1164, %1164 : vector<8x256xf32>
    %cst_473 = arith.constant dense<0.000000e+00> : vector<8xf32>
    %1166 = vector.multi_reduction <add>, %1165, %cst_473 [1] : vector<8x256xf32> to vector<8xf32>
    %1167 = vector.shape_cast %1166 : vector<8xf32> to vector<8x1xf32>
    %cst_474 = arith.constant 2.560000e+02 : f32
    %1168 = vector.broadcast %cst_474 : f32 to vector<8x1xf32>
    %1169 = arith.divf %1167, %1168 : vector<8x1xf32>
    %1170 = vector.broadcast %1162 : vector<8x1xf32> to vector<8x256xf32>
    %1171 = arith.subf %1158, %1170 : vector<8x256xf32>
    %cst_475 = arith.constant 9.99999974E-6 : f32
    %1172 = vector.broadcast %cst_475 : f32 to vector<8x1xf32>
    %1173 = arith.addf %1169, %1172 : vector<8x1xf32>
    %1174 = math.rsqrt %1173 : vector<8x1xf32>
    %1175 = vector.broadcast %1174 : vector<8x1xf32> to vector<8x256xf32>
    %1176 = arith.mulf %1171, %1175 : vector<8x256xf32>
    %cst_476 = arith.constant 0.000000e+00 : f32
    %1177 = vector.broadcast %cst_476 : f32 to vector<8x256xf32>
    %1178 = arith.cmpf oge, %1176, %1177 : vector<8x256xf32>
    %cst_477 = arith.constant 2.000000e-01 : f32
    %1179 = vector.broadcast %cst_477 : f32 to vector<8x256xf32>
    %1180 = arith.mulf %1179, %1176 : vector<8x256xf32>
    %1181 = arith.select %1178, %1176, %1180 : vector<8x256xi1>, vector<8x256xf32>
    %c0_478 = arith.constant 0 : index
    %c0_479 = arith.constant 0 : index
    %1182 = vector.load %arg23[%c0_478, %c0_479] : memref<2x8xbf16, #tpu.memory_space<vmem>>, vector<2x8xbf16>
    %1183 = arith.truncf %1181 : vector<8x256xf32> to vector<8x256xbf16>
    %cst_480 = arith.constant dense<0.000000e+00> : vector<2x256xf32>
    %1184 = tpu.matmul %1182, %1183, %cst_480 {dimension_numbers = #tpu.dot_dimension_numbers<[1], [0], [0], [1], [0, 0, 1, 1], [], []>} : vector<2x8xbf16>, vector<8x256xbf16>, vector<2x256xf32> -> vector<2x256xf32>
    %c0_481 = arith.constant 0 : index
    %c0_482 = arith.constant 0 : index
    %1185 = vector.load %arg24[%c0_481, %c0_482] : memref<2x1xf32, #tpu.memory_space<vmem>>, vector<2x1xf32>
    %1186 = vector.broadcast %1185 : vector<2x1xf32> to vector<2x256xf32>
    %1187 = arith.addf %1184, %1186 : vector<2x256xf32>
    %c0_483 = arith.constant 0 : index
    %c0_484 = arith.constant 0 : index
    %c0_485 = arith.constant 0 : index
    %1188 = vector.load %arg25[%c0_483, %c0_484, %c0_485] : memref<1x2x256xf32, #tpu.memory_space<vmem>>, vector<1x2x256xf32>
    %1189 = vector.shape_cast %1188 : vector<1x2x256xf32> to vector<2x256xf32>
    %1190 = vector.shape_cast %1187 : vector<2x256xf32> to vector<1x2x256xf32>
    tpu.vector_store %arg25[%c0_483, %c0_484, %c0_485], %1190 {strides = array<i32>} : memref<1x2x256xf32, #tpu.memory_space<vmem>>, vector<1x2x256xf32>,
    return
  }
  func.func @transform_0(%arg0: i32) -> (i32, i32, i32) {
    %c0_i32 = arith.constant 0 : i32
    %c0_i32_0 = arith.constant 0 : i32
    %c0_i32_1 = arith.constant 0 : i32
    return %arg0, %c0_i32, %c0_i32_0 : i32, i32, i32
  }
  func.func @transform_1(%arg0: i32) -> (i32, i32, i32) {
    %c0_i32 = arith.constant 0 : i32
    %c0_i32_0 = arith.constant 0 : i32
    %c0_i32_1 = arith.constant 0 : i32
    %c0_i32_2 = arith.constant 0 : i32
    return %c0_i32, %c0_i32_0, %c0_i32_1 : i32, i32, i32
  }
  func.func @transform_2(%arg0: i32) -> (i32, i32, i32) {
    %c0_i32 = arith.constant 0 : i32
    %c0_i32_0 = arith.constant 0 : i32
    %c0_i32_1 = arith.constant 0 : i32
    %c0_i32_2 = arith.constant 0 : i32
    return %c0_i32, %c0_i32_0, %c0_i32_1 : i32, i32, i32
  }
  func.func @transform_3(%arg0: i32) -> (i32, i32, i32) {
    %c0_i32 = arith.constant 0 : i32
    %c0_i32_0 = arith.constant 0 : i32
    %c0_i32_1 = arith.constant 0 : i32
    %c0_i32_2 = arith.constant 0 : i32
    return %c0_i32, %c0_i32_0, %c0_i32_1 : i32, i32, i32
  }
  func.func @transform_4(%arg0: i32) -> (i32, i32) {
    %c0_i32 = arith.constant 0 : i32
    %c0_i32_0 = arith.constant 0 : i32
    %c0_i32_1 = arith.constant 0 : i32
    return %c0_i32, %c0_i32_0 : i32, i32
  }
  func.func @transform_5(%arg0: i32) -> (i32, i32) {
    %c0_i32 = arith.constant 0 : i32
    %c0_i32_0 = arith.constant 0 : i32
    %c0_i32_1 = arith.constant 0 : i32
    return %c0_i32, %c0_i32_0 : i32, i32
  }
  func.func @transform_6(%arg0: i32) -> (i32, i32, i32) {
    %c0_i32 = arith.constant 0 : i32
    %c0_i32_0 = arith.constant 0 : i32
    %c0_i32_1 = arith.constant 0 : i32
    %c0_i32_2 = arith.constant 0 : i32
    return %c0_i32, %c0_i32_0, %c0_i32_1 : i32, i32, i32
  }
  func.func @transform_7(%arg0: i32) -> (i32, i32, i32) {
    %c0_i32 = arith.constant 0 : i32
    %c0_i32_0 = arith.constant 0 : i32
    %c0_i32_1 = arith.constant 0 : i32
    %c0_i32_2 = arith.constant 0 : i32
    return %c0_i32, %c0_i32_0, %c0_i32_1 : i32, i32, i32
  }
  func.func @transform_8(%arg0: i32) -> (i32, i32) {
    %c0_i32 = arith.constant 0 : i32
    %c0_i32_0 = arith.constant 0 : i32
    %c0_i32_1 = arith.constant 0 : i32
    return %c0_i32, %c0_i32_0 : i32, i32
  }
  func.func @transform_9(%arg0: i32) -> (i32, i32) {
    %c0_i32 = arith.constant 0 : i32
    %c0_i32_0 = arith.constant 0 : i32
    %c0_i32_1 = arith.constant 0 : i32
    return %c0_i32, %c0_i32_0 : i32, i32
  }
  func.func @transform_10(%arg0: i32) -> (i32, i32) {
    %c0_i32 = arith.constant 0 : i32
    %c0_i32_0 = arith.constant 0 : i32
    %c0_i32_1 = arith.constant 0 : i32
    return %c0_i32, %c0_i32_0 : i32, i32
  }
  func.func @transform_11(%arg0: i32) -> (i32, i32) {
    %c0_i32 = arith.constant 0 : i32
    %c0_i32_0 = arith.constant 0 : i32
    %c0_i32_1 = arith.constant 0 : i32
    return %c0_i32, %c0_i32_0 : i32, i32
  }
  func.func @transform_12(%arg0: i32) -> (i32, i32) {
    %c0_i32 = arith.constant 0 : i32
    %c0_i32_0 = arith.constant 0 : i32
    %c0_i32_1 = arith.constant 0 : i32
    return %c0_i32, %c0_i32_0 : i32, i32
  }
  func.func @transform_13(%arg0: i32) -> (i32, i32) {
    %c0_i32 = arith.constant 0 : i32
    %c0_i32_0 = arith.constant 0 : i32
    %c0_i32_1 = arith.constant 0 : i32
    return %c0_i32, %c0_i32_0 : i32, i32
  }
  func.func @transform_14(%arg0: i32) -> (i32, i32) {
    %c0_i32 = arith.constant 0 : i32
    %c0_i32_0 = arith.constant 0 : i32
    %c0_i32_1 = arith.constant 0 : i32
    return %c0_i32, %c0_i32_0 : i32, i32
  }
  func.func @transform_15(%arg0: i32) -> (i32, i32) {
    %c0_i32 = arith.constant 0 : i32
    %c0_i32_0 = arith.constant 0 : i32
    %c0_i32_1 = arith.constant 0 : i32
    return %c0_i32, %c0_i32_0 : i32, i32
  }
  func.func @transform_16(%arg0: i32) -> (i32, i32) {
    %c0_i32 = arith.constant 0 : i32
    %c0_i32_0 = arith.constant 0 : i32
    %c0_i32_1 = arith.constant 0 : i32
    return %c0_i32, %c0_i32_0 : i32, i32
  }
  func.func @transform_17(%arg0: i32) -> (i32, i32) {
    %c0_i32 = arith.constant 0 : i32
    %c0_i32_0 = arith.constant 0 : i32
    %c0_i32_1 = arith.constant 0 : i32
    return %c0_i32, %c0_i32_0 : i32, i32
  }
  func.func @transform_18(%arg0: i32) -> (i32, i32) {
    %c0_i32 = arith.constant 0 : i32
    %c0_i32_0 = arith.constant 0 : i32
    %c0_i32_1 = arith.constant 0 : i32
    return %c0_i32, %c0_i32_0 : i32, i32
  }
  func.func @transform_19(%arg0: i32) -> (i32, i32) {
    %c0_i32 = arith.constant 0 : i32
    %c0_i32_0 = arith.constant 0 : i32
    %c0_i32_1 = arith.constant 0 : i32
    return %c0_i32, %c0_i32_0 : i32, i32
  }
  func.func @transform_20(%arg0: i32) -> (i32, i32) {
    %c0_i32 = arith.constant 0 : i32
    %c0_i32_0 = arith.constant 0 : i32
    %c0_i32_1 = arith.constant 0 : i32
    return %c0_i32, %c0_i32_0 : i32, i32
  }
  func.func @transform_21(%arg0: i32) -> (i32, i32) {
    %c0_i32 = arith.constant 0 : i32
    %c0_i32_0 = arith.constant 0 : i32
    %c0_i32_1 = arith.constant 0 : i32
    return %c0_i32, %c0_i32_0 : i32, i32
  }
  func.func @transform_22(%arg0: i32) -> (i32, i32) {
    %c0_i32 = arith.constant 0 : i32
    %c0_i32_0 = arith.constant 0 : i32
    %c0_i32_1 = arith.constant 0 : i32
    return %c0_i32, %c0_i32_0 : i32, i32
  }
  func.func @transform_23(%arg0: i32) -> (i32, i32) {
    %c0_i32 = arith.constant 0 : i32
    %c0_i32_0 = arith.constant 0 : i32
    %c0_i32_1 = arith.constant 0 : i32
    return %c0_i32, %c0_i32_0 : i32, i32
  }
  func.func @transform_24(%arg0: i32) -> (i32, i32, i32) {
    %c0_i32 = arith.constant 0 : i32
    %c0_i32_0 = arith.constant 0 : i32
    %c0_i32_1 = arith.constant 0 : i32
    return %arg0, %c0_i32, %c0_i32_0 : i32, i32, i32
  }
}

</mosaic_0001>

<llo_original>
// kernel: norm_unet_forward.1
$region0: #{norm_unet_forward.1}
  #allocation0 [shape = 'u32[]', space=smem, size = 0x4, offset = 0x4, fixed_abs, tag = 'smem constant byte address 0x4 - core index']
  #allocation1 [shape = 'u32[144,128]{1,0:T(1,128)}', space=vmem, size = 0x12000, scoped, tag = 'internal scratch']
  %s0 = inlined_call_operand.vmem [shape: f32[2,2,256], index: 0, kind: input, shape index: {}]
  %s1 = inlined_call_operand.vmem [shape: f32[9,1,256], index: 1, kind: input, shape index: {}]
  %s2 = inlined_call_operand.vmem [shape: f32[9,1,64], index: 2, kind: input, shape index: {}]
  %s3 = inlined_call_operand.vmem [shape: f32[9,1,16], index: 3, kind: input, shape index: {}]
  %s4 = inlined_call_operand.vmem [shape: bf16[256,64], index: 4, kind: input, shape index: {}]
  %s5 = inlined_call_operand.vmem [shape: bf16[64,16], index: 5, kind: input, shape index: {}]
  %s6 = inlined_call_operand.vmem [shape: bf16[4,16,64], index: 6, kind: input, shape index: {}]
  %s7 = inlined_call_operand.vmem [shape: bf16[4,64,256], index: 7, kind: input, shape index: {}]
  %s8 = inlined_call_operand.vmem [shape: bf16[8,18], index: 8, kind: input, shape index: {}]
  %s9 = inlined_call_operand.vmem [shape: bf16[8,72], index: 9, kind: input, shape index: {}]
  %s10 = inlined_call_operand.vmem [shape: bf16[16,72], index: 10, kind: input, shape index: {}]
  %s11 = inlined_call_operand.vmem [shape: bf16[16,144], index: 11, kind: input, shape index: {}]
  %s12 = inlined_call_operand.vmem [shape: bf16[32,144], index: 12, kind: input, shape index: {}]
  %s13 = inlined_call_operand.vmem [shape: bf16[32,288], index: 13, kind: input, shape index: {}]
  %s14 = inlined_call_operand.vmem [shape: bf16[64,32], index: 14, kind: input, shape index: {}]
  %s15 = inlined_call_operand.vmem [shape: bf16[16,144], index: 15, kind: input, shape index: {}]
  %s16 = inlined_call_operand.vmem [shape: bf16[16,144], index: 16, kind: input, shape index: {}]
  %s17 = inlined_call_operand.vmem [shape: bf16[16,144], index: 17, kind: input, shape index: {}]
  %s18 = inlined_call_operand.vmem [shape: bf16[32,16], index: 18, kind: input, shape index: {}]
  %s19 = inlined_call_operand.vmem [shape: bf16[8,72], index: 19, kind: input, shape index: {}]
  %s20 = inlined_call_operand.vmem [shape: bf16[8,72], index: 20, kind: input, shape index: {}]
  %s21 = inlined_call_operand.vmem [shape: bf16[8,72], index: 21, kind: input, shape index: {}]
  %s22 = inlined_call_operand.vmem [shape: bf16[2,8], index: 22, kind: input, shape index: {}]
  %s23 = inlined_call_operand.vmem [shape: f32[2,1], index: 23, kind: input, shape index: {}]
  %s24 = inlined_call_operand.vmem [shape: f32[2,2,256], index: 24, kind: output, shape index: {}]
  %s25 = sld [smem:[#allocation0]]
  $region129: #{norm_unet_forward.1} parent=0
    _
  %s27 = ssub.s32 1, %s25
  %s28 = scalar_select 0, %s27, %s25
  loop: start=0, step=1, limit=4
  $region2: #{norm_unet_forward.1} parent=0 // loop_pre_header
    _
  $region3: #{norm_unet_forward.1} parent=0 // loop_header
    %s30 = sphi 0, %s34
    %p31 = scmp.ge.s32.totalorder %s30, 4
    %s40 = sphi 0, %s42
    %s43 = sphi 0, %s40
    %s44 = sphi 0, %s43
    %s60 = sphi 0, %s44
    %s64 = sphi 0, %s64
    %s66 = sphi 0, %s64
    %s67 = sphi 0, %s66
    %s81 = sphi 0, %s67
    %s85 = sphi 0, %s85
    %s87 = sphi 0, %s85
    %s88 = sphi 0, %s87
    %s102 = sphi 0, %s88
    %s106 = sphi 0, %s106
    %s108 = sphi 0, %s106
    %s109 = sphi 0, %s108
    %s123 = sphi 0, %s109
    %s127 = sphi 0, %s127
    %s129 = sphi 0, %s127
    %s130 = sphi 0, %s129
    %s144 = sphi 0, %s130
    %s148 = sphi 0, %s148
    %s150 = sphi 0, %s148
    %s151 = sphi 0, %s150
    %s165 = sphi 0, %s151
    %s169 = sphi 0, %s169
    %s171 = sphi 0, %s169
    %s172 = sphi 0, %s171
    %s186 = sphi 0, %s172
    %s190 = sphi 0, %s190
    %s192 = sphi 0, %s190
    %s193 = sphi 0, %s192
    %s207 = sphi 0, %s193
    %s211 = sphi 0, %s211
    %s213 = sphi 0, %s211
    %s214 = sphi 0, %s213
    %s228 = sphi 0, %s214
    %s232 = sphi 0, %s232
    %s234 = sphi 0, %s232
    %s235 = sphi 0, %s234
    %s249 = sphi 0, %s235
    %s253 = sphi 0, %s253
    %s255 = sphi 0, %s253
    %s256 = sphi 0, %s255
    %s270 = sphi 0, %s256
    %s274 = sphi 0, %s274
    %s276 = sphi 0, %s274
    %s277 = sphi 0, %s276
    %s291 = sphi 0, %s277
    %s295 = sphi 0, %s295
    %s297 = sphi 0, %s295
    %s298 = sphi 0, %s297
    %s312 = sphi 0, %s298
    %s316 = sphi 0, %s316
    %s318 = sphi 0, %s316
    %s319 = sphi 0, %s318
    %s333 = sphi 0, %s319
    %s337 = sphi 0, %s337
    %s339 = sphi 0, %s337
    %s340 = sphi 0, %s339
    %s354 = sphi 0, %s340
    %s358 = sphi 0, %s358
    %s360 = sphi 0, %s358
    %s361 = sphi 0, %s360
    %s375 = sphi 0, %s361
    %s379 = sphi 0, %s379
    %s381 = sphi 0, %s379
    %s382 = sphi 0, %s381
    %s396 = sphi 0, %s382
    %s400 = sphi 0, %s400
    %s402 = sphi 0, %s400
    %s403 = sphi 0, %s402
    %s417 = sphi 0, %s403
    %s421 = sphi 0, %s421
    %s423 = sphi 0, %s421
    %s424 = sphi 0, %s423
    %s438 = sphi 0, %s424
    %s442 = sphi 0, %s442
    %s444 = sphi 0, %s442
    %s445 = sphi 0, %s444
    %s459 = sphi 0, %s445
    %s463 = sphi 0, %s463
    %s465 = sphi 0, %s463
    %s466 = sphi 0, %s465
    %s480 = sphi 0, %s466
    %s484 = sphi 0, %s484
    %s486 = sphi 0, %s484
    %s487 = sphi 0, %s486
    %s501 = sphi 0, %s487
    %s505 = sphi 0, %s505
    %s507 = sphi 0, %s505
    %s508 = sphi 0, %s507
    %s522 = sphi 0, %s508
    %s526 = sphi 0, %s526
    %s528 = sphi 0, %s526
    %s529 = sphi 0, %s528
    %s543 = sphi 0, %s529
    %s549 = sphi 0, %s551
    %s552 = sphi 0, %s549
    %s553 = sphi 0, %s552
    %s569 = sphi 0, %s553
  $region4: #{norm_unet_forward.1} parent=0 // loop_header_branch
    %33 = sbr.rel (%p31) target = $region8
  $region5: #{norm_unet_forward.1} parent=0 // loop_body
    %s35 = ssub.s32 %s30, 1
    %s36 = ssub.s32 %s30, 2
    %s37 = sadd.s32 %s30, 1
    %s38 = ssub.s32 %s30, %s37
    %p39 = scmp.eq.s32.totalorder %s38, 0
    %s41 = sadd.s32 %s40, 1
    %s42 = scalar_select %p39, %s40, %s41
    %p45 = pneg %p39
    %p46 = scmp.eq.s32.totalorder %s30, 1
    %p47 = por %p45, %p46
    %p48 = scmp.ne.s32.totalorder %s40, %s43
    %p49 = scmp.eq.s32.totalorder %s30, 0
    %p50 = por %p48, %p49
    %p51 = scmp.ne.s32.totalorder %s40, %s43
    %p52 = scmp.eq.s32.totalorder %s35, 1
    %p53 = por %p51, %p52
    %p54 = scmp.ne.s32.totalorder %s43, %s44
    %p55 = scmp.eq.s32.totalorder %s35, 0
    %p56 = por %p54, %p55
    %p57 = scmp.ne.s32.totalorder %s43, %s44
    %p58 = scmp.eq.s32.totalorder %s36, 1
    %p59 = por %p57, %p58
    %p61 = scmp.ne.s32.totalorder %s44, %s60
    %p62 = scmp.eq.s32.totalorder %s36, 0
    %p63 = por %p61, %p62
    %s65 = sadd.s32 %s64, 1
    %p68 = scmp.eq.s32.totalorder %s30, 1
    %p69 = scmp.ne.s32.totalorder %s64, %s66
    %p70 = scmp.eq.s32.totalorder %s30, 0
    %p71 = por %p69, %p70
    %p72 = scmp.ne.s32.totalorder %s64, %s66
    %p73 = scmp.eq.s32.totalorder %s35, 1
    %p74 = por %p72, %p73
    %p75 = scmp.ne.s32.totalorder %s66, %s67
    %p76 = scmp.eq.s32.totalorder %s35, 0
    %p77 = por %p75, %p76
    %p78 = scmp.ne.s32.totalorder %s66, %s67
    %p79 = scmp.eq.s32.totalorder %s36, 1
    %p80 = por %p78, %p79
    %p82 = scmp.ne.s32.totalorder %s67, %s81
    %p83 = scmp.eq.s32.totalorder %s36, 0
    %p84 = por %p82, %p83
    %s86 = sadd.s32 %s85, 1
    %p89 = scmp.eq.s32.totalorder %s30, 1
    %p90 = scmp.ne.s32.totalorder %s85, %s87
    %p91 = scmp.eq.s32.totalorder %s30, 0
    %p92 = por %p90, %p91
    %p93 = scmp.ne.s32.totalorder %s85, %s87
    %p94 = scmp.eq.s32.totalorder %s35, 1
    %p95 = por %p93, %p94
    %p96 = scmp.ne.s32.totalorder %s87, %s88
    %p97 = scmp.eq.s32.totalorder %s35, 0
    %p98 = por %p96, %p97
    %p99 = scmp.ne.s32.totalorder %s87, %s88
    %p100 = scmp.eq.s32.totalorder %s36, 1
    %p101 = por %p99, %p100
    %p103 = scmp.ne.s32.totalorder %s88, %s102
    %p104 = scmp.eq.s32.totalorder %s36, 0
    %p105 = por %p103, %p104
    %s107 = sadd.s32 %s106, 1
    %p110 = scmp.eq.s32.totalorder %s30, 1
    %p111 = scmp.ne.s32.totalorder %s106, %s108
    %p112 = scmp.eq.s32.totalorder %s30, 0
    %p113 = por %p111, %p112
    %p114 = scmp.ne.s32.totalorder %s106, %s108
    %p115 = scmp.eq.s32.totalorder %s35, 1
    %p116 = por %p114, %p115
    %p117 = scmp.ne.s32.totalorder %s108, %s109
    %p118 = scmp.eq.s32.totalorder %s35, 0
    %p119 = por %p117, %p118
    %p120 = scmp.ne.s32.totalorder %s108, %s109
    %p121 = scmp.eq.s32.totalorder %s36, 1
    %p122 = por %p120, %p121
    %p124 = scmp.ne.s32.totalorder %s109, %s123
    %p125 = scmp.eq.s32.totalorder %s36, 0
    %p126 = por %p124, %p125
    %s128 = sadd.s32 %s127, 1
    %p131 = scmp.eq.s32.totalorder %s30, 1
    %p132 = scmp.ne.s32.totalorder %s127, %s129
    %p133 = scmp.eq.s32.totalorder %s30, 0
    %p134 = por %p132, %p133
    %p135 = scmp.ne.s32.totalorder %s127, %s129
    %p136 = scmp.eq.s32.totalorder %s35, 1
    %p137 = por %p135, %p136
    %p138 = scmp.ne.s32.totalorder %s129, %s130
    %p139 = scmp.eq.s32.totalorder %s35, 0
    %p140 = por %p138, %p139
    %p141 = scmp.ne.s32.totalorder %s129, %s130
    %p142 = scmp.eq.s32.totalorder %s36, 1
    %p143 = por %p141, %p142
    %p145 = scmp.ne.s32.totalorder %s130, %s144
    %p146 = scmp.eq.s32.totalorder %s36, 0
    %p147 = por %p145, %p146
    %s149 = sadd.s32 %s148, 1
    %p152 = scmp.eq.s32.totalorder %s30, 1
    %p153 = scmp.ne.s32.totalorder %s148, %s150
    %p154 = scmp.eq.s32.totalorder %s30, 0
    %p155 = por %p153, %p154
    %p156 = scmp.ne.s32.totalorder %s148, %s150
    %p157 = scmp.eq.s32.totalorder %s35, 1
    %p158 = por %p156, %p157
    %p159 = scmp.ne.s32.totalorder %s150, %s151
    %p160 = scmp.eq.s32.totalorder %s35, 0
    %p161 = por %p159, %p160
    %p162 = scmp.ne.s32.totalorder %s150, %s151
    %p163 = scmp.eq.s32.totalorder %s36, 1
    %p164 = por %p162, %p163
    %p166 = scmp.ne.s32.totalorder %s151, %s165
    %p167 = scmp.eq.s32.totalorder %s36, 0
    %p168 = por %p166, %p167
    %s170 = sadd.s32 %s169, 1
    %p173 = scmp.eq.s32.totalorder %s30, 1
    %p174 = scmp.ne.s32.totalorder %s169, %s171
    %p175 = scmp.eq.s32.totalorder %s30, 0
    %p176 = por %p174, %p175
    %p177 = scmp.ne.s32.totalorder %s169, %s171
    %p178 = scmp.eq.s32.totalorder %s35, 1
    %p179 = por %p177, %p178
    %p180 = scmp.ne.s32.totalorder %s171, %s172
    %p181 = scmp.eq.s32.totalorder %s35, 0
    %p182 = por %p180, %p181
    %p183 = scmp.ne.s32.totalorder %s171, %s172
    %p184 = scmp.eq.s32.totalorder %s36, 1
    %p185 = por %p183, %p184
    %p187 = scmp.ne.s32.totalorder %s172, %s186
    %p188 = scmp.eq.s32.totalorder %s36, 0
    %p189 = por %p187, %p188
    %s191 = sadd.s32 %s190, 1
    %p194 = scmp.eq.s32.totalorder %s30, 1
    %p195 = scmp.ne.s32.totalorder %s190, %s192
    %p196 = scmp.eq.s32.totalorder %s30, 0
    %p197 = por %p195, %p196
    %p198 = scmp.ne.s32.totalorder %s190, %s192
    %p199 = scmp.eq.s32.totalorder %s35, 1
    %p200 = por %p198, %p199
    %p201 = scmp.ne.s32.totalorder %s192, %s193
    %p202 = scmp.eq.s32.totalorder %s35, 0
    %p203 = por %p201, %p202
    %p204 = scmp.ne.s32.totalorder %s192, %s193
    %p205 = scmp.eq.s32.totalorder %s36, 1
    %p206 = por %p204, %p205
    %p208 = scmp.ne.s32.totalorder %s193, %s207
    %p209 = scmp.eq.s32.totalorder %s36, 0
    %p210 = por %p208, %p209
    %s212 = sadd.s32 %s211, 1
    %p215 = scmp.eq.s32.totalorder %s30, 1
    %p216 = scmp.ne.s32.totalorder %s211, %s213
    %p217 = scmp.eq.s32.totalorder %s30, 0
    %p218 = por %p216, %p217
    %p219 = scmp.ne.s32.totalorder %s211, %s213
    %p220 = scmp.eq.s32.totalorder %s35, 1
    %p221 = por %p219, %p220
    %p222 = scmp.ne.s32.totalorder %s213, %s214
    %p223 = scmp.eq.s32.totalorder %s35, 0
    %p224 = por %p222, %p223
    %p225 = scmp.ne.s32.totalorder %s213, %s214
    %p226 = scmp.eq.s32.totalorder %s36, 1
    %p227 = por %p225, %p226
    %p229 = scmp.ne.s32.totalorder %s214, %s228
    %p230 = scmp.eq.s32.totalorder %s36, 0
    %p231 = por %p229, %p230
    %s233 = sadd.s32 %s232, 1
    %p236 = scmp.eq.s32.totalorder %s30, 1
    %p237 = scmp.ne.s32.totalorder %s232, %s234
    %p238 = scmp.eq.s32.totalorder %s30, 0
    %p239 = por %p237, %p238
    %p240 = scmp.ne.s32.totalorder %s232, %s234
    %p241 = scmp.eq.s32.totalorder %s35, 1
    %p242 = por %p240, %p241
    %p243 = scmp.ne.s32.totalorder %s234, %s235
    %p244 = scmp.eq.s32.totalorder %s35, 0
    %p245 = por %p243, %p244
    %p246 = scmp.ne.s32.totalorder %s234, %s235
    %p247 = scmp.eq.s32.totalorder %s36, 1
    %p248 = por %p246, %p247
    %p250 = scmp.ne.s32.totalorder %s235, %s249
    %p251 = scmp.eq.s32.totalorder %s36, 0
    %p252 = por %p250, %p251
    %s254 = sadd.s32 %s253, 1
    %p257 = scmp.eq.s32.totalorder %s30, 1
    %p258 = scmp.ne.s32.totalorder %s253, %s255
    %p259 = scmp.eq.s32.totalorder %s30, 0
    %p260 = por %p258, %p259
    %p261 = scmp.ne.s32.totalorder %s253, %s255
    %p262 = scmp.eq.s32.totalorder %s35, 1
    %p263 = por %p261, %p262
    %p264 = scmp.ne.s32.totalorder %s255, %s256
    %p265 = scmp.eq.s32.totalorder %s35, 0
    %p266 = por %p264, %p265
    %p267 = scmp.ne.s32.totalorder %s255, %s256
    %p268 = scmp.eq.s32.totalorder %s36, 1
    %p269 = por %p267, %p268
    %p271 = scmp.ne.s32.totalorder %s256, %s270
    %p272 = scmp.eq.s32.totalorder %s36, 0
    %p273 = por %p271, %p272
    %s275 = sadd.s32 %s274, 1
    %p278 = scmp.eq.s32.totalorder %s30, 1
    %p279 = scmp.ne.s32.totalorder %s274, %s276
    %p280 = scmp.eq.s32.totalorder %s30, 0
    %p281 = por %p279, %p280
    %p282 = scmp.ne.s32.totalorder %s274, %s276
    %p283 = scmp.eq.s32.totalorder %s35, 1
    %p284 = por %p282, %p283
    %p285 = scmp.ne.s32.totalorder %s276, %s277
    %p286 = scmp.eq.s32.totalorder %s35, 0
    %p287 = por %p285, %p286
    %p288 = scmp.ne.s32.totalorder %s276, %s277
    %p289 = scmp.eq.s32.totalorder %s36, 1
    %p290 = por %p288, %p289
    %p292 = scmp.ne.s32.totalorder %s277, %s291
    %p293 = scmp.eq.s32.totalorder %s36, 0
    %p294 = por %p292, %p293
    %s296 = sadd.s32 %s295, 1
    %p299 = scmp.eq.s32.totalorder %s30, 1
    %p300 = scmp.ne.s32.totalorder %s295, %s297
    %p301 = scmp.eq.s32.totalorder %s30, 0
    %p302 = por %p300, %p301
    %p303 = scmp.ne.s32.totalorder %s295, %s297
    %p304 = scmp.eq.s32.totalorder %s35, 1
    %p305 = por %p303, %p304
    %p306 = scmp.ne.s32.totalorder %s297, %s298
    %p307 = scmp.eq.s32.totalorder %s35, 0
    %p308 = por %p306, %p307
    %p309 = scmp.ne.s32.totalorder %s297, %s298
    %p310 = scmp.eq.s32.totalorder %s36, 1
    %p311 = por %p309, %p310
    %p313 = scmp.ne.s32.totalorder %s298, %s312
    %p314 = scmp.eq.s32.totalorder %s36, 0
    %p315 = por %p313, %p314
    %s317 = sadd.s32 %s316, 1
    %p320 = scmp.eq.s32.totalorder %s30, 1
    %p321 = scmp.ne.s32.totalorder %s316, %s318
    %p322 = scmp.eq.s32.totalorder %s30, 0
    %p323 = por %p321, %p322
    %p324 = scmp.ne.s32.totalorder %s316, %s318
    %p325 = scmp.eq.s32.totalorder %s35, 1
    %p326 = por %p324, %p325
    %p327 = scmp.ne.s32.totalorder %s318, %s319
    %p328 = scmp.eq.s32.totalorder %s35, 0
    %p329 = por %p327, %p328
    %p330 = scmp.ne.s32.totalorder %s318, %s319
    %p331 = scmp.eq.s32.totalorder %s36, 1
    %p332 = por %p330, %p331
    %p334 = scmp.ne.s32.totalorder %s319, %s333
    %p335 = scmp.eq.s32.totalorder %s36, 0
    %p336 = por %p334, %p335
    %s338 = sadd.s32 %s337, 1
    %p341 = scmp.eq.s32.totalorder %s30, 1
    %p342 = scmp.ne.s32.totalorder %s337, %s339
    %p343 = scmp.eq.s32.totalorder %s30, 0
    %p344 = por %p342, %p343
    %p345 = scmp.ne.s32.totalorder %s337, %s339
    %p346 = scmp.eq.s32.totalorder %s35, 1
    %p347 = por %p345, %p346
    %p348 = scmp.ne.s32.totalorder %s339, %s340
    %p349 = scmp.eq.s32.totalorder %s35, 0
    %p350 = por %p348, %p349
    %p351 = scmp.ne.s32.totalorder %s339, %s340
    %p352 = scmp.eq.s32.totalorder %s36, 1
    %p353 = por %p351, %p352
    %p355 = scmp.ne.s32.totalorder %s340, %s354
    %p356 = scmp.eq.s32.totalorder %s36, 0
    %p357 = por %p355, %p356
    %s359 = sadd.s32 %s358, 1
    %p362 = scmp.eq.s32.totalorder %s30, 1
    %p363 = scmp.ne.s32.totalorder %s358, %s360
    %p364 = scmp.eq.s32.totalorder %s30, 0
    %p365 = por %p363, %p364
    %p366 = scmp.ne.s32.totalorder %s358, %s360
    %p367 = scmp.eq.s32.totalorder %s35, 1
    %p368 = por %p366, %p367
    %p369 = scmp.ne.s32.totalorder %s360, %s361
    %p370 = scmp.eq.s32.totalorder %s35, 0
    %p371 = por %p369, %p370
    %p372 = scmp.ne.s32.totalorder %s360, %s361
    %p373 = scmp.eq.s32.totalorder %s36, 1
    %p374 = por %p372, %p373
    %p376 = scmp.ne.s32.totalorder %s361, %s375
    %p377 = scmp.eq.s32.totalorder %s36, 0
    %p378 = por %p376, %p377
    %s380 = sadd.s32 %s379, 1
    %p383 = scmp.eq.s32.totalorder %s30, 1
    %p384 = scmp.ne.s32.totalorder %s379, %s381
    %p385 = scmp.eq.s32.totalorder %s30, 0
    %p386 = por %p384, %p385
    %p387 = scmp.ne.s32.totalorder %s379, %s381
    %p388 = scmp.eq.s32.totalorder %s35, 1
    %p389 = por %p387, %p388
    %p390 = scmp.ne.s32.totalorder %s381, %s382
    %p391 = scmp.eq.s32.totalorder %s35, 0
    %p392 = por %p390, %p391
    %p393 = scmp.ne.s32.totalorder %s381, %s382
    %p394 = scmp.eq.s32.totalorder %s36, 1
    %p395 = por %p393, %p394
    %p397 = scmp.ne.s32.totalorder %s382, %s396
    %p398 = scmp.eq.s32.totalorder %s36, 0
    %p399 = por %p397, %p398
    %s401 = sadd.s32 %s400, 1
    %p404 = scmp.eq.s32.totalorder %s30, 1
    %p405 = scmp.ne.s32.totalorder %s400, %s402
    %p406 = scmp.eq.s32.totalorder %s30, 0
    %p407 = por %p405, %p406
    %p408 = scmp.ne.s32.totalorder %s400, %s402
    %p409 = scmp.eq.s32.totalorder %s35, 1
    %p410 = por %p408, %p409
    %p411 = scmp.ne.s32.totalorder %s402, %s403
    %p412 = scmp.eq.s32.totalorder %s35, 0
    %p413 = por %p411, %p412
    %p414 = scmp.ne.s32.totalorder %s402, %s403
    %p415 = scmp.eq.s32.totalorder %s36, 1
    %p416 = por %p414, %p415
    %p418 = scmp.ne.s32.totalorder %s403, %s417
    %p419 = scmp.eq.s32.totalorder %s36, 0
    %p420 = por %p418, %p419
    %s422 = sadd.s32 %s421, 1
    %p425 = scmp.eq.s32.totalorder %s30, 1
    %p426 = scmp.ne.s32.totalorder %s421, %s423
    %p427 = scmp.eq.s32.totalorder %s30, 0
    %p428 = por %p426, %p427
    %p429 = scmp.ne.s32.totalorder %s421, %s423
    %p430 = scmp.eq.s32.totalorder %s35, 1
    %p431 = por %p429, %p430
    %p432 = scmp.ne.s32.totalorder %s423, %s424
    %p433 = scmp.eq.s32.totalorder %s35, 0
    %p434 = por %p432, %p433
    %p435 = scmp.ne.s32.totalorder %s423, %s424
    %p436 = scmp.eq.s32.totalorder %s36, 1
    %p437 = por %p435, %p436
    %p439 = scmp.ne.s32.totalorder %s424, %s438
    %p440 = scmp.eq.s32.totalorder %s36, 0
    %p441 = por %p439, %p440
    %s443 = sadd.s32 %s442, 1
    %p446 = scmp.eq.s32.totalorder %s30, 1
    %p447 = scmp.ne.s32.totalorder %s442, %s444
    %p448 = scmp.eq.s32.totalorder %s30, 0
    %p449 = por %p447, %p448
    %p450 = scmp.ne.s32.totalorder %s442, %s444
    %p451 = scmp.eq.s32.totalorder %s35, 1
    %p452 = por %p450, %p451
    %p453 = scmp.ne.s32.totalorder %s444, %s445
    %p454 = scmp.eq.s32.totalorder %s35, 0
    %p455 = por %p453, %p454
    %p456 = scmp.ne.s32.totalorder %s444, %s445
    %p457 = scmp.eq.s32.totalorder %s36, 1
    %p458 = por %p456, %p457
    %p460 = scmp.ne.s32.totalorder %s445, %s459
    %p461 = scmp.eq.s32.totalorder %s36, 0
    %p462 = por %p460, %p461
    %s464 = sadd.s32 %s463, 1
    %p467 = scmp.eq.s32.totalorder %s30, 1
    %p468 = scmp.ne.s32.totalorder %s463, %s465
    %p469 = scmp.eq.s32.totalorder %s30, 0
    %p470 = por %p468, %p469
    %p471 = scmp.ne.s32.totalorder %s463, %s465
    %p472 = scmp.eq.s32.totalorder %s35, 1
    %p473 = por %p471, %p472
    %p474 = scmp.ne.s32.totalorder %s465, %s466
    %p475 = scmp.eq.s32.totalorder %s35, 0
    %p476 = por %p474, %p475
    %p477 = scmp.ne.s32.totalorder %s465, %s466
    %p478 = scmp.eq.s32.totalorder %s36, 1
    %p479 = por %p477, %p478
    %p481 = scmp.ne.s32.totalorder %s466, %s480
    %p482 = scmp.eq.s32.totalorder %s36, 0
    %p483 = por %p481, %p482
    %s485 = sadd.s32 %s484, 1
    %p488 = scmp.eq.s32.totalorder %s30, 1
    %p489 = scmp.ne.s32.totalorder %s484, %s486
    %p490 = scmp.eq.s32.totalorder %s30, 0
    %p491 = por %p489, %p490
    %p492 = scmp.ne.s32.totalorder %s484, %s486
    %p493 = scmp.eq.s32.totalorder %s35, 1
    %p494 = por %p492, %p493
    %p495 = scmp.ne.s32.totalorder %s486, %s487
    %p496 = scmp.eq.s32.totalorder %s35, 0
    %p497 = por %p495, %p496
    %p498 = scmp.ne.s32.totalorder %s486, %s487
    %p499 = scmp.eq.s32.totalorder %s36, 1
    %p500 = por %p498, %p499
    %p502 = scmp.ne.s32.totalorder %s487, %s501
    %p503 = scmp.eq.s32.totalorder %s36, 0
    %p504 = por %p502, %p503
    %s506 = sadd.s32 %s505, 1
    %p509 = scmp.eq.s32.totalorder %s30, 1
    %p510 = scmp.ne.s32.totalorder %s505, %s507
    %p511 = scmp.eq.s32.totalorder %s30, 0
    %p512 = por %p510, %p511
    %p513 = scmp.ne.s32.totalorder %s505, %s507
    %p514 = scmp.eq.s32.totalorder %s35, 1
    %p515 = por %p513, %p514
    %p516 = scmp.ne.s32.totalorder %s507, %s508
    %p517 = scmp.eq.s32.totalorder %s35, 0
    %p518 = por %p516, %p517
    %p519 = scmp.ne.s32.totalorder %s507, %s508
    %p520 = scmp.eq.s32.totalorder %s36, 1
    %p521 = por %p519, %p520
    %p523 = scmp.ne.s32.totalorder %s508, %s522
    %p524 = scmp.eq.s32.totalorder %s36, 0
    %p525 = por %p523, %p524
    %s527 = sadd.s32 %s526, 1
    %p530 = scmp.eq.s32.totalorder %s30, 1
    %p531 = scmp.ne.s32.totalorder %s526, %s528
    %p532 = scmp.eq.s32.totalorder %s30, 0
    %p533 = por %p531, %p532
    %p534 = scmp.ne.s32.totalorder %s526, %s528
    %p535 = scmp.eq.s32.totalorder %s35, 1
    %p536 = por %p534, %p535
    %p537 = scmp.ne.s32.totalorder %s528, %s529
    %p538 = scmp.eq.s32.totalorder %s35, 0
    %p539 = por %p537, %p538
    %p540 = scmp.ne.s32.totalorder %s528, %s529
    %p541 = scmp.eq.s32.totalorder %s36, 1
    %p542 = por %p540, %p541
    %p544 = scmp.ne.s32.totalorder %s529, %s543
    %p545 = scmp.eq.s32.totalorder %s36, 0
    %p546 = por %p544, %p545
    %s547 = ssub.s32 %s30, %s37
    %p548 = scmp.eq.s32.totalorder %s547, 0
    %s550 = sadd.s32 %s549, 1
    %s551 = scalar_select %p548, %s549, %s550
    %p554 = pneg %p548
    %p555 = scmp.eq.s32.totalorder %s30, 1
    %p556 = por %p554, %p555
    %p557 = scmp.ne.s32.totalorder %s549, %s552
    %p558 = scmp.eq.s32.totalorder %s30, 0
    %p559 = por %p557, %p558
    %p560 = scmp.ne.s32.totalorder %s549, %s552
    %p561 = scmp.eq.s32.totalorder %s35, 1
    %p562 = por %p560, %p561
    %p563 = scmp.ne.s32.totalorder %s552, %s553
    %p564 = scmp.eq.s32.totalorder %s35, 0
    %p565 = por %p563, %p564
    %p566 = scmp.ne.s32.totalorder %s552, %s553
    %p567 = scmp.eq.s32.totalorder %s36, 1
    %p568 = por %p566, %p567
    %p570 = scmp.ne.s32.totalorder %s553, %s569
    %p571 = scmp.eq.s32.totalorder %s36, 0
    %p572 = por %p570, %p571
    %p573 = scmp.le.s32.totalorder 1, %s30
    %p574 = scmp.lt.s32.totalorder %s30, 3
    %p575 = pnand %p573, %p574
    %p576 = pneg %p575
    // Predicated region
    $region9: #{norm_unet_forward.1} parent=5 // pred_check
      _
    $region10: #{norm_unet_forward.1} parent=5 // pred_check_branch
      %578 = sbr.rel (%p575) target = $region12
    $region11: #{norm_unet_forward.1} parent=5 // pred_region
      %s579 = ssub.s32 %s30, 1
      // Predicated region
      $region13: #{norm_unet_forward.1} parent=11 // pred_check
        %p580 = pneg %p77
      $region14: #{norm_unet_forward.1} parent=11 // pred_check_branch
        %582 = sbr.rel (%p580) target = $region16
      $region15: #{norm_unet_forward.1} parent=11 // pred_region
        _
      $region16: #{norm_unet_forward.1} parent=11 // pred_fallthru
        _
      // Predicated region
      $region17: #{norm_unet_forward.1} parent=11 // pred_check
        %p583 = pneg %p98
      $region18: #{norm_unet_forward.1} parent=11 // pred_check_branch
        %585 = sbr.rel (%p583) target = $region20
      $region19: #{norm_unet_forward.1} parent=11 // pred_region
        _
      $region20: #{norm_unet_forward.1} parent=11 // pred_fallthru
        _
      // Predicated region
      $region21: #{norm_unet_forward.1} parent=11 // pred_check
        %p586 = pneg %p119
      $region22: #{norm_unet_forward.1} parent=11 // pred_check_branch
        %588 = sbr.rel (%p586) target = $region24
      $region23: #{norm_unet_forward.1} parent=11 // pred_region
        _
      $region24: #{norm_unet_forward.1} parent=11 // pred_fallthru
        _
      // Predicated region
      $region25: #{norm_unet_forward.1} parent=11 // pred_check
        %p589 = pneg %p140
      $region26: #{norm_unet_forward.1} parent=11 // pred_check_branch
        %591 = sbr.rel (%p589) target = $region28
      $region27: #{norm_unet_forward.1} parent=11 // pred_region
        _
      $region28: #{norm_unet_forward.1} parent=11 // pred_fallthru
        _
      // Predicated region
      $region29: #{norm_unet_forward.1} parent=11 // pred_check
        %p592 = pneg %p161
      $region30: #{norm_unet_forward.1} parent=11 // pred_check_branch
        %594 = sbr.rel (%p592) target = $region32
      $region31: #{norm_unet_forward.1} parent=11 // pred_region
        _
      $region32: #{norm_unet_forward.1} parent=11 // pred_fallthru
        _
      // Predicated region
      $region33: #{norm_unet_forward.1} parent=11 // pred_check
        %p595 = pneg %p182
      $region34: #{norm_unet_forward.1} parent=11 // pred_check_branch
        %597 = sbr.rel (%p595) target = $region36
      $region35: #{norm_unet_forward.1} parent=11 // pred_region
        _
      $region36: #{norm_unet_forward.1} parent=11 // pred_fallthru
        _
      // Predicated region
      $region37: #{norm_unet_forward.1} parent=11 // pred_check
        %p598 = pneg %p203
      $region38: #{norm_unet_forward.1} parent=11 // pred_check_branch
        %600 = sbr.rel (%p598) target = $region40
      $region39: #{norm_unet_forward.1} parent=11 // pred_region
        _
      $region40: #{norm_unet_forward.1} parent=11 // pred_fallthru
        _
      // Predicated region
      $region41: #{norm_unet_forward.1} parent=11 // pred_check
        %p601 = pneg %p224
      $region42: #{norm_unet_forward.1} parent=11 // pred_check_branch
        %603 = sbr.rel (%p601) target = $region44
      $region43: #{norm_unet_forward.1} parent=11 // pred_region
        _
      $region44: #{norm_unet_forward.1} parent=11 // pred_fallthru
        _
      // Predicated region
      $region45: #{norm_unet_forward.1} parent=11 // pred_check
        %p604 = pneg %p245
      $region46: #{norm_unet_forward.1} parent=11 // pred_check_branch
        %606 = sbr.rel (%p604) target = $region48
      $region47: #{norm_unet_forward.1} parent=11 // pred_region
        _
      $region48: #{norm_unet_forward.1} parent=11 // pred_fallthru
        _
      // Predicated region
      $region49: #{norm_unet_forward.1} parent=11 // pred_check
        %p607 = pneg %p266
      $region50: #{norm_unet_forward.1} parent=11 // pred_check_branch
        %609 = sbr.rel (%p607) target = $region52
      $region51: #{norm_unet_forward.1} parent=11 // pred_region
        _
      $region52: #{norm_unet_forward.1} parent=11 // pred_fallthru
        _
      // Predicated region
      $region53: #{norm_unet_forward.1} parent=11 // pred_check
        %p610 = pneg %p287
      $region54: #{norm_unet_forward.1} parent=11 // pred_check_branch
        %612 = sbr.rel (%p610) target = $region56
      $region55: #{norm_unet_forward.1} parent=11 // pred_region
        _
      $region56: #{norm_unet_forward.1} parent=11 // pred_fallthru
        _
      // Predicated region
      $region57: #{norm_unet_forward.1} parent=11 // pred_check
        %p613 = pneg %p308
      $region58: #{norm_unet_forward.1} parent=11 // pred_check_branch
        %615 = sbr.rel (%p613) target = $region60
      $region59: #{norm_unet_forward.1} parent=11 // pred_region
        _
      $region60: #{norm_unet_forward.1} parent=11 // pred_fallthru
        _
      // Predicated region
      $region61: #{norm_unet_forward.1} parent=11 // pred_check
        %p616 = pneg %p329
      $region62: #{norm_unet_forward.1} parent=11 // pred_check_branch
        %618 = sbr.rel (%p616) target = $region64
      $region63: #{norm_unet_forward.1} parent=11 // pred_region
        _
      $region64: #{norm_unet_forward.1} parent=11 // pred_fallthru
        _
      // Predicated region
      $region65: #{norm_unet_forward.1} parent=11 // pred_check
        %p619 = pneg %p350
      $region66: #{norm_unet_forward.1} parent=11 // pred_check_branch
        %621 = sbr.rel (%p619) target = $region68
      $region67: #{norm_unet_forward.1} parent=11 // pred_region
        _
      $region68: #{norm_unet_forward.1} parent=11 // pred_fallthru
        _
      // Predicated region
      $region69: #{norm_unet_forward.1} parent=11 // pred_check
        %p622 = pneg %p371
      $region70: #{norm_unet_forward.1} parent=11 // pred_check_branch
        %624 = sbr.rel (%p622) target = $region72
      $region71: #{norm_unet_forward.1} parent=11 // pred_region
        _
      $region72: #{norm_unet_forward.1} parent=11 // pred_fallthru
        _
      // Predicated region
      $region73: #{norm_unet_forward.1} parent=11 // pred_check
        %p625 = pneg %p392
      $region74: #{norm_unet_forward.1} parent=11 // pred_check_branch
        %627 = sbr.rel (%p625) target = $region76
      $region75: #{norm_unet_forward.1} parent=11 // pred_region
        _
      $region76: #{norm_unet_forward.1} parent=11 // pred_fallthru
        _
      // Predicated region
      $region77: #{norm_unet_forward.1} parent=11 // pred_check
        %p628 = pneg %p413
      $region78: #{norm_unet_forward.1} parent=11 // pred_check_branch
        %630 = sbr.rel (%p628) target = $region80
      $region79: #{norm_unet_forward.1} parent=11 // pred_region
        _
      $region80: #{norm_unet_forward.1} parent=11 // pred_fallthru
        _
      // Predicated region
      $region81: #{norm_unet_forward.1} parent=11 // pred_check
        %p631 = pneg %p434
      $region82: #{norm_unet_forward.1} parent=11 // pred_check_branch
        %633 = sbr.rel (%p631) target = $region84
      $region83: #{norm_unet_forward.1} parent=11 // pred_region
        _
      $region84: #{norm_unet_forward.1} parent=11 // pred_fallthru
        _
      // Predicated region
      $region85: #{norm_unet_forward.1} parent=11 // pred_check
        %p634 = pneg %p455
      $region86: #{norm_unet_forward.1} parent=11 // pred_check_branch
        %636 = sbr.rel (%p634) target = $region88
      $region87: #{norm_unet_forward.1} parent=11 // pred_region
        _
      $region88: #{norm_unet_forward.1} parent=11 // pred_fallthru
        _
      // Predicated region
      $region89: #{norm_unet_forward.1} parent=11 // pred_check
        %p637 = pneg %p476
      $region90: #{norm_unet_forward.1} parent=11 // pred_check_branch
        %639 = sbr.rel (%p637) target = $region92
      $region91: #{norm_unet_forward.1} parent=11 // pred_region
        _
      $region92: #{norm_unet_forward.1} parent=11 // pred_fallthru
        _
      // Predicated region
      $region93: #{norm_unet_forward.1} parent=11 // pred_check
        %p640 = pneg %p497
      $region94: #{norm_unet_forward.1} parent=11 // pred_check_branch
        %642 = sbr.rel (%p640) target = $region96
      $region95: #{norm_unet_forward.1} parent=11 // pred_region
        _
      $region96: #{norm_unet_forward.1} parent=11 // pred_fallthru
        _
      // Predicated region
      $region97: #{norm_unet_forward.1} parent=11 // pred_check
        %p643 = pneg %p518
      $region98: #{norm_unet_forward.1} parent=11 // pred_check_branch
        %645 = sbr.rel (%p643) target = $region100
      $region99: #{norm_unet_forward.1} parent=11 // pred_region
        _
      $region100: #{norm_unet_forward.1} parent=11 // pred_fallthru
        _
      // Predicated region
      $region101: #{norm_unet_forward.1} parent=11 // pred_check
        %p646 = pneg %p539
      $region102: #{norm_unet_forward.1} parent=11 // pred_check_branch
        %648 = sbr.rel (%p646) target = $region104
      $region103: #{norm_unet_forward.1} parent=11 // pred_region
        _
      $region104: #{norm_unet_forward.1} parent=11 // pred_fallthru
        _
    $region12: #{norm_unet_forward.1} parent=5 // pred_fallthru
      _
    %p649 = scmp.lt.s32.totalorder %s30, 2
    // Predicated region
    $region105: #{norm_unet_forward.1} parent=5 // pred_check
      %p650 = pneg %p649
    $region106: #{norm_unet_forward.1} parent=5 // pred_check_branch
      %652 = sbr.rel (%p650) target = $region108
    $region107: #{norm_unet_forward.1} parent=5 // pred_region
      // Predicated region
      $region109: #{norm_unet_forward.1} parent=107 // pred_check
        %p653 = pneg %p50
      $region110: #{norm_unet_forward.1} parent=107 // pred_check_branch
        %655 = sbr.rel (%p653) target = $region112
      $region111: #{norm_unet_forward.1} parent=107 // pred_region
        %p656 = scmp.lt.s32.totalorder %s30, 1
        %s657 = scalar_select %p656, %s30, 1
        %s658 = smul.addr %s657, 2
        %s659 = smul.addr %s658, 2
        %s660 = scalar_lea.vmem %s0, %s659
      $region112: #{norm_unet_forward.1} parent=107 // pred_fallthru
        _
    $region108: #{norm_unet_forward.1} parent=5 // pred_fallthru
      _
    %p661 = scmp.le.s32.totalorder 1, %s30
    %p662 = scmp.lt.s32.totalorder %s30, 3
    %p663 = pnand %p661, %p662
    %p664 = pneg %p663
    // Predicated region
    $region113: #{norm_unet_forward.1} parent=5 // pred_check
      _
    $region114: #{norm_unet_forward.1} parent=5 // pred_check_branch
      %666 = sbr.rel (%p663) target = $region116
    $region115: #{norm_unet_forward.1} parent=5 // pred_region
      %s667 = ssub.s32 %s30, 1
      %p668 = scmp.lt.s32.totalorder %s35, 1
      %s669 = scalar_select %p668, %s35, 1
      %s670 = smul.addr %s669, 2
      %s671 = smul.addr %s670, 2
      %s672 = scalar_lea.vmem %s0, %s671
      %p673 = pneg %p56
      %p674 = pneg %p53
      %p675 = pneg %p77
      %p676 = pneg %p74
      %p677 = pneg %p98
      %p678 = pneg %p95
      %p679 = pneg %p119
      %p680 = pneg %p116
      %p681 = pneg %p140
      %p682 = pneg %p137
      %p683 = pneg %p161
      %p684 = pneg %p158
      %p685 = pneg %p182
      %p686 = pneg %p179
      %p687 = pneg %p203
      %p688 = pneg %p200
      %p689 = pneg %p224
      %p690 = pneg %p221
      %p691 = pneg %p245
      %p692 = pneg %p242
      %p693 = pneg %p266
      %p694 = pneg %p263
      %p695 = pneg %p287
      %p696 = pneg %p284
      %p697 = pneg %p308
      %p698 = pneg %p305
      %p699 = pneg %p329
      %p700 = pneg %p326
      %p701 = pneg %p350
      %p702 = pneg %p347
      %p703 = pneg %p371
      %p704 = pneg %p368
      %p705 = pneg %p392
      %p706 = pneg %p389
      %p707 = pneg %p413
      %p708 = pneg %p410
      %p709 = pneg %p434
      %p710 = pneg %p431
      %p711 = pneg %p455
      %p712 = pneg %p452
      %p713 = pneg %p476
      %p714 = pneg %p473
      %p715 = pneg %p497
      %p716 = pneg %p494
      %p717 = pneg %p518
      %p718 = pneg %p515
      %p719 = pneg %p539
      %p720 = pneg %p536
      %p721 = pneg %p565
      %p722 = pneg %p562
      %p723 = scmp.lt.s32.totalorder %s35, 1
      %s724 = scalar_select %p723, %s35, 1
      %s725 = smul.addr %s724, 2
      %s726 = smul.addr %s725, 2
      %s727 = scalar_lea.vmem %s24, %s726
      %p728 = scmp.lt.s32.totalorder %s35, 1
      %s729 = scalar_select %p728, %s35, 1
      %s730 = smul.addr %s729, 2
      %s731 = smul.addr %s730, 2
      %s732 = scalar_lea.vmem %s0, %s731
      %p733 = scmp.lt.s32.totalorder %s35, 1
      %s734 = scalar_select %p733, %s35, 1
      %s735 = smul.addr %s734, 2
      %s736 = smul.addr %s735, 2
      %s737 = scalar_lea.vmem %s24, %s736
      %v739 = vld [vmem:[%s732] sm:$0xf]
      %v742 = vunpack.c.l.s4 1983009808
      %v743 = vunpack.c.0.s8 %v742
      %v744 = vlaneseq
      %v745 = vshrl.u32 %v744, 7
      %v746 = vsub.s32 %v743, %v745
      %v747 = vrot.slane %v739, %v746
      %v748 = vcombine.high %v747, %v747
      %749 = vrot.lane.b32.xlu0 %v748, 17
      %v750 = vpop.permute.xlu0 %749
      %752 = vrot.lane.b32.xlu0 %v747, 17
      %v753 = vpop.permute.xlu0 %752
      %vm754 = vcmask 138240
      %v755 = vsel %vm754, %v753, %v750
      %v758 = vsel %vm754, %v750, %v753
      %v759 = vld [vmem:[%s1] sm:$0x3]
      %v761 = vlaneseq
      %v762 = vshrl.u32 %v761, 7
      %v763 = vsub.s32 0, %v762
      %v764 = vrot.slane %v759, %v763
      %v765 = vlaneseq
      %v766 = vshrl.u32 %v765, 7
      %v767 = vsub.s32 1, %v766
      %v768 = vrot.slane %v759, %v767
      %v771 = vmul.f32 %v758, %v764
      %v772 = vmul.f32 %v755, %v768
      %773 = vrot.lane.b32.xlu0 %v748, 16
      %v774 = vpop.permute.xlu0 %773
      %776 = vrot.lane.b32.xlu0 %v747, 16
      %v777 = vpop.permute.xlu0 %776
      %vm778 = vcmask 130048
      %v779 = vsel %vm778, %v777, %v774
      %v782 = vsel %vm778, %v774, %v777
      %s783 = scalar_lea.vmem %s1, 2
      %v784 = vld [vmem:[%s783] sm:$0x3]
      %v786 = vlaneseq
      %v787 = vshrl.u32 %v786, 7
      %v788 = vsub.s32 0, %v787
      %v789 = vrot.slane %v784, %v788
      %v790 = vlaneseq
      %v791 = vshrl.u32 %v790, 7
      %v792 = vsub.s32 1, %v791
      %v793 = vrot.slane %v784, %v792
      %v796 = vmul.f32 %v782, %v789
      %v797 = vmul.f32 %v779, %v793
      %798 = vrot.lane.b32.xlu0 %v748, 15
      %v799 = vpop.permute.xlu0 %798
      %801 = vrot.lane.b32.xlu0 %v747, 15
      %v802 = vpop.permute.xlu0 %801
      %vm803 = vcmask 121856
      %v804 = vsel %vm803, %v802, %v799
      %v807 = vsel %vm803, %v799, %v802
      %s808 = scalar_lea.vmem %s1, 4
      %v809 = vld [vmem:[%s808] sm:$0x3]
      %v811 = vlaneseq
      %v812 = vshrl.u32 %v811, 7
      %v813 = vsub.s32 0, %v812
      %v814 = vrot.slane %v809, %v813
      %v815 = vlaneseq
      %v816 = vshrl.u32 %v815, 7
      %v817 = vsub.s32 1, %v816
      %v818 = vrot.slane %v809, %v817
      %v821 = vmul.f32 %v807, %v814
      %v822 = vmul.f32 %v804, %v818
      %823 = vrot.lane.b32.xlu0 %v748, 1
      %v824 = vpop.permute.xlu0 %823
      %826 = vrot.lane.b32.xlu0 %v747, 1
      %v827 = vpop.permute.xlu0 %826
      %vm828 = vcmask 7168
      %v829 = vsel %vm828, %v827, %v824
      %v832 = vsel %vm828, %v824, %v827
      %s833 = scalar_lea.vmem %s1, 6
      %v834 = vld [vmem:[%s833] sm:$0x3]
      %v836 = vlaneseq
      %v837 = vshrl.u32 %v836, 7
      %v838 = vsub.s32 0, %v837
      %v839 = vrot.slane %v834, %v838
      %v840 = vlaneseq
      %v841 = vshrl.u32 %v840, 7
      %v842 = vsub.s32 1, %v841
      %v843 = vrot.slane %v834, %v842
      %v846 = vmul.f32 %v832, %v839
      %v847 = vmul.f32 %v829, %v843
      %848 = vrot.lane.b32.xlu0 %v747, 127
      %v849 = vpop.permute.xlu0 %848
      %850 = vrot.lane.b32.xlu0 %v748, 127
      %v851 = vpop.permute.xlu0 %850
      %vm852 = vcmask 1039360
      %v853 = vsel %vm852, %v849, %v851
      %v857 = vsel %vm852, %v851, %v849
      %s858 = scalar_lea.vmem %s1, 10
      %v859 = vld [vmem:[%s858] sm:$0x3]
      %v861 = vlaneseq
      %v862 = vshrl.u32 %v861, 7
      %v863 = vsub.s32 0, %v862
      %v864 = vrot.slane %v859, %v863
      %v865 = vlaneseq
      %v866 = vshrl.u32 %v865, 7
      %v867 = vsub.s32 1, %v866
      %v868 = vrot.slane %v859, %v867
      %v871 = vmul.f32 %v853, %v864
      %v872 = vmul.f32 %v857, %v868
      %873 = vrot.lane.b32.xlu0 %v747, 113
      %v874 = vpop.permute.xlu0 %873
      %875 = vrot.lane.b32.xlu0 %v748, 113
      %v876 = vpop.permute.xlu0 %875
      %vm877 = vcmask 924672
      %v878 = vsel %vm877, %v874, %v876
      %v882 = vsel %vm877, %v876, %v874
      %s883 = scalar_lea.vmem %s1, 12
      %v884 = vld [vmem:[%s883] sm:$0x3]
      %v886 = vlaneseq
      %v887 = vshrl.u32 %v886, 7
      %v888 = vsub.s32 0, %v887
      %v889 = vrot.slane %v884, %v888
      %v890 = vlaneseq
      %v891 = vshrl.u32 %v890, 7
      %v892 = vsub.s32 1, %v891
      %v893 = vrot.slane %v884, %v892
      %v896 = vmul.f32 %v878, %v889
      %v897 = vmul.f32 %v882, %v893
      %898 = vrot.lane.b32.xlu0 %v747, 112
      %v899 = vpop.permute.xlu0 %898
      %900 = vrot.lane.b32.xlu0 %v748, 112
      %v901 = vpop.permute.xlu0 %900
      %vm902 = vcmask 916480
      %v903 = vsel %vm902, %v899, %v901
      %v907 = vsel %vm902, %v901, %v899
      %s908 = scalar_lea.vmem %s1, 14
      %v909 = vld [vmem:[%s908] sm:$0x3]
      %v911 = vlaneseq
      %v912 = vshrl.u32 %v911, 7
      %v913 = vsub.s32 0, %v912
      %v914 = vrot.slane %v909, %v913
      %v915 = vlaneseq
      %v916 = vshrl.u32 %v915, 7
      %v917 = vsub.s32 1, %v916
      %v918 = vrot.slane %v909, %v917
      %v921 = vmul.f32 %v903, %v914
      %v922 = vmul.f32 %v907, %v918
      %923 = vrot.lane.b32.xlu0 %v747, 111
      %v924 = vpop.permute.xlu0 %923
      %925 = vrot.lane.b32.xlu0 %v748, 111
      %v926 = vpop.permute.xlu0 %925
      %vm927 = vcmask 908288
      %v928 = vsel %vm927, %v924, %v926
      %v932 = vsel %vm927, %v926, %v924
      %s933 = scalar_lea.vmem %s1, 16
      %v934 = vld [vmem:[%s933] sm:$0x3]
      %v936 = vlaneseq
      %v937 = vshrl.u32 %v936, 7
      %v938 = vsub.s32 0, %v937
      %v939 = vrot.slane %v934, %v938
      %v940 = vlaneseq
      %v941 = vshrl.u32 %v940, 7
      %v942 = vsub.s32 1, %v941
      %v943 = vrot.slane %v934, %v942
      %v946 = vmul.f32 %v928, %v939
      %v947 = vmul.f32 %v932, %v943
      %v950 = vrot.slane %v796, 6
      %v951 = vrot.slane %v797, 6
      %v956 = vrot.slane %v821, 4
      %v957 = vrot.slane %v822, 4
      %v962 = vrot.slane %v846, 2
      %v963 = vrot.slane %v847, 2
      %v970 = vrot.slane %v871, 6
      %v971 = vrot.slane %v872, 6
      %v976 = vrot.slane %v896, 4
      %v977 = vrot.slane %v897, 4
      %v982 = vrot.slane %v921, 2
      %v983 = vrot.slane %v922, 2
      %vm986 = vcmask 1041408
      %v987 = vsel %vm986, %v771, %v950
      %v988 = vsel %vm986, %v772, %v951
      %vm989 = vcmask 1043456
      %v990 = vsel %vm989, %v987, %v956
      %v991 = vsel %vm989, %v988, %v957
      %vm992 = vcmask 1045504
      %v993 = vsel %vm992, %v990, %v962
      %v994 = vsel %vm992, %v991, %v963
      %v995 = vsel %vm986, %v747, %v970
      %v996 = vsel %vm986, %v748, %v971
      %v997 = vsel %vm989, %v995, %v976
      %v998 = vsel %vm989, %v996, %v977
      %v999 = vsel %vm992, %v997, %v982
      %v1000 = vsel %vm992, %v998, %v983
      %v1001 = vpack.c.bf16 %v999, %v993
      %v1002 = vpack.c.bf16 %v1000, %v994
      %v1003 = vpack.c.bf16 %v946, %v946
      %v1004 = vpack.c.bf16 %v947, %v947
      %v1005 = vld [vmem:[%s8] sm:$0xf]
      %vm1006 = vcmask 146432
      %v1008 = vsel %vm1006, %v1005, 0
      %vm1010 = vcmask 1040384
      %v1012 = vsel %vm1010, %v1003, 0
      %v1015 = vsel %vm1010, %v1004, 0
      %1017 = vmatprep.subr.bf16.mxu0 %v1002
      %1018 = vmatpush1.bf16.msra.mxu0 %v1001
      %1019 = vmatprep.subr.bf16.mxu0 %v1015
      %1020 = vmatpush1.bf16.msra.mxu0 %v1012
      %1021 = vmatprep.subr.bf16.mxu0 0
      %1022 = vmatpush1.bf16.msra.mxu0 0
      %1023 = vmatprep.subr.bf16.mxu0 0
      %1024 = vmatpush1.bf16.msra.mxu0 0
      %1025 = vmatprep.subr.bf16.mxu0 0
      %1026 = vmatpush1.bf16.msra.mxu0 0
      %1027 = vmatprep.subr.bf16.mxu0 0
      %1028 = vmatpush1.bf16.msra.mxu0 0
      %1029 = vmatprep.subr.bf16.mxu0 0
      %1030 = vmatpush1.bf16.msra.mxu0 0
      %1031 = vmatprep.subr.bf16.mxu0 0
      %1032 = vmatpush1.bf16.msra.mxu0 0
      %1033 = vmatprep.subr.bf16.mxu0 0
      %1034 = vmatpush1.bf16.msra.mxu0 0
      %1035 = vmatprep.subr.bf16.mxu0 0
      %1036 = vmatpush1.bf16.msra.mxu0 0
      %1037 = vmatprep.subr.bf16.mxu0 0
      %1038 = vmatpush1.bf16.msra.mxu0 0
      %1039 = vmatprep.subr.bf16.mxu0 0
      %1040 = vmatpush1.bf16.msra.mxu0 0
      %1041 = vmatprep.subr.bf16.mxu0 0
      %1042 = vmatpush1.bf16.msra.mxu0 0
      %1043 = vmatprep.subr.bf16.mxu0 0
      %1044 = vmatpush1.bf16.msra.mxu0 0
      %1045 = vmatprep.subr.bf16.mxu0 0
      %1046 = vmatpush1.bf16.msra.mxu0 0
      %1047 = vmatprep.subr.bf16.mxu0 0
      %1048 = vmatpush1.bf16.msra.mxu0 0
      %1049 = vmatprep.mubr.bf16.mxu0 0
      %1050 = vmatmul.mubr.bf16.gmra.mrb[0].mxu0 %v1008
      %v1051 = vpop.f32.mrb[0].mxu0
      %v1052 = vadd.f32 0.0, %v1051
      %v1053 = vpop.f32.mrb[0].mxu0
      %v1054 = vadd.f32 0.0, %v1053
      %v1055 = vpop.f32.mrb[0].mxu0
      %v1056 = vpop.f32.mrb[0].mxu0
      %1057 = vdwg.mxu0
      %v1058 = vadd.f32 %v1052, %v1054
      %1059 = vadd.xlane.f32.xlu0 %v1058
      %v1060 = vpop.xlane.xlu0 %1059
      %v1061 = vrcp.pop 256.0
      %v1062 = vmul.f32 %v1060, %v1061
      %v1063 = vsub.f32 %v1052, %v1062
      %v1064 = vsub.f32 %v1054, %v1062
      %v1065 = vmul.f32 %v1063, %v1063
      %v1066 = vmul.f32 %v1064, %v1064
      %v1067 = vadd.f32 %v1065, %v1066
      %1068 = vadd.xlane.f32.xlu0 %v1067
      %v1069 = vpop.xlane.xlu0 %1068
      %v1070 = vmul.f32 %v1069, %v1061
      %v1071 = vadd.f32 %v1070, 1e-05
      %v1072 = vrsqrt.pop %v1071
      %v1073 = vmul.f32 %v1063, %v1072
      %v1074 = vmul.f32 %v1064, %v1072
      %vm1075 = vcmp.ge.f32.partialorder %v1073, 0.0
      %vm1076 = vcmp.ge.f32.partialorder %v1074, 0.0
      %v1077 = vmul.f32 %v1073, 0.2
      %v1078 = vmul.f32 %v1074, 0.2
      %v1079 = vsel %vm1075, %v1073, %v1077
      %v1080 = vsel %vm1076, %v1074, %v1078
      %1082 = vrot.lane.b32.xlu0 %v1080, 17
      %v1083 = vpop.permute.xlu0 %1082
      %1086 = vrot.lane.b32.xlu0 %v1079, 17
      %v1087 = vpop.permute.xlu0 %1086
      %v1088 = vsel %vm754, %v1087, %v1083
      %v1091 = vsel %vm754, %v1083, %v1087
      %v1092 = vmul.f32 %v1091, %v764
      %v1093 = vmul.f32 %v1088, %v768
      %1094 = vrot.lane.b32.xlu0 %v1080, 16
      %v1095 = vpop.permute.xlu0 %1094
      %1097 = vrot.lane.b32.xlu0 %v1079, 16
      %v1098 = vpop.permute.xlu0 %1097
      %v1099 = vsel %vm778, %v1098, %v1095
      %v1102 = vsel %vm778, %v1095, %v1098
      %v1103 = vmul.f32 %v1102, %v789
      %v1104 = vmul.f32 %v1099, %v793
      %1105 = vrot.lane.b32.xlu0 %v1080, 15
      %v1106 = vpop.permute.xlu0 %1105
      %1108 = vrot.lane.b32.xlu0 %v1079, 15
      %v1109 = vpop.permute.xlu0 %1108
      %v1110 = vsel %vm803, %v1109, %v1106
      %v1113 = vsel %vm803, %v1106, %v1109
      %v1114 = vmul.f32 %v1113, %v814
      %v1115 = vmul.f32 %v1110, %v818
      %1116 = vrot.lane.b32.xlu0 %v1080, 1
      %v1117 = vpop.permute.xlu0 %1116
      %1119 = vrot.lane.b32.xlu0 %v1079, 1
      %v1120 = vpop.permute.xlu0 %1119
      %v1121 = vsel %vm828, %v1120, %v1117
      %v1124 = vsel %vm828, %v1117, %v1120
      %v1125 = vmul.f32 %v1124, %v839
      %v1126 = vmul.f32 %v1121, %v843
      %1127 = vrot.lane.b32.xlu0 %v1079, 127
      %v1128 = vpop.permute.xlu0 %1127
      %1129 = vrot.lane.b32.xlu0 %v1080, 127
      %v1130 = vpop.permute.xlu0 %1129
      %v1131 = vsel %vm852, %v1128, %v1130
      %v1135 = vsel %vm852, %v1130, %v1128
      %v1136 = vmul.f32 %v1131, %v864
      %v1137 = vmul.f32 %v1135, %v868
      %1138 = vrot.lane.b32.xlu0 %v1079, 113
      %v1139 = vpop.permute.xlu0 %1138
      %1140 = vrot.lane.b32.xlu0 %v1080, 113
      %v1141 = vpop.permute.xlu0 %1140
      %v1142 = vsel %vm877, %v1139, %v1141
      %v1146 = vsel %vm877, %v1141, %v1139
      %v1147 = vmul.f32 %v1142, %v889
      %v1148 = vmul.f32 %v1146, %v893
      %1149 = vrot.lane.b32.xlu0 %v1079, 112
      %v1150 = vpop.permute.xlu0 %1149
      %1151 = vrot.lane.b32.xlu0 %v1080, 112
      %v1152 = vpop.permute.xlu0 %1151
      %v1153 = vsel %vm902, %v1150, %v1152
      %v1157 = vsel %vm902, %v1152, %v1150
      %v1158 = vmul.f32 %v1153, %v914
      %v1159 = vmul.f32 %v1157, %v918
      %1160 = vrot.lane.b32.xlu0 %v1079, 111
      %v1161 = vpop.permute.xlu0 %1160
      %1162 = vrot.lane.b32.xlu0 %v1080, 111
      %v1163 = vpop.permute.xlu0 %1162
      %v1164 = vsel %vm927, %v1161, %v1163
      %v1168 = vsel %vm927, %v1163, %v1161
      %v1169 = vmul.f32 %v1164, %v939
      %v1170 = vmul.f32 %v1168, %v943
      %v1171 = vpack.c.bf16 %v1103, %v1092
      %v1172 = vpack.c.bf16 %v1104, %v1093
      %v1173 = vpack.c.bf16 %v1125, %v1114
      %v1174 = vpack.c.bf16 %v1126, %v1115
      %v1175 = vpack.c.bf16 %v1136, %v1079
      %v1176 = vpack.c.bf16 %v1137, %v1080
      %v1177 = vpack.c.bf16 %v1158, %v1147
      %v1178 = vpack.c.bf16 %v1159, %v1148
      %v1179 = vpack.c.bf16 %v1169, %v1169
      %v1180 = vpack.c.bf16 %v1170, %v1170
      %v1181 = vld [vmem:[%s9] sm:$0xf]
      %vm1182 = vcmask 588800
      %v1184 = vsel %vm1182, %v1181, 0
      %v1187 = vsel %vm989, %v1179, 0
      %v1190 = vsel %vm989, %v1180, 0
      %1192 = vmatprep.subr.bf16.mxu0 %v1172
      %1193 = vmatpush1.bf16.msra.mxu0 %v1171
      %1194 = vmatprep.subr.bf16.mxu0 %v1174
      %1195 = vmatpush1.bf16.msra.mxu0 %v1173
      %1196 = vmatprep.subr.bf16.mxu0 %v1176
      %1197 = vmatpush1.bf16.msra.mxu0 %v1175
      %1198 = vmatprep.subr.bf16.mxu0 %v1178
      %1199 = vmatpush1.bf16.msra.mxu0 %v1177
      %1200 = vmatprep.subr.bf16.mxu0 %v1190
      %1201 = vmatpush1.bf16.msra.mxu0 %v1187
      %1202 = vmatprep.subr.bf16.mxu0 0
      %1203 = vmatpush1.bf16.msra.mxu0 0
      %1204 = vmatprep.subr.bf16.mxu0 0
      %1205 = vmatpush1.bf16.msra.mxu0 0
      %1206 = vmatprep.subr.bf16.mxu0 0
      %1207 = vmatpush1.bf16.msra.mxu0 0
      %1208 = vmatprep.subr.bf16.mxu0 0
      %1209 = vmatpush1.bf16.msra.mxu0 0
      %1210 = vmatprep.subr.bf16.mxu0 0
      %1211 = vmatpush1.bf16.msra.mxu0 0
      %1212 = vmatprep.subr.bf16.mxu0 0
      %1213 = vmatpush1.bf16.msra.mxu0 0
      %1214 = vmatprep.subr.bf16.mxu0 0
      %1215 = vmatpush1.bf16.msra.mxu0 0
      %1216 = vmatprep.subr.bf16.mxu0 0
      %1217 = vmatpush1.bf16.msra.mxu0 0
      %1218 = vmatprep.subr.bf16.mxu0 0
      %1219 = vmatpush1.bf16.msra.mxu0 0
      %1220 = vmatprep.subr.bf16.mxu0 0
      %1221 = vmatpush1.bf16.msra.mxu0 0
      %1222 = vmatprep.subr.bf16.mxu0 0
      %1223 = vmatpush1.bf16.msra.mxu0 0
      %1224 = vmatprep.mubr.bf16.mxu0 0
      %1225 = vmatmul.mubr.bf16.gmra.mrb[0].mxu0 %v1184
      %v1226 = vpop.f32.mrb[0].mxu0
      %v1227 = vadd.f32 0.0, %v1226
      %v1228 = vpop.f32.mrb[0].mxu0
      %v1229 = vadd.f32 0.0, %v1228
      %v1230 = vpop.f32.mrb[0].mxu0
      %v1231 = vpop.f32.mrb[0].mxu0
      %1232 = vdwg.mxu0
      %v1233 = vadd.f32 %v1227, %v1229
      %1234 = vadd.xlane.f32.xlu0 %v1233
      %v1235 = vpop.xlane.xlu0 %1234
      %v1236 = vmul.f32 %v1235, %v1061
      %v1237 = vsub.f32 %v1227, %v1236
      %v1238 = vsub.f32 %v1229, %v1236
      %v1239 = vmul.f32 %v1237, %v1237
      %v1240 = vmul.f32 %v1238, %v1238
      %v1241 = vadd.f32 %v1239, %v1240
      %1242 = vadd.xlane.f32.xlu0 %v1241
      %v1243 = vpop.xlane.xlu0 %1242
      %v1244 = vmul.f32 %v1243, %v1061
      %v1245 = vadd.f32 %v1244, 1e-05
      %v1246 = vrsqrt.pop %v1245
      %v1247 = vmul.f32 %v1237, %v1246
      %v1248 = vmul.f32 %v1238, %v1246
      %vm1249 = vcmp.ge.f32.partialorder %v1247, 0.0
      %vm1250 = vcmp.ge.f32.partialorder %v1248, 0.0
      %v1251 = vmul.f32 %v1247, 0.2
      %v1252 = vmul.f32 %v1248, 0.2
      %v1253 = vsel %vm1249, %v1247, %v1251
      %v1254 = vsel %vm1250, %v1248, %v1252
      %v1255 = vpack.c.bf16 %v1253, %v1253
      %v1256 = vpack.c.bf16 %v1254, %v1254
      %v1257 = vld [vmem:[%s4] sm:$0xf]
      %v1258 = vld [vmem:[%s4 + $0x4] sm:$0xf]
      %v1259 = vld [vmem:[%s4 + $0x8] sm:$0xf]
      %v1260 = vld [vmem:[%s4 + $0xc] sm:$0xf]
      %v1261 = vld [vmem:[%s4 + $0x10] sm:$0xf]
      %v1262 = vld [vmem:[%s4 + $0x14] sm:$0xf]
      %v1263 = vld [vmem:[%s4 + $0x18] sm:$0xf]
      %v1264 = vld [vmem:[%s4 + $0x1c] sm:$0xf]
      %v1265 = vld [vmem:[%s4 + $0x20] sm:$0xf]
      %v1266 = vld [vmem:[%s4 + $0x24] sm:$0xf]
      %v1267 = vld [vmem:[%s4 + $0x28] sm:$0xf]
      %v1268 = vld [vmem:[%s4 + $0x2c] sm:$0xf]
      %v1269 = vld [vmem:[%s4 + $0x30] sm:$0xf]
      %v1270 = vld [vmem:[%s4 + $0x34] sm:$0xf]
      %v1271 = vld [vmem:[%s4 + $0x38] sm:$0xf]
      %v1272 = vld [vmem:[%s4 + $0x3c] sm:$0xf]
      %v1273 = vld [vmem:[%s4 + $0x40] sm:$0xf]
      %v1274 = vld [vmem:[%s4 + $0x44] sm:$0xf]
      %v1275 = vld [vmem:[%s4 + $0x48] sm:$0xf]
      %v1276 = vld [vmem:[%s4 + $0x4c] sm:$0xf]
      %v1277 = vld [vmem:[%s4 + $0x50] sm:$0xf]
      %v1278 = vld [vmem:[%s4 + $0x54] sm:$0xf]
      %v1279 = vld [vmem:[%s4 + $0x58] sm:$0xf]
      %v1280 = vld [vmem:[%s4 + $0x5c] sm:$0xf]
      %v1281 = vld [vmem:[%s4 + $0x60] sm:$0xf]
      %v1282 = vld [vmem:[%s4 + $0x64] sm:$0xf]
      %v1283 = vld [vmem:[%s4 + $0x68] sm:$0xf]
      %v1284 = vld [vmem:[%s4 + $0x6c] sm:$0xf]
      %v1285 = vld [vmem:[%s4 + $0x70] sm:$0xf]
      %v1286 = vld [vmem:[%s4 + $0x74] sm:$0xf]
      %v1287 = vld [vmem:[%s4 + $0x78] sm:$0xf]
      %v1288 = vld [vmem:[%s4 + $0x7c] sm:$0xf]
      %v1321 = vunpack.c.l.b16 %v1257
      %v1322 = vunpack.c.l.b16 %v1258
      %v1323 = vunpack.c.l.b16 %v1259
      %v1324 = vunpack.c.l.b16 %v1260
      %v1325 = vunpack.c.l.b16 %v1261
      %v1326 = vunpack.c.l.b16 %v1262
      %v1327 = vunpack.c.l.b16 %v1263
      %v1328 = vunpack.c.l.b16 %v1264
      %v1329 = vunpack.c.l.b16 %v1265
      %v1330 = vunpack.c.l.b16 %v1266
      %v1331 = vunpack.c.l.b16 %v1267
      %v1332 = vunpack.c.l.b16 %v1268
      %v1333 = vunpack.c.l.b16 %v1269
      %v1334 = vunpack.c.l.b16 %v1270
      %v1335 = vunpack.c.l.b16 %v1271
      %v1336 = vunpack.c.l.b16 %v1272
      %v1337 = vunpack.c.l.b16 %v1273
      %v1338 = vunpack.c.l.b16 %v1274
      %v1339 = vunpack.c.l.b16 %v1275
      %v1340 = vunpack.c.l.b16 %v1276
      %v1341 = vunpack.c.l.b16 %v1277
      %v1342 = vunpack.c.l.b16 %v1278
      %v1343 = vunpack.c.l.b16 %v1279
      %v1344 = vunpack.c.l.b16 %v1280
      %v1345 = vunpack.c.l.b16 %v1281
      %v1346 = vunpack.c.l.b16 %v1282
      %v1347 = vunpack.c.l.b16 %v1283
      %v1348 = vunpack.c.l.b16 %v1284
      %v1349 = vunpack.c.l.b16 %v1285
      %v1350 = vunpack.c.l.b16 %v1286
      %v1351 = vunpack.c.l.b16 %v1287
      %v1352 = vunpack.c.l.b16 %v1288
      %v1353 = vpack.c.b16 %v1322, %v1321
      %v1354 = vpack.c.b16 %v1324, %v1323
      %v1355 = vpack.c.b16 %v1326, %v1325
      %v1356 = vpack.c.b16 %v1328, %v1327
      %v1357 = vpack.c.b16 %v1330, %v1329
      %v1358 = vpack.c.b16 %v1332, %v1331
      %v1359 = vpack.c.b16 %v1334, %v1333
      %v1360 = vpack.c.b16 %v1336, %v1335
      %v1361 = vpack.c.b16 %v1338, %v1337
      %v1362 = vpack.c.b16 %v1340, %v1339
      %v1363 = vpack.c.b16 %v1342, %v1341
      %v1364 = vpack.c.b16 %v1344, %v1343
      %v1365 = vpack.c.b16 %v1346, %v1345
      %v1366 = vpack.c.b16 %v1348, %v1347
      %v1367 = vpack.c.b16 %v1350, %v1349
      %v1368 = vpack.c.b16 %v1352, %v1351
      %1385 = vmatprep.subr.bf16.mxu0 0
      %1386 = vmatpush1.bf16.msra.mxu0 %v1353
      %1387 = vmatprep.subr.bf16.mxu0 0
      %1388 = vmatpush1.bf16.msra.mxu0 %v1354
      %1389 = vmatprep.subr.bf16.mxu0 0
      %1390 = vmatpush1.bf16.msra.mxu0 %v1355
      %1391 = vmatprep.subr.bf16.mxu0 0
      %1392 = vmatpush1.bf16.msra.mxu0 %v1356
      %1393 = vmatprep.subr.bf16.mxu0 0
      %1394 = vmatpush1.bf16.msra.mxu0 %v1357
      %1395 = vmatprep.subr.bf16.mxu0 0
      %1396 = vmatpush1.bf16.msra.mxu0 %v1358
      %1397 = vmatprep.subr.bf16.mxu0 0
      %1398 = vmatpush1.bf16.msra.mxu0 %v1359
      %1399 = vmatprep.subr.bf16.mxu0 0
      %1400 = vmatpush1.bf16.msra.mxu0 %v1360
      %1401 = vmatprep.subr.bf16.mxu0 0
      %1402 = vmatpush1.bf16.msra.mxu0 %v1361
      %1403 = vmatprep.subr.bf16.mxu0 0
      %1404 = vmatpush1.bf16.msra.mxu0 %v1362
      %1405 = vmatprep.subr.bf16.mxu0 0
      %1406 = vmatpush1.bf16.msra.mxu0 %v1363
      %1407 = vmatprep.subr.bf16.mxu0 0
      %1408 = vmatpush1.bf16.msra.mxu0 %v1364
      %1409 = vmatprep.subr.bf16.mxu0 0
      %1410 = vmatpush1.bf16.msra.mxu0 %v1365
      %1411 = vmatprep.subr.bf16.mxu0 0
      %1412 = vmatpush1.bf16.msra.mxu0 %v1366
      %1413 = vmatprep.subr.bf16.mxu0 0
      %1414 = vmatpush1.bf16.msra.mxu0 %v1367
      %1415 = vmatprep.subr.bf16.mxu0 0
      %1416 = vmatpush1.bf16.msra.mxu0 %v1368
      %1417 = vmatprep.mubr.bf16.mxu0 %v1256
      %1418 = vmatmul.mubr.bf16.gmra.mrb[0].mxu0 %v1255
      %v1419 = vpop.f32.mrb[0].mxu0
      %v1420 = vadd.f32 0.0, %v1419
      %v1421 = vpop.f32.mrb[0].mxu0
      %v1422 = vpop.f32.mrb[0].mxu0
      %v1423 = vpop.f32.mrb[0].mxu0
      %1424 = vdwg.mxu0
      %1426 = vrot.lane.b32.xlu0 %v1420, 73
      %v1427 = vpop.permute.xlu0 %1426
      %1429 = vrot.lane.b32.xlu0 %v1420, 9
      %v1430 = vpop.permute.xlu0 %1429
      %vm1432 = vcmask 72704
      %v1433 = vsel %vm1432, %v1427, %v1430
      %v1434 = vld [vmem:[%s2] sm:$0x1]
      %v1436 = vlaneseq
      %v1437 = vshrl.u32 %v1436, 7
      %v1438 = vsub.s32 0, %v1437
      %v1439 = vrot.slane %v1434, %v1438
      %v1441 = vmul.f32 %v1433, %v1439
      %1442 = vrot.lane.b32.xlu0 %v1420, 72
      %v1443 = vpop.permute.xlu0 %1442
      %1445 = vrot.lane.b32.xlu0 %v1420, 8
      %v1446 = vpop.permute.xlu0 %1445
      %vm1448 = vcmask 64512
      %v1449 = vsel %vm1448, %v1443, %v1446
      %s1450 = scalar_lea.vmem %s2, 1
      %v1451 = vld [vmem:[%s1450] sm:$0x1]
      %v1453 = vlaneseq
      %v1454 = vshrl.u32 %v1453, 7
      %v1455 = vsub.s32 0, %v1454
      %v1456 = vrot.slane %v1451, %v1455
      %v1458 = vmul.f32 %v1449, %v1456
      %1459 = vrot.lane.b32.xlu0 %v1420, 71
      %v1460 = vpop.permute.xlu0 %1459
      %1462 = vrot.lane.b32.xlu0 %v1420, 7
      %v1463 = vpop.permute.xlu0 %1462
      %vm1465 = vcmask 56320
      %v1466 = vsel %vm1465, %v1460, %v1463
      %s1467 = scalar_lea.vmem %s2, 2
      %v1468 = vld [vmem:[%s1467] sm:$0x1]
      %v1470 = vlaneseq
      %v1471 = vshrl.u32 %v1470, 7
      %v1472 = vsub.s32 0, %v1471
      %v1473 = vrot.slane %v1468, %v1472
      %v1475 = vmul.f32 %v1466, %v1473
      %1476 = vrot.lane.b32.xlu0 %v1420, 65
      %v1477 = vpop.permute.xlu0 %1476
      %1479 = vrot.lane.b32.xlu0 %v1420, 1
      %v1480 = vpop.permute.xlu0 %1479
      %v1482 = vsel %vm828, %v1477, %v1480
      %s1483 = scalar_lea.vmem %s2, 3
      %v1484 = vld [vmem:[%s1483] sm:$0x1]
      %v1486 = vlaneseq
      %v1487 = vshrl.u32 %v1486, 7
      %v1488 = vsub.s32 0, %v1487
      %v1489 = vrot.slane %v1484, %v1488
      %v1491 = vmul.f32 %v1482, %v1489
      %1492 = vrot.lane.b32.xlu0 %v1420, 127
      %v1493 = vpop.permute.xlu0 %1492
      %1495 = vrot.lane.b32.xlu0 %v1420, 63
      %v1496 = vpop.permute.xlu0 %1495
      %vm1498 = vcmask 515072
      %v1499 = vsel %vm1498, %v1493, %v1496
      %s1500 = scalar_lea.vmem %s2, 5
      %v1501 = vld [vmem:[%s1500] sm:$0x1]
      %v1503 = vlaneseq
      %v1504 = vshrl.u32 %v1503, 7
      %v1505 = vsub.s32 0, %v1504
      %v1506 = vrot.slane %v1501, %v1505
      %v1508 = vmul.f32 %v1499, %v1506
      %1509 = vrot.lane.b32.xlu0 %v1420, 121
      %v1510 = vpop.permute.xlu0 %1509
      %1512 = vrot.lane.b32.xlu0 %v1420, 57
      %v1513 = vpop.permute.xlu0 %1512
      %vm1515 = vcmask 465920
      %v1516 = vsel %vm1515, %v1510, %v1513
      %s1517 = scalar_lea.vmem %s2, 6
      %v1518 = vld [vmem:[%s1517] sm:$0x1]
      %v1520 = vlaneseq
      %v1521 = vshrl.u32 %v1520, 7
      %v1522 = vsub.s32 0, %v1521
      %v1523 = vrot.slane %v1518, %v1522
      %v1525 = vmul.f32 %v1516, %v1523
      %1526 = vrot.lane.b32.xlu0 %v1420, 120
      %v1527 = vpop.permute.xlu0 %1526
      %1529 = vrot.lane.b32.xlu0 %v1420, 56
      %v1530 = vpop.permute.xlu0 %1529
      %vm1532 = vcmask 457728
      %v1533 = vsel %vm1532, %v1527, %v1530
      %s1534 = scalar_lea.vmem %s2, 7
      %v1535 = vld [vmem:[%s1534] sm:$0x1]
      %v1537 = vlaneseq
      %v1538 = vshrl.u32 %v1537, 7
      %v1539 = vsub.s32 0, %v1538
      %v1540 = vrot.slane %v1535, %v1539
      %v1542 = vmul.f32 %v1533, %v1540
      %1543 = vrot.lane.b32.xlu0 %v1420, 119
      %v1544 = vpop.permute.xlu0 %1543
      %1546 = vrot.lane.b32.xlu0 %v1420, 55
      %v1547 = vpop.permute.xlu0 %1546
      %vm1549 = vcmask 449536
      %v1550 = vsel %vm1549, %v1544, %v1547
      %s1551 = scalar_lea.vmem %s2, 8
      %v1552 = vld [vmem:[%s1551] sm:$0x1]
      %v1554 = vlaneseq
      %v1555 = vshrl.u32 %v1554, 7
      %v1556 = vsub.s32 0, %v1555
      %v1557 = vrot.slane %v1552, %v1556
      %v1559 = vmul.f32 %v1550, %v1557
      %v1560 = vpack.c.bf16 %v1458, %v1441
      %v1561 = vpack.c.bf16 %v1491, %v1475
      %v1562 = vpack.c.bf16 %v1508, %v1420
      %v1563 = vpack.c.bf16 %v1542, %v1525
      %v1564 = vpack.c.bf16 %v1559, %v1559
      %v1565 = vld [vmem:[%s10] sm:$0xf]
      %v1566 = vld [vmem:[%s10 + $0x4] sm:$0xf]
      %v1569 = vunpack.c.l.b16 %v1565
      %v1570 = vunpack.c.l.b16 %v1566
      %v1571 = vpack.c.b16 %v1570, %v1569
      %v1573 = vsel %vm1182, %v1571, 0
      %v1576 = vsel %vm989, %v1564, 0
      %1578 = vmatprep.subr.bf16.mxu0 0
      %1579 = vmatpush1.bf16.msra.mxu0 %v1560
      %1580 = vmatprep.subr.bf16.mxu0 0
      %1581 = vmatpush1.bf16.msra.mxu0 %v1561
      %1582 = vmatprep.subr.bf16.mxu0 0
      %1583 = vmatpush1.bf16.msra.mxu0 %v1562
      %1584 = vmatprep.subr.bf16.mxu0 0
      %1585 = vmatpush1.bf16.msra.mxu0 %v1563
      %1586 = vmatprep.subr.bf16.mxu0 0
      %1587 = vmatpush1.bf16.msra.mxu0 %v1576
      %1588 = vmatprep.subr.bf16.mxu0 0
      %1589 = vmatpush1.bf16.msra.mxu0 0
      %1590 = vmatprep.subr.bf16.mxu0 0
      %1591 = vmatpush1.bf16.msra.mxu0 0
      %1592 = vmatprep.subr.bf16.mxu0 0
      %1593 = vmatpush1.bf16.msra.mxu0 0
      %1594 = vmatprep.subr.bf16.mxu0 0
      %1595 = vmatpush1.bf16.msra.mxu0 0
      %1596 = vmatprep.subr.bf16.mxu0 0
      %1597 = vmatpush1.bf16.msra.mxu0 0
      %1598 = vmatprep.subr.bf16.mxu0 0
      %1599 = vmatpush1.bf16.msra.mxu0 0
      %1600 = vmatprep.subr.bf16.mxu0 0
      %1601 = vmatpush1.bf16.msra.mxu0 0
      %1602 = vmatprep.subr.bf16.mxu0 0
      %1603 = vmatpush1.bf16.msra.mxu0 0
      %1604 = vmatprep.subr.bf16.mxu0 0
      %1605 = vmatpush1.bf16.msra.mxu0 0
      %1606 = vmatprep.subr.bf16.mxu0 0
      %1607 = vmatpush1.bf16.msra.mxu0 0
      %1608 = vmatprep.subr.bf16.mxu0 0
      %1609 = vmatpush1.bf16.msra.mxu0 0
      %1610 = vmatprep.mubr.bf16.mxu0 0
      %1611 = vmatmul.mubr.bf16.gmra.mrb[0].mxu0 %v1573
      %v1612 = vpop.f32.mrb[0].mxu0
      %v1613 = vadd.f32 0.0, %v1612
      %v1614 = vpop.f32.mrb[0].mxu0
      %v1615 = vpop.f32.mrb[0].mxu0
      %v1616 = vadd.f32 0.0, %v1615
      %v1617 = vpop.f32.mrb[0].mxu0
      %1618 = vdwg.mxu0
      %vm1619 = vcmask 523264
      %v1620 = vsel %vm1619, %v1613, 0.0
      %1621 = vadd.xlane.f32.xlu0 %v1620
      %v1622 = vpop.xlane.xlu0 %1621
      %v1623 = vsel %vm1619, %v1616, 0.0
      %1624 = vadd.xlane.f32.xlu0 %v1623
      %v1625 = vpop.xlane.xlu0 %1624
      %v1626 = vrcp.pop 64.0
      %v1627 = vmul.f32 %v1622, %v1626
      %v1628 = vmul.f32 %v1625, %v1626
      %v1629 = vsub.f32 %v1613, %v1627
      %v1630 = vsub.f32 %v1616, %v1628
      %v1631 = vmul.f32 %v1629, %v1629
      %v1632 = vmul.f32 %v1630, %v1630
      %v1633 = vsel %vm1619, %v1631, 0.0
      %1634 = vadd.xlane.f32.xlu0 %v1633
      %v1635 = vpop.xlane.xlu0 %1634
      %v1636 = vsel %vm1619, %v1632, 0.0
      %1637 = vadd.xlane.f32.xlu0 %v1636
      %v1638 = vpop.xlane.xlu0 %1637
      %v1639 = vmul.f32 %v1635, %v1626
      %v1640 = vmul.f32 %v1638, %v1626
      %v1641 = vadd.f32 %v1639, 1e-05
      %v1642 = vadd.f32 %v1640, 1e-05
      %v1643 = vrsqrt.pop %v1641
      %v1644 = vrsqrt.pop %v1642
      %v1645 = vmul.f32 %v1629, %v1643
      %v1646 = vmul.f32 %v1630, %v1644
      %vm1647 = vcmp.ge.f32.partialorder %v1645, 0.0
      %vm1648 = vcmp.ge.f32.partialorder %v1646, 0.0
      %v1649 = vmul.f32 %v1645, 0.2
      %v1650 = vmul.f32 %v1646, 0.2
      %v1651 = vsel %vm1647, %v1645, %v1649
      %v1652 = vsel %vm1648, %v1646, %v1650
      %1655 = vrot.lane.b32.xlu0 %v1651, 73
      %v1656 = vpop.permute.xlu0 %1655
      %1657 = vrot.lane.b32.xlu0 %v1652, 73
      %v1658 = vpop.permute.xlu0 %1657
      %1661 = vrot.lane.b32.xlu0 %v1651, 9
      %v1662 = vpop.permute.xlu0 %1661
      %1663 = vrot.lane.b32.xlu0 %v1652, 9
      %v1664 = vpop.permute.xlu0 %1663
      %v1667 = vsel %vm1432, %v1656, %v1662
      %v1668 = vsel %vm1432, %v1658, %v1664
      %v1669 = vmul.f32 %v1667, %v1439
      %v1670 = vmul.f32 %v1668, %v1439
      %1671 = vrot.lane.b32.xlu0 %v1651, 72
      %v1672 = vpop.permute.xlu0 %1671
      %1673 = vrot.lane.b32.xlu0 %v1652, 72
      %v1674 = vpop.permute.xlu0 %1673
      %1677 = vrot.lane.b32.xlu0 %v1651, 8
      %v1678 = vpop.permute.xlu0 %1677
      %1679 = vrot.lane.b32.xlu0 %v1652, 8
      %v1680 = vpop.permute.xlu0 %1679
      %v1683 = vsel %vm1448, %v1672, %v1678
      %v1684 = vsel %vm1448, %v1674, %v1680
      %v1685 = vmul.f32 %v1683, %v1456
      %v1686 = vmul.f32 %v1684, %v1456
      %1687 = vrot.lane.b32.xlu0 %v1651, 71
      %v1688 = vpop.permute.xlu0 %1687
      %1689 = vrot.lane.b32.xlu0 %v1652, 71
      %v1690 = vpop.permute.xlu0 %1689
      %1693 = vrot.lane.b32.xlu0 %v1651, 7
      %v1694 = vpop.permute.xlu0 %1693
      %1695 = vrot.lane.b32.xlu0 %v1652, 7
      %v1696 = vpop.permute.xlu0 %1695
      %v1699 = vsel %vm1465, %v1688, %v1694
      %v1700 = vsel %vm1465, %v1690, %v1696
      %v1701 = vmul.f32 %v1699, %v1473
      %v1702 = vmul.f32 %v1700, %v1473
      %1703 = vrot.lane.b32.xlu0 %v1651, 65
      %v1704 = vpop.permute.xlu0 %1703
      %1705 = vrot.lane.b32.xlu0 %v1652, 65
      %v1706 = vpop.permute.xlu0 %1705
      %1709 = vrot.lane.b32.xlu0 %v1651, 1
      %v1710 = vpop.permute.xlu0 %1709
      %1711 = vrot.lane.b32.xlu0 %v1652, 1
      %v1712 = vpop.permute.xlu0 %1711
      %v1715 = vsel %vm828, %v1704, %v1710
      %v1716 = vsel %vm828, %v1706, %v1712
      %v1717 = vmul.f32 %v1715, %v1489
      %v1718 = vmul.f32 %v1716, %v1489
      %1719 = vrot.lane.b32.xlu0 %v1651, 127
      %v1720 = vpop.permute.xlu0 %1719
      %1721 = vrot.lane.b32.xlu0 %v1652, 127
      %v1722 = vpop.permute.xlu0 %1721
      %1725 = vrot.lane.b32.xlu0 %v1651, 63
      %v1726 = vpop.permute.xlu0 %1725
      %1727 = vrot.lane.b32.xlu0 %v1652, 63
      %v1728 = vpop.permute.xlu0 %1727
      %v1731 = vsel %vm1498, %v1720, %v1726
      %v1732 = vsel %vm1498, %v1722, %v1728
      %v1733 = vmul.f32 %v1731, %v1506
      %v1734 = vmul.f32 %v1732, %v1506
      %1735 = vrot.lane.b32.xlu0 %v1651, 121
      %v1736 = vpop.permute.xlu0 %1735
      %1737 = vrot.lane.b32.xlu0 %v1652, 121
      %v1738 = vpop.permute.xlu0 %1737
      %1741 = vrot.lane.b32.xlu0 %v1651, 57
      %v1742 = vpop.permute.xlu0 %1741
      %1743 = vrot.lane.b32.xlu0 %v1652, 57
      %v1744 = vpop.permute.xlu0 %1743
      %v1747 = vsel %vm1515, %v1736, %v1742
      %v1748 = vsel %vm1515, %v1738, %v1744
      %v1749 = vmul.f32 %v1747, %v1523
      %v1750 = vmul.f32 %v1748, %v1523
      %1751 = vrot.lane.b32.xlu0 %v1651, 120
      %v1752 = vpop.permute.xlu0 %1751
      %1753 = vrot.lane.b32.xlu0 %v1652, 120
      %v1754 = vpop.permute.xlu0 %1753
      %1757 = vrot.lane.b32.xlu0 %v1651, 56
      %v1758 = vpop.permute.xlu0 %1757
      %1759 = vrot.lane.b32.xlu0 %v1652, 56
      %v1760 = vpop.permute.xlu0 %1759
      %v1763 = vsel %vm1532, %v1752, %v1758
      %v1764 = vsel %vm1532, %v1754, %v1760
      %v1765 = vmul.f32 %v1763, %v1540
      %v1766 = vmul.f32 %v1764, %v1540
      %1767 = vrot.lane.b32.xlu0 %v1651, 119
      %v1768 = vpop.permute.xlu0 %1767
      %1769 = vrot.lane.b32.xlu0 %v1652, 119
      %v1770 = vpop.permute.xlu0 %1769
      %1773 = vrot.lane.b32.xlu0 %v1651, 55
      %v1774 = vpop.permute.xlu0 %1773
      %1775 = vrot.lane.b32.xlu0 %v1652, 55
      %v1776 = vpop.permute.xlu0 %1775
      %v1779 = vsel %vm1549, %v1768, %v1774
      %v1780 = vsel %vm1549, %v1770, %v1776
      %v1781 = vmul.f32 %v1779, %v1557
      %v1782 = vmul.f32 %v1780, %v1557
      %v1783 = vpack.c.bf16 %v1670, %v1669
      %v1784 = vpack.c.bf16 %v1686, %v1685
      %v1785 = vpack.c.bf16 %v1702, %v1701
      %v1786 = vpack.c.bf16 %v1718, %v1717
      %v1787 = vpack.c.bf16 %v1652, %v1651
      %v1788 = vpack.c.bf16 %v1734, %v1733
      %v1789 = vpack.c.bf16 %v1750, %v1749
      %v1790 = vpack.c.bf16 %v1766, %v1765
      %v1791 = vpack.c.bf16 %v1782, %v1781
      %v1792 = vld [vmem:[%s11] sm:$0xff]
      %v1793 = vld [vmem:[%s11 + $0x8] sm:$0xff]
      %v1796 = vunpack.c.l.b16 %v1792
      %v1797 = vunpack.c.h.b16 %v1792
      %v1798 = vunpack.c.l.b16 %v1793
      %v1799 = vunpack.c.h.b16 %v1793
      %v1800 = vpack.c.b16 %v1798, %v1796
      %v1801 = vpack.c.b16 %v1799, %v1797
      %v1804 = vsel %vm778, %v1801, 0
      %1806 = vmatprep.subr.bf16.mxu0 0
      %1807 = vmatpush1.bf16.msra.mxu0 %v1783
      %1808 = vmatprep.subr.bf16.mxu0 0
      %1809 = vmatpush1.bf16.msra.mxu0 %v1784
      %1810 = vmatprep.subr.bf16.mxu0 0
      %1811 = vmatpush1.bf16.msra.mxu0 %v1785
      %1812 = vmatprep.subr.bf16.mxu0 0
      %1813 = vmatpush1.bf16.msra.mxu0 %v1786
      %1814 = vmatprep.subr.bf16.mxu0 0
      %1815 = vmatpush1.bf16.msra.mxu0 %v1787
      %1816 = vmatprep.subr.bf16.mxu0 0
      %1817 = vmatpush1.bf16.msra.mxu0 %v1788
      %1818 = vmatprep.subr.bf16.mxu0 0
      %1819 = vmatpush1.bf16.msra.mxu0 %v1789
      %1820 = vmatprep.subr.bf16.mxu0 0
      %1821 = vmatpush1.bf16.msra.mxu0 %v1790
      %1822 = vmatprep.subr.bf16.mxu0 0
      %1823 = vmatpush1.bf16.msra.mxu0 %v1791
      %1824 = vmatprep.subr.bf16.mxu0 0
      %1825 = vmatpush1.bf16.msra.mxu0 0
      %1826 = vmatprep.subr.bf16.mxu0 0
      %1827 = vmatpush1.bf16.msra.mxu0 0
      %1828 = vmatprep.subr.bf16.mxu0 0
      %1829 = vmatpush1.bf16.msra.mxu0 0
      %1830 = vmatprep.subr.bf16.mxu0 0
      %1831 = vmatpush1.bf16.msra.mxu0 0
      %1832 = vmatprep.subr.bf16.mxu0 0
      %1833 = vmatpush1.bf16.msra.mxu0 0
      %1834 = vmatprep.subr.bf16.mxu0 0
      %1835 = vmatpush1.bf16.msra.mxu0 0
      %1836 = vmatprep.subr.bf16.mxu0 0
      %1837 = vmatpush1.bf16.msra.mxu0 0
      %1838 = vmatprep.mubr.bf16.mxu0 %v1804
      %1839 = vmatmul.mubr.bf16.gmra.mrb[0].mxu0 %v1800
      %v1840 = vpop.f32.mrb[0].mxu0
      %v1841 = vadd.f32 0.0, %v1840
      %v1842 = vpop.f32.mrb[0].mxu0
      %v1843 = vpop.f32.mrb[0].mxu0
      %v1844 = vadd.f32 0.0, %v1843
      %v1845 = vpop.f32.mrb[0].mxu0
      %1846 = vdwg.mxu0
      %v1847 = vsel %vm1619, %v1841, 0.0
      %1848 = vadd.xlane.f32.xlu0 %v1847
      %v1849 = vpop.xlane.xlu0 %1848
      %v1850 = vsel %vm1619, %v1844, 0.0
      %1851 = vadd.xlane.f32.xlu0 %v1850
      %v1852 = vpop.xlane.xlu0 %1851
      %v1853 = vmul.f32 %v1849, %v1626
      %v1854 = vmul.f32 %v1852, %v1626
      %v1855 = vsub.f32 %v1841, %v1853
      %v1856 = vsub.f32 %v1844, %v1854
      %v1857 = vmul.f32 %v1855, %v1855
      %v1858 = vmul.f32 %v1856, %v1856
      %v1859 = vsel %vm1619, %v1857, 0.0
      %1860 = vadd.xlane.f32.xlu0 %v1859
      %v1861 = vpop.xlane.xlu0 %1860
      %v1862 = vsel %vm1619, %v1858, 0.0
      %1863 = vadd.xlane.f32.xlu0 %v1862
      %v1864 = vpop.xlane.xlu0 %1863
      %v1865 = vmul.f32 %v1861, %v1626
      %v1866 = vmul.f32 %v1864, %v1626
      %v1867 = vadd.f32 %v1865, 1e-05
      %v1868 = vadd.f32 %v1866, 1e-05
      %v1869 = vrsqrt.pop %v1867
      %v1870 = vrsqrt.pop %v1868
      %v1871 = vmul.f32 %v1855, %v1869
      %v1872 = vmul.f32 %v1856, %v1870
      %vm1873 = vcmp.ge.f32.partialorder %v1871, 0.0
      %vm1874 = vcmp.ge.f32.partialorder %v1872, 0.0
      %v1875 = vmul.f32 %v1871, 0.2
      %v1876 = vmul.f32 %v1872, 0.2
      %v1877 = vsel %vm1873, %v1871, %v1875
      %v1878 = vsel %vm1874, %v1872, %v1876
      %v1879 = vpack.c.bf16 %v1878, %v1877
      %v1880 = vld [vmem:[%s5] sm:$0xf]
      %v1881 = vld [vmem:[%s5 + $0x4] sm:$0xf]
      %v1882 = vld [vmem:[%s5 + $0x8] sm:$0xf]
      %v1883 = vld [vmem:[%s5 + $0xc] sm:$0xf]
      %v1884 = vld [vmem:[%s5 + $0x10] sm:$0xf]
      %v1885 = vld [vmem:[%s5 + $0x14] sm:$0xf]
      %v1886 = vld [vmem:[%s5 + $0x18] sm:$0xf]
      %v1887 = vld [vmem:[%s5 + $0x1c] sm:$0xf]
      %v1896 = vunpack.c.l.b16 %v1880
      %v1897 = vunpack.c.l.b16 %v1881
      %v1898 = vunpack.c.l.b16 %v1882
      %v1899 = vunpack.c.l.b16 %v1883
      %v1900 = vunpack.c.l.b16 %v1884
      %v1901 = vunpack.c.l.b16 %v1885
      %v1902 = vunpack.c.l.b16 %v1886
      %v1903 = vunpack.c.l.b16 %v1887
      %v1904 = vpack.c.b16 %v1897, %v1896
      %v1905 = vpack.c.b16 %v1899, %v1898
      %v1906 = vpack.c.b16 %v1901, %v1900
      %v1907 = vpack.c.b16 %v1903, %v1902
      %v1913 = vsel %vm1619, %v1879, 0
      %1915 = vmatprep.subr.bf16.mxu0 0
      %1916 = vmatpush1.bf16.msra.mxu0 %v1904
      %1917 = vmatprep.subr.bf16.mxu0 0
      %1918 = vmatpush1.bf16.msra.mxu0 %v1905
      %1919 = vmatprep.subr.bf16.mxu0 0
      %1920 = vmatpush1.bf16.msra.mxu0 %v1906
      %1921 = vmatprep.subr.bf16.mxu0 0
      %1922 = vmatpush1.bf16.msra.mxu0 %v1907
      %1923 = vmatprep.subr.bf16.mxu0 0
      %1924 = vmatpush1.bf16.msra.mxu0 0
      %1925 = vmatprep.subr.bf16.mxu0 0
      %1926 = vmatpush1.bf16.msra.mxu0 0
      %1927 = vmatprep.subr.bf16.mxu0 0
      %1928 = vmatpush1.bf16.msra.mxu0 0
      %1929 = vmatprep.subr.bf16.mxu0 0
      %1930 = vmatpush1.bf16.msra.mxu0 0
      %1931 = vmatprep.subr.bf16.mxu0 0
      %1932 = vmatpush1.bf16.msra.mxu0 0
      %1933 = vmatprep.subr.bf16.mxu0 0
      %1934 = vmatpush1.bf16.msra.mxu0 0
      %1935 = vmatprep.subr.bf16.mxu0 0
      %1936 = vmatpush1.bf16.msra.mxu0 0
      %1937 = vmatprep.subr.bf16.mxu0 0
      %1938 = vmatpush1.bf16.msra.mxu0 0
      %1939 = vmatprep.subr.bf16.mxu0 0
      %1940 = vmatpush1.bf16.msra.mxu0 0
      %1941 = vmatprep.subr.bf16.mxu0 0
      %1942 = vmatpush1.bf16.msra.mxu0 0
      %1943 = vmatprep.subr.bf16.mxu0 0
      %1944 = vmatpush1.bf16.msra.mxu0 0
      %1945 = vmatprep.subr.bf16.mxu0 0
      %1946 = vmatpush1.bf16.msra.mxu0 0
      %1947 = vmatprep.mubr.bf16.mxu0 0
      %1948 = vmatmul.mubr.bf16.gmra.mrb[0].mxu0 %v1913
      %v1949 = vpop.f32.mrb[0].mxu0
      %v1950 = vadd.f32 0.0, %v1949
      %v1951 = vpop.f32.mrb[0].mxu0
      %v1952 = vpop.f32.mrb[0].mxu0
      %v1953 = vadd.f32 0.0, %v1952
      %v1954 = vpop.f32.mrb[0].mxu0
      %1955 = vdwg.mxu0
      %1958 = vrot.lane.b32.xlu0 %v1950, 117
      %v1959 = vpop.permute.xlu0 %1958
      %1960 = vrot.lane.b32.xlu0 %v1953, 117
      %v1961 = vpop.permute.xlu0 %1960
      %1964 = vrot.lane.b32.xlu0 %v1950, 5
      %v1965 = vpop.permute.xlu0 %1964
      %1966 = vrot.lane.b32.xlu0 %v1953, 5
      %v1967 = vpop.permute.xlu0 %1966
      %vm1970 = vcmask 39936
      %v1971 = vsel %vm1970, %v1959, %v1965
      %v1972 = vsel %vm1970, %v1961, %v1967
      %v1973 = vld [vmem:[%s3] sm:$0x1]
      %v1975 = vlaneseq
      %v1976 = vshrl.u32 %v1975, 7
      %v1977 = vsub.s32 0, %v1976
      %v1978 = vrot.slane %v1973, %v1977
      %v1980 = vmul.f32 %v1971, %v1978
      %v1981 = vmul.f32 %v1972, %v1978
      %1982 = vrot.lane.b32.xlu0 %v1950, 116
      %v1983 = vpop.permute.xlu0 %1982
      %1984 = vrot.lane.b32.xlu0 %v1953, 116
      %v1985 = vpop.permute.xlu0 %1984
      %1988 = vrot.lane.b32.xlu0 %v1950, 4
      %v1989 = vpop.permute.xlu0 %1988
      %1990 = vrot.lane.b32.xlu0 %v1953, 4
      %v1991 = vpop.permute.xlu0 %1990
      %vm1994 = vcmask 31744
      %v1995 = vsel %vm1994, %v1983, %v1989
      %v1996 = vsel %vm1994, %v1985, %v1991
      %s1997 = scalar_lea.vmem %s3, 1
      %v1998 = vld [vmem:[%s1997] sm:$0x1]
      %v2000 = vlaneseq
      %v2001 = vshrl.u32 %v2000, 7
      %v2002 = vsub.s32 0, %v2001
      %v2003 = vrot.slane %v1998, %v2002
      %v2005 = vmul.f32 %v1995, %v2003
      %v2006 = vmul.f32 %v1996, %v2003
      %2007 = vrot.lane.b32.xlu0 %v1950, 115
      %v2008 = vpop.permute.xlu0 %2007
      %2009 = vrot.lane.b32.xlu0 %v1953, 115
      %v2010 = vpop.permute.xlu0 %2009
      %2013 = vrot.lane.b32.xlu0 %v1950, 3
      %v2014 = vpop.permute.xlu0 %2013
      %2015 = vrot.lane.b32.xlu0 %v1953, 3
      %v2016 = vpop.permute.xlu0 %2015
      %vm2019 = vcmask 23552
      %v2020 = vsel %vm2019, %v2008, %v2014
      %v2021 = vsel %vm2019, %v2010, %v2016
      %s2022 = scalar_lea.vmem %s3, 2
      %v2023 = vld [vmem:[%s2022] sm:$0x1]
      %v2025 = vlaneseq
      %v2026 = vshrl.u32 %v2025, 7
      %v2027 = vsub.s32 0, %v2026
      %v2028 = vrot.slane %v2023, %v2027
      %v2030 = vmul.f32 %v2020, %v2028
      %v2031 = vmul.f32 %v2021, %v2028
      %2032 = vrot.lane.b32.xlu0 %v1950, 113
      %v2033 = vpop.permute.xlu0 %2032
      %2034 = vrot.lane.b32.xlu0 %v1953, 113
      %v2035 = vpop.permute.xlu0 %2034
      %2038 = vrot.lane.b32.xlu0 %v1950, 1
      %v2039 = vpop.permute.xlu0 %2038
      %2040 = vrot.lane.b32.xlu0 %v1953, 1
      %v2041 = vpop.permute.xlu0 %2040
      %v2044 = vsel %vm828, %v2033, %v2039
      %v2045 = vsel %vm828, %v2035, %v2041
      %s2046 = scalar_lea.vmem %s3, 3
      %v2047 = vld [vmem:[%s2046] sm:$0x1]
      %v2049 = vlaneseq
      %v2050 = vshrl.u32 %v2049, 7
      %v2051 = vsub.s32 0, %v2050
      %v2052 = vrot.slane %v2047, %v2051
      %v2054 = vmul.f32 %v2044, %v2052
      %v2055 = vmul.f32 %v2045, %v2052
      %2056 = vrot.lane.b32.xlu0 %v1950, 127
      %v2057 = vpop.permute.xlu0 %2056
      %2058 = vrot.lane.b32.xlu0 %v1953, 127
      %v2059 = vpop.permute.xlu0 %2058
      %2062 = vrot.lane.b32.xlu0 %v1950, 15
      %v2063 = vpop.permute.xlu0 %2062
      %2064 = vrot.lane.b32.xlu0 %v1953, 15
      %v2065 = vpop.permute.xlu0 %2064
      %v2068 = vsel %vm803, %v2057, %v2063
      %v2069 = vsel %vm803, %v2059, %v2065
      %s2070 = scalar_lea.vmem %s3, 5
      %v2071 = vld [vmem:[%s2070] sm:$0x1]
      %v2073 = vlaneseq
      %v2074 = vshrl.u32 %v2073, 7
      %v2075 = vsub.s32 0, %v2074
      %v2076 = vrot.slane %v2071, %v2075
      %v2078 = vmul.f32 %v2068, %v2076
      %v2079 = vmul.f32 %v2069, %v2076
      %2080 = vrot.lane.b32.xlu0 %v1950, 125
      %v2081 = vpop.permute.xlu0 %2080
      %2082 = vrot.lane.b32.xlu0 %v1953, 125
      %v2083 = vpop.permute.xlu0 %2082
      %2086 = vrot.lane.b32.xlu0 %v1950, 13
      %v2087 = vpop.permute.xlu0 %2086
      %2088 = vrot.lane.b32.xlu0 %v1953, 13
      %v2089 = vpop.permute.xlu0 %2088
      %vm2092 = vcmask 105472
      %v2093 = vsel %vm2092, %v2081, %v2087
      %v2094 = vsel %vm2092, %v2083, %v2089
      %s2095 = scalar_lea.vmem %s3, 6
      %v2096 = vld [vmem:[%s2095] sm:$0x1]
      %v2098 = vlaneseq
      %v2099 = vshrl.u32 %v2098, 7
      %v2100 = vsub.s32 0, %v2099
      %v2101 = vrot.slane %v2096, %v2100
      %v2103 = vmul.f32 %v2093, %v2101
      %v2104 = vmul.f32 %v2094, %v2101
      %2105 = vrot.lane.b32.xlu0 %v1950, 124
      %v2106 = vpop.permute.xlu0 %2105
      %2107 = vrot.lane.b32.xlu0 %v1953, 124
      %v2108 = vpop.permute.xlu0 %2107
      %2111 = vrot.lane.b32.xlu0 %v1950, 12
      %v2112 = vpop.permute.xlu0 %2111
      %2113 = vrot.lane.b32.xlu0 %v1953, 12
      %v2114 = vpop.permute.xlu0 %2113
      %vm2117 = vcmask 97280
      %v2118 = vsel %vm2117, %v2106, %v2112
      %v2119 = vsel %vm2117, %v2108, %v2114
      %s2120 = scalar_lea.vmem %s3, 7
      %v2121 = vld [vmem:[%s2120] sm:$0x1]
      %v2123 = vlaneseq
      %v2124 = vshrl.u32 %v2123, 7
      %v2125 = vsub.s32 0, %v2124
      %v2126 = vrot.slane %v2121, %v2125
      %v2128 = vmul.f32 %v2118, %v2126
      %v2129 = vmul.f32 %v2119, %v2126
      %2130 = vrot.lane.b32.xlu0 %v1950, 123
      %v2131 = vpop.permute.xlu0 %2130
      %2132 = vrot.lane.b32.xlu0 %v1953, 123
      %v2133 = vpop.permute.xlu0 %2132
      %2136 = vrot.lane.b32.xlu0 %v1950, 11
      %v2137 = vpop.permute.xlu0 %2136
      %2138 = vrot.lane.b32.xlu0 %v1953, 11
      %v2139 = vpop.permute.xlu0 %2138
      %vm2142 = vcmask 89088
      %v2143 = vsel %vm2142, %v2131, %v2137
      %v2144 = vsel %vm2142, %v2133, %v2139
      %s2145 = scalar_lea.vmem %s3, 8
      %v2146 = vld [vmem:[%s2145] sm:$0x1]
      %v2148 = vlaneseq
      %v2149 = vshrl.u32 %v2148, 7
      %v2150 = vsub.s32 0, %v2149
      %v2151 = vrot.slane %v2146, %v2150
      %v2153 = vmul.f32 %v2143, %v2151
      %v2154 = vmul.f32 %v2144, %v2151
      %v2155 = vpack.c.bf16 %v1981, %v1980
      %v2156 = vpack.c.bf16 %v2006, %v2005
      %v2157 = vpack.c.bf16 %v2031, %v2030
      %v2158 = vpack.c.bf16 %v2055, %v2054
      %v2159 = vpack.c.bf16 %v1953, %v1950
      %v2160 = vpack.c.bf16 %v2079, %v2078
      %v2161 = vpack.c.bf16 %v2104, %v2103
      %v2162 = vpack.c.bf16 %v2129, %v2128
      %v2163 = vpack.c.bf16 %v2154, %v2153
      %v2164 = vld [vmem:[%s12] sm:$0xff]
      %v2165 = vld [vmem:[%s12 + $0x8] sm:$0xff]
      %v2166 = vld [vmem:[%s12 + $0x10] sm:$0xff]
      %v2167 = vld [vmem:[%s12 + $0x18] sm:$0xff]
      %v2172 = vunpack.c.l.b16 %v2164
      %v2173 = vunpack.c.h.b16 %v2164
      %v2174 = vunpack.c.l.b16 %v2165
      %v2175 = vunpack.c.h.b16 %v2165
      %v2176 = vunpack.c.l.b16 %v2166
      %v2177 = vunpack.c.h.b16 %v2166
      %v2178 = vunpack.c.l.b16 %v2167
      %v2179 = vunpack.c.h.b16 %v2167
      %v2180 = vpack.c.b16 %v2174, %v2172
      %v2181 = vpack.c.b16 %v2175, %v2173
      %v2182 = vpack.c.b16 %v2178, %v2176
      %v2183 = vpack.c.b16 %v2179, %v2177
      %v2187 = vsel %vm778, %v2181, 0
      %v2190 = vsel %vm778, %v2183, 0
      %2192 = vmatprep.subr.bf16.mxu0 0
      %2193 = vmatpush1.bf16.msra.mxu0 %v2155
      %2194 = vmatprep.subr.bf16.mxu0 0
      %2195 = vmatpush1.bf16.msra.mxu0 %v2156
      %2196 = vmatprep.subr.bf16.mxu0 0
      %2197 = vmatpush1.bf16.msra.mxu0 %v2157
      %2198 = vmatprep.subr.bf16.mxu0 0
      %2199 = vmatpush1.bf16.msra.mxu0 %v2158
      %2200 = vmatprep.subr.bf16.mxu0 0
      %2201 = vmatpush1.bf16.msra.mxu0 %v2159
      %2202 = vmatprep.subr.bf16.mxu0 0
      %2203 = vmatpush1.bf16.msra.mxu0 %v2160
      %2204 = vmatprep.subr.bf16.mxu0 0
      %2205 = vmatpush1.bf16.msra.mxu0 %v2161
      %2206 = vmatprep.subr.bf16.mxu0 0
      %2207 = vmatpush1.bf16.msra.mxu0 %v2162
      %2208 = vmatprep.subr.bf16.mxu0 0
      %2209 = vmatpush1.bf16.msra.mxu0 %v2163
      %2210 = vmatprep.subr.bf16.mxu0 0
      %2211 = vmatpush1.bf16.msra.mxu0 0
      %2212 = vmatprep.subr.bf16.mxu0 0
      %2213 = vmatpush1.bf16.msra.mxu0 0
      %2214 = vmatprep.subr.bf16.mxu0 0
      %2215 = vmatpush1.bf16.msra.mxu0 0
      %2216 = vmatprep.subr.bf16.mxu0 0
      %2217 = vmatpush1.bf16.msra.mxu0 0
      %2218 = vmatprep.subr.bf16.mxu0 0
      %2219 = vmatpush1.bf16.msra.mxu0 0
      %2220 = vmatprep.subr.bf16.mxu0 0
      %2221 = vmatpush1.bf16.msra.mxu0 0
      %2222 = vmatprep.subr.bf16.mxu0 0
      %2223 = vmatpush1.bf16.msra.mxu0 0
      %2224 = vmatprep.mubr.bf16.mxu0 %v2187
      %2225 = vmatmul.mubr.bf16.gmra.mrb[0].mxu0 %v2180
      %v2226 = vpop.f32.mrb[0].mxu0
      %v2227 = vadd.f32 0.0, %v2226
      %v2228 = vpop.f32.mrb[0].mxu0
      %v2229 = vpop.f32.mrb[0].mxu0
      %v2230 = vadd.f32 0.0, %v2229
      %v2231 = vpop.f32.mrb[0].mxu0
      %2232 = vmatprep.mubr.bf16.mxu0 %v2190
      %2233 = vmatmul.mubr.bf16.gmra.mrb[0].mxu0 %v2182
      %v2234 = vpop.f32.mrb[0].mxu0
      %v2235 = vadd.f32 0.0, %v2234
      %v2236 = vpop.f32.mrb[0].mxu0
      %v2237 = vpop.f32.mrb[0].mxu0
      %v2238 = vadd.f32 0.0, %v2237
      %v2239 = vpop.f32.mrb[0].mxu0
      %2240 = vdwg.mxu0
      %v2241 = vsel %vm778, %v2227, 0.0
      %2242 = vadd.xlane.f32.xlu0 %v2241
      %v2243 = vpop.xlane.xlu0 %2242
      %v2244 = vsel %vm778, %v2230, 0.0
      %2245 = vadd.xlane.f32.xlu0 %v2244
      %v2246 = vpop.xlane.xlu0 %2245
      %v2247 = vsel %vm778, %v2235, 0.0
      %2248 = vadd.xlane.f32.xlu0 %v2247
      %v2249 = vpop.xlane.xlu0 %2248
      %v2250 = vsel %vm778, %v2238, 0.0
      %2251 = vadd.xlane.f32.xlu0 %v2250
      %v2252 = vpop.xlane.xlu0 %2251
      %v2253 = vrcp.pop 16.0
      %v2254 = vmul.f32 %v2243, %v2253
      %v2255 = vmul.f32 %v2246, %v2253
      %v2256 = vmul.f32 %v2249, %v2253
      %v2257 = vmul.f32 %v2252, %v2253
      %v2258 = vsub.f32 %v2227, %v2254
      %v2259 = vsub.f32 %v2230, %v2255
      %v2260 = vsub.f32 %v2235, %v2256
      %v2261 = vsub.f32 %v2238, %v2257
      %v2262 = vmul.f32 %v2258, %v2258
      %v2263 = vmul.f32 %v2259, %v2259
      %v2264 = vmul.f32 %v2260, %v2260
      %v2265 = vmul.f32 %v2261, %v2261
      %v2266 = vsel %vm778, %v2262, 0.0
      %2267 = vadd.xlane.f32.xlu0 %v2266
      %v2268 = vpop.xlane.xlu0 %2267
      %v2269 = vsel %vm778, %v2263, 0.0
      %2270 = vadd.xlane.f32.xlu0 %v2269
      %v2271 = vpop.xlane.xlu0 %2270
      %v2272 = vsel %vm778, %v2264, 0.0
      %2273 = vadd.xlane.f32.xlu0 %v2272
      %v2274 = vpop.xlane.xlu0 %2273
      %v2275 = vsel %vm778, %v2265, 0.0
      %2276 = vadd.xlane.f32.xlu0 %v2275
      %v2277 = vpop.xlane.xlu0 %2276
      %v2278 = vmul.f32 %v2268, %v2253
      %v2279 = vmul.f32 %v2271, %v2253
      %v2280 = vmul.f32 %v2274, %v2253
      %v2281 = vmul.f32 %v2277, %v2253
      %v2282 = vadd.f32 %v2278, 1e-05
      %v2283 = vadd.f32 %v2279, 1e-05
      %v2284 = vadd.f32 %v2280, 1e-05
      %v2285 = vadd.f32 %v2281, 1e-05
      %v2286 = vrsqrt.pop %v2282
      %v2287 = vrsqrt.pop %v2283
      %v2288 = vrsqrt.pop %v2284
      %v2289 = vrsqrt.pop %v2285
      %v2290 = vmul.f32 %v2258, %v2286
      %v2291 = vmul.f32 %v2259, %v2287
      %v2292 = vmul.f32 %v2260, %v2288
      %v2293 = vmul.f32 %v2261, %v2289
      %vm2294 = vcmp.ge.f32.partialorder %v2290, 0.0
      %vm2295 = vcmp.ge.f32.partialorder %v2291, 0.0
      %vm2296 = vcmp.ge.f32.partialorder %v2292, 0.0
      %vm2297 = vcmp.ge.f32.partialorder %v2293, 0.0
      %v2298 = vmul.f32 %v2290, 0.2
      %v2299 = vmul.f32 %v2291, 0.2
      %v2300 = vmul.f32 %v2292, 0.2
      %v2301 = vmul.f32 %v2293, 0.2
      %v2302 = vsel %vm2294, %v2290, %v2298
      %v2303 = vsel %vm2295, %v2291, %v2299
      %v2304 = vsel %vm2296, %v2292, %v2300
      %v2305 = vsel %vm2297, %v2293, %v2301
      %2310 = vrot.lane.b32.xlu0 %v2302, 117
      %v2311 = vpop.permute.xlu0 %2310
      %2312 = vrot.lane.b32.xlu0 %v2303, 117
      %v2313 = vpop.permute.xlu0 %2312
      %2314 = vrot.lane.b32.xlu0 %v2304, 117
      %v2315 = vpop.permute.xlu0 %2314
      %2316 = vrot.lane.b32.xlu0 %v2305, 117
      %v2317 = vpop.permute.xlu0 %2316
      %2322 = vrot.lane.b32.xlu0 %v2302, 5
      %v2323 = vpop.permute.xlu0 %2322
      %2324 = vrot.lane.b32.xlu0 %v2303, 5
      %v2325 = vpop.permute.xlu0 %2324
      %2326 = vrot.lane.b32.xlu0 %v2304, 5
      %v2327 = vpop.permute.xlu0 %2326
      %2328 = vrot.lane.b32.xlu0 %v2305, 5
      %v2329 = vpop.permute.xlu0 %2328
      %v2334 = vsel %vm1970, %v2311, %v2323
      %v2335 = vsel %vm1970, %v2313, %v2325
      %v2336 = vsel %vm1970, %v2315, %v2327
      %v2337 = vsel %vm1970, %v2317, %v2329
      %v2338 = vmul.f32 %v2334, %v1978
      %v2339 = vmul.f32 %v2335, %v1978
      %v2340 = vmul.f32 %v2336, %v1978
      %v2341 = vmul.f32 %v2337, %v1978
      %2342 = vrot.lane.b32.xlu0 %v2302, 116
      %v2343 = vpop.permute.xlu0 %2342
      %2344 = vrot.lane.b32.xlu0 %v2303, 116
      %v2345 = vpop.permute.xlu0 %2344
      %2346 = vrot.lane.b32.xlu0 %v2304, 116
      %v2347 = vpop.permute.xlu0 %2346
      %2348 = vrot.lane.b32.xlu0 %v2305, 116
      %v2349 = vpop.permute.xlu0 %2348
      %2354 = vrot.lane.b32.xlu0 %v2302, 4
      %v2355 = vpop.permute.xlu0 %2354
      %2356 = vrot.lane.b32.xlu0 %v2303, 4
      %v2357 = vpop.permute.xlu0 %2356
      %2358 = vrot.lane.b32.xlu0 %v2304, 4
      %v2359 = vpop.permute.xlu0 %2358
      %2360 = vrot.lane.b32.xlu0 %v2305, 4
      %v2361 = vpop.permute.xlu0 %2360
      %v2366 = vsel %vm1994, %v2343, %v2355
      %v2367 = vsel %vm1994, %v2345, %v2357
      %v2368 = vsel %vm1994, %v2347, %v2359
      %v2369 = vsel %vm1994, %v2349, %v2361
      %v2370 = vmul.f32 %v2366, %v2003
      %v2371 = vmul.f32 %v2367, %v2003
      %v2372 = vmul.f32 %v2368, %v2003
      %v2373 = vmul.f32 %v2369, %v2003
      %2374 = vrot.lane.b32.xlu0 %v2302, 115
      %v2375 = vpop.permute.xlu0 %2374
      %2376 = vrot.lane.b32.xlu0 %v2303, 115
      %v2377 = vpop.permute.xlu0 %2376
      %2378 = vrot.lane.b32.xlu0 %v2304, 115
      %v2379 = vpop.permute.xlu0 %2378
      %2380 = vrot.lane.b32.xlu0 %v2305, 115
      %v2381 = vpop.permute.xlu0 %2380
      %2386 = vrot.lane.b32.xlu0 %v2302, 3
      %v2387 = vpop.permute.xlu0 %2386
      %2388 = vrot.lane.b32.xlu0 %v2303, 3
      %v2389 = vpop.permute.xlu0 %2388
      %2390 = vrot.lane.b32.xlu0 %v2304, 3
      %v2391 = vpop.permute.xlu0 %2390
      %2392 = vrot.lane.b32.xlu0 %v2305, 3
      %v2393 = vpop.permute.xlu0 %2392
      %v2398 = vsel %vm2019, %v2375, %v2387
      %v2399 = vsel %vm2019, %v2377, %v2389
      %v2400 = vsel %vm2019, %v2379, %v2391
      %v2401 = vsel %vm2019, %v2381, %v2393
      %v2402 = vmul.f32 %v2398, %v2028
      %v2403 = vmul.f32 %v2399, %v2028
      %v2404 = vmul.f32 %v2400, %v2028
      %v2405 = vmul.f32 %v2401, %v2028
      %2406 = vrot.lane.b32.xlu0 %v2302, 113
      %v2407 = vpop.permute.xlu0 %2406
      %2408 = vrot.lane.b32.xlu0 %v2303, 113
      %v2409 = vpop.permute.xlu0 %2408
      %2410 = vrot.lane.b32.xlu0 %v2304, 113
      %v2411 = vpop.permute.xlu0 %2410
      %2412 = vrot.lane.b32.xlu0 %v2305, 113
      %v2413 = vpop.permute.xlu0 %2412
      %2418 = vrot.lane.b32.xlu0 %v2302, 1
      %v2419 = vpop.permute.xlu0 %2418
      %2420 = vrot.lane.b32.xlu0 %v2303, 1
      %v2421 = vpop.permute.xlu0 %2420
      %2422 = vrot.lane.b32.xlu0 %v2304, 1
      %v2423 = vpop.permute.xlu0 %2422
      %2424 = vrot.lane.b32.xlu0 %v2305, 1
      %v2425 = vpop.permute.xlu0 %2424
      %v2430 = vsel %vm828, %v2407, %v2419
      %v2431 = vsel %vm828, %v2409, %v2421
      %v2432 = vsel %vm828, %v2411, %v2423
      %v2433 = vsel %vm828, %v2413, %v2425
      %v2434 = vmul.f32 %v2430, %v2052
      %v2435 = vmul.f32 %v2431, %v2052
      %v2436 = vmul.f32 %v2432, %v2052
      %v2437 = vmul.f32 %v2433, %v2052
      %2438 = vrot.lane.b32.xlu0 %v2302, 127
      %v2439 = vpop.permute.xlu0 %2438
      %2440 = vrot.lane.b32.xlu0 %v2303, 127
      %v2441 = vpop.permute.xlu0 %2440
      %2442 = vrot.lane.b32.xlu0 %v2304, 127
      %v2443 = vpop.permute.xlu0 %2442
      %2444 = vrot.lane.b32.xlu0 %v2305, 127
      %v2445 = vpop.permute.xlu0 %2444
      %2450 = vrot.lane.b32.xlu0 %v2302, 15
      %v2451 = vpop.permute.xlu0 %2450
      %2452 = vrot.lane.b32.xlu0 %v2303, 15
      %v2453 = vpop.permute.xlu0 %2452
      %2454 = vrot.lane.b32.xlu0 %v2304, 15
      %v2455 = vpop.permute.xlu0 %2454
      %2456 = vrot.lane.b32.xlu0 %v2305, 15
      %v2457 = vpop.permute.xlu0 %2456
      %v2462 = vsel %vm803, %v2439, %v2451
      %v2463 = vsel %vm803, %v2441, %v2453
      %v2464 = vsel %vm803, %v2443, %v2455
      %v2465 = vsel %vm803, %v2445, %v2457
      %v2466 = vmul.f32 %v2462, %v2076
      %v2467 = vmul.f32 %v2463, %v2076
      %v2468 = vmul.f32 %v2464, %v2076
      %v2469 = vmul.f32 %v2465, %v2076
      %2470 = vrot.lane.b32.xlu0 %v2302, 125
      %v2471 = vpop.permute.xlu0 %2470
      %2472 = vrot.lane.b32.xlu0 %v2303, 125
      %v2473 = vpop.permute.xlu0 %2472
      %2474 = vrot.lane.b32.xlu0 %v2304, 125
      %v2475 = vpop.permute.xlu0 %2474
      %2476 = vrot.lane.b32.xlu0 %v2305, 125
      %v2477 = vpop.permute.xlu0 %2476
      %2482 = vrot.lane.b32.xlu0 %v2302, 13
      %v2483 = vpop.permute.xlu0 %2482
      %2484 = vrot.lane.b32.xlu0 %v2303, 13
      %v2485 = vpop.permute.xlu0 %2484
      %2486 = vrot.lane.b32.xlu0 %v2304, 13
      %v2487 = vpop.permute.xlu0 %2486
      %2488 = vrot.lane.b32.xlu0 %v2305, 13
      %v2489 = vpop.permute.xlu0 %2488
      %v2494 = vsel %vm2092, %v2471, %v2483
      %v2495 = vsel %vm2092, %v2473, %v2485
      %v2496 = vsel %vm2092, %v2475, %v2487
      %v2497 = vsel %vm2092, %v2477, %v2489
      %v2498 = vmul.f32 %v2494, %v2101
      %v2499 = vmul.f32 %v2495, %v2101
      %v2500 = vmul.f32 %v2496, %v2101
      %v2501 = vmul.f32 %v2497, %v2101
      %2502 = vrot.lane.b32.xlu0 %v2302, 124
      %v2503 = vpop.permute.xlu0 %2502
      %2504 = vrot.lane.b32.xlu0 %v2303, 124
      %v2505 = vpop.permute.xlu0 %2504
      %2506 = vrot.lane.b32.xlu0 %v2304, 124
      %v2507 = vpop.permute.xlu0 %2506
      %2508 = vrot.lane.b32.xlu0 %v2305, 124
      %v2509 = vpop.permute.xlu0 %2508
      %2514 = vrot.lane.b32.xlu0 %v2302, 12
      %v2515 = vpop.permute.xlu0 %2514
      %2516 = vrot.lane.b32.xlu0 %v2303, 12
      %v2517 = vpop.permute.xlu0 %2516
      %2518 = vrot.lane.b32.xlu0 %v2304, 12
      %v2519 = vpop.permute.xlu0 %2518
      %2520 = vrot.lane.b32.xlu0 %v2305, 12
      %v2521 = vpop.permute.xlu0 %2520
      %v2526 = vsel %vm2117, %v2503, %v2515
      %v2527 = vsel %vm2117, %v2505, %v2517
      %v2528 = vsel %vm2117, %v2507, %v2519
      %v2529 = vsel %vm2117, %v2509, %v2521
      %v2530 = vmul.f32 %v2526, %v2126
      %v2531 = vmul.f32 %v2527, %v2126
      %v2532 = vmul.f32 %v2528, %v2126
      %v2533 = vmul.f32 %v2529, %v2126
      %2534 = vrot.lane.b32.xlu0 %v2302, 123
      %v2535 = vpop.permute.xlu0 %2534
      %2536 = vrot.lane.b32.xlu0 %v2303, 123
      %v2537 = vpop.permute.xlu0 %2536
      %2538 = vrot.lane.b32.xlu0 %v2304, 123
      %v2539 = vpop.permute.xlu0 %2538
      %2540 = vrot.lane.b32.xlu0 %v2305, 123
      %v2541 = vpop.permute.xlu0 %2540
      %2546 = vrot.lane.b32.xlu0 %v2302, 11
      %v2547 = vpop.permute.xlu0 %2546
      %2548 = vrot.lane.b32.xlu0 %v2303, 11
      %v2549 = vpop.permute.xlu0 %2548
      %2550 = vrot.lane.b32.xlu0 %v2304, 11
      %v2551 = vpop.permute.xlu0 %2550
      %2552 = vrot.lane.b32.xlu0 %v2305, 11
      %v2553 = vpop.permute.xlu0 %2552
      %v2558 = vsel %vm2142, %v2535, %v2547
      %v2559 = vsel %vm2142, %v2537, %v2549
      %v2560 = vsel %vm2142, %v2539, %v2551
      %v2561 = vsel %vm2142, %v2541, %v2553
      %v2562 = vmul.f32 %v2558, %v2151
      %v2563 = vmul.f32 %v2559, %v2151
      %v2564 = vmul.f32 %v2560, %v2151
      %v2565 = vmul.f32 %v2561, %v2151
      %v2566 = vpack.c.bf16 %v2339, %v2338
      %v2567 = vpack.c.bf16 %v2341, %v2340
      %v2568 = vpack.c.bf16 %v2371, %v2370
      %v2569 = vpack.c.bf16 %v2373, %v2372
      %v2570 = vpack.c.bf16 %v2403, %v2402
      %v2571 = vpack.c.bf16 %v2405, %v2404
      %v2572 = vpack.c.bf16 %v2435, %v2434
      %v2573 = vpack.c.bf16 %v2437, %v2436
      %v2574 = vpack.c.bf16 %v2303, %v2302
      %v2575 = vpack.c.bf16 %v2305, %v2304
      %v2576 = vpack.c.bf16 %v2467, %v2466
      %v2577 = vpack.c.bf16 %v2469, %v2468
      %v2578 = vpack.c.bf16 %v2499, %v2498
      %v2579 = vpack.c.bf16 %v2501, %v2500
      %v2580 = vpack.c.bf16 %v2531, %v2530
      %v2581 = vpack.c.bf16 %v2533, %v2532
      %v2582 = vpack.c.bf16 %v2563, %v2562
      %v2583 = vpack.c.bf16 %v2565, %v2564
      %v2584 = vld [vmem:[%s13] sm:$0xff]
      %v2585 = vld [vmem:[%s13 + $0x8] sm:$0xf]
      %v2586 = vld [vmem:[%s13 + $0xc] sm:$0xff]
      %v2587 = vld [vmem:[%s13 + $0x14] sm:$0xf]
      %v2588 = vld [vmem:[%s13 + $0x18] sm:$0xff]
      %v2589 = vld [vmem:[%s13 + $0x20] sm:$0xf]
      %v2590 = vld [vmem:[%s13 + $0x24] sm:$0xff]
      %v2591 = vld [vmem:[%s13 + $0x2c] sm:$0xf]
      %v2600 = vunpack.c.l.b16 %v2584
      %v2601 = vunpack.c.h.b16 %v2584
      %v2602 = vunpack.c.l.b16 %v2585
      %v2603 = vunpack.c.l.b16 %v2586
      %v2604 = vunpack.c.h.b16 %v2586
      %v2605 = vunpack.c.l.b16 %v2587
      %v2606 = vunpack.c.l.b16 %v2588
      %v2607 = vunpack.c.h.b16 %v2588
      %v2608 = vunpack.c.l.b16 %v2589
      %v2609 = vunpack.c.l.b16 %v2590
      %v2610 = vunpack.c.h.b16 %v2590
      %v2611 = vunpack.c.l.b16 %v2591
      %v2612 = vpack.c.b16 %v2603, %v2600
      %v2613 = vpack.c.b16 %v2604, %v2601
      %v2614 = vpack.c.b16 %v2605, %v2602
      %v2615 = vpack.c.b16 %v2609, %v2606
      %v2616 = vpack.c.b16 %v2610, %v2607
      %v2617 = vpack.c.b16 %v2611, %v2608
      %vm2622 = vcmask 261120
      %v2624 = vsel %vm2622, %v2614, 0
      %v2627 = vsel %vm2622, %v2617, 0
      %2629 = vmatprep.subr.bf16.mxu0 0
      %2630 = vmatpush1.bf16.msra.mxu0 %v2566
      %2631 = vmatprep.subr.bf16.mxu0 0
      %2632 = vmatpush1.bf16.msra.mxu0 %v2567
      %2633 = vmatprep.subr.bf16.mxu0 0
      %2634 = vmatpush1.bf16.msra.mxu0 %v2568
      %2635 = vmatprep.subr.bf16.mxu0 0
      %2636 = vmatpush1.bf16.msra.mxu0 %v2569
      %2637 = vmatprep.subr.bf16.mxu0 0
      %2638 = vmatpush1.bf16.msra.mxu0 %v2570
      %2639 = vmatprep.subr.bf16.mxu0 0
      %2640 = vmatpush1.bf16.msra.mxu0 %v2571
      %2641 = vmatprep.subr.bf16.mxu0 0
      %2642 = vmatpush1.bf16.msra.mxu0 %v2572
      %2643 = vmatprep.subr.bf16.mxu0 0
      %2644 = vmatpush1.bf16.msra.mxu0 %v2573
      %2645 = vmatprep.subr.bf16.mxu0 0
      %2646 = vmatpush1.bf16.msra.mxu0 %v2574
      %2647 = vmatprep.subr.bf16.mxu0 0
      %2648 = vmatpush1.bf16.msra.mxu0 %v2575
      %2649 = vmatprep.subr.bf16.mxu0 0
      %2650 = vmatpush1.bf16.msra.mxu0 %v2576
      %2651 = vmatprep.subr.bf16.mxu0 0
      %2652 = vmatpush1.bf16.msra.mxu0 %v2577
      %2653 = vmatprep.subr.bf16.mxu0 0
      %2654 = vmatpush1.bf16.msra.mxu0 %v2578
      %2655 = vmatprep.subr.bf16.mxu0 0
      %2656 = vmatpush1.bf16.msra.mxu0 %v2579
      %2657 = vmatprep.subr.bf16.mxu0 0
      %2658 = vmatpush1.bf16.msra.mxu0 %v2580
      %2659 = vmatprep.subr.bf16.mxu0 0
      %2660 = vmatpush1.bf16.msra.mxu0 %v2581
      %2661 = vmatprep.mubr.bf16.mxu0 %v2613
      %2662 = vmatmul.mubr.bf16.gmra.mrb[0].mxu0 %v2612
      %v2663 = vpop.f32.mrb[0].mxu0
      %v2664 = vadd.f32 0.0, %v2663
      %v2665 = vpop.f32.mrb[0].mxu0
      %v2666 = vpop.f32.mrb[0].mxu0
      %v2667 = vadd.f32 0.0, %v2666
      %v2668 = vpop.f32.mrb[0].mxu0
      %2669 = vmatprep.mubr.bf16.mxu0 %v2616
      %2670 = vmatmul.mubr.bf16.gmra.mrb[0].mxu0 %v2615
      %v2671 = vpop.f32.mrb[0].mxu0
      %v2672 = vadd.f32 0.0, %v2671
      %v2673 = vpop.f32.mrb[0].mxu0
      %v2674 = vpop.f32.mrb[0].mxu0
      %v2675 = vadd.f32 0.0, %v2674
      %v2676 = vpop.f32.mrb[0].mxu0
      %2677 = vdwg.mxu0
      %2678 = vmatprep.subr.bf16.mxu0 0
      %2679 = vmatpush1.bf16.msra.mxu0 %v2582
      %2680 = vmatprep.subr.bf16.mxu0 0
      %2681 = vmatpush1.bf16.msra.mxu0 %v2583
      %2682 = vmatprep.subr.bf16.mxu0 0
      %2683 = vmatpush1.bf16.msra.mxu0 0
      %2684 = vmatprep.subr.bf16.mxu0 0
      %2685 = vmatpush1.bf16.msra.mxu0 0
      %2686 = vmatprep.subr.bf16.mxu0 0
      %2687 = vmatpush1.bf16.msra.mxu0 0
      %2688 = vmatprep.subr.bf16.mxu0 0
      %2689 = vmatpush1.bf16.msra.mxu0 0
      %2690 = vmatprep.subr.bf16.mxu0 0
      %2691 = vmatpush1.bf16.msra.mxu0 0
      %2692 = vmatprep.subr.bf16.mxu0 0
      %2693 = vmatpush1.bf16.msra.mxu0 0
      %2694 = vmatprep.subr.bf16.mxu0 0
      %2695 = vmatpush1.bf16.msra.mxu0 0
      %2696 = vmatprep.subr.bf16.mxu0 0
      %2697 = vmatpush1.bf16.msra.mxu0 0
      %2698 = vmatprep.subr.bf16.mxu0 0
      %2699 = vmatpush1.bf16.msra.mxu0 0
      %2700 = vmatprep.subr.bf16.mxu0 0
      %2701 = vmatpush1.bf16.msra.mxu0 0
      %2702 = vmatprep.subr.bf16.mxu0 0
      %2703 = vmatpush1.bf16.msra.mxu0 0
      %2704 = vmatprep.subr.bf16.mxu0 0
      %2705 = vmatpush1.bf16.msra.mxu0 0
      %2706 = vmatprep.subr.bf16.mxu0 0
      %2707 = vmatpush1.bf16.msra.mxu0 0
      %2708 = vmatprep.subr.bf16.mxu0 0
      %2709 = vmatpush1.bf16.msra.mxu0 0
      %2710 = vmatprep.mubr.bf16.mxu0 0
      %2711 = vmatmul.mubr.bf16.gmra.mrb[0].mxu0 %v2624
      %v2712 = vpop.f32.mrb[0].mxu0
      %v2713 = vadd.f32 %v2664, %v2712
      %v2714 = vpop.f32.mrb[0].mxu0
      %v2715 = vpop.f32.mrb[0].mxu0
      %v2716 = vadd.f32 %v2667, %v2715
      %v2717 = vpop.f32.mrb[0].mxu0
      %2718 = vmatprep.mubr.bf16.mxu0 0
      %2719 = vmatmul.mubr.bf16.gmra.mrb[0].mxu0 %v2627
      %v2720 = vpop.f32.mrb[0].mxu0
      %v2721 = vadd.f32 %v2672, %v2720
      %v2722 = vpop.f32.mrb[0].mxu0
      %v2723 = vpop.f32.mrb[0].mxu0
      %v2724 = vadd.f32 %v2675, %v2723
      %v2725 = vpop.f32.mrb[0].mxu0
      %2726 = vdwg.mxu0
      %v2727 = vsel %vm778, %v2713, 0.0
      %2728 = vadd.xlane.f32.xlu0 %v2727
      %v2729 = vpop.xlane.xlu0 %2728
      %v2730 = vsel %vm778, %v2716, 0.0
      %2731 = vadd.xlane.f32.xlu0 %v2730
      %v2732 = vpop.xlane.xlu0 %2731
      %v2733 = vsel %vm778, %v2721, 0.0
      %2734 = vadd.xlane.f32.xlu0 %v2733
      %v2735 = vpop.xlane.xlu0 %2734
      %v2736 = vsel %vm778, %v2724, 0.0
      %2737 = vadd.xlane.f32.xlu0 %v2736
      %v2738 = vpop.xlane.xlu0 %2737
      %v2739 = vmul.f32 %v2729, %v2253
      %v2740 = vmul.f32 %v2732, %v2253
      %v2741 = vmul.f32 %v2735, %v2253
      %v2742 = vmul.f32 %v2738, %v2253
      %v2743 = vsub.f32 %v2713, %v2739
      %v2744 = vsub.f32 %v2716, %v2740
      %v2745 = vsub.f32 %v2721, %v2741
      %v2746 = vsub.f32 %v2724, %v2742
      %v2747 = vmul.f32 %v2743, %v2743
      %v2748 = vmul.f32 %v2744, %v2744
      %v2749 = vmul.f32 %v2745, %v2745
      %v2750 = vmul.f32 %v2746, %v2746
      %v2751 = vsel %vm778, %v2747, 0.0
      %2752 = vadd.xlane.f32.xlu0 %v2751
      %v2753 = vpop.xlane.xlu0 %2752
      %v2754 = vsel %vm778, %v2748, 0.0
      %2755 = vadd.xlane.f32.xlu0 %v2754
      %v2756 = vpop.xlane.xlu0 %2755
      %v2757 = vsel %vm778, %v2749, 0.0
      %2758 = vadd.xlane.f32.xlu0 %v2757
      %v2759 = vpop.xlane.xlu0 %2758
      %v2760 = vsel %vm778, %v2750, 0.0
      %2761 = vadd.xlane.f32.xlu0 %v2760
      %v2762 = vpop.xlane.xlu0 %2761
      %v2763 = vmul.f32 %v2753, %v2253
      %v2764 = vmul.f32 %v2756, %v2253
      %v2765 = vmul.f32 %v2759, %v2253
      %v2766 = vmul.f32 %v2762, %v2253
      %v2767 = vadd.f32 %v2763, 1e-05
      %v2768 = vadd.f32 %v2764, 1e-05
      %v2769 = vadd.f32 %v2765, 1e-05
      %v2770 = vadd.f32 %v2766, 1e-05
      %v2771 = vrsqrt.pop %v2767
      %v2772 = vrsqrt.pop %v2768
      %v2773 = vrsqrt.pop %v2769
      %v2774 = vrsqrt.pop %v2770
      %v2775 = vmul.f32 %v2743, %v2771
      %v2776 = vmul.f32 %v2744, %v2772
      %v2777 = vmul.f32 %v2745, %v2773
      %v2778 = vmul.f32 %v2746, %v2774
      %vm2779 = vcmp.ge.f32.partialorder %v2775, 0.0
      %vm2780 = vcmp.ge.f32.partialorder %v2776, 0.0
      %vm2781 = vcmp.ge.f32.partialorder %v2777, 0.0
      %vm2782 = vcmp.ge.f32.partialorder %v2778, 0.0
      %v2783 = vmul.f32 %v2775, 0.2
      %v2784 = vmul.f32 %v2776, 0.2
      %v2785 = vmul.f32 %v2777, 0.2
      %v2786 = vmul.f32 %v2778, 0.2
      %v2787 = vsel %vm2779, %v2775, %v2783
      %v2788 = vsel %vm2780, %v2776, %v2784
      %v2789 = vsel %vm2781, %v2777, %v2785
      %v2790 = vsel %vm2782, %v2778, %v2786
      %v2791 = vld [vmem:[%s14] sm:$0xf]
      %v2792 = vld [vmem:[%s14 + $0x4] sm:$0xf]
      %v2793 = vld [vmem:[%s14 + $0x8] sm:$0xf]
      %v2794 = vld [vmem:[%s14 + $0xc] sm:$0xf]
      %v2795 = vld [vmem:[%s14 + $0x10] sm:$0xf]
      %v2796 = vld [vmem:[%s14 + $0x14] sm:$0xf]
      %v2797 = vld [vmem:[%s14 + $0x18] sm:$0xf]
      %v2798 = vld [vmem:[%s14 + $0x1c] sm:$0xf]
      %v2799 = vpack.c.bf16 %v2788, %v2787
      %v2800 = vpack.c.bf16 %v2790, %v2789
      %v2809 = vunpack.c.l.b16 %v2791
      %v2810 = vunpack.c.l.b16 %v2792
      %v2811 = vunpack.c.l.b16 %v2793
      %v2812 = vunpack.c.l.b16 %v2794
      %v2813 = vunpack.c.l.b16 %v2795
      %v2814 = vunpack.c.l.b16 %v2796
      %v2815 = vunpack.c.l.b16 %v2797
      %v2816 = vunpack.c.l.b16 %v2798
      %v2817 = vpack.c.b16 %v2810, %v2809
      %v2818 = vpack.c.b16 %v2812, %v2811
      %v2819 = vpack.c.b16 %v2814, %v2813
      %v2820 = vpack.c.b16 %v2816, %v2815
      %v2822 = vsel %vm2622, %v2817, 0
      %v2825 = vsel %vm2622, %v2818, 0
      %v2828 = vsel %vm2622, %v2819, 0
      %v2831 = vsel %vm2622, %v2820, 0
      %2833 = vmatprep.subr.bf16.mxu0 0
      %2834 = vmatpush1.bf16.msra.mxu0 %v2799
      %2835 = vmatprep.subr.bf16.mxu0 0
      %2836 = vmatpush1.bf16.msra.mxu0 %v2800
      %2837 = vmatprep.subr.bf16.mxu0 0
      %2838 = vmatpush1.bf16.msra.mxu0 0
      %2839 = vmatprep.subr.bf16.mxu0 0
      %2840 = vmatpush1.bf16.msra.mxu0 0
      %2841 = vmatprep.subr.bf16.mxu0 0
      %2842 = vmatpush1.bf16.msra.mxu0 0
      %2843 = vmatprep.subr.bf16.mxu0 0
      %2844 = vmatpush1.bf16.msra.mxu0 0
      %2845 = vmatprep.subr.bf16.mxu0 0
      %2846 = vmatpush1.bf16.msra.mxu0 0
      %2847 = vmatprep.subr.bf16.mxu0 0
      %2848 = vmatpush1.bf16.msra.mxu0 0
      %2849 = vmatprep.subr.bf16.mxu0 0
      %2850 = vmatpush1.bf16.msra.mxu0 0
      %2851 = vmatprep.subr.bf16.mxu0 0
      %2852 = vmatpush1.bf16.msra.mxu0 0
      %2853 = vmatprep.subr.bf16.mxu0 0
      %2854 = vmatpush1.bf16.msra.mxu0 0
      %2855 = vmatprep.subr.bf16.mxu0 0
      %2856 = vmatpush1.bf16.msra.mxu0 0
      %2857 = vmatprep.subr.bf16.mxu0 0
      %2858 = vmatpush1.bf16.msra.mxu0 0
      %2859 = vmatprep.subr.bf16.mxu0 0
      %2860 = vmatpush1.bf16.msra.mxu0 0
      %2861 = vmatprep.subr.bf16.mxu0 0
      %2862 = vmatpush1.bf16.msra.mxu0 0
      %2863 = vmatprep.subr.bf16.mxu0 0
      %2864 = vmatpush1.bf16.msra.mxu0 0
      %2865 = vmatprep.mubr.bf16.mxu0 0
      %2866 = vmatmul.mubr.bf16.gmra.mrb[0].mxu0 %v2822
      %v2867 = vpop.f32.mrb[0].mxu0
      %v2868 = vadd.f32 0.0, %v2867
      %v2869 = vpop.f32.mrb[0].mxu0
      %v2870 = vpop.f32.mrb[0].mxu0
      %v2871 = vadd.f32 0.0, %v2870
      %v2872 = vpop.f32.mrb[0].mxu0
      %2873 = vmatprep.mubr.bf16.mxu0 0
      %2874 = vmatmul.mubr.bf16.gmra.mrb[0].mxu0 %v2825
      %v2875 = vpop.f32.mrb[0].mxu0
      %v2876 = vadd.f32 0.0, %v2875
      %v2877 = vpop.f32.mrb[0].mxu0
      %v2878 = vpop.f32.mrb[0].mxu0
      %v2879 = vadd.f32 0.0, %v2878
      %v2880 = vpop.f32.mrb[0].mxu0
      %2881 = vmatprep.mubr.bf16.mxu0 0
      %2882 = vmatmul.mubr.bf16.gmra.mrb[0].mxu0 %v2828
      %v2883 = vpop.f32.mrb[0].mxu0
      %v2884 = vadd.f32 0.0, %v2883
      %v2885 = vpop.f32.mrb[0].mxu0
      %v2886 = vpop.f32.mrb[0].mxu0
      %v2887 = vadd.f32 0.0, %v2886
      %v2888 = vpop.f32.mrb[0].mxu0
      %2889 = vmatprep.mubr.bf16.mxu0 0
      %2890 = vmatmul.mubr.bf16.gmra.mrb[0].mxu0 %v2831
      %v2891 = vpop.f32.mrb[0].mxu0
      %v2892 = vadd.f32 0.0, %v2891
      %v2893 = vpop.f32.mrb[0].mxu0
      %v2894 = vpop.f32.mrb[0].mxu0
      %v2895 = vadd.f32 0.0, %v2894
      %v2896 = vpop.f32.mrb[0].mxu0
      %2897 = vdwg.mxu0
      %v2898 = vadd.f32 %v2868, %v2876
      %v2899 = vadd.f32 %v2871, %v2879
      %v2900 = vadd.f32 %v2898, %v2884
      %v2901 = vadd.f32 %v2899, %v2887
      %v2902 = vadd.f32 %v2900, %v2892
      %v2903 = vadd.f32 %v2901, %v2895
      %v2904 = vsel %vm778, %v2902, 0.0
      %2905 = vadd.xlane.f32.xlu0 %v2904
      %v2906 = vpop.xlane.xlu0 %2905
      %v2907 = vsel %vm778, %v2903, 0.0
      %2908 = vadd.xlane.f32.xlu0 %v2907
      %v2909 = vpop.xlane.xlu0 %2908
      %v2910 = vmul.f32 %v2906, 0.015625
      %v2911 = vmul.f32 %v2909, 0.015625
      %v2912 = vsub.f32 %v2868, %v2910
      %v2913 = vsub.f32 %v2871, %v2911
      %v2914 = vmul.f32 %v2912, %v2912
      %v2915 = vmul.f32 %v2913, %v2913
      %v2916 = vsel %vm778, %v2914, 0.0
      %2917 = vadd.xlane.f32.xlu0 %v2916
      %v2918 = vpop.xlane.xlu0 %2917
      %v2919 = vsel %vm778, %v2915, 0.0
      %2920 = vadd.xlane.f32.xlu0 %v2919
      %v2921 = vpop.xlane.xlu0 %2920
      %v2922 = vadd.f32 %v2918, 0.0
      %v2923 = vadd.f32 %v2921, 0.0
      %v2924 = vsub.f32 %v2876, %v2910
      %v2925 = vsub.f32 %v2879, %v2911
      %v2926 = vmul.f32 %v2924, %v2924
      %v2927 = vmul.f32 %v2925, %v2925
      %v2928 = vsel %vm778, %v2926, 0.0
      %2929 = vadd.xlane.f32.xlu0 %v2928
      %v2930 = vpop.xlane.xlu0 %2929
      %v2931 = vsel %vm778, %v2927, 0.0
      %2932 = vadd.xlane.f32.xlu0 %v2931
      %v2933 = vpop.xlane.xlu0 %2932
      %v2934 = vadd.f32 %v2922, %v2930
      %v2935 = vadd.f32 %v2923, %v2933
      %v2936 = vsub.f32 %v2884, %v2910
      %v2937 = vsub.f32 %v2887, %v2911
      %v2938 = vmul.f32 %v2936, %v2936
      %v2939 = vmul.f32 %v2937, %v2937
      %v2940 = vsel %vm778, %v2938, 0.0
      %2941 = vadd.xlane.f32.xlu0 %v2940
      %v2942 = vpop.xlane.xlu0 %2941
      %v2943 = vsel %vm778, %v2939, 0.0
      %2944 = vadd.xlane.f32.xlu0 %v2943
      %v2945 = vpop.xlane.xlu0 %2944
      %v2946 = vadd.f32 %v2934, %v2942
      %v2947 = vadd.f32 %v2935, %v2945
      %v2948 = vsub.f32 %v2892, %v2910
      %v2949 = vsub.f32 %v2895, %v2911
      %v2950 = vmul.f32 %v2948, %v2948
      %v2951 = vmul.f32 %v2949, %v2949
      %v2952 = vsel %vm778, %v2950, 0.0
      %2953 = vadd.xlane.f32.xlu0 %v2952
      %v2954 = vpop.xlane.xlu0 %2953
      %v2955 = vsel %vm778, %v2951, 0.0
      %2956 = vadd.xlane.f32.xlu0 %v2955
      %v2957 = vpop.xlane.xlu0 %2956
      %v2958 = vadd.f32 %v2946, %v2954
      %v2959 = vadd.f32 %v2947, %v2957
      %v2960 = vmul.f32 %v2958, 0.015625
      %v2961 = vmul.f32 %v2959, 0.015625
      %v2962 = vadd.f32 %v2960, 1e-05
      %v2963 = vadd.f32 %v2961, 1e-05
      %v2964 = vrsqrt.pop %v2962
      %v2965 = vrsqrt.pop %v2963
      %v2966 = vmul.f32 %v2912, %v2964
      %v2967 = vmul.f32 %v2913, %v2965
      %vm2968 = vcmp.ge.f32.partialorder %v2966, 0.0
      %vm2969 = vcmp.ge.f32.partialorder %v2967, 0.0
      %v2970 = vmul.f32 %v2966, 0.2
      %v2971 = vmul.f32 %v2967, 0.2
      %v2972 = vsel %vm2968, %v2966, %v2970
      %v2973 = vsel %vm2969, %v2967, %v2971
      %v2974 = vpack.c.bf16 %v2973, %v2972
      %v2975 = vld [vmem:[%s6] sm:$0xf]
      %v2976 = vld [vmem:[%s6 + $0x4] sm:$0xf]
      %v2977 = vmul.f32 %v2924, %v2964
      %v2978 = vmul.f32 %v2925, %v2965
      %vm2979 = vcmp.ge.f32.partialorder %v2977, 0.0
      %vm2980 = vcmp.ge.f32.partialorder %v2978, 0.0
      %v2981 = vmul.f32 %v2977, 0.2
      %v2982 = vmul.f32 %v2978, 0.2
      %v2983 = vsel %vm2979, %v2977, %v2981
      %v2984 = vsel %vm2980, %v2978, %v2982
      %v2985 = vpack.c.bf16 %v2984, %v2983
      %s2986 = scalar_lea.vmem %s6, 8
      %v2987 = vld [vmem:[%s2986] sm:$0xf]
      %v2988 = vld [vmem:[%s2986 + $0x4] sm:$0xf]
      %v2991 = vunpack.c.l.b16 %v2987
      %v2992 = vunpack.c.l.b16 %v2988
      %v2993 = vpack.c.b16 %v2992, %v2991
      %v2996 = vsel %vm778, %v2985, 0
      %2998 = vmatprep.subr.bf16.mxu0 0
      %2999 = vmatpush1.bf16.msra.mxu0 %v2993
      %3000 = vmatprep.subr.bf16.mxu0 0
      %3001 = vmatpush1.bf16.msra.mxu0 0
      %3002 = vmatprep.subr.bf16.mxu0 0
      %3003 = vmatpush1.bf16.msra.mxu0 0
      %3004 = vmatprep.subr.bf16.mxu0 0
      %3005 = vmatpush1.bf16.msra.mxu0 0
      %3006 = vmatprep.subr.bf16.mxu0 0
      %3007 = vmatpush1.bf16.msra.mxu0 0
      %3008 = vmatprep.subr.bf16.mxu0 0
      %3009 = vmatpush1.bf16.msra.mxu0 0
      %3010 = vmatprep.subr.bf16.mxu0 0
      %3011 = vmatpush1.bf16.msra.mxu0 0
      %3012 = vmatprep.subr.bf16.mxu0 0
      %3013 = vmatpush1.bf16.msra.mxu0 0
      %3014 = vmatprep.subr.bf16.mxu0 0
      %3015 = vmatpush1.bf16.msra.mxu0 0
      %3016 = vmatprep.subr.bf16.mxu0 0
      %3017 = vmatpush1.bf16.msra.mxu0 0
      %3018 = vmatprep.subr.bf16.mxu0 0
      %3019 = vmatpush1.bf16.msra.mxu0 0
      %3020 = vmatprep.subr.bf16.mxu0 0
      %3021 = vmatpush1.bf16.msra.mxu0 0
      %3022 = vmatprep.subr.bf16.mxu0 0
      %3023 = vmatpush1.bf16.msra.mxu0 0
      %3024 = vmatprep.subr.bf16.mxu0 0
      %3025 = vmatpush1.bf16.msra.mxu0 0
      %3026 = vmatprep.subr.bf16.mxu0 0
      %3027 = vmatpush1.bf16.msra.mxu0 0
      %3028 = vmatprep.subr.bf16.mxu0 0
      %3029 = vmatpush1.bf16.msra.mxu0 0
      %3030 = vmatprep.mubr.bf16.mxu0 0
      %3031 = vmatmul.mubr.bf16.gmra.mrb[0].mxu0 %v2996
      %v3032 = vpop.f32.mrb[0].mxu0
      %v3033 = vadd.f32 0.0, %v3032
      %v3034 = vpop.f32.mrb[0].mxu0
      %v3035 = vpop.f32.mrb[0].mxu0
      %v3036 = vadd.f32 0.0, %v3035
      %v3037 = vpop.f32.mrb[0].mxu0
      %3038 = vdwg.mxu0
      %v3041 = vunpack.c.l.b16 %v2975
      %v3042 = vunpack.c.l.b16 %v2976
      %v3043 = vpack.c.b16 %v3042, %v3041
      %v3046 = vsel %vm778, %v2974, 0
      %3048 = vmatprep.subr.bf16.mxu0 0
      %3049 = vmatpush1.bf16.msra.mxu0 %v3043
      %3050 = vmatprep.subr.bf16.mxu0 0
      %3051 = vmatpush1.bf16.msra.mxu0 0
      %3052 = vmatprep.subr.bf16.mxu0 0
      %3053 = vmatpush1.bf16.msra.mxu0 0
      %3054 = vmatprep.subr.bf16.mxu0 0
      %3055 = vmatpush1.bf16.msra.mxu0 0
      %3056 = vmatprep.subr.bf16.mxu0 0
      %3057 = vmatpush1.bf16.msra.mxu0 0
      %3058 = vmatprep.subr.bf16.mxu0 0
      %3059 = vmatpush1.bf16.msra.mxu0 0
      %3060 = vmatprep.subr.bf16.mxu0 0
      %3061 = vmatpush1.bf16.msra.mxu0 0
      %3062 = vmatprep.subr.bf16.mxu0 0
      %3063 = vmatpush1.bf16.msra.mxu0 0
      %3064 = vmatprep.subr.bf16.mxu0 0
      %3065 = vmatpush1.bf16.msra.mxu0 0
      %3066 = vmatprep.subr.bf16.mxu0 0
      %3067 = vmatpush1.bf16.msra.mxu0 0
      %3068 = vmatprep.subr.bf16.mxu0 0
      %3069 = vmatpush1.bf16.msra.mxu0 0
      %3070 = vmatprep.subr.bf16.mxu0 0
      %3071 = vmatpush1.bf16.msra.mxu0 0
      %3072 = vmatprep.subr.bf16.mxu0 0
      %3073 = vmatpush1.bf16.msra.mxu0 0
      %3074 = vmatprep.subr.bf16.mxu0 0
      %3075 = vmatpush1.bf16.msra.mxu0 0
      %3076 = vmatprep.subr.bf16.mxu0 0
      %3077 = vmatpush1.bf16.msra.mxu0 0
      %3078 = vmatprep.subr.bf16.mxu0 0
      %3079 = vmatpush1.bf16.msra.mxu0 0
      %3080 = vmatprep.mubr.bf16.mxu0 0
      %3081 = vmatmul.mubr.bf16.gmra.mrb[0].mxu0 %v3046
      %v3082 = vpop.f32.mrb[0].mxu0
      %v3083 = vadd.f32 %v3033, %v3082
      %v3084 = vpop.f32.mrb[0].mxu0
      %v3085 = vpop.f32.mrb[0].mxu0
      %v3086 = vadd.f32 %v3036, %v3085
      %v3087 = vpop.f32.mrb[0].mxu0
      %3088 = vdwg.mxu0
      %v3089 = vmul.f32 %v2936, %v2964
      %v3090 = vmul.f32 %v2937, %v2965
      %vm3091 = vcmp.ge.f32.partialorder %v3089, 0.0
      %vm3092 = vcmp.ge.f32.partialorder %v3090, 0.0
      %v3093 = vmul.f32 %v3089, 0.2
      %v3094 = vmul.f32 %v3090, 0.2
      %v3095 = vsel %vm3091, %v3089, %v3093
      %v3096 = vsel %vm3092, %v3090, %v3094
      %v3097 = vpack.c.bf16 %v3096, %v3095
      %s3098 = scalar_lea.vmem %s6, 16
      %v3099 = vld [vmem:[%s3098] sm:$0xf]
      %v3100 = vld [vmem:[%s3098 + $0x4] sm:$0xf]
      %v3103 = vunpack.c.l.b16 %v3099
      %v3104 = vunpack.c.l.b16 %v3100
      %v3105 = vpack.c.b16 %v3104, %v3103
      %v3108 = vsel %vm778, %v3097, 0
      %3110 = vmatprep.subr.bf16.mxu0 0
      %3111 = vmatpush1.bf16.msra.mxu0 %v3105
      %3112 = vmatprep.subr.bf16.mxu0 0
      %3113 = vmatpush1.bf16.msra.mxu0 0
      %3114 = vmatprep.subr.bf16.mxu0 0
      %3115 = vmatpush1.bf16.msra.mxu0 0
      %3116 = vmatprep.subr.bf16.mxu0 0
      %3117 = vmatpush1.bf16.msra.mxu0 0
      %3118 = vmatprep.subr.bf16.mxu0 0
      %3119 = vmatpush1.bf16.msra.mxu0 0
      %3120 = vmatprep.subr.bf16.mxu0 0
      %3121 = vmatpush1.bf16.msra.mxu0 0
      %3122 = vmatprep.subr.bf16.mxu0 0
      %3123 = vmatpush1.bf16.msra.mxu0 0
      %3124 = vmatprep.subr.bf16.mxu0 0
      %3125 = vmatpush1.bf16.msra.mxu0 0
      %3126 = vmatprep.subr.bf16.mxu0 0
      %3127 = vmatpush1.bf16.msra.mxu0 0
      %3128 = vmatprep.subr.bf16.mxu0 0
      %3129 = vmatpush1.bf16.msra.mxu0 0
      %3130 = vmatprep.subr.bf16.mxu0 0
      %3131 = vmatpush1.bf16.msra.mxu0 0
      %3132 = vmatprep.subr.bf16.mxu0 0
      %3133 = vmatpush1.bf16.msra.mxu0 0
      %3134 = vmatprep.subr.bf16.mxu0 0
      %3135 = vmatpush1.bf16.msra.mxu0 0
      %3136 = vmatprep.subr.bf16.mxu0 0
      %3137 = vmatpush1.bf16.msra.mxu0 0
      %3138 = vmatprep.subr.bf16.mxu0 0
      %3139 = vmatpush1.bf16.msra.mxu0 0
      %3140 = vmatprep.subr.bf16.mxu0 0
      %3141 = vmatpush1.bf16.msra.mxu0 0
      %3142 = vmatprep.mubr.bf16.mxu0 0
      %3143 = vmatmul.mubr.bf16.gmra.mrb[0].mxu0 %v3108
      %v3144 = vpop.f32.mrb[0].mxu0
      %v3145 = vadd.f32 0.0, %v3144
      %v3146 = vpop.f32.mrb[0].mxu0
      %v3147 = vpop.f32.mrb[0].mxu0
      %v3148 = vadd.f32 0.0, %v3147
      %v3149 = vpop.f32.mrb[0].mxu0
      %3150 = vdwg.mxu0
      %v3151 = vadd.f32 %v3083, %v3145
      %v3152 = vadd.f32 %v3086, %v3148
      %v3153 = vmul.f32 %v2948, %v2964
      %v3154 = vmul.f32 %v2949, %v2965
      %vm3155 = vcmp.ge.f32.partialorder %v3153, 0.0
      %vm3156 = vcmp.ge.f32.partialorder %v3154, 0.0
      %v3157 = vmul.f32 %v3153, 0.2
      %v3158 = vmul.f32 %v3154, 0.2
      %v3159 = vsel %vm3155, %v3153, %v3157
      %v3160 = vsel %vm3156, %v3154, %v3158
      %v3161 = vpack.c.bf16 %v3160, %v3159
      %s3162 = scalar_lea.vmem %s6, 24
      %v3163 = vld [vmem:[%s3162] sm:$0xf]
      %v3164 = vld [vmem:[%s3162 + $0x4] sm:$0xf]
      %v3167 = vunpack.c.l.b16 %v3163
      %v3168 = vunpack.c.l.b16 %v3164
      %v3169 = vpack.c.b16 %v3168, %v3167
      %v3172 = vsel %vm778, %v3161, 0
      %3174 = vmatprep.subr.bf16.mxu0 0
      %3175 = vmatpush1.bf16.msra.mxu0 %v3169
      %3176 = vmatprep.subr.bf16.mxu0 0
      %3177 = vmatpush1.bf16.msra.mxu0 0
      %3178 = vmatprep.subr.bf16.mxu0 0
      %3179 = vmatpush1.bf16.msra.mxu0 0
      %3180 = vmatprep.subr.bf16.mxu0 0
      %3181 = vmatpush1.bf16.msra.mxu0 0
      %3182 = vmatprep.subr.bf16.mxu0 0
      %3183 = vmatpush1.bf16.msra.mxu0 0
      %3184 = vmatprep.subr.bf16.mxu0 0
      %3185 = vmatpush1.bf16.msra.mxu0 0
      %3186 = vmatprep.subr.bf16.mxu0 0
      %3187 = vmatpush1.bf16.msra.mxu0 0
      %3188 = vmatprep.subr.bf16.mxu0 0
      %3189 = vmatpush1.bf16.msra.mxu0 0
      %3190 = vmatprep.subr.bf16.mxu0 0
      %3191 = vmatpush1.bf16.msra.mxu0 0
      %3192 = vmatprep.subr.bf16.mxu0 0
      %3193 = vmatpush1.bf16.msra.mxu0 0
      %3194 = vmatprep.subr.bf16.mxu0 0
      %3195 = vmatpush1.bf16.msra.mxu0 0
      %3196 = vmatprep.subr.bf16.mxu0 0
      %3197 = vmatpush1.bf16.msra.mxu0 0
      %3198 = vmatprep.subr.bf16.mxu0 0
      %3199 = vmatpush1.bf16.msra.mxu0 0
      %3200 = vmatprep.subr.bf16.mxu0 0
      %3201 = vmatpush1.bf16.msra.mxu0 0
      %3202 = vmatprep.subr.bf16.mxu0 0
      %3203 = vmatpush1.bf16.msra.mxu0 0
      %3204 = vmatprep.subr.bf16.mxu0 0
      %3205 = vmatpush1.bf16.msra.mxu0 0
      %3206 = vmatprep.mubr.bf16.mxu0 0
      %3207 = vmatmul.mubr.bf16.gmra.mrb[0].mxu0 %v3172
      %v3208 = vpop.f32.mrb[0].mxu0
      %v3209 = vadd.f32 0.0, %v3208
      %v3210 = vpop.f32.mrb[0].mxu0
      %v3211 = vpop.f32.mrb[0].mxu0
      %v3212 = vadd.f32 0.0, %v3211
      %v3213 = vpop.f32.mrb[0].mxu0
      %3214 = vdwg.mxu0
      %v3215 = vadd.f32 %v3151, %v3209
      %v3216 = vadd.f32 %v3152, %v3212
      %3219 = vrot.lane.b32.xlu0 %v3215, 73
      %v3220 = vpop.permute.xlu0 %3219
      %3221 = vrot.lane.b32.xlu0 %v3216, 73
      %v3222 = vpop.permute.xlu0 %3221
      %3225 = vrot.lane.b32.xlu0 %v3215, 9
      %v3226 = vpop.permute.xlu0 %3225
      %3227 = vrot.lane.b32.xlu0 %v3216, 9
      %v3228 = vpop.permute.xlu0 %3227
      %v3231 = vsel %vm1432, %v3220, %v3226
      %v3232 = vsel %vm1432, %v3222, %v3228
      %v3233 = vmul.f32 %v3231, %v1439
      %v3234 = vmul.f32 %v3232, %v1439
      %3235 = vrot.lane.b32.xlu0 %v3215, 72
      %v3236 = vpop.permute.xlu0 %3235
      %3237 = vrot.lane.b32.xlu0 %v3216, 72
      %v3238 = vpop.permute.xlu0 %3237
      %3241 = vrot.lane.b32.xlu0 %v3215, 8
      %v3242 = vpop.permute.xlu0 %3241
      %3243 = vrot.lane.b32.xlu0 %v3216, 8
      %v3244 = vpop.permute.xlu0 %3243
      %v3247 = vsel %vm1448, %v3236, %v3242
      %v3248 = vsel %vm1448, %v3238, %v3244
      %v3249 = vmul.f32 %v3247, %v1456
      %v3250 = vmul.f32 %v3248, %v1456
      %3251 = vrot.lane.b32.xlu0 %v3215, 71
      %v3252 = vpop.permute.xlu0 %3251
      %3253 = vrot.lane.b32.xlu0 %v3216, 71
      %v3254 = vpop.permute.xlu0 %3253
      %3257 = vrot.lane.b32.xlu0 %v3215, 7
      %v3258 = vpop.permute.xlu0 %3257
      %3259 = vrot.lane.b32.xlu0 %v3216, 7
      %v3260 = vpop.permute.xlu0 %3259
      %v3263 = vsel %vm1465, %v3252, %v3258
      %v3264 = vsel %vm1465, %v3254, %v3260
      %v3265 = vmul.f32 %v3263, %v1473
      %v3266 = vmul.f32 %v3264, %v1473
      %3267 = vrot.lane.b32.xlu0 %v3215, 65
      %v3268 = vpop.permute.xlu0 %3267
      %3269 = vrot.lane.b32.xlu0 %v3216, 65
      %v3270 = vpop.permute.xlu0 %3269
      %3273 = vrot.lane.b32.xlu0 %v3215, 1
      %v3274 = vpop.permute.xlu0 %3273
      %3275 = vrot.lane.b32.xlu0 %v3216, 1
      %v3276 = vpop.permute.xlu0 %3275
      %v3279 = vsel %vm828, %v3268, %v3274
      %v3280 = vsel %vm828, %v3270, %v3276
      %v3281 = vmul.f32 %v3279, %v1489
      %v3282 = vmul.f32 %v3280, %v1489
      %3283 = vrot.lane.b32.xlu0 %v3215, 127
      %v3284 = vpop.permute.xlu0 %3283
      %3285 = vrot.lane.b32.xlu0 %v3216, 127
      %v3286 = vpop.permute.xlu0 %3285
      %3289 = vrot.lane.b32.xlu0 %v3215, 63
      %v3290 = vpop.permute.xlu0 %3289
      %3291 = vrot.lane.b32.xlu0 %v3216, 63
      %v3292 = vpop.permute.xlu0 %3291
      %v3295 = vsel %vm1498, %v3284, %v3290
      %v3296 = vsel %vm1498, %v3286, %v3292
      %v3297 = vmul.f32 %v3295, %v1506
      %v3298 = vmul.f32 %v3296, %v1506
      %3299 = vrot.lane.b32.xlu0 %v3215, 121
      %v3300 = vpop.permute.xlu0 %3299
      %3301 = vrot.lane.b32.xlu0 %v3216, 121
      %v3302 = vpop.permute.xlu0 %3301
      %3305 = vrot.lane.b32.xlu0 %v3215, 57
      %v3306 = vpop.permute.xlu0 %3305
      %3307 = vrot.lane.b32.xlu0 %v3216, 57
      %v3308 = vpop.permute.xlu0 %3307
      %v3311 = vsel %vm1515, %v3300, %v3306
      %v3312 = vsel %vm1515, %v3302, %v3308
      %v3313 = vmul.f32 %v3311, %v1523
      %v3314 = vmul.f32 %v3312, %v1523
      %3315 = vrot.lane.b32.xlu0 %v3215, 120
      %v3316 = vpop.permute.xlu0 %3315
      %3317 = vrot.lane.b32.xlu0 %v3216, 120
      %v3318 = vpop.permute.xlu0 %3317
      %3321 = vrot.lane.b32.xlu0 %v3215, 56
      %v3322 = vpop.permute.xlu0 %3321
      %3323 = vrot.lane.b32.xlu0 %v3216, 56
      %v3324 = vpop.permute.xlu0 %3323
      %v3327 = vsel %vm1532, %v3316, %v3322
      %v3328 = vsel %vm1532, %v3318, %v3324
      %v3329 = vmul.f32 %v3327, %v1540
      %v3330 = vmul.f32 %v3328, %v1540
      %3331 = vrot.lane.b32.xlu0 %v3215, 119
      %v3332 = vpop.permute.xlu0 %3331
      %3333 = vrot.lane.b32.xlu0 %v3216, 119
      %v3334 = vpop.permute.xlu0 %3333
      %3337 = vrot.lane.b32.xlu0 %v3215, 55
      %v3338 = vpop.permute.xlu0 %3337
      %3339 = vrot.lane.b32.xlu0 %v3216, 55
      %v3340 = vpop.permute.xlu0 %3339
      %v3343 = vsel %vm1549, %v3332, %v3338
      %v3344 = vsel %vm1549, %v3334, %v3340
      %v3345 = vmul.f32 %v3343, %v1557
      %v3346 = vmul.f32 %v3344, %v1557
      %v3347 = vpack.c.bf16 %v3234, %v3233
      %v3348 = vpack.c.bf16 %v3250, %v3249
      %v3349 = vpack.c.bf16 %v3266, %v3265
      %v3350 = vpack.c.bf16 %v3282, %v3281
      %v3351 = vpack.c.bf16 %v3216, %v3215
      %v3352 = vpack.c.bf16 %v3298, %v3297
      %v3353 = vpack.c.bf16 %v3314, %v3313
      %v3354 = vpack.c.bf16 %v3330, %v3329
      %v3355 = vpack.c.bf16 %v3346, %v3345
      %v3356 = vld [vmem:[%s15] sm:$0xff]
      %v3357 = vld [vmem:[%s15 + $0x8] sm:$0xff]
      %3360 = vrot.lane.b32.xlu0 %v1877, 73
      %v3361 = vpop.permute.xlu0 %3360
      %3362 = vrot.lane.b32.xlu0 %v1878, 73
      %v3363 = vpop.permute.xlu0 %3362
      %3366 = vrot.lane.b32.xlu0 %v1877, 9
      %v3367 = vpop.permute.xlu0 %3366
      %3368 = vrot.lane.b32.xlu0 %v1878, 9
      %v3369 = vpop.permute.xlu0 %3368
      %v3372 = vsel %vm1432, %v3361, %v3367
      %v3373 = vsel %vm1432, %v3363, %v3369
      %v3374 = vmul.f32 %v3372, %v1439
      %v3375 = vmul.f32 %v3373, %v1439
      %3376 = vrot.lane.b32.xlu0 %v1877, 72
      %v3377 = vpop.permute.xlu0 %3376
      %3378 = vrot.lane.b32.xlu0 %v1878, 72
      %v3379 = vpop.permute.xlu0 %3378
      %3382 = vrot.lane.b32.xlu0 %v1877, 8
      %v3383 = vpop.permute.xlu0 %3382
      %3384 = vrot.lane.b32.xlu0 %v1878, 8
      %v3385 = vpop.permute.xlu0 %3384
      %v3388 = vsel %vm1448, %v3377, %v3383
      %v3389 = vsel %vm1448, %v3379, %v3385
      %v3390 = vmul.f32 %v3388, %v1456
      %v3391 = vmul.f32 %v3389, %v1456
      %3392 = vrot.lane.b32.xlu0 %v1877, 71
      %v3393 = vpop.permute.xlu0 %3392
      %3394 = vrot.lane.b32.xlu0 %v1878, 71
      %v3395 = vpop.permute.xlu0 %3394
      %3398 = vrot.lane.b32.xlu0 %v1877, 7
      %v3399 = vpop.permute.xlu0 %3398
      %3400 = vrot.lane.b32.xlu0 %v1878, 7
      %v3401 = vpop.permute.xlu0 %3400
      %v3404 = vsel %vm1465, %v3393, %v3399
      %v3405 = vsel %vm1465, %v3395, %v3401
      %v3406 = vmul.f32 %v3404, %v1473
      %v3407 = vmul.f32 %v3405, %v1473
      %3408 = vrot.lane.b32.xlu0 %v1877, 65
      %v3409 = vpop.permute.xlu0 %3408
      %3410 = vrot.lane.b32.xlu0 %v1878, 65
      %v3411 = vpop.permute.xlu0 %3410
      %3414 = vrot.lane.b32.xlu0 %v1877, 1
      %v3415 = vpop.permute.xlu0 %3414
      %3416 = vrot.lane.b32.xlu0 %v1878, 1
      %v3417 = vpop.permute.xlu0 %3416
      %v3420 = vsel %vm828, %v3409, %v3415
      %v3421 = vsel %vm828, %v3411, %v3417
      %v3422 = vmul.f32 %v3420, %v1489
      %v3423 = vmul.f32 %v3421, %v1489
      %3424 = vrot.lane.b32.xlu0 %v1877, 127
      %v3425 = vpop.permute.xlu0 %3424
      %3426 = vrot.lane.b32.xlu0 %v1878, 127
      %v3427 = vpop.permute.xlu0 %3426
      %3430 = vrot.lane.b32.xlu0 %v1877, 63
      %v3431 = vpop.permute.xlu0 %3430
      %3432 = vrot.lane.b32.xlu0 %v1878, 63
      %v3433 = vpop.permute.xlu0 %3432
      %v3436 = vsel %vm1498, %v3425, %v3431
      %v3437 = vsel %vm1498, %v3427, %v3433
      %v3438 = vmul.f32 %v3436, %v1506
      %v3439 = vmul.f32 %v3437, %v1506
      %3440 = vrot.lane.b32.xlu0 %v1877, 121
      %v3441 = vpop.permute.xlu0 %3440
      %3442 = vrot.lane.b32.xlu0 %v1878, 121
      %v3443 = vpop.permute.xlu0 %3442
      %3446 = vrot.lane.b32.xlu0 %v1877, 57
      %v3447 = vpop.permute.xlu0 %3446
      %3448 = vrot.lane.b32.xlu0 %v1878, 57
      %v3449 = vpop.permute.xlu0 %3448
      %v3452 = vsel %vm1515, %v3441, %v3447
      %v3453 = vsel %vm1515, %v3443, %v3449
      %v3454 = vmul.f32 %v3452, %v1523
      %v3455 = vmul.f32 %v3453, %v1523
      %3456 = vrot.lane.b32.xlu0 %v1877, 120
      %v3457 = vpop.permute.xlu0 %3456
      %3458 = vrot.lane.b32.xlu0 %v1878, 120
      %v3459 = vpop.permute.xlu0 %3458
      %3462 = vrot.lane.b32.xlu0 %v1877, 56
      %v3463 = vpop.permute.xlu0 %3462
      %3464 = vrot.lane.b32.xlu0 %v1878, 56
      %v3465 = vpop.permute.xlu0 %3464
      %v3468 = vsel %vm1532, %v3457, %v3463
      %v3469 = vsel %vm1532, %v3459, %v3465
      %v3470 = vmul.f32 %v3468, %v1540
      %v3471 = vmul.f32 %v3469, %v1540
      %3472 = vrot.lane.b32.xlu0 %v1877, 119
      %v3473 = vpop.permute.xlu0 %3472
      %3474 = vrot.lane.b32.xlu0 %v1878, 119
      %v3475 = vpop.permute.xlu0 %3474
      %3478 = vrot.lane.b32.xlu0 %v1877, 55
      %v3479 = vpop.permute.xlu0 %3478
      %3480 = vrot.lane.b32.xlu0 %v1878, 55
      %v3481 = vpop.permute.xlu0 %3480
      %v3484 = vsel %vm1549, %v3473, %v3479
      %v3485 = vsel %vm1549, %v3475, %v3481
      %v3486 = vmul.f32 %v3484, %v1557
      %v3487 = vmul.f32 %v3485, %v1557
      %v3488 = vpack.c.bf16 %v3375, %v3374
      %v3489 = vpack.c.bf16 %v3391, %v3390
      %v3490 = vpack.c.bf16 %v3407, %v3406
      %v3491 = vpack.c.bf16 %v3423, %v3422
      %v3492 = vpack.c.bf16 %v3439, %v3438
      %v3493 = vpack.c.bf16 %v3455, %v3454
      %v3494 = vpack.c.bf16 %v3471, %v3470
      %v3495 = vpack.c.bf16 %v3487, %v3486
      %v3496 = vld [vmem:[%s16] sm:$0xff]
      %v3497 = vld [vmem:[%s16 + $0x8] sm:$0xff]
      %v3500 = vunpack.c.l.b16 %v3496
      %v3501 = vunpack.c.h.b16 %v3496
      %v3502 = vunpack.c.l.b16 %v3497
      %v3503 = vunpack.c.h.b16 %v3497
      %v3504 = vpack.c.b16 %v3502, %v3500
      %v3505 = vpack.c.b16 %v3503, %v3501
      %v3508 = vsel %vm778, %v3505, 0
      %3510 = vmatprep.subr.bf16.mxu0 0
      %3511 = vmatpush1.bf16.msra.mxu0 %v3488
      %3512 = vmatprep.subr.bf16.mxu0 0
      %3513 = vmatpush1.bf16.msra.mxu0 %v3489
      %3514 = vmatprep.subr.bf16.mxu0 0
      %3515 = vmatpush1.bf16.msra.mxu0 %v3490
      %3516 = vmatprep.subr.bf16.mxu0 0
      %3517 = vmatpush1.bf16.msra.mxu0 %v3491
      %3518 = vmatprep.subr.bf16.mxu0 0
      %3519 = vmatpush1.bf16.msra.mxu0 %v1879
      %3520 = vmatprep.subr.bf16.mxu0 0
      %3521 = vmatpush1.bf16.msra.mxu0 %v3492
      %3522 = vmatprep.subr.bf16.mxu0 0
      %3523 = vmatpush1.bf16.msra.mxu0 %v3493
      %3524 = vmatprep.subr.bf16.mxu0 0
      %3525 = vmatpush1.bf16.msra.mxu0 %v3494
      %3526 = vmatprep.subr.bf16.mxu0 0
      %3527 = vmatpush1.bf16.msra.mxu0 %v3495
      %3528 = vmatprep.subr.bf16.mxu0 0
      %3529 = vmatpush1.bf16.msra.mxu0 0
      %3530 = vmatprep.subr.bf16.mxu0 0
      %3531 = vmatpush1.bf16.msra.mxu0 0
      %3532 = vmatprep.subr.bf16.mxu0 0
      %3533 = vmatpush1.bf16.msra.mxu0 0
      %3534 = vmatprep.subr.bf16.mxu0 0
      %3535 = vmatpush1.bf16.msra.mxu0 0
      %3536 = vmatprep.subr.bf16.mxu0 0
      %3537 = vmatpush1.bf16.msra.mxu0 0
      %3538 = vmatprep.subr.bf16.mxu0 0
      %3539 = vmatpush1.bf16.msra.mxu0 0
      %3540 = vmatprep.subr.bf16.mxu0 0
      %3541 = vmatpush1.bf16.msra.mxu0 0
      %3542 = vmatprep.mubr.bf16.mxu0 %v3508
      %3543 = vmatmul.mubr.bf16.gmra.mrb[0].mxu0 %v3504
      %v3544 = vpop.f32.mrb[0].mxu0
      %v3545 = vadd.f32 0.0, %v3544
      %v3546 = vpop.f32.mrb[0].mxu0
      %v3547 = vpop.f32.mrb[0].mxu0
      %v3548 = vadd.f32 0.0, %v3547
      %v3549 = vpop.f32.mrb[0].mxu0
      %3550 = vdwg.mxu0
      %v3553 = vunpack.c.l.b16 %v3356
      %v3554 = vunpack.c.h.b16 %v3356
      %v3555 = vunpack.c.l.b16 %v3357
      %v3556 = vunpack.c.h.b16 %v3357
      %v3557 = vpack.c.b16 %v3555, %v3553
      %v3558 = vpack.c.b16 %v3556, %v3554
      %v3561 = vsel %vm778, %v3558, 0
      %3563 = vmatprep.subr.bf16.mxu0 0
      %3564 = vmatpush1.bf16.msra.mxu0 %v3347
      %3565 = vmatprep.subr.bf16.mxu0 0
      %3566 = vmatpush1.bf16.msra.mxu0 %v3348
      %3567 = vmatprep.subr.bf16.mxu0 0
      %3568 = vmatpush1.bf16.msra.mxu0 %v3349
      %3569 = vmatprep.subr.bf16.mxu0 0
      %3570 = vmatpush1.bf16.msra.mxu0 %v3350
      %3571 = vmatprep.subr.bf16.mxu0 0
      %3572 = vmatpush1.bf16.msra.mxu0 %v3351
      %3573 = vmatprep.subr.bf16.mxu0 0
      %3574 = vmatpush1.bf16.msra.mxu0 %v3352
      %3575 = vmatprep.subr.bf16.mxu0 0
      %3576 = vmatpush1.bf16.msra.mxu0 %v3353
      %3577 = vmatprep.subr.bf16.mxu0 0
      %3578 = vmatpush1.bf16.msra.mxu0 %v3354
      %3579 = vmatprep.subr.bf16.mxu0 0
      %3580 = vmatpush1.bf16.msra.mxu0 %v3355
      %3581 = vmatprep.subr.bf16.mxu0 0
      %3582 = vmatpush1.bf16.msra.mxu0 0
      %3583 = vmatprep.subr.bf16.mxu0 0
      %3584 = vmatpush1.bf16.msra.mxu0 0
      %3585 = vmatprep.subr.bf16.mxu0 0
      %3586 = vmatpush1.bf16.msra.mxu0 0
      %3587 = vmatprep.subr.bf16.mxu0 0
      %3588 = vmatpush1.bf16.msra.mxu0 0
      %3589 = vmatprep.subr.bf16.mxu0 0
      %3590 = vmatpush1.bf16.msra.mxu0 0
      %3591 = vmatprep.subr.bf16.mxu0 0
      %3592 = vmatpush1.bf16.msra.mxu0 0
      %3593 = vmatprep.subr.bf16.mxu0 0
      %3594 = vmatpush1.bf16.msra.mxu0 0
      %3595 = vmatprep.mubr.bf16.mxu0 %v3561
      %3596 = vmatmul.mubr.bf16.gmra.mrb[0].mxu0 %v3557
      %v3597 = vpop.f32.mrb[0].mxu0
      %v3598 = vadd.f32 %v3545, %v3597
      %v3599 = vpop.f32.mrb[0].mxu0
      %v3600 = vpop.f32.mrb[0].mxu0
      %v3601 = vadd.f32 %v3548, %v3600
      %v3602 = vpop.f32.mrb[0].mxu0
      %3603 = vdwg.mxu0
      %v3604 = vsel %vm1619, %v3598, 0.0
      %3605 = vadd.xlane.f32.xlu0 %v3604
      %v3606 = vpop.xlane.xlu0 %3605
      %v3607 = vsel %vm1619, %v3601, 0.0
      %3608 = vadd.xlane.f32.xlu0 %v3607
      %v3609 = vpop.xlane.xlu0 %3608
      %v3610 = vmul.f32 %v3606, %v1626
      %v3611 = vmul.f32 %v3609, %v1626
      %v3612 = vsub.f32 %v3598, %v3610
      %v3613 = vsub.f32 %v3601, %v3611
      %v3614 = vmul.f32 %v3612, %v3612
      %v3615 = vmul.f32 %v3613, %v3613
      %v3616 = vsel %vm1619, %v3614, 0.0
      %3617 = vadd.xlane.f32.xlu0 %v3616
      %v3618 = vpop.xlane.xlu0 %3617
      %v3619 = vsel %vm1619, %v3615, 0.0
      %3620 = vadd.xlane.f32.xlu0 %v3619
      %v3621 = vpop.xlane.xlu0 %3620
      %v3622 = vmul.f32 %v3618, %v1626
      %v3623 = vmul.f32 %v3621, %v1626
      %v3624 = vadd.f32 %v3622, 1e-05
      %v3625 = vadd.f32 %v3623, 1e-05
      %v3626 = vrsqrt.pop %v3624
      %v3627 = vrsqrt.pop %v3625
      %v3628 = vmul.f32 %v3612, %v3626
      %v3629 = vmul.f32 %v3613, %v3627
      %vm3630 = vcmp.ge.f32.partialorder %v3628, 0.0
      %vm3631 = vcmp.ge.f32.partialorder %v3629, 0.0
      %v3632 = vmul.f32 %v3628, 0.2
      %v3633 = vmul.f32 %v3629, 0.2
      %v3634 = vsel %vm3630, %v3628, %v3632
      %v3635 = vsel %vm3631, %v3629, %v3633
      %3638 = vrot.lane.b32.xlu0 %v3634, 73
      %v3639 = vpop.permute.xlu0 %3638
      %3640 = vrot.lane.b32.xlu0 %v3635, 73
      %v3641 = vpop.permute.xlu0 %3640
      %3644 = vrot.lane.b32.xlu0 %v3634, 9
      %v3645 = vpop.permute.xlu0 %3644
      %3646 = vrot.lane.b32.xlu0 %v3635, 9
      %v3647 = vpop.permute.xlu0 %3646
      %v3650 = vsel %vm1432, %v3639, %v3645
      %v3651 = vsel %vm1432, %v3641, %v3647
      %v3652 = vmul.f32 %v3650, %v1439
      %v3653 = vmul.f32 %v3651, %v1439
      %3654 = vrot.lane.b32.xlu0 %v3634, 72
      %v3655 = vpop.permute.xlu0 %3654
      %3656 = vrot.lane.b32.xlu0 %v3635, 72
      %v3657 = vpop.permute.xlu0 %3656
      %3660 = vrot.lane.b32.xlu0 %v3634, 8
      %v3661 = vpop.permute.xlu0 %3660
      %3662 = vrot.lane.b32.xlu0 %v3635, 8
      %v3663 = vpop.permute.xlu0 %3662
      %v3666 = vsel %vm1448, %v3655, %v3661
      %v3667 = vsel %vm1448, %v3657, %v3663
      %v3668 = vmul.f32 %v3666, %v1456
      %v3669 = vmul.f32 %v3667, %v1456
      %3670 = vrot.lane.b32.xlu0 %v3634, 71
      %v3671 = vpop.permute.xlu0 %3670
      %3672 = vrot.lane.b32.xlu0 %v3635, 71
      %v3673 = vpop.permute.xlu0 %3672
      %3676 = vrot.lane.b32.xlu0 %v3634, 7
      %v3677 = vpop.permute.xlu0 %3676
      %3678 = vrot.lane.b32.xlu0 %v3635, 7
      %v3679 = vpop.permute.xlu0 %3678
      %v3682 = vsel %vm1465, %v3671, %v3677
      %v3683 = vsel %vm1465, %v3673, %v3679
      %v3684 = vmul.f32 %v3682, %v1473
      %v3685 = vmul.f32 %v3683, %v1473
      %3686 = vrot.lane.b32.xlu0 %v3634, 65
      %v3687 = vpop.permute.xlu0 %3686
      %3688 = vrot.lane.b32.xlu0 %v3635, 65
      %v3689 = vpop.permute.xlu0 %3688
      %3692 = vrot.lane.b32.xlu0 %v3634, 1
      %v3693 = vpop.permute.xlu0 %3692
      %3694 = vrot.lane.b32.xlu0 %v3635, 1
      %v3695 = vpop.permute.xlu0 %3694
      %v3698 = vsel %vm828, %v3687, %v3693
      %v3699 = vsel %vm828, %v3689, %v3695
      %v3700 = vmul.f32 %v3698, %v1489
      %v3701 = vmul.f32 %v3699, %v1489
      %3702 = vrot.lane.b32.xlu0 %v3634, 127
      %v3703 = vpop.permute.xlu0 %3702
      %3704 = vrot.lane.b32.xlu0 %v3635, 127
      %v3705 = vpop.permute.xlu0 %3704
      %3708 = vrot.lane.b32.xlu0 %v3634, 63
      %v3709 = vpop.permute.xlu0 %3708
      %3710 = vrot.lane.b32.xlu0 %v3635, 63
      %v3711 = vpop.permute.xlu0 %3710
      %v3714 = vsel %vm1498, %v3703, %v3709
      %v3715 = vsel %vm1498, %v3705, %v3711
      %v3716 = vmul.f32 %v3714, %v1506
      %v3717 = vmul.f32 %v3715, %v1506
      %3718 = vrot.lane.b32.xlu0 %v3634, 121
      %v3719 = vpop.permute.xlu0 %3718
      %3720 = vrot.lane.b32.xlu0 %v3635, 121
      %v3721 = vpop.permute.xlu0 %3720
      %3724 = vrot.lane.b32.xlu0 %v3634, 57
      %v3725 = vpop.permute.xlu0 %3724
      %3726 = vrot.lane.b32.xlu0 %v3635, 57
      %v3727 = vpop.permute.xlu0 %3726
      %v3730 = vsel %vm1515, %v3719, %v3725
      %v3731 = vsel %vm1515, %v3721, %v3727
      %v3732 = vmul.f32 %v3730, %v1523
      %v3733 = vmul.f32 %v3731, %v1523
      %3734 = vrot.lane.b32.xlu0 %v3634, 120
      %v3735 = vpop.permute.xlu0 %3734
      %3736 = vrot.lane.b32.xlu0 %v3635, 120
      %v3737 = vpop.permute.xlu0 %3736
      %3740 = vrot.lane.b32.xlu0 %v3634, 56
      %v3741 = vpop.permute.xlu0 %3740
      %3742 = vrot.lane.b32.xlu0 %v3635, 56
      %v3743 = vpop.permute.xlu0 %3742
      %v3746 = vsel %vm1532, %v3735, %v3741
      %v3747 = vsel %vm1532, %v3737, %v3743
      %v3748 = vmul.f32 %v3746, %v1540
      %v3749 = vmul.f32 %v3747, %v1540
      %3750 = vrot.lane.b32.xlu0 %v3634, 119
      %v3751 = vpop.permute.xlu0 %3750
      %3752 = vrot.lane.b32.xlu0 %v3635, 119
      %v3753 = vpop.permute.xlu0 %3752
      %3756 = vrot.lane.b32.xlu0 %v3634, 55
      %v3757 = vpop.permute.xlu0 %3756
      %3758 = vrot.lane.b32.xlu0 %v3635, 55
      %v3759 = vpop.permute.xlu0 %3758
      %v3762 = vsel %vm1549, %v3751, %v3757
      %v3763 = vsel %vm1549, %v3753, %v3759
      %v3764 = vmul.f32 %v3762, %v1557
      %v3765 = vmul.f32 %v3763, %v1557
      %v3766 = vpack.c.bf16 %v3653, %v3652
      %v3767 = vpack.c.bf16 %v3669, %v3668
      %v3768 = vpack.c.bf16 %v3685, %v3684
      %v3769 = vpack.c.bf16 %v3701, %v3700
      %v3770 = vpack.c.bf16 %v3635, %v3634
      %v3771 = vpack.c.bf16 %v3717, %v3716
      %v3772 = vpack.c.bf16 %v3733, %v3732
      %v3773 = vpack.c.bf16 %v3749, %v3748
      %v3774 = vpack.c.bf16 %v3765, %v3764
      %v3775 = vld [vmem:[%s17] sm:$0xff]
      %v3776 = vld [vmem:[%s17 + $0x8] sm:$0xff]
      %v3779 = vunpack.c.l.b16 %v3775
      %v3780 = vunpack.c.h.b16 %v3775
      %v3781 = vunpack.c.l.b16 %v3776
      %v3782 = vunpack.c.h.b16 %v3776
      %v3783 = vpack.c.b16 %v3781, %v3779
      %v3784 = vpack.c.b16 %v3782, %v3780
      %v3787 = vsel %vm778, %v3784, 0
      %3789 = vmatprep.subr.bf16.mxu0 0
      %3790 = vmatpush1.bf16.msra.mxu0 %v3766
      %3791 = vmatprep.subr.bf16.mxu0 0
      %3792 = vmatpush1.bf16.msra.mxu0 %v3767
      %3793 = vmatprep.subr.bf16.mxu0 0
      %3794 = vmatpush1.bf16.msra.mxu0 %v3768
      %3795 = vmatprep.subr.bf16.mxu0 0
      %3796 = vmatpush1.bf16.msra.mxu0 %v3769
      %3797 = vmatprep.subr.bf16.mxu0 0
      %3798 = vmatpush1.bf16.msra.mxu0 %v3770
      %3799 = vmatprep.subr.bf16.mxu0 0
      %3800 = vmatpush1.bf16.msra.mxu0 %v3771
      %3801 = vmatprep.subr.bf16.mxu0 0
      %3802 = vmatpush1.bf16.msra.mxu0 %v3772
      %3803 = vmatprep.subr.bf16.mxu0 0
      %3804 = vmatpush1.bf16.msra.mxu0 %v3773
      %3805 = vmatprep.subr.bf16.mxu0 0
      %3806 = vmatpush1.bf16.msra.mxu0 %v3774
      %3807 = vmatprep.subr.bf16.mxu0 0
      %3808 = vmatpush1.bf16.msra.mxu0 0
      %3809 = vmatprep.subr.bf16.mxu0 0
      %3810 = vmatpush1.bf16.msra.mxu0 0
      %3811 = vmatprep.subr.bf16.mxu0 0
      %3812 = vmatpush1.bf16.msra.mxu0 0
      %3813 = vmatprep.subr.bf16.mxu0 0
      %3814 = vmatpush1.bf16.msra.mxu0 0
      %3815 = vmatprep.subr.bf16.mxu0 0
      %3816 = vmatpush1.bf16.msra.mxu0 0
      %3817 = vmatprep.subr.bf16.mxu0 0
      %3818 = vmatpush1.bf16.msra.mxu0 0
      %3819 = vmatprep.subr.bf16.mxu0 0
      %3820 = vmatpush1.bf16.msra.mxu0 0
      %3821 = vmatprep.mubr.bf16.mxu0 %v3787
      %3822 = vmatmul.mubr.bf16.gmra.mrb[0].mxu0 %v3783
      %v3823 = vpop.f32.mrb[0].mxu0
      %v3824 = vadd.f32 0.0, %v3823
      %v3825 = vpop.f32.mrb[0].mxu0
      %v3826 = vpop.f32.mrb[0].mxu0
      %v3827 = vadd.f32 0.0, %v3826
      %v3828 = vpop.f32.mrb[0].mxu0
      %3829 = vdwg.mxu0
      %v3830 = vsel %vm1619, %v3824, 0.0
      %3831 = vadd.xlane.f32.xlu0 %v3830
      %v3832 = vpop.xlane.xlu0 %3831
      %v3833 = vsel %vm1619, %v3827, 0.0
      %3834 = vadd.xlane.f32.xlu0 %v3833
      %v3835 = vpop.xlane.xlu0 %3834
      %v3836 = vmul.f32 %v3832, %v1626
      %v3837 = vmul.f32 %v3835, %v1626
      %v3838 = vsub.f32 %v3824, %v3836
      %v3839 = vsub.f32 %v3827, %v3837
      %v3840 = vmul.f32 %v3838, %v3838
      %v3841 = vmul.f32 %v3839, %v3839
      %v3842 = vsel %vm1619, %v3840, 0.0
      %3843 = vadd.xlane.f32.xlu0 %v3842
      %v3844 = vpop.xlane.xlu0 %3843
      %v3845 = vsel %vm1619, %v3841, 0.0
      %3846 = vadd.xlane.f32.xlu0 %v3845
      %v3847 = vpop.xlane.xlu0 %3846
      %v3848 = vmul.f32 %v3844, %v1626
      %v3849 = vmul.f32 %v3847, %v1626
      %v3850 = vadd.f32 %v3848, 1e-05
      %v3851 = vadd.f32 %v3849, 1e-05
      %v3852 = vrsqrt.pop %v3850
      %v3853 = vrsqrt.pop %v3851
      %v3854 = vmul.f32 %v3838, %v3852
      %v3855 = vmul.f32 %v3839, %v3853
      %vm3856 = vcmp.ge.f32.partialorder %v3854, 0.0
      %vm3857 = vcmp.ge.f32.partialorder %v3855, 0.0
      %v3858 = vmul.f32 %v3854, 0.2
      %v3859 = vmul.f32 %v3855, 0.2
      %v3860 = vsel %vm3856, %v3854, %v3858
      %v3861 = vsel %vm3857, %v3855, %v3859
      %v3862 = vld [vmem:[%s18] sm:$0xf]
      %v3863 = vld [vmem:[%s18 + $0x4] sm:$0xf]
      %v3864 = vld [vmem:[%s18 + $0x8] sm:$0xf]
      %v3865 = vld [vmem:[%s18 + $0xc] sm:$0xf]
      %v3866 = vpack.c.bf16 %v3861, %v3860
      %v3871 = vunpack.c.l.b16 %v3862
      %v3872 = vunpack.c.l.b16 %v3863
      %v3873 = vunpack.c.l.b16 %v3864
      %v3874 = vunpack.c.l.b16 %v3865
      %v3875 = vpack.c.b16 %v3872, %v3871
      %v3876 = vpack.c.b16 %v3874, %v3873
      %v3878 = vsel %vm778, %v3875, 0
      %v3881 = vsel %vm778, %v3876, 0
      %3883 = vmatprep.subr.bf16.mxu0 0
      %3884 = vmatpush1.bf16.msra.mxu0 %v3866
      %3885 = vmatprep.subr.bf16.mxu0 0
      %3886 = vmatpush1.bf16.msra.mxu0 0
      %3887 = vmatprep.subr.bf16.mxu0 0
      %3888 = vmatpush1.bf16.msra.mxu0 0
      %3889 = vmatprep.subr.bf16.mxu0 0
      %3890 = vmatpush1.bf16.msra.mxu0 0
      %3891 = vmatprep.subr.bf16.mxu0 0
      %3892 = vmatpush1.bf16.msra.mxu0 0
      %3893 = vmatprep.subr.bf16.mxu0 0
      %3894 = vmatpush1.bf16.msra.mxu0 0
      %3895 = vmatprep.subr.bf16.mxu0 0
      %3896 = vmatpush1.bf16.msra.mxu0 0
      %3897 = vmatprep.subr.bf16.mxu0 0
      %3898 = vmatpush1.bf16.msra.mxu0 0
      %3899 = vmatprep.subr.bf16.mxu0 0
      %3900 = vmatpush1.bf16.msra.mxu0 0
      %3901 = vmatprep.subr.bf16.mxu0 0
      %3902 = vmatpush1.bf16.msra.mxu0 0
      %3903 = vmatprep.subr.bf16.mxu0 0
      %3904 = vmatpush1.bf16.msra.mxu0 0
      %3905 = vmatprep.subr.bf16.mxu0 0
      %3906 = vmatpush1.bf16.msra.mxu0 0
      %3907 = vmatprep.subr.bf16.mxu0 0
      %3908 = vmatpush1.bf16.msra.mxu0 0
      %3909 = vmatprep.subr.bf16.mxu0 0
      %3910 = vmatpush1.bf16.msra.mxu0 0
      %3911 = vmatprep.subr.bf16.mxu0 0
      %3912 = vmatpush1.bf16.msra.mxu0 0
      %3913 = vmatprep.subr.bf16.mxu0 0
      %3914 = vmatpush1.bf16.msra.mxu0 0
      %3915 = vmatprep.mubr.bf16.mxu0 0
      %3916 = vmatmul.mubr.bf16.gmra.mrb[0].mxu0 %v3878
      %v3917 = vpop.f32.mrb[0].mxu0
      %v3918 = vadd.f32 0.0, %v3917
      %v3919 = vpop.f32.mrb[0].mxu0
      %v3920 = vpop.f32.mrb[0].mxu0
      %v3921 = vadd.f32 0.0, %v3920
      %v3922 = vpop.f32.mrb[0].mxu0
      %3923 = vmatprep.mubr.bf16.mxu0 0
      %3924 = vmatmul.mubr.bf16.gmra.mrb[0].mxu0 %v3881
      %v3925 = vpop.f32.mrb[0].mxu0
      %v3926 = vadd.f32 0.0, %v3925
      %v3927 = vpop.f32.mrb[0].mxu0
      %v3928 = vpop.f32.mrb[0].mxu0
      %v3929 = vadd.f32 0.0, %v3928
      %v3930 = vpop.f32.mrb[0].mxu0
      %3931 = vdwg.mxu0
      %v3932 = vadd.f32 %v3918, %v3921
      %v3933 = vadd.f32 %v3932, %v3926
      %v3934 = vadd.f32 %v3933, %v3929
      %v3935 = vsel %vm1619, %v3934, 0.0
      %3936 = vadd.xlane.f32.xlu0 %v3935
      %v3937 = vpop.xlane.xlu0 %3936
      %v3938 = vmul.f32 %v3937, 0.00390625
      %v3939 = vsub.f32 %v3918, %v3938
      %v3940 = vmul.f32 %v3939, %v3939
      %v3941 = vsel %vm1619, %v3940, 0.0
      %3942 = vadd.xlane.f32.xlu0 %v3941
      %v3943 = vpop.xlane.xlu0 %3942
      %v3944 = vadd.f32 %v3943, 0.0
      %v3945 = vsub.f32 %v3921, %v3938
      %v3946 = vmul.f32 %v3945, %v3945
      %v3947 = vsel %vm1619, %v3946, 0.0
      %3948 = vadd.xlane.f32.xlu0 %v3947
      %v3949 = vpop.xlane.xlu0 %3948
      %v3950 = vadd.f32 %v3944, %v3949
      %v3951 = vsub.f32 %v3926, %v3938
      %v3952 = vmul.f32 %v3951, %v3951
      %v3953 = vsel %vm1619, %v3952, 0.0
      %3954 = vadd.xlane.f32.xlu0 %v3953
      %v3955 = vpop.xlane.xlu0 %3954
      %v3956 = vadd.f32 %v3950, %v3955
      %v3957 = vsub.f32 %v3929, %v3938
      %v3958 = vmul.f32 %v3957, %v3957
      %v3959 = vsel %vm1619, %v3958, 0.0
      %3960 = vadd.xlane.f32.xlu0 %v3959
      %v3961 = vpop.xlane.xlu0 %3960
      %v3962 = vadd.f32 %v3956, %v3961
      %v3963 = vmul.f32 %v3962, 0.00390625
      %v3964 = vadd.f32 %v3963, 1e-05
      %v3965 = vrsqrt.pop %v3964
      %v3966 = vmul.f32 %v3939, %v3965
      %vm3967 = vcmp.ge.f32.partialorder %v3966, 0.0
      %v3968 = vmul.f32 %v3966, 0.2
      %v3969 = vsel %vm3967, %v3966, %v3968
      %v3970 = vpack.c.bf16 %v3969, %v3969
      %v3971 = vld [vmem:[%s7] sm:$0xff]
      %v3972 = vld [vmem:[%s7 + $0x8] sm:$0xff]
      %v3973 = vld [vmem:[%s7 + $0x10] sm:$0xff]
      %v3974 = vld [vmem:[%s7 + $0x18] sm:$0xff]
      %v3975 = vld [vmem:[%s7 + $0x20] sm:$0xff]
      %v3976 = vld [vmem:[%s7 + $0x28] sm:$0xff]
      %v3977 = vld [vmem:[%s7 + $0x30] sm:$0xff]
      %v3978 = vld [vmem:[%s7 + $0x38] sm:$0xff]
      %v3979 = vmul.f32 %v3945, %v3965
      %vm3980 = vcmp.ge.f32.partialorder %v3979, 0.0
      %v3981 = vmul.f32 %v3979, 0.2
      %v3982 = vsel %vm3980, %v3979, %v3981
      %v3983 = vpack.c.bf16 %v3982, %v3982
      %s3984 = scalar_lea.vmem %s7, 64
      %v3985 = vld [vmem:[%s3984] sm:$0xff]
      %v3986 = vld [vmem:[%s3984 + $0x8] sm:$0xff]
      %v3987 = vld [vmem:[%s3984 + $0x10] sm:$0xff]
      %v3988 = vld [vmem:[%s3984 + $0x18] sm:$0xff]
      %v3989 = vld [vmem:[%s3984 + $0x20] sm:$0xff]
      %v3990 = vld [vmem:[%s3984 + $0x28] sm:$0xff]
      %v3991 = vld [vmem:[%s3984 + $0x30] sm:$0xff]
      %v3992 = vld [vmem:[%s3984 + $0x38] sm:$0xff]
      %v4001 = vunpack.c.l.b16 %v3985
      %v4002 = vunpack.c.h.b16 %v3985
      %v4003 = vunpack.c.l.b16 %v3986
      %v4004 = vunpack.c.h.b16 %v3986
      %v4005 = vunpack.c.l.b16 %v3987
      %v4006 = vunpack.c.h.b16 %v3987
      %v4007 = vunpack.c.l.b16 %v3988
      %v4008 = vunpack.c.h.b16 %v3988
      %v4009 = vunpack.c.l.b16 %v3989
      %v4010 = vunpack.c.h.b16 %v3989
      %v4011 = vunpack.c.l.b16 %v3990
      %v4012 = vunpack.c.h.b16 %v3990
      %v4013 = vunpack.c.l.b16 %v3991
      %v4014 = vunpack.c.h.b16 %v3991
      %v4015 = vunpack.c.l.b16 %v3992
      %v4016 = vunpack.c.h.b16 %v3992
      %v4017 = vpack.c.b16 %v4003, %v4001
      %v4018 = vpack.c.b16 %v4004, %v4002
      %v4019 = vpack.c.b16 %v4007, %v4005
      %v4020 = vpack.c.b16 %v4008, %v4006
      %v4021 = vpack.c.b16 %v4011, %v4009
      %v4022 = vpack.c.b16 %v4012, %v4010
      %v4023 = vpack.c.b16 %v4015, %v4013
      %v4024 = vpack.c.b16 %v4016, %v4014
      %v4034 = vsel %vm1619, %v3983, 0
      %4036 = vmatprep.subr.bf16.mxu0 %v4018
      %4037 = vmatpush1.bf16.msra.mxu0 %v4017
      %4038 = vmatprep.subr.bf16.mxu0 %v4020
      %4039 = vmatpush1.bf16.msra.mxu0 %v4019
      %4040 = vmatprep.subr.bf16.mxu0 %v4022
      %4041 = vmatpush1.bf16.msra.mxu0 %v4021
      %4042 = vmatprep.subr.bf16.mxu0 %v4024
      %4043 = vmatpush1.bf16.msra.mxu0 %v4023
      %4044 = vmatprep.subr.bf16.mxu0 0
      %4045 = vmatpush1.bf16.msra.mxu0 0
      %4046 = vmatprep.subr.bf16.mxu0 0
      %4047 = vmatpush1.bf16.msra.mxu0 0
      %4048 = vmatprep.subr.bf16.mxu0 0
      %4049 = vmatpush1.bf16.msra.mxu0 0
      %4050 = vmatprep.subr.bf16.mxu0 0
      %4051 = vmatpush1.bf16.msra.mxu0 0
      %4052 = vmatprep.subr.bf16.mxu0 0
      %4053 = vmatpush1.bf16.msra.mxu0 0
      %4054 = vmatprep.subr.bf16.mxu0 0
      %4055 = vmatpush1.bf16.msra.mxu0 0
      %4056 = vmatprep.subr.bf16.mxu0 0
      %4057 = vmatpush1.bf16.msra.mxu0 0
      %4058 = vmatprep.subr.bf16.mxu0 0
      %4059 = vmatpush1.bf16.msra.mxu0 0
      %4060 = vmatprep.subr.bf16.mxu0 0
      %4061 = vmatpush1.bf16.msra.mxu0 0
      %4062 = vmatprep.subr.bf16.mxu0 0
      %4063 = vmatpush1.bf16.msra.mxu0 0
      %4064 = vmatprep.subr.bf16.mxu0 0
      %4065 = vmatpush1.bf16.msra.mxu0 0
      %4066 = vmatprep.subr.bf16.mxu0 0
      %4067 = vmatpush1.bf16.msra.mxu0 0
      %4068 = vmatprep.mubr.bf16.mxu0 0
      %4069 = vmatmul.mubr.bf16.gmra.mrb[0].mxu0 %v4034
      %v4070 = vpop.f32.mrb[0].mxu0
      %v4071 = vadd.f32 0.0, %v4070
      %v4072 = vpop.f32.mrb[0].mxu0
      %v4073 = vadd.f32 0.0, %v4072
      %v4074 = vpop.f32.mrb[0].mxu0
      %v4075 = vpop.f32.mrb[0].mxu0
      %4076 = vdwg.mxu0
      %v4085 = vunpack.c.l.b16 %v3971
      %v4086 = vunpack.c.h.b16 %v3971
      %v4087 = vunpack.c.l.b16 %v3972
      %v4088 = vunpack.c.h.b16 %v3972
      %v4089 = vunpack.c.l.b16 %v3973
      %v4090 = vunpack.c.h.b16 %v3973
      %v4091 = vunpack.c.l.b16 %v3974
      %v4092 = vunpack.c.h.b16 %v3974
      %v4093 = vunpack.c.l.b16 %v3975
      %v4094 = vunpack.c.h.b16 %v3975
      %v4095 = vunpack.c.l.b16 %v3976
      %v4096 = vunpack.c.h.b16 %v3976
      %v4097 = vunpack.c.l.b16 %v3977
      %v4098 = vunpack.c.h.b16 %v3977
      %v4099 = vunpack.c.l.b16 %v3978
      %v4100 = vunpack.c.h.b16 %v3978
      %v4101 = vpack.c.b16 %v4087, %v4085
      %v4102 = vpack.c.b16 %v4088, %v4086
      %v4103 = vpack.c.b16 %v4091, %v4089
      %v4104 = vpack.c.b16 %v4092, %v4090
      %v4105 = vpack.c.b16 %v4095, %v4093
      %v4106 = vpack.c.b16 %v4096, %v4094
      %v4107 = vpack.c.b16 %v4099, %v4097
      %v4108 = vpack.c.b16 %v4100, %v4098
      %v4118 = vsel %vm1619, %v3970, 0
      %4120 = vmatprep.subr.bf16.mxu0 %v4102
      %4121 = vmatpush1.bf16.msra.mxu0 %v4101
      %4122 = vmatprep.subr.bf16.mxu0 %v4104
      %4123 = vmatpush1.bf16.msra.mxu0 %v4103
      %4124 = vmatprep.subr.bf16.mxu0 %v4106
      %4125 = vmatpush1.bf16.msra.mxu0 %v4105
      %4126 = vmatprep.subr.bf16.mxu0 %v4108
      %4127 = vmatpush1.bf16.msra.mxu0 %v4107
      %4128 = vmatprep.subr.bf16.mxu0 0
      %4129 = vmatpush1.bf16.msra.mxu0 0
      %4130 = vmatprep.subr.bf16.mxu0 0
      %4131 = vmatpush1.bf16.msra.mxu0 0
      %4132 = vmatprep.subr.bf16.mxu0 0
      %4133 = vmatpush1.bf16.msra.mxu0 0
      %4134 = vmatprep.subr.bf16.mxu0 0
      %4135 = vmatpush1.bf16.msra.mxu0 0
      %4136 = vmatprep.subr.bf16.mxu0 0
      %4137 = vmatpush1.bf16.msra.mxu0 0
      %4138 = vmatprep.subr.bf16.mxu0 0
      %4139 = vmatpush1.bf16.msra.mxu0 0
      %4140 = vmatprep.subr.bf16.mxu0 0
      %4141 = vmatpush1.bf16.msra.mxu0 0
      %4142 = vmatprep.subr.bf16.mxu0 0
      %4143 = vmatpush1.bf16.msra.mxu0 0
      %4144 = vmatprep.subr.bf16.mxu0 0
      %4145 = vmatpush1.bf16.msra.mxu0 0
      %4146 = vmatprep.subr.bf16.mxu0 0
      %4147 = vmatpush1.bf16.msra.mxu0 0
      %4148 = vmatprep.subr.bf16.mxu0 0
      %4149 = vmatpush1.bf16.msra.mxu0 0
      %4150 = vmatprep.subr.bf16.mxu0 0
      %4151 = vmatpush1.bf16.msra.mxu0 0
      %4152 = vmatprep.mubr.bf16.mxu0 0
      %4153 = vmatmul.mubr.bf16.gmra.mrb[0].mxu0 %v4118
      %v4154 = vpop.f32.mrb[0].mxu0
      %v4155 = vadd.f32 %v4071, %v4154
      %v4156 = vpop.f32.mrb[0].mxu0
      %v4157 = vadd.f32 %v4073, %v4156
      %v4158 = vpop.f32.mrb[0].mxu0
      %v4159 = vpop.f32.mrb[0].mxu0
      %4160 = vdwg.mxu0
      %v4161 = vmul.f32 %v3951, %v3965
      %vm4162 = vcmp.ge.f32.partialorder %v4161, 0.0
      %v4163 = vmul.f32 %v4161, 0.2
      %v4164 = vsel %vm4162, %v4161, %v4163
      %v4165 = vpack.c.bf16 %v4164, %v4164
      %s4166 = scalar_lea.vmem %s7, 128
      %v4167 = vld [vmem:[%s4166] sm:$0xff]
      %v4168 = vld [vmem:[%s4166 + $0x8] sm:$0xff]
      %v4169 = vld [vmem:[%s4166 + $0x10] sm:$0xff]
      %v4170 = vld [vmem:[%s4166 + $0x18] sm:$0xff]
      %v4171 = vld [vmem:[%s4166 + $0x20] sm:$0xff]
      %v4172 = vld [vmem:[%s4166 + $0x28] sm:$0xff]
      %v4173 = vld [vmem:[%s4166 + $0x30] sm:$0xff]
      %v4174 = vld [vmem:[%s4166 + $0x38] sm:$0xff]
      %v4183 = vunpack.c.l.b16 %v4167
      %v4184 = vunpack.c.h.b16 %v4167
      %v4185 = vunpack.c.l.b16 %v4168
      %v4186 = vunpack.c.h.b16 %v4168
      %v4187 = vunpack.c.l.b16 %v4169
      %v4188 = vunpack.c.h.b16 %v4169
      %v4189 = vunpack.c.l.b16 %v4170
      %v4190 = vunpack.c.h.b16 %v4170
      %v4191 = vunpack.c.l.b16 %v4171
      %v4192 = vunpack.c.h.b16 %v4171
      %v4193 = vunpack.c.l.b16 %v4172
      %v4194 = vunpack.c.h.b16 %v4172
      %v4195 = vunpack.c.l.b16 %v4173
      %v4196 = vunpack.c.h.b16 %v4173
      %v4197 = vunpack.c.l.b16 %v4174
      %v4198 = vunpack.c.h.b16 %v4174
      %v4199 = vpack.c.b16 %v4185, %v4183
      %v4200 = vpack.c.b16 %v4186, %v4184
      %v4201 = vpack.c.b16 %v4189, %v4187
      %v4202 = vpack.c.b16 %v4190, %v4188
      %v4203 = vpack.c.b16 %v4193, %v4191
      %v4204 = vpack.c.b16 %v4194, %v4192
      %v4205 = vpack.c.b16 %v4197, %v4195
      %v4206 = vpack.c.b16 %v4198, %v4196
      %v4216 = vsel %vm1619, %v4165, 0
      %4218 = vmatprep.subr.bf16.mxu0 %v4200
      %4219 = vmatpush1.bf16.msra.mxu0 %v4199
      %4220 = vmatprep.subr.bf16.mxu0 %v4202
      %4221 = vmatpush1.bf16.msra.mxu0 %v4201
      %4222 = vmatprep.subr.bf16.mxu0 %v4204
      %4223 = vmatpush1.bf16.msra.mxu0 %v4203
      %4224 = vmatprep.subr.bf16.mxu0 %v4206
      %4225 = vmatpush1.bf16.msra.mxu0 %v4205
      %4226 = vmatprep.subr.bf16.mxu0 0
      %4227 = vmatpush1.bf16.msra.mxu0 0
      %4228 = vmatprep.subr.bf16.mxu0 0
      %4229 = vmatpush1.bf16.msra.mxu0 0
      %4230 = vmatprep.subr.bf16.mxu0 0
      %4231 = vmatpush1.bf16.msra.mxu0 0
      %4232 = vmatprep.subr.bf16.mxu0 0
      %4233 = vmatpush1.bf16.msra.mxu0 0
      %4234 = vmatprep.subr.bf16.mxu0 0
      %4235 = vmatpush1.bf16.msra.mxu0 0
      %4236 = vmatprep.subr.bf16.mxu0 0
      %4237 = vmatpush1.bf16.msra.mxu0 0
      %4238 = vmatprep.subr.bf16.mxu0 0
      %4239 = vmatpush1.bf16.msra.mxu0 0
      %4240 = vmatprep.subr.bf16.mxu0 0
      %4241 = vmatpush1.bf16.msra.mxu0 0
      %4242 = vmatprep.subr.bf16.mxu0 0
      %4243 = vmatpush1.bf16.msra.mxu0 0
      %4244 = vmatprep.subr.bf16.mxu0 0
      %4245 = vmatpush1.bf16.msra.mxu0 0
      %4246 = vmatprep.subr.bf16.mxu0 0
      %4247 = vmatpush1.bf16.msra.mxu0 0
      %4248 = vmatprep.subr.bf16.mxu0 0
      %4249 = vmatpush1.bf16.msra.mxu0 0
      %4250 = vmatprep.mubr.bf16.mxu0 0
      %4251 = vmatmul.mubr.bf16.gmra.mrb[0].mxu0 %v4216
      %v4252 = vpop.f32.mrb[0].mxu0
      %v4253 = vadd.f32 0.0, %v4252
      %v4254 = vpop.f32.mrb[0].mxu0
      %v4255 = vadd.f32 0.0, %v4254
      %v4256 = vpop.f32.mrb[0].mxu0
      %v4257 = vpop.f32.mrb[0].mxu0
      %4258 = vdwg.mxu0
      %v4259 = vadd.f32 %v4155, %v4253
      %v4260 = vadd.f32 %v4157, %v4255
      %v4261 = vmul.f32 %v3957, %v3965
      %vm4262 = vcmp.ge.f32.partialorder %v4261, 0.0
      %v4263 = vmul.f32 %v4261, 0.2
      %v4264 = vsel %vm4262, %v4261, %v4263
      %v4265 = vpack.c.bf16 %v4264, %v4264
      %s4266 = scalar_lea.vmem %s7, 192
      %v4267 = vld [vmem:[%s4266] sm:$0xff]
      %v4268 = vld [vmem:[%s4266 + $0x8] sm:$0xff]
      %v4269 = vld [vmem:[%s4266 + $0x10] sm:$0xff]
      %v4270 = vld [vmem:[%s4266 + $0x18] sm:$0xff]
      %v4271 = vld [vmem:[%s4266 + $0x20] sm:$0xff]
      %v4272 = vld [vmem:[%s4266 + $0x28] sm:$0xff]
      %v4273 = vld [vmem:[%s4266 + $0x30] sm:$0xff]
      %v4274 = vld [vmem:[%s4266 + $0x38] sm:$0xff]
      %v4283 = vunpack.c.l.b16 %v4267
      %v4284 = vunpack.c.h.b16 %v4267
      %v4285 = vunpack.c.l.b16 %v4268
      %v4286 = vunpack.c.h.b16 %v4268
      %v4287 = vunpack.c.l.b16 %v4269
      %v4288 = vunpack.c.h.b16 %v4269
      %v4289 = vunpack.c.l.b16 %v4270
      %v4290 = vunpack.c.h.b16 %v4270
      %v4291 = vunpack.c.l.b16 %v4271
      %v4292 = vunpack.c.h.b16 %v4271
      %v4293 = vunpack.c.l.b16 %v4272
      %v4294 = vunpack.c.h.b16 %v4272
      %v4295 = vunpack.c.l.b16 %v4273
      %v4296 = vunpack.c.h.b16 %v4273
      %v4297 = vunpack.c.l.b16 %v4274
      %v4298 = vunpack.c.h.b16 %v4274
      %v4299 = vpack.c.b16 %v4285, %v4283
      %v4300 = vpack.c.b16 %v4286, %v4284
      %v4301 = vpack.c.b16 %v4289, %v4287
      %v4302 = vpack.c.b16 %v4290, %v4288
      %v4303 = vpack.c.b16 %v4293, %v4291
      %v4304 = vpack.c.b16 %v4294, %v4292
      %v4305 = vpack.c.b16 %v4297, %v4295
      %v4306 = vpack.c.b16 %v4298, %v4296
      %v4316 = vsel %vm1619, %v4265, 0
      %4318 = vmatprep.subr.bf16.mxu0 %v4300
      %4319 = vmatpush1.bf16.msra.mxu0 %v4299
      %4320 = vmatprep.subr.bf16.mxu0 %v4302
      %4321 = vmatpush1.bf16.msra.mxu0 %v4301
      %4322 = vmatprep.subr.bf16.mxu0 %v4304
      %4323 = vmatpush1.bf16.msra.mxu0 %v4303
      %4324 = vmatprep.subr.bf16.mxu0 %v4306
      %4325 = vmatpush1.bf16.msra.mxu0 %v4305
      %4326 = vmatprep.subr.bf16.mxu0 0
      %4327 = vmatpush1.bf16.msra.mxu0 0
      %4328 = vmatprep.subr.bf16.mxu0 0
      %4329 = vmatpush1.bf16.msra.mxu0 0
      %4330 = vmatprep.subr.bf16.mxu0 0
      %4331 = vmatpush1.bf16.msra.mxu0 0
      %4332 = vmatprep.subr.bf16.mxu0 0
      %4333 = vmatpush1.bf16.msra.mxu0 0
      %4334 = vmatprep.subr.bf16.mxu0 0
      %4335 = vmatpush1.bf16.msra.mxu0 0
      %4336 = vmatprep.subr.bf16.mxu0 0
      %4337 = vmatpush1.bf16.msra.mxu0 0
      %4338 = vmatprep.subr.bf16.mxu0 0
      %4339 = vmatpush1.bf16.msra.mxu0 0
      %4340 = vmatprep.subr.bf16.mxu0 0
      %4341 = vmatpush1.bf16.msra.mxu0 0
      %4342 = vmatprep.subr.bf16.mxu0 0
      %4343 = vmatpush1.bf16.msra.mxu0 0
      %4344 = vmatprep.subr.bf16.mxu0 0
      %4345 = vmatpush1.bf16.msra.mxu0 0
      %4346 = vmatprep.subr.bf16.mxu0 0
      %4347 = vmatpush1.bf16.msra.mxu0 0
      %4348 = vmatprep.subr.bf16.mxu0 0
      %4349 = vmatpush1.bf16.msra.mxu0 0
      %4350 = vmatprep.mubr.bf16.mxu0 0
      %4351 = vmatmul.mubr.bf16.gmra.mrb[0].mxu0 %v4316
      %v4352 = vpop.f32.mrb[0].mxu0
      %v4353 = vadd.f32 0.0, %v4352
      %v4354 = vpop.f32.mrb[0].mxu0
      %v4355 = vadd.f32 0.0, %v4354
      %v4356 = vpop.f32.mrb[0].mxu0
      %v4357 = vpop.f32.mrb[0].mxu0
      %4358 = vdwg.mxu0
      %v4359 = vadd.f32 %v4259, %v4353
      %v4360 = vadd.f32 %v4260, %v4355
      %4362 = vrot.lane.b32.xlu0 %v4360, 17
      %v4363 = vpop.permute.xlu0 %4362
      %4366 = vrot.lane.b32.xlu0 %v4359, 17
      %v4367 = vpop.permute.xlu0 %4366
      %v4368 = vsel %vm754, %v4367, %v4363
      %v4371 = vsel %vm754, %v4363, %v4367
      %v4372 = vmul.f32 %v4371, %v764
      %v4373 = vmul.f32 %v4368, %v768
      %4374 = vrot.lane.b32.xlu0 %v4360, 16
      %v4375 = vpop.permute.xlu0 %4374
      %4377 = vrot.lane.b32.xlu0 %v4359, 16
      %v4378 = vpop.permute.xlu0 %4377
      %v4379 = vsel %vm778, %v4378, %v4375
      %v4382 = vsel %vm778, %v4375, %v4378
      %v4383 = vmul.f32 %v4382, %v789
      %v4384 = vmul.f32 %v4379, %v793
      %4385 = vrot.lane.b32.xlu0 %v4360, 15
      %v4386 = vpop.permute.xlu0 %4385
      %4388 = vrot.lane.b32.xlu0 %v4359, 15
      %v4389 = vpop.permute.xlu0 %4388
      %v4390 = vsel %vm803, %v4389, %v4386
      %v4393 = vsel %vm803, %v4386, %v4389
      %v4394 = vmul.f32 %v4393, %v814
      %v4395 = vmul.f32 %v4390, %v818
      %4396 = vrot.lane.b32.xlu0 %v4360, 1
      %v4397 = vpop.permute.xlu0 %4396
      %4399 = vrot.lane.b32.xlu0 %v4359, 1
      %v4400 = vpop.permute.xlu0 %4399
      %v4401 = vsel %vm828, %v4400, %v4397
      %v4404 = vsel %vm828, %v4397, %v4400
      %v4405 = vmul.f32 %v4404, %v839
      %v4406 = vmul.f32 %v4401, %v843
      %4407 = vrot.lane.b32.xlu0 %v4359, 127
      %v4408 = vpop.permute.xlu0 %4407
      %4409 = vrot.lane.b32.xlu0 %v4360, 127
      %v4410 = vpop.permute.xlu0 %4409
      %v4411 = vsel %vm852, %v4408, %v4410
      %v4415 = vsel %vm852, %v4410, %v4408
      %v4416 = vmul.f32 %v4411, %v864
      %v4417 = vmul.f32 %v4415, %v868
      %4418 = vrot.lane.b32.xlu0 %v4359, 113
      %v4419 = vpop.permute.xlu0 %4418
      %4420 = vrot.lane.b32.xlu0 %v4360, 113
      %v4421 = vpop.permute.xlu0 %4420
      %v4422 = vsel %vm877, %v4419, %v4421
      %v4426 = vsel %vm877, %v4421, %v4419
      %v4427 = vmul.f32 %v4422, %v889
      %v4428 = vmul.f32 %v4426, %v893
      %4429 = vrot.lane.b32.xlu0 %v4359, 112
      %v4430 = vpop.permute.xlu0 %4429
      %4431 = vrot.lane.b32.xlu0 %v4360, 112
      %v4432 = vpop.permute.xlu0 %4431
      %v4433 = vsel %vm902, %v4430, %v4432
      %v4437 = vsel %vm902, %v4432, %v4430
      %v4438 = vmul.f32 %v4433, %v914
      %v4439 = vmul.f32 %v4437, %v918
      %4440 = vrot.lane.b32.xlu0 %v4359, 111
      %v4441 = vpop.permute.xlu0 %4440
      %4442 = vrot.lane.b32.xlu0 %v4360, 111
      %v4443 = vpop.permute.xlu0 %4442
      %v4444 = vsel %vm927, %v4441, %v4443
      %v4448 = vsel %vm927, %v4443, %v4441
      %v4449 = vmul.f32 %v4444, %v939
      %v4450 = vmul.f32 %v4448, %v943
      %v4451 = vpack.c.bf16 %v4383, %v4372
      %v4452 = vpack.c.bf16 %v4384, %v4373
      %v4453 = vpack.c.bf16 %v4405, %v4394
      %v4454 = vpack.c.bf16 %v4406, %v4395
      %v4455 = vpack.c.bf16 %v4416, %v4359
      %v4456 = vpack.c.bf16 %v4417, %v4360
      %v4457 = vpack.c.bf16 %v4438, %v4427
      %v4458 = vpack.c.bf16 %v4439, %v4428
      %v4459 = vpack.c.bf16 %v4449, %v4449
      %v4460 = vpack.c.bf16 %v4450, %v4450
      %v4461 = vld [vmem:[%s19] sm:$0xf]
      %4463 = vrot.lane.b32.xlu0 %v1254, 17
      %v4464 = vpop.permute.xlu0 %4463
      %4467 = vrot.lane.b32.xlu0 %v1253, 17
      %v4468 = vpop.permute.xlu0 %4467
      %v4469 = vsel %vm754, %v4468, %v4464
      %v4472 = vsel %vm754, %v4464, %v4468
      %v4473 = vmul.f32 %v4472, %v764
      %v4474 = vmul.f32 %v4469, %v768
      %4475 = vrot.lane.b32.xlu0 %v1254, 16
      %v4476 = vpop.permute.xlu0 %4475
      %4478 = vrot.lane.b32.xlu0 %v1253, 16
      %v4479 = vpop.permute.xlu0 %4478
      %v4480 = vsel %vm778, %v4479, %v4476
      %v4483 = vsel %vm778, %v4476, %v4479
      %v4484 = vmul.f32 %v4483, %v789
      %v4485 = vmul.f32 %v4480, %v793
      %4486 = vrot.lane.b32.xlu0 %v1254, 15
      %v4487 = vpop.permute.xlu0 %4486
      %4489 = vrot.lane.b32.xlu0 %v1253, 15
      %v4490 = vpop.permute.xlu0 %4489
      %v4491 = vsel %vm803, %v4490, %v4487
      %v4494 = vsel %vm803, %v4487, %v4490
      %v4495 = vmul.f32 %v4494, %v814
      %v4496 = vmul.f32 %v4491, %v818
      %4497 = vrot.lane.b32.xlu0 %v1254, 1
      %v4498 = vpop.permute.xlu0 %4497
      %4500 = vrot.lane.b32.xlu0 %v1253, 1
      %v4501 = vpop.permute.xlu0 %4500
      %v4502 = vsel %vm828, %v4501, %v4498
      %v4505 = vsel %vm828, %v4498, %v4501
      %v4506 = vmul.f32 %v4505, %v839
      %v4507 = vmul.f32 %v4502, %v843
      %4508 = vrot.lane.b32.xlu0 %v1253, 127
      %v4509 = vpop.permute.xlu0 %4508
      %4510 = vrot.lane.b32.xlu0 %v1254, 127
      %v4511 = vpop.permute.xlu0 %4510
      %v4512 = vsel %vm852, %v4509, %v4511
      %v4516 = vsel %vm852, %v4511, %v4509
      %v4517 = vmul.f32 %v4512, %v864
      %v4518 = vmul.f32 %v4516, %v868
      %4519 = vrot.lane.b32.xlu0 %v1253, 113
      %v4520 = vpop.permute.xlu0 %4519
      %4521 = vrot.lane.b32.xlu0 %v1254, 113
      %v4522 = vpop.permute.xlu0 %4521
      %v4523 = vsel %vm877, %v4520, %v4522
      %v4527 = vsel %vm877, %v4522, %v4520
      %v4528 = vmul.f32 %v4523, %v889
      %v4529 = vmul.f32 %v4527, %v893
      %4530 = vrot.lane.b32.xlu0 %v1253, 112
      %v4531 = vpop.permute.xlu0 %4530
      %4532 = vrot.lane.b32.xlu0 %v1254, 112
      %v4533 = vpop.permute.xlu0 %4532
      %v4534 = vsel %vm902, %v4531, %v4533
      %v4538 = vsel %vm902, %v4533, %v4531
      %v4539 = vmul.f32 %v4534, %v914
      %v4540 = vmul.f32 %v4538, %v918
      %4541 = vrot.lane.b32.xlu0 %v1253, 111
      %v4542 = vpop.permute.xlu0 %4541
      %4543 = vrot.lane.b32.xlu0 %v1254, 111
      %v4544 = vpop.permute.xlu0 %4543
      %v4545 = vsel %vm927, %v4542, %v4544
      %v4549 = vsel %vm927, %v4544, %v4542
      %v4550 = vmul.f32 %v4545, %v939
      %v4551 = vmul.f32 %v4549, %v943
      %v4552 = vpack.c.bf16 %v4484, %v4473
      %v4553 = vpack.c.bf16 %v4485, %v4474
      %v4554 = vpack.c.bf16 %v4506, %v4495
      %v4555 = vpack.c.bf16 %v4507, %v4496
      %v4556 = vpack.c.bf16 %v4517, %v1253
      %v4557 = vpack.c.bf16 %v4518, %v1254
      %v4558 = vpack.c.bf16 %v4539, %v4528
      %v4559 = vpack.c.bf16 %v4540, %v4529
      %v4560 = vpack.c.bf16 %v4550, %v4550
      %v4561 = vpack.c.bf16 %v4551, %v4551
      %v4562 = vld [vmem:[%s20] sm:$0xf]
      %v4564 = vsel %vm1182, %v4562, 0
      %v4567 = vsel %vm989, %v4560, 0
      %v4570 = vsel %vm989, %v4561, 0
      %4572 = vmatprep.subr.bf16.mxu0 %v4553
      %4573 = vmatpush1.bf16.msra.mxu0 %v4552
      %4574 = vmatprep.subr.bf16.mxu0 %v4555
      %4575 = vmatpush1.bf16.msra.mxu0 %v4554
      %4576 = vmatprep.subr.bf16.mxu0 %v4557
      %4577 = vmatpush1.bf16.msra.mxu0 %v4556
      %4578 = vmatprep.subr.bf16.mxu0 %v4559
      %4579 = vmatpush1.bf16.msra.mxu0 %v4558
      %4580 = vmatprep.subr.bf16.mxu0 %v4570
      %4581 = vmatpush1.bf16.msra.mxu0 %v4567
      %4582 = vmatprep.subr.bf16.mxu0 0
      %4583 = vmatpush1.bf16.msra.mxu0 0
      %4584 = vmatprep.subr.bf16.mxu0 0
      %4585 = vmatpush1.bf16.msra.mxu0 0
      %4586 = vmatprep.subr.bf16.mxu0 0
      %4587 = vmatpush1.bf16.msra.mxu0 0
      %4588 = vmatprep.subr.bf16.mxu0 0
      %4589 = vmatpush1.bf16.msra.mxu0 0
      %4590 = vmatprep.subr.bf16.mxu0 0
      %4591 = vmatpush1.bf16.msra.mxu0 0
      %4592 = vmatprep.subr.bf16.mxu0 0
      %4593 = vmatpush1.bf16.msra.mxu0 0
      %4594 = vmatprep.subr.bf16.mxu0 0
      %4595 = vmatpush1.bf16.msra.mxu0 0
      %4596 = vmatprep.subr.bf16.mxu0 0
      %4597 = vmatpush1.bf16.msra.mxu0 0
      %4598 = vmatprep.subr.bf16.mxu0 0
      %4599 = vmatpush1.bf16.msra.mxu0 0
      %4600 = vmatprep.subr.bf16.mxu0 0
      %4601 = vmatpush1.bf16.msra.mxu0 0
      %4602 = vmatprep.subr.bf16.mxu0 0
      %4603 = vmatpush1.bf16.msra.mxu0 0
      %4604 = vmatprep.mubr.bf16.mxu0 0
      %4605 = vmatmul.mubr.bf16.gmra.mrb[0].mxu0 %v4564
      %v4606 = vpop.f32.mrb[0].mxu0
      %v4607 = vadd.f32 0.0, %v4606
      %v4608 = vpop.f32.mrb[0].mxu0
      %v4609 = vadd.f32 0.0, %v4608
      %v4610 = vpop.f32.mrb[0].mxu0
      %v4611 = vpop.f32.mrb[0].mxu0
      %4612 = vdwg.mxu0
      %v4614 = vsel %vm1182, %v4461, 0
      %v4617 = vsel %vm989, %v4459, 0
      %v4620 = vsel %vm989, %v4460, 0
      %4622 = vmatprep.subr.bf16.mxu0 %v4452
      %4623 = vmatpush1.bf16.msra.mxu0 %v4451
      %4624 = vmatprep.subr.bf16.mxu0 %v4454
      %4625 = vmatpush1.bf16.msra.mxu0 %v4453
      %4626 = vmatprep.subr.bf16.mxu0 %v4456
      %4627 = vmatpush1.bf16.msra.mxu0 %v4455
      %4628 = vmatprep.subr.bf16.mxu0 %v4458
      %4629 = vmatpush1.bf16.msra.mxu0 %v4457
      %4630 = vmatprep.subr.bf16.mxu0 %v4620
      %4631 = vmatpush1.bf16.msra.mxu0 %v4617
      %4632 = vmatprep.subr.bf16.mxu0 0
      %4633 = vmatpush1.bf16.msra.mxu0 0
      %4634 = vmatprep.subr.bf16.mxu0 0
      %4635 = vmatpush1.bf16.msra.mxu0 0
      %4636 = vmatprep.subr.bf16.mxu0 0
      %4637 = vmatpush1.bf16.msra.mxu0 0
      %4638 = vmatprep.subr.bf16.mxu0 0
      %4639 = vmatpush1.bf16.msra.mxu0 0
      %4640 = vmatprep.subr.bf16.mxu0 0
      %4641 = vmatpush1.bf16.msra.mxu0 0
      %4642 = vmatprep.subr.bf16.mxu0 0
      %4643 = vmatpush1.bf16.msra.mxu0 0
      %4644 = vmatprep.subr.bf16.mxu0 0
      %4645 = vmatpush1.bf16.msra.mxu0 0
      %4646 = vmatprep.subr.bf16.mxu0 0
      %4647 = vmatpush1.bf16.msra.mxu0 0
      %4648 = vmatprep.subr.bf16.mxu0 0
      %4649 = vmatpush1.bf16.msra.mxu0 0
      %4650 = vmatprep.subr.bf16.mxu0 0
      %4651 = vmatpush1.bf16.msra.mxu0 0
      %4652 = vmatprep.subr.bf16.mxu0 0
      %4653 = vmatpush1.bf16.msra.mxu0 0
      %4654 = vmatprep.mubr.bf16.mxu0 0
      %4655 = vmatmul.mubr.bf16.gmra.mrb[0].mxu0 %v4614
      %v4656 = vpop.f32.mrb[0].mxu0
      %v4657 = vadd.f32 %v4607, %v4656
      %v4658 = vpop.f32.mrb[0].mxu0
      %v4659 = vadd.f32 %v4609, %v4658
      %v4660 = vpop.f32.mrb[0].mxu0
      %v4661 = vpop.f32.mrb[0].mxu0
      %4662 = vdwg.mxu0
      %v4663 = vadd.f32 %v4657, %v4659
      %4664 = vadd.xlane.f32.xlu0 %v4663
      %v4665 = vpop.xlane.xlu0 %4664
      %v4666 = vmul.f32 %v4665, %v1061
      %v4667 = vsub.f32 %v4657, %v4666
      %v4668 = vsub.f32 %v4659, %v4666
      %v4669 = vmul.f32 %v4667, %v4667
      %v4670 = vmul.f32 %v4668, %v4668
      %v4671 = vadd.f32 %v4669, %v4670
      %4672 = vadd.xlane.f32.xlu0 %v4671
      %v4673 = vpop.xlane.xlu0 %4672
      %v4674 = vmul.f32 %v4673, %v1061
      %v4675 = vadd.f32 %v4674, 1e-05
      %v4676 = vrsqrt.pop %v4675
      %v4677 = vmul.f32 %v4667, %v4676
      %v4678 = vmul.f32 %v4668, %v4676
      %vm4679 = vcmp.ge.f32.partialorder %v4677, 0.0
      %vm4680 = vcmp.ge.f32.partialorder %v4678, 0.0
      %v4681 = vmul.f32 %v4677, 0.2
      %v4682 = vmul.f32 %v4678, 0.2
      %v4683 = vsel %vm4679, %v4677, %v4681
      %v4684 = vsel %vm4680, %v4678, %v4682
      %4686 = vrot.lane.b32.xlu0 %v4684, 17
      %v4687 = vpop.permute.xlu0 %4686
      %4690 = vrot.lane.b32.xlu0 %v4683, 17
      %v4691 = vpop.permute.xlu0 %4690
      %v4692 = vsel %vm754, %v4691, %v4687
      %v4695 = vsel %vm754, %v4687, %v4691
      %v4696 = vmul.f32 %v4695, %v764
      %v4697 = vmul.f32 %v4692, %v768
      %4698 = vrot.lane.b32.xlu0 %v4684, 16
      %v4699 = vpop.permute.xlu0 %4698
      %4701 = vrot.lane.b32.xlu0 %v4683, 16
      %v4702 = vpop.permute.xlu0 %4701
      %v4703 = vsel %vm778, %v4702, %v4699
      %v4706 = vsel %vm778, %v4699, %v4702
      %v4707 = vmul.f32 %v4706, %v789
      %v4708 = vmul.f32 %v4703, %v793
      %4709 = vrot.lane.b32.xlu0 %v4684, 15
      %v4710 = vpop.permute.xlu0 %4709
      %4712 = vrot.lane.b32.xlu0 %v4683, 15
      %v4713 = vpop.permute.xlu0 %4712
      %v4714 = vsel %vm803, %v4713, %v4710
      %v4717 = vsel %vm803, %v4710, %v4713
      %v4718 = vmul.f32 %v4717, %v814
      %v4719 = vmul.f32 %v4714, %v818
      %4720 = vrot.lane.b32.xlu0 %v4684, 1
      %v4721 = vpop.permute.xlu0 %4720
      %4723 = vrot.lane.b32.xlu0 %v4683, 1
      %v4724 = vpop.permute.xlu0 %4723
      %v4725 = vsel %vm828, %v4724, %v4721
      %v4728 = vsel %vm828, %v4721, %v4724
      %v4729 = vmul.f32 %v4728, %v839
      %v4730 = vmul.f32 %v4725, %v843
      %4731 = vrot.lane.b32.xlu0 %v4683, 127
      %v4732 = vpop.permute.xlu0 %4731
      %4733 = vrot.lane.b32.xlu0 %v4684, 127
      %v4734 = vpop.permute.xlu0 %4733
      %v4735 = vsel %vm852, %v4732, %v4734
      %v4739 = vsel %vm852, %v4734, %v4732
      %v4740 = vmul.f32 %v4735, %v864
      %v4741 = vmul.f32 %v4739, %v868
      %4742 = vrot.lane.b32.xlu0 %v4683, 113
      %v4743 = vpop.permute.xlu0 %4742
      %4744 = vrot.lane.b32.xlu0 %v4684, 113
      %v4745 = vpop.permute.xlu0 %4744
      %v4746 = vsel %vm877, %v4743, %v4745
      %v4750 = vsel %vm877, %v4745, %v4743
      %v4751 = vmul.f32 %v4746, %v889
      %v4752 = vmul.f32 %v4750, %v893
      %4753 = vrot.lane.b32.xlu0 %v4683, 112
      %v4754 = vpop.permute.xlu0 %4753
      %4755 = vrot.lane.b32.xlu0 %v4684, 112
      %v4756 = vpop.permute.xlu0 %4755
      %v4757 = vsel %vm902, %v4754, %v4756
      %v4761 = vsel %vm902, %v4756, %v4754
      %v4762 = vmul.f32 %v4757, %v914
      %v4763 = vmul.f32 %v4761, %v918
      %4764 = vrot.lane.b32.xlu0 %v4683, 111
      %v4765 = vpop.permute.xlu0 %4764
      %4766 = vrot.lane.b32.xlu0 %v4684, 111
      %v4767 = vpop.permute.xlu0 %4766
      %v4768 = vsel %vm927, %v4765, %v4767
      %v4772 = vsel %vm927, %v4767, %v4765
      %v4773 = vmul.f32 %v4768, %v939
      %v4774 = vmul.f32 %v4772, %v943
      %v4775 = vpack.c.bf16 %v4707, %v4696
      %v4776 = vpack.c.bf16 %v4708, %v4697
      %v4777 = vpack.c.bf16 %v4729, %v4718
      %v4778 = vpack.c.bf16 %v4730, %v4719
      %v4779 = vpack.c.bf16 %v4740, %v4683
      %v4780 = vpack.c.bf16 %v4741, %v4684
      %v4781 = vpack.c.bf16 %v4762, %v4751
      %v4782 = vpack.c.bf16 %v4763, %v4752
      %v4783 = vpack.c.bf16 %v4773, %v4773
      %v4784 = vpack.c.bf16 %v4774, %v4774
      %v4785 = vld [vmem:[%s21] sm:$0xf]
      %v4787 = vsel %vm1182, %v4785, 0
      %v4790 = vsel %vm989, %v4783, 0
      %v4793 = vsel %vm989, %v4784, 0
      %4795 = vmatprep.subr.bf16.mxu0 %v4776
      %4796 = vmatpush1.bf16.msra.mxu0 %v4775
      %4797 = vmatprep.subr.bf16.mxu0 %v4778
      %4798 = vmatpush1.bf16.msra.mxu0 %v4777
      %4799 = vmatprep.subr.bf16.mxu0 %v4780
      %4800 = vmatpush1.bf16.msra.mxu0 %v4779
      %4801 = vmatprep.subr.bf16.mxu0 %v4782
      %4802 = vmatpush1.bf16.msra.mxu0 %v4781
      %4803 = vmatprep.subr.bf16.mxu0 %v4793
      %4804 = vmatpush1.bf16.msra.mxu0 %v4790
      %4805 = vmatprep.subr.bf16.mxu0 0
      %4806 = vmatpush1.bf16.msra.mxu0 0
      %4807 = vmatprep.subr.bf16.mxu0 0
      %4808 = vmatpush1.bf16.msra.mxu0 0
      %4809 = vmatprep.subr.bf16.mxu0 0
      %4810 = vmatpush1.bf16.msra.mxu0 0
      %4811 = vmatprep.subr.bf16.mxu0 0
      %4812 = vmatpush1.bf16.msra.mxu0 0
      %4813 = vmatprep.subr.bf16.mxu0 0
      %4814 = vmatpush1.bf16.msra.mxu0 0
      %4815 = vmatprep.subr.bf16.mxu0 0
      %4816 = vmatpush1.bf16.msra.mxu0 0
      %4817 = vmatprep.subr.bf16.mxu0 0
      %4818 = vmatpush1.bf16.msra.mxu0 0
      %4819 = vmatprep.subr.bf16.mxu0 0
      %4820 = vmatpush1.bf16.msra.mxu0 0
      %4821 = vmatprep.subr.bf16.mxu0 0
      %4822 = vmatpush1.bf16.msra.mxu0 0
      %4823 = vmatprep.subr.bf16.mxu0 0
      %4824 = vmatpush1.bf16.msra.mxu0 0
      %4825 = vmatprep.subr.bf16.mxu0 0
      %4826 = vmatpush1.bf16.msra.mxu0 0
      %4827 = vmatprep.mubr.bf16.mxu0 0
      %4828 = vmatmul.mubr.bf16.gmra.mrb[0].mxu0 %v4787
      %v4829 = vpop.f32.mrb[0].mxu0
      %v4830 = vadd.f32 0.0, %v4829
      %v4831 = vpop.f32.mrb[0].mxu0
      %v4832 = vadd.f32 0.0, %v4831
      %v4833 = vpop.f32.mrb[0].mxu0
      %v4834 = vpop.f32.mrb[0].mxu0
      %4835 = vdwg.mxu0
      %v4836 = vadd.f32 %v4830, %v4832
      %4837 = vadd.xlane.f32.xlu0 %v4836
      %v4838 = vpop.xlane.xlu0 %4837
      %v4839 = vmul.f32 %v4838, %v1061
      %v4840 = vsub.f32 %v4830, %v4839
      %v4841 = vsub.f32 %v4832, %v4839
      %v4842 = vmul.f32 %v4840, %v4840
      %v4843 = vmul.f32 %v4841, %v4841
      %v4844 = vadd.f32 %v4842, %v4843
      %4845 = vadd.xlane.f32.xlu0 %v4844
      %v4846 = vpop.xlane.xlu0 %4845
      %v4847 = vmul.f32 %v4846, %v1061
      %v4848 = vadd.f32 %v4847, 1e-05
      %v4849 = vrsqrt.pop %v4848
      %v4850 = vmul.f32 %v4840, %v4849
      %v4851 = vmul.f32 %v4841, %v4849
      %vm4852 = vcmp.ge.f32.partialorder %v4850, 0.0
      %vm4853 = vcmp.ge.f32.partialorder %v4851, 0.0
      %v4854 = vmul.f32 %v4850, 0.2
      %v4855 = vmul.f32 %v4851, 0.2
      %v4856 = vsel %vm4852, %v4850, %v4854
      %v4857 = vsel %vm4853, %v4851, %v4855
      %v4858 = vld [vmem:[%s22] sm:$0x1]
      %v4859 = vpack.c.bf16 %v4856, %v4856
      %v4860 = vpack.c.bf16 %v4857, %v4857
      %v4861 = vld [vmem:[%s23] sm:$0x3]
      %4863 = vset.pattern.permute.xlu0 0
      %4864 = vperm.xlu0 %4863, %v4861
      %v4865 = vpop.permute.xlu0 %4864
      %v4868 = vsel %vm1448, %v4858, 0
      %v4871 = vsel %vm989, %v4859, 0
      %v4874 = vsel %vm989, %v4860, 0
      %4876 = vmatprep.subr.bf16.mxu0 %v4874
      %4877 = vmatpush1.bf16.msra.mxu0 %v4871
      %4878 = vmatprep.subr.bf16.mxu0 0
      %4879 = vmatpush1.bf16.msra.mxu0 0
      %4880 = vmatprep.subr.bf16.mxu0 0
      %4881 = vmatpush1.bf16.msra.mxu0 0
      %4882 = vmatprep.subr.bf16.mxu0 0
      %4883 = vmatpush1.bf16.msra.mxu0 0
      %4884 = vmatprep.subr.bf16.mxu0 0
      %4885 = vmatpush1.bf16.msra.mxu0 0
      %4886 = vmatprep.subr.bf16.mxu0 0
      %4887 = vmatpush1.bf16.msra.mxu0 0
      %4888 = vmatprep.subr.bf16.mxu0 0
      %4889 = vmatpush1.bf16.msra.mxu0 0
      %4890 = vmatprep.subr.bf16.mxu0 0
      %4891 = vmatpush1.bf16.msra.mxu0 0
      %4892 = vmatprep.subr.bf16.mxu0 0
      %4893 = vmatpush1.bf16.msra.mxu0 0
      %4894 = vmatprep.subr.bf16.mxu0 0
      %4895 = vmatpush1.bf16.msra.mxu0 0
      %4896 = vmatprep.subr.bf16.mxu0 0
      %4897 = vmatpush1.bf16.msra.mxu0 0
      %4898 = vmatprep.subr.bf16.mxu0 0
      %4899 = vmatpush1.bf16.msra.mxu0 0
      %4900 = vmatprep.subr.bf16.mxu0 0
      %4901 = vmatpush1.bf16.msra.mxu0 0
      %4902 = vmatprep.subr.bf16.mxu0 0
      %4903 = vmatpush1.bf16.msra.mxu0 0
      %4904 = vmatprep.subr.bf16.mxu0 0
      %4905 = vmatpush1.bf16.msra.mxu0 0
      %4906 = vmatprep.subr.bf16.mxu0 0
      %4907 = vmatpush1.bf16.msra.mxu0 0
      %4908 = vmatprep.mubr.bf16.mxu0 0
      %4909 = vmatmul.mubr.bf16.gmra.mrb[0].mxu0 %v4868
      %v4910 = vpop.f32.mrb[0].mxu0
      %v4911 = vadd.f32 %v4865, %v4910
      %v4912 = vpop.f32.mrb[0].mxu0
      %v4913 = vadd.f32 %v4865, %v4912
      %v4914 = vpop.f32.mrb[0].mxu0
      %v4915 = vpop.f32.mrb[0].mxu0
      %4916 = vdwg.mxu0
      %v4919 = vcombine.low %v4911, %v4913
      %v4921 = vunpack.c.l.s4 1983009808
      %v4922 = vunpack.c.0.s8 %v4921
      %v4923 = vlaneseq
      %v4924 = vshrl.u32 %v4923, 7
      %v4925 = vsub.s32 %v4922, %v4924
      %v4926 = vrot.slane %v4919, %v4925
      %4928 = vst [vmem:[%s737] sm:$0xf] %v4926
      %p4929 = scmp.lt.s32.totalorder %s35, 1
      %s4930 = scalar_select %p4929, %s35, 1
      %s4931 = smul.addr %s4930, 2
      %s4932 = smul.addr %s4931, 2
      %s4933 = scalar_lea.vmem %s24, %s4932
      // Predicated region
      $region117: #{norm_unet_forward.1} parent=115 // pred_check
        %p4934 = pneg %p562
      $region118: #{norm_unet_forward.1} parent=115 // pred_check_branch
        %4936 = sbr.rel (%p4934) target = $region120
      $region119: #{norm_unet_forward.1} parent=115 // pred_region
        _
      $region120: #{norm_unet_forward.1} parent=115 // pred_fallthru
        _
    $region116: #{norm_unet_forward.1} parent=5 // pred_fallthru
      _
    %p4937 = scmp.le.s32.totalorder 2, %s30
    // Predicated region
    $region121: #{norm_unet_forward.1} parent=5 // pred_check
      %p4938 = pneg %p4937
    $region122: #{norm_unet_forward.1} parent=5 // pred_check_branch
      %4940 = sbr.rel (%p4938) target = $region124
    $region123: #{norm_unet_forward.1} parent=5 // pred_region
      %s4941 = ssub.s32 %s30, 2
      // Predicated region
      $region125: #{norm_unet_forward.1} parent=123 // pred_check
        %p4942 = pneg %p568
      $region126: #{norm_unet_forward.1} parent=123 // pred_check_branch
        %4944 = sbr.rel (%p4942) target = $region128
      $region127: #{norm_unet_forward.1} parent=123 // pred_region
        %p4945 = scmp.lt.s32.totalorder %s36, 1
        %s4946 = scalar_select %p4945, %s36, 1
        %s4947 = smul.addr %s4946, 2
        %s4948 = smul.addr %s4947, 2
        %s4949 = scalar_lea.vmem %s24, %s4948
      $region128: #{norm_unet_forward.1} parent=123 // pred_fallthru
        _
    $region124: #{norm_unet_forward.1} parent=5 // pred_fallthru
      _
  $region6: #{norm_unet_forward.1} parent=0 // loop_footer
    %s34 = sadd.s32 1, %s30
  $region7: #{norm_unet_forward.1} parent=0 // loop_footer_branch
    %29 = sbr.rel target = $region3
  $region8: #{norm_unet_forward.1} parent=0 // loop_exit
    _

</llo_original>
